<compile_context>
chip_gen: v5e
topology: v5e:2x2
jax: 0.10.0
libtpu: 0.0.40
codegen_flags: <defaults>
</compile_context>

<pallas_src>
import math

import jax
import jax.numpy as jnp
from jax.experimental import pallas as pl
from jax.experimental.pallas import tpu as pltpu

# ---- model config (consistent with the module defaults, small shapes) ----
INPUT_SIZE = 16
HIDDEN = 128            # embed_dim, divisible by NUM_HEADS
NUM_LAYERS = 3
OUTPUT_SIZE = 1
NUM_HEADS = 8
HEAD_DIM = HIDDEN // NUM_HEADS
BATCH = 2
SEQ = 8

_VMEM = pltpu.MemorySpace.VMEM
_F32 = jnp.float32
_BF16 = jnp.bfloat16


def _mxu(a, w):
    """MXU matmul with bf16 operands (fewer MXU passes) and f32 accumulate."""
    return jnp.dot(a.astype(_BF16), w.astype(_BF16),
                   preferred_element_type=_F32)


# --------------------------------------------------------------------------
# One fused kernel: LSTM stack + MHA + prediction/uncertainty heads.
# --------------------------------------------------------------------------
def _fused_forward_kernel(
    x_ref,
    # LSTM (3 layers): W_ih^T (D_in,4H) bf16, W_hh^T (H,4H) bf16, bias (1,4H)
    w_ih0, w_hh0, b0, w_ih1, w_hh1, b1, w_ih2, w_hh2, b2,
    # attention: full-width (H,H) bf16 weights stored (in,out), (1,H) biases
    wq, wk, wv, bq, bk, bv, wo, bo,
    # prediction + uncertainty heads (f32, stored (in,out) / (1,out))
    f1w, f1b, f2w, f2b, f3w, f3b, u1w, u1b, u2w, u2b,
    # outputs
    pred_ref, unc_ref, attnw_ref,
    # scratch: last-layer LSTM outputs, batch-major (B, T, H)
    lstm_ref,
):
    B, T, _ = x_ref.shape
    H = HIDDEN
    NH = NUM_HEADS
    hd = HEAD_DIM

    # ------------------ LSTM stack (eval mode, no dropout) ------------------
    # Time-major flat layout (row = t*B + b): the hoisted input projection is
    # one matmul per layer and the per-step gate read is a single contiguous
    # static 2-row slice (no 1-row slices / concats on the recurrence).
    seq = jnp.concatenate([x_ref[:, t, :] for t in range(T)], axis=0)  # (T*B,D)

    lstm_weights = ((w_ih0, w_hh0, b0), (w_ih1, w_hh1, b1), (w_ih2, w_hh2, b2))
    for layer, (w_ih, w_hh, b) in enumerate(lstm_weights):
        # Hoisted input projection + combined bias: ONE matmul per layer.
        gates = _mxu(seq, w_ih[...]) + b[...]                 # (T*B, 4H) f32
        w_hh_v = w_hh[...]                                    # (H, 4H) bf16

        h = jnp.zeros((B, H), _F32)
        c = jnp.zeros((B, H), _F32)
        outs = []
        for t in range(T):                                    # fully unrolled
            g = gates[t * B:(t + 1) * B, :] + _mxu(h, w_hh_v)  # (B, 4H) f32
            # PyTorch gate order: input, forget, cell(g), output
            i_g = jax.nn.sigmoid(g[:, 0:H])
            f_g = jax.nn.sigmoid(g[:, H:2 * H])
            c_g = jnp.tanh(g[:, 2 * H:3 * H])
            o_g = jax.nn.sigmoid(g[:, 3 * H:4 * H])
            c = f_g * c + i_g * c_g                           # f32 cell state
            h = o_g * jnp.tanh(c)                             # f32 hidden
            if layer == NUM_LAYERS - 1:
                lstm_ref[:, t, :] = h        # batch-major regroup via VMEM
            else:
                outs.append(h)
        if layer != NUM_LAYERS - 1:
            seq = jnp.concatenate(outs, axis=0)               # (T*B, H)

    # -------- Multi-head self-attention: full-width projections -------------
    # Q/K/V for the whole (B*T, H) block, one 128x128 matmul each.
    flat = jnp.concatenate([lstm_ref[0], lstm_ref[1]], axis=0)  # (B*T, H)
    q = _mxu(flat, wq[...]) + bq[...]                           # (B*T, H) f32
    k = _mxu(flat, wk[...]) + bk[...]
    v = _mxu(flat, wv[...]) + bv[...]

    def split_heads(m):                       # (T, H) -> (NH, T, hd), bf16
        return jnp.stack(
            [m[:, hh * hd:(hh + 1) * hd] for hh in range(NH)],
            axis=0).astype(_BF16)

    scale = 1.0 / math.sqrt(hd)
    attnw_rows = []
    ctx_rows = []
    for bb in range(B):                                       # B == 2 (tiny)
        qh = split_heads(q[bb * T:(bb + 1) * T, :])           # (NH, T, hd)
        kh = split_heads(k[bb * T:(bb + 1) * T, :])
        vh = split_heads(v[bb * T:(bb + 1) * T, :])
        s = jnp.einsum("hqd,hkd->hqk", qh, kh,
                       preferred_element_type=_F32) * scale   # (NH, T, T)
        p = jax.nn.softmax(s, axis=-1)                        # f32
        attnw_rows.append(jnp.mean(p, axis=0))                # head-averaged
        # Context only for the last query row (only row the heads consume).
        p_last = p[:, T - 1:T, :].astype(_BF16)               # (NH, 1, T)
        ctx = jnp.einsum("hqk,hkd->hqd", p_last, vh,
                         preferred_element_type=_F32)         # (NH, 1, hd)
        ctx_rows.append(jnp.concatenate(
            [ctx[hh] for hh in range(NH)], axis=-1))          # (1, H) concat heads

    attnw_ref[...] = jnp.stack(attnw_rows, axis=0)            # (B, T, T)
    ctx_flat = jnp.concatenate(ctx_rows, axis=0)              # (B, H)
    # Output projection: ONE concat-heads 128x128 matmul (no per-head sum).
    last = _mxu(ctx_flat, wo[...]) + bo[...]                  # (B, H)

    # ------------------- prediction + uncertainty heads --------------------
    def dense(a, w, b_):
        return jnp.dot(a, w[...], preferred_element_type=_F32) + b_[...]

    h1 = jax.nn.relu(dense(last, f1w, f1b))
    h2 = jax.nn.relu(dense(h1, f2w, f2b))
    pred_ref[...] = dense(h2, f3w, f3b)

    u1 = jax.nn.relu(dense(last, u1w, u1b))
    unc_ref[...] = jax.nn.softplus(dense(u1, u2w, u2b))


# --------------------------------------------------------------------------
# Wrapper: a single pallas_call, everything VMEM-resident, no grid.
# (Intentionally NOT sharding B=2 across v7x's two TensorCores: the recurrent
#  chain latency is independent of M, so splitting batch only duplicates DMA.)
# --------------------------------------------------------------------------
def lstm_predictor_forward(params, x):
    # x: (B, T, INPUT_SIZE) float32, batch_first like the PyTorch module.
    B, T, _ = x.shape
    args = (x,) + params["lstm"] + params["attn"] + params["heads"]

    flops = 2 * (
        B * T * (INPUT_SIZE + 2 * HIDDEN) * 4 * HIDDEN        # input projections
        + NUM_LAYERS * T * B * HIDDEN * 4 * HIDDEN            # recurrent h @ W_hh
        + 3 * B * T * HIDDEN * HIDDEN                         # q/k/v projections
        + B * HIDDEN * HIDDEN                                 # output projection
        + 2 * B * NUM_HEADS * T * T * HEAD_DIM                # scores + context
        + B * (HIDDEN * 64 + 64 * 32 + 32 + HIDDEN * 32 + 32) # fc / unc heads
    )
    bytes_accessed = sum(int(a.size) * a.dtype.itemsize for a in args)
    transcendentals = NUM_LAYERS * T * B * 5 * HIDDEN + B * NUM_HEADS * T * T

    pred, unc, attn_w = pl.pallas_call(
        _fused_forward_kernel,
        out_shape=(jax.ShapeDtypeStruct((B, OUTPUT_SIZE), _F32),
                   jax.ShapeDtypeStruct((B, 1), _F32),
                   jax.ShapeDtypeStruct((B, T, T), _F32)),
        in_specs=[pl.BlockSpec(memory_space=_VMEM)] * len(args),
        out_specs=(pl.BlockSpec(memory_space=_VMEM),
                   pl.BlockSpec(memory_space=_VMEM),
                   pl.BlockSpec(memory_space=_VMEM)),
        scratch_shapes=[pltpu.VMEM((B, T, HIDDEN), _F32)],
        cost_estimate=pl.CostEstimate(flops=int(flops),
                                      transcendentals=int(transcendentals),
                                      bytes_accessed=int(bytes_accessed)),
    )(*args)
    return pred, unc, attn_w


# --------------------------------------------------------------------------
# Deterministic parameter initialization (shapes from LSTMPredictor.__init__).
# Weights stored transposed as (in_features, out_features); LSTM / attention
# weights stored bf16 (MXU operands), biases and head params stay f32.
# --------------------------------------------------------------------------
def init_params(key):
    keys = iter(jax.random.split(key, 64))

    def u(shape, fan_in, dtype=_F32):
        s = 1.0 / math.sqrt(fan_in)
        return jax.random.uniform(next(keys), shape, _F32, -s, s).astype(dtype)

    params = {}

    # LSTM: per layer W_ih^T (D_in,4H), W_hh^T (H,4H), combined bias (1,4H)
    lstm = []
    for layer in range(NUM_LAYERS):
        d_in = INPUT_SIZE if layer == 0 else HIDDEN
        w_ih = u((d_in, 4 * HIDDEN), HIDDEN, _BF16)
        w_hh = u((HIDDEN, 4 * HIDDEN), HIDDEN, _BF16)
        b_ih = u((1, 4 * HIDDEN), HIDDEN)
        b_hh = u((1, 4 * HIDDEN), HIDDEN)
        lstm.extend([w_ih, w_hh, b_ih + b_hh])
    params["lstm"] = tuple(lstm)

    # MultiheadAttention: full-width (H,H) weights stored (in,out) = W^T.
    # TODO(synk): PyTorch uses xavier_uniform for in_proj; uniform(1/sqrt(H))
    # used here — irrelevant to kernel numerics (load real weights to match).
    wq = u((HIDDEN, HIDDEN), HIDDEN, _BF16)
    wk = u((HIDDEN, HIDDEN), HIDDEN, _BF16)
    wv = u((HIDDEN, HIDDEN), HIDDEN, _BF16)
    wo = u((HIDDEN, HIDDEN), HIDDEN, _BF16)
    bq = u((1, HIDDEN), HIDDEN)
    bk = u((1, HIDDEN), HIDDEN)
    bv = u((1, HIDDEN), HIDDEN)
    bo = u((1, HIDDEN), HIDDEN)
    params["attn"] = (wq, wk, wv, bq, bk, bv, wo, bo)

    # fc_layers: H -> H/2 -> H/4 -> output ; uncertainty: H -> 32 -> 1
    h2, h4 = HIDDEN // 2, HIDDEN // 4
    params["heads"] = (
        u((HIDDEN, h2), HIDDEN), u((1, h2), HIDDEN),
        u((h2, h4), h2), u((1, h4), h2),
        u((h4, OUTPUT_SIZE), h4), u((1, OUTPUT_SIZE), h4),
        u((HIDDEN, 32), HIDDEN), u((1, 32), HIDDEN),
        u((32, 1), 32), u((1, 1), 32),
    )
    return params


if __name__ == "__main__":
    root = jax.random.PRNGKey(0)
    k_param, k_x = jax.random.split(root)
    params = init_params(k_param)
    x = jax.random.normal(k_x, (BATCH, SEQ, INPUT_SIZE), _F32)

    fwd = jax.jit(lstm_predictor_forward)
    preds, unc, attn_w = fwd(params, x)
    jax.block_until_ready((preds, unc, attn_w))

    assert preds.shape == (BATCH, OUTPUT_SIZE)
    assert unc.shape == (BATCH, 1)
    assert attn_w.shape == (BATCH, SEQ, SEQ)
    assert bool(jnp.all(jnp.isfinite(preds)))
    assert bool(jnp.all(unc > 0.0))  # Softplus output is strictly positive
    # attention weights are a head-averaged softmax -> rows sum to 1
    assert bool(jnp.allclose(jnp.sum(attn_w, axis=-1), 1.0, atol=1e-3))

    print("KERNEL_OK")
</pallas_src>

<mosaic_0001>
module attributes {stable_mosaic.version = 11 : i64} {
  func.func @_fused_forward_kernel(%arg0: memref<2x8x16xf32, #tpu.memory_space<vmem>>, %arg1: memref<16x512xbf16, #tpu.memory_space<vmem>>, %arg2: memref<128x512xbf16, #tpu.memory_space<vmem>>, %arg3: memref<1x512xf32, #tpu.memory_space<vmem>>, %arg4: memref<128x512xbf16, #tpu.memory_space<vmem>>, %arg5: memref<128x512xbf16, #tpu.memory_space<vmem>>, %arg6: memref<1x512xf32, #tpu.memory_space<vmem>>, %arg7: memref<128x512xbf16, #tpu.memory_space<vmem>>, %arg8: memref<128x512xbf16, #tpu.memory_space<vmem>>, %arg9: memref<1x512xf32, #tpu.memory_space<vmem>>, %arg10: memref<128x128xbf16, #tpu.memory_space<vmem>>, %arg11: memref<128x128xbf16, #tpu.memory_space<vmem>>, %arg12: memref<128x128xbf16, #tpu.memory_space<vmem>>, %arg13: memref<1x128xf32, #tpu.memory_space<vmem>>, %arg14: memref<1x128xf32, #tpu.memory_space<vmem>>, %arg15: memref<1x128xf32, #tpu.memory_space<vmem>>, %arg16: memref<128x128xbf16, #tpu.memory_space<vmem>>, %arg17: memref<1x128xf32, #tpu.memory_space<vmem>>, %arg18: memref<128x64xf32, #tpu.memory_space<vmem>>, %arg19: memref<1x64xf32, #tpu.memory_space<vmem>>, %arg20: memref<64x32xf32, #tpu.memory_space<vmem>>, %arg21: memref<1x32xf32, #tpu.memory_space<vmem>>, %arg22: memref<32x1xf32, #tpu.memory_space<vmem>>, %arg23: memref<1x1xf32, #tpu.memory_space<vmem>>, %arg24: memref<128x32xf32, #tpu.memory_space<vmem>>, %arg25: memref<1x32xf32, #tpu.memory_space<vmem>>, %arg26: memref<32x1xf32, #tpu.memory_space<vmem>>, %arg27: memref<1x1xf32, #tpu.memory_space<vmem>>, %arg28: memref<2x1xf32, #tpu.memory_space<vmem>>, %arg29: memref<2x1xf32, #tpu.memory_space<vmem>>, %arg30: memref<2x8x8xf32, #tpu.memory_space<vmem>>, %arg31: memref<2x8x128xf32, #tpu.memory_space<vmem>>) attributes {dimension_semantics = [], scalar_prefetch = 0 : i64, scratch_operands = 1 : i64, tpu.core_type = #tpu.core_type<tc>} {
    %c0 = arith.constant 0 : index
    %c0_0 = arith.constant 0 : index
    %c0_1 = arith.constant 0 : index
    %0 = vector.load %arg0[%c0, %c0_0, %c0_1] : memref<2x8x16xf32, #tpu.memory_space<vmem>>, vector<2x1x16xf32>
    %1 = vector.shape_cast %0 : vector<2x1x16xf32> to vector<2x16xf32>
    %c0_2 = arith.constant 0 : index
    %c1 = arith.constant 1 : index
    %c0_3 = arith.constant 0 : index
    %2 = vector.load %arg0[%c0_2, %c1, %c0_3] : memref<2x8x16xf32, #tpu.memory_space<vmem>>, vector<2x1x16xf32>
    %3 = vector.shape_cast %2 : vector<2x1x16xf32> to vector<2x16xf32>
    %c0_4 = arith.constant 0 : index
    %c2 = arith.constant 2 : index
    %c0_5 = arith.constant 0 : index
    %4 = vector.load %arg0[%c0_4, %c2, %c0_5] : memref<2x8x16xf32, #tpu.memory_space<vmem>>, vector<2x1x16xf32>
    %5 = vector.shape_cast %4 : vector<2x1x16xf32> to vector<2x16xf32>
    %c0_6 = arith.constant 0 : index
    %c3 = arith.constant 3 : index
    %c0_7 = arith.constant 0 : index
    %6 = vector.load %arg0[%c0_6, %c3, %c0_7] : memref<2x8x16xf32, #tpu.memory_space<vmem>>, vector<2x1x16xf32>
    %7 = vector.shape_cast %6 : vector<2x1x16xf32> to vector<2x16xf32>
    %c0_8 = arith.constant 0 : index
    %c4 = arith.constant 4 : index
    %c0_9 = arith.constant 0 : index
    %8 = vector.load %arg0[%c0_8, %c4, %c0_9] : memref<2x8x16xf32, #tpu.memory_space<vmem>>, vector<2x1x16xf32>
    %9 = vector.shape_cast %8 : vector<2x1x16xf32> to vector<2x16xf32>
    %c0_10 = arith.constant 0 : index
    %c5 = arith.constant 5 : index
    %c0_11 = arith.constant 0 : index
    %10 = vector.load %arg0[%c0_10, %c5, %c0_11] : memref<2x8x16xf32, #tpu.memory_space<vmem>>, vector<2x1x16xf32>
    %11 = vector.shape_cast %10 : vector<2x1x16xf32> to vector<2x16xf32>
    %c0_12 = arith.constant 0 : index
    %c6 = arith.constant 6 : index
    %c0_13 = arith.constant 0 : index
    %12 = vector.load %arg0[%c0_12, %c6, %c0_13] : memref<2x8x16xf32, #tpu.memory_space<vmem>>, vector<2x1x16xf32>
    %13 = vector.shape_cast %12 : vector<2x1x16xf32> to vector<2x16xf32>
    %c0_14 = arith.constant 0 : index
    %c7 = arith.constant 7 : index
    %c0_15 = arith.constant 0 : index
    %14 = vector.load %arg0[%c0_14, %c7, %c0_15] : memref<2x8x16xf32, #tpu.memory_space<vmem>>, vector<2x1x16xf32>
    %15 = vector.shape_cast %14 : vector<2x1x16xf32> to vector<2x16xf32>
    %16 = tpu.concatenate %1, %3, %5, %7, %9, %11, %13, %15 in 0 : vector<2x16xf32>, vector<2x16xf32>, vector<2x16xf32>, vector<2x16xf32>, vector<2x16xf32>, vector<2x16xf32>, vector<2x16xf32>, vector<2x16xf32> -> vector<16x16xf32>
    %c0_16 = arith.constant 0 : index
    %c0_17 = arith.constant 0 : index
    %17 = vector.load %arg1[%c0_16, %c0_17] : memref<16x512xbf16, #tpu.memory_space<vmem>>, vector<16x512xbf16>
    %18 = arith.truncf %16 : vector<16x16xf32> to vector<16x16xbf16>
    %cst = arith.constant dense<0.000000e+00> : vector<16x512xf32>
    %19 = tpu.matmul %18, %17, %cst {dimension_numbers = #tpu.dot_dimension_numbers<[1], [0], [0], [1], [0, 0, 1, 1], [], []>} : vector<16x16xbf16>, vector<16x512xbf16>, vector<16x512xf32> -> vector<16x512xf32>
    %c0_18 = arith.constant 0 : index
    %c0_19 = arith.constant 0 : index
    %20 = vector.load %arg3[%c0_18, %c0_19] : memref<1x512xf32, #tpu.memory_space<vmem>>, vector<1x512xf32>
    %21 = vector.broadcast %20 : vector<1x512xf32> to vector<16x512xf32>
    %22 = arith.addf %19, %21 : vector<16x512xf32>
    %c0_20 = arith.constant 0 : index
    %c0_21 = arith.constant 0 : index
    %23 = vector.load %arg2[%c0_20, %c0_21] : memref<128x512xbf16, #tpu.memory_space<vmem>>, vector<128x512xbf16>
    %cst_22 = arith.constant 0.000000e+00 : f32
    %24 = vector.broadcast %cst_22 : f32 to vector<2x128xf32>
    %cst_23 = arith.constant 0.000000e+00 : f32
    %25 = vector.broadcast %cst_23 : f32 to vector<2x128xf32>
    %26 = vector.extract_strided_slice %22 {offsets = [0, 0], sizes = [2, 512], strides = [1, 1]} : vector<16x512xf32> to vector<2x512xf32>
    %27 = arith.truncf %24 : vector<2x128xf32> to vector<2x128xbf16>
    %cst_24 = arith.constant dense<0.000000e+00> : vector<2x512xf32>
    %28 = tpu.matmul %27, %23, %cst_24 {dimension_numbers = #tpu.dot_dimension_numbers<[1], [0], [0], [1], [0, 0, 1, 1], [], []>} : vector<2x128xbf16>, vector<128x512xbf16>, vector<2x512xf32> -> vector<2x512xf32>
    %29 = arith.addf %26, %28 : vector<2x512xf32>
    %30 = vector.extract_strided_slice %29 {offsets = [0, 0], sizes = [2, 128], strides = [1, 1]} : vector<2x512xf32> to vector<2x128xf32>
    %31 = arith.negf %30 : vector<2x128xf32>
    %32 = math.exp %31 : vector<2x128xf32>
    %cst_25 = arith.constant 1.000000e+00 : f32
    %33 = vector.broadcast %cst_25 : f32 to vector<2x128xf32>
    %34 = arith.addf %33, %32 : vector<2x128xf32>
    %35 = arith.divf %33, %34 : vector<2x128xf32>
    %36 = vector.extract_strided_slice %29 {offsets = [0, 128], sizes = [2, 128], strides = [1, 1]} : vector<2x512xf32> to vector<2x128xf32>
    %37 = arith.negf %36 : vector<2x128xf32>
    %38 = math.exp %37 : vector<2x128xf32>
    %cst_26 = arith.constant 1.000000e+00 : f32
    %39 = vector.broadcast %cst_26 : f32 to vector<2x128xf32>
    %40 = arith.addf %39, %38 : vector<2x128xf32>
    %41 = arith.divf %39, %40 : vector<2x128xf32>
    %42 = vector.extract_strided_slice %29 {offsets = [0, 256], sizes = [2, 128], strides = [1, 1]} : vector<2x512xf32> to vector<2x128xf32>
    %43 = math.tanh %42 : vector<2x128xf32>
    %44 = vector.extract_strided_slice %29 {offsets = [0, 384], sizes = [2, 128], strides = [1, 1]} : vector<2x512xf32> to vector<2x128xf32>
    %45 = arith.negf %44 : vector<2x128xf32>
    %46 = math.exp %45 : vector<2x128xf32>
    %cst_27 = arith.constant 1.000000e+00 : f32
    %47 = vector.broadcast %cst_27 : f32 to vector<2x128xf32>
    %48 = arith.addf %47, %46 : vector<2x128xf32>
    %49 = arith.divf %47, %48 : vector<2x128xf32>
    %50 = arith.mulf %41, %25 : vector<2x128xf32>
    %51 = arith.mulf %35, %43 : vector<2x128xf32>
    %52 = arith.addf %50, %51 : vector<2x128xf32>
    %53 = math.tanh %52 : vector<2x128xf32>
    %54 = arith.mulf %49, %53 : vector<2x128xf32>
    %55 = vector.extract_strided_slice %22 {offsets = [2, 0], sizes = [2, 512], strides = [1, 1]} : vector<16x512xf32> to vector<2x512xf32>
    %56 = arith.truncf %54 : vector<2x128xf32> to vector<2x128xbf16>
    %cst_28 = arith.constant dense<0.000000e+00> : vector<2x512xf32>
    %57 = tpu.matmul %56, %23, %cst_28 {dimension_numbers = #tpu.dot_dimension_numbers<[1], [0], [0], [1], [0, 0, 1, 1], [], []>} : vector<2x128xbf16>, vector<128x512xbf16>, vector<2x512xf32> -> vector<2x512xf32>
    %58 = arith.addf %55, %57 : vector<2x512xf32>
    %59 = vector.extract_strided_slice %58 {offsets = [0, 0], sizes = [2, 128], strides = [1, 1]} : vector<2x512xf32> to vector<2x128xf32>
    %60 = arith.negf %59 : vector<2x128xf32>
    %61 = math.exp %60 : vector<2x128xf32>
    %cst_29 = arith.constant 1.000000e+00 : f32
    %62 = vector.broadcast %cst_29 : f32 to vector<2x128xf32>
    %63 = arith.addf %62, %61 : vector<2x128xf32>
    %64 = arith.divf %62, %63 : vector<2x128xf32>
    %65 = vector.extract_strided_slice %58 {offsets = [0, 128], sizes = [2, 128], strides = [1, 1]} : vector<2x512xf32> to vector<2x128xf32>
    %66 = arith.negf %65 : vector<2x128xf32>
    %67 = math.exp %66 : vector<2x128xf32>
    %cst_30 = arith.constant 1.000000e+00 : f32
    %68 = vector.broadcast %cst_30 : f32 to vector<2x128xf32>
    %69 = arith.addf %68, %67 : vector<2x128xf32>
    %70 = arith.divf %68, %69 : vector<2x128xf32>
    %71 = vector.extract_strided_slice %58 {offsets = [0, 256], sizes = [2, 128], strides = [1, 1]} : vector<2x512xf32> to vector<2x128xf32>
    %72 = math.tanh %71 : vector<2x128xf32>
    %73 = vector.extract_strided_slice %58 {offsets = [0, 384], sizes = [2, 128], strides = [1, 1]} : vector<2x512xf32> to vector<2x128xf32>
    %74 = arith.negf %73 : vector<2x128xf32>
    %75 = math.exp %74 : vector<2x128xf32>
    %cst_31 = arith.constant 1.000000e+00 : f32
    %76 = vector.broadcast %cst_31 : f32 to vector<2x128xf32>
    %77 = arith.addf %76, %75 : vector<2x128xf32>
    %78 = arith.divf %76, %77 : vector<2x128xf32>
    %79 = arith.mulf %70, %52 : vector<2x128xf32>
    %80 = arith.mulf %64, %72 : vector<2x128xf32>
    %81 = arith.addf %79, %80 : vector<2x128xf32>
    %82 = math.tanh %81 : vector<2x128xf32>
    %83 = arith.mulf %78, %82 : vector<2x128xf32>
    %84 = vector.extract_strided_slice %22 {offsets = [4, 0], sizes = [2, 512], strides = [1, 1]} : vector<16x512xf32> to vector<2x512xf32>
    %85 = arith.truncf %83 : vector<2x128xf32> to vector<2x128xbf16>
    %cst_32 = arith.constant dense<0.000000e+00> : vector<2x512xf32>
    %86 = tpu.matmul %85, %23, %cst_32 {dimension_numbers = #tpu.dot_dimension_numbers<[1], [0], [0], [1], [0, 0, 1, 1], [], []>} : vector<2x128xbf16>, vector<128x512xbf16>, vector<2x512xf32> -> vector<2x512xf32>
    %87 = arith.addf %84, %86 : vector<2x512xf32>
    %88 = vector.extract_strided_slice %87 {offsets = [0, 0], sizes = [2, 128], strides = [1, 1]} : vector<2x512xf32> to vector<2x128xf32>
    %89 = arith.negf %88 : vector<2x128xf32>
    %90 = math.exp %89 : vector<2x128xf32>
    %cst_33 = arith.constant 1.000000e+00 : f32
    %91 = vector.broadcast %cst_33 : f32 to vector<2x128xf32>
    %92 = arith.addf %91, %90 : vector<2x128xf32>
    %93 = arith.divf %91, %92 : vector<2x128xf32>
    %94 = vector.extract_strided_slice %87 {offsets = [0, 128], sizes = [2, 128], strides = [1, 1]} : vector<2x512xf32> to vector<2x128xf32>
    %95 = arith.negf %94 : vector<2x128xf32>
    %96 = math.exp %95 : vector<2x128xf32>
    %cst_34 = arith.constant 1.000000e+00 : f32
    %97 = vector.broadcast %cst_34 : f32 to vector<2x128xf32>
    %98 = arith.addf %97, %96 : vector<2x128xf32>
    %99 = arith.divf %97, %98 : vector<2x128xf32>
    %100 = vector.extract_strided_slice %87 {offsets = [0, 256], sizes = [2, 128], strides = [1, 1]} : vector<2x512xf32> to vector<2x128xf32>
    %101 = math.tanh %100 : vector<2x128xf32>
    %102 = vector.extract_strided_slice %87 {offsets = [0, 384], sizes = [2, 128], strides = [1, 1]} : vector<2x512xf32> to vector<2x128xf32>
    %103 = arith.negf %102 : vector<2x128xf32>
    %104 = math.exp %103 : vector<2x128xf32>
    %cst_35 = arith.constant 1.000000e+00 : f32
    %105 = vector.broadcast %cst_35 : f32 to vector<2x128xf32>
    %106 = arith.addf %105, %104 : vector<2x128xf32>
    %107 = arith.divf %105, %106 : vector<2x128xf32>
    %108 = arith.mulf %99, %81 : vector<2x128xf32>
    %109 = arith.mulf %93, %101 : vector<2x128xf32>
    %110 = arith.addf %108, %109 : vector<2x128xf32>
    %111 = math.tanh %110 : vector<2x128xf32>
    %112 = arith.mulf %107, %111 : vector<2x128xf32>
    %113 = vector.extract_strided_slice %22 {offsets = [6, 0], sizes = [2, 512], strides = [1, 1]} : vector<16x512xf32> to vector<2x512xf32>
    %114 = arith.truncf %112 : vector<2x128xf32> to vector<2x128xbf16>
    %cst_36 = arith.constant dense<0.000000e+00> : vector<2x512xf32>
    %115 = tpu.matmul %114, %23, %cst_36 {dimension_numbers = #tpu.dot_dimension_numbers<[1], [0], [0], [1], [0, 0, 1, 1], [], []>} : vector<2x128xbf16>, vector<128x512xbf16>, vector<2x512xf32> -> vector<2x512xf32>
    %116 = arith.addf %113, %115 : vector<2x512xf32>
    %117 = vector.extract_strided_slice %116 {offsets = [0, 0], sizes = [2, 128], strides = [1, 1]} : vector<2x512xf32> to vector<2x128xf32>
    %118 = arith.negf %117 : vector<2x128xf32>
    %119 = math.exp %118 : vector<2x128xf32>
    %cst_37 = arith.constant 1.000000e+00 : f32
    %120 = vector.broadcast %cst_37 : f32 to vector<2x128xf32>
    %121 = arith.addf %120, %119 : vector<2x128xf32>
    %122 = arith.divf %120, %121 : vector<2x128xf32>
    %123 = vector.extract_strided_slice %116 {offsets = [0, 128], sizes = [2, 128], strides = [1, 1]} : vector<2x512xf32> to vector<2x128xf32>
    %124 = arith.negf %123 : vector<2x128xf32>
    %125 = math.exp %124 : vector<2x128xf32>
    %cst_38 = arith.constant 1.000000e+00 : f32
    %126 = vector.broadcast %cst_38 : f32 to vector<2x128xf32>
    %127 = arith.addf %126, %125 : vector<2x128xf32>
    %128 = arith.divf %126, %127 : vector<2x128xf32>
    %129 = vector.extract_strided_slice %116 {offsets = [0, 256], sizes = [2, 128], strides = [1, 1]} : vector<2x512xf32> to vector<2x128xf32>
    %130 = math.tanh %129 : vector<2x128xf32>
    %131 = vector.extract_strided_slice %116 {offsets = [0, 384], sizes = [2, 128], strides = [1, 1]} : vector<2x512xf32> to vector<2x128xf32>
    %132 = arith.negf %131 : vector<2x128xf32>
    %133 = math.exp %132 : vector<2x128xf32>
    %cst_39 = arith.constant 1.000000e+00 : f32
    %134 = vector.broadcast %cst_39 : f32 to vector<2x128xf32>
    %135 = arith.addf %134, %133 : vector<2x128xf32>
    %136 = arith.divf %134, %135 : vector<2x128xf32>
    %137 = arith.mulf %128, %110 : vector<2x128xf32>
    %138 = arith.mulf %122, %130 : vector<2x128xf32>
    %139 = arith.addf %137, %138 : vector<2x128xf32>
    %140 = math.tanh %139 : vector<2x128xf32>
    %141 = arith.mulf %136, %140 : vector<2x128xf32>
    %142 = vector.extract_strided_slice %22 {offsets = [8, 0], sizes = [2, 512], strides = [1, 1]} : vector<16x512xf32> to vector<2x512xf32>
    %143 = arith.truncf %141 : vector<2x128xf32> to vector<2x128xbf16>
    %cst_40 = arith.constant dense<0.000000e+00> : vector<2x512xf32>
    %144 = tpu.matmul %143, %23, %cst_40 {dimension_numbers = #tpu.dot_dimension_numbers<[1], [0], [0], [1], [0, 0, 1, 1], [], []>} : vector<2x128xbf16>, vector<128x512xbf16>, vector<2x512xf32> -> vector<2x512xf32>
    %145 = arith.addf %142, %144 : vector<2x512xf32>
    %146 = vector.extract_strided_slice %145 {offsets = [0, 0], sizes = [2, 128], strides = [1, 1]} : vector<2x512xf32> to vector<2x128xf32>
    %147 = arith.negf %146 : vector<2x128xf32>
    %148 = math.exp %147 : vector<2x128xf32>
    %cst_41 = arith.constant 1.000000e+00 : f32
    %149 = vector.broadcast %cst_41 : f32 to vector<2x128xf32>
    %150 = arith.addf %149, %148 : vector<2x128xf32>
    %151 = arith.divf %149, %150 : vector<2x128xf32>
    %152 = vector.extract_strided_slice %145 {offsets = [0, 128], sizes = [2, 128], strides = [1, 1]} : vector<2x512xf32> to vector<2x128xf32>
    %153 = arith.negf %152 : vector<2x128xf32>
    %154 = math.exp %153 : vector<2x128xf32>
    %cst_42 = arith.constant 1.000000e+00 : f32
    %155 = vector.broadcast %cst_42 : f32 to vector<2x128xf32>
    %156 = arith.addf %155, %154 : vector<2x128xf32>
    %157 = arith.divf %155, %156 : vector<2x128xf32>
    %158 = vector.extract_strided_slice %145 {offsets = [0, 256], sizes = [2, 128], strides = [1, 1]} : vector<2x512xf32> to vector<2x128xf32>
    %159 = math.tanh %158 : vector<2x128xf32>
    %160 = vector.extract_strided_slice %145 {offsets = [0, 384], sizes = [2, 128], strides = [1, 1]} : vector<2x512xf32> to vector<2x128xf32>
    %161 = arith.negf %160 : vector<2x128xf32>
    %162 = math.exp %161 : vector<2x128xf32>
    %cst_43 = arith.constant 1.000000e+00 : f32
    %163 = vector.broadcast %cst_43 : f32 to vector<2x128xf32>
    %164 = arith.addf %163, %162 : vector<2x128xf32>
    %165 = arith.divf %163, %164 : vector<2x128xf32>
    %166 = arith.mulf %157, %139 : vector<2x128xf32>
    %167 = arith.mulf %151, %159 : vector<2x128xf32>
    %168 = arith.addf %166, %167 : vector<2x128xf32>
    %169 = math.tanh %168 : vector<2x128xf32>
    %170 = arith.mulf %165, %169 : vector<2x128xf32>
    %171 = vector.extract_strided_slice %22 {offsets = [10, 0], sizes = [2, 512], strides = [1, 1]} : vector<16x512xf32> to vector<2x512xf32>
    %172 = arith.truncf %170 : vector<2x128xf32> to vector<2x128xbf16>
    %cst_44 = arith.constant dense<0.000000e+00> : vector<2x512xf32>
    %173 = tpu.matmul %172, %23, %cst_44 {dimension_numbers = #tpu.dot_dimension_numbers<[1], [0], [0], [1], [0, 0, 1, 1], [], []>} : vector<2x128xbf16>, vector<128x512xbf16>, vector<2x512xf32> -> vector<2x512xf32>
    %174 = arith.addf %171, %173 : vector<2x512xf32>
    %175 = vector.extract_strided_slice %174 {offsets = [0, 0], sizes = [2, 128], strides = [1, 1]} : vector<2x512xf32> to vector<2x128xf32>
    %176 = arith.negf %175 : vector<2x128xf32>
    %177 = math.exp %176 : vector<2x128xf32>
    %cst_45 = arith.constant 1.000000e+00 : f32
    %178 = vector.broadcast %cst_45 : f32 to vector<2x128xf32>
    %179 = arith.addf %178, %177 : vector<2x128xf32>
    %180 = arith.divf %178, %179 : vector<2x128xf32>
    %181 = vector.extract_strided_slice %174 {offsets = [0, 128], sizes = [2, 128], strides = [1, 1]} : vector<2x512xf32> to vector<2x128xf32>
    %182 = arith.negf %181 : vector<2x128xf32>
    %183 = math.exp %182 : vector<2x128xf32>
    %cst_46 = arith.constant 1.000000e+00 : f32
    %184 = vector.broadcast %cst_46 : f32 to vector<2x128xf32>
    %185 = arith.addf %184, %183 : vector<2x128xf32>
    %186 = arith.divf %184, %185 : vector<2x128xf32>
    %187 = vector.extract_strided_slice %174 {offsets = [0, 256], sizes = [2, 128], strides = [1, 1]} : vector<2x512xf32> to vector<2x128xf32>
    %188 = math.tanh %187 : vector<2x128xf32>
    %189 = vector.extract_strided_slice %174 {offsets = [0, 384], sizes = [2, 128], strides = [1, 1]} : vector<2x512xf32> to vector<2x128xf32>
    %190 = arith.negf %189 : vector<2x128xf32>
    %191 = math.exp %190 : vector<2x128xf32>
    %cst_47 = arith.constant 1.000000e+00 : f32
    %192 = vector.broadcast %cst_47 : f32 to vector<2x128xf32>
    %193 = arith.addf %192, %191 : vector<2x128xf32>
    %194 = arith.divf %192, %193 : vector<2x128xf32>
    %195 = arith.mulf %186, %168 : vector<2x128xf32>
    %196 = arith.mulf %180, %188 : vector<2x128xf32>
    %197 = arith.addf %195, %196 : vector<2x128xf32>
    %198 = math.tanh %197 : vector<2x128xf32>
    %199 = arith.mulf %194, %198 : vector<2x128xf32>
    %200 = vector.extract_strided_slice %22 {offsets = [12, 0], sizes = [2, 512], strides = [1, 1]} : vector<16x512xf32> to vector<2x512xf32>
    %201 = arith.truncf %199 : vector<2x128xf32> to vector<2x128xbf16>
    %cst_48 = arith.constant dense<0.000000e+00> : vector<2x512xf32>
    %202 = tpu.matmul %201, %23, %cst_48 {dimension_numbers = #tpu.dot_dimension_numbers<[1], [0], [0], [1], [0, 0, 1, 1], [], []>} : vector<2x128xbf16>, vector<128x512xbf16>, vector<2x512xf32> -> vector<2x512xf32>
    %203 = arith.addf %200, %202 : vector<2x512xf32>
    %204 = vector.extract_strided_slice %203 {offsets = [0, 0], sizes = [2, 128], strides = [1, 1]} : vector<2x512xf32> to vector<2x128xf32>
    %205 = arith.negf %204 : vector<2x128xf32>
    %206 = math.exp %205 : vector<2x128xf32>
    %cst_49 = arith.constant 1.000000e+00 : f32
    %207 = vector.broadcast %cst_49 : f32 to vector<2x128xf32>
    %208 = arith.addf %207, %206 : vector<2x128xf32>
    %209 = arith.divf %207, %208 : vector<2x128xf32>
    %210 = vector.extract_strided_slice %203 {offsets = [0, 128], sizes = [2, 128], strides = [1, 1]} : vector<2x512xf32> to vector<2x128xf32>
    %211 = arith.negf %210 : vector<2x128xf32>
    %212 = math.exp %211 : vector<2x128xf32>
    %cst_50 = arith.constant 1.000000e+00 : f32
    %213 = vector.broadcast %cst_50 : f32 to vector<2x128xf32>
    %214 = arith.addf %213, %212 : vector<2x128xf32>
    %215 = arith.divf %213, %214 : vector<2x128xf32>
    %216 = vector.extract_strided_slice %203 {offsets = [0, 256], sizes = [2, 128], strides = [1, 1]} : vector<2x512xf32> to vector<2x128xf32>
    %217 = math.tanh %216 : vector<2x128xf32>
    %218 = vector.extract_strided_slice %203 {offsets = [0, 384], sizes = [2, 128], strides = [1, 1]} : vector<2x512xf32> to vector<2x128xf32>
    %219 = arith.negf %218 : vector<2x128xf32>
    %220 = math.exp %219 : vector<2x128xf32>
    %cst_51 = arith.constant 1.000000e+00 : f32
    %221 = vector.broadcast %cst_51 : f32 to vector<2x128xf32>
    %222 = arith.addf %221, %220 : vector<2x128xf32>
    %223 = arith.divf %221, %222 : vector<2x128xf32>
    %224 = arith.mulf %215, %197 : vector<2x128xf32>
    %225 = arith.mulf %209, %217 : vector<2x128xf32>
    %226 = arith.addf %224, %225 : vector<2x128xf32>
    %227 = math.tanh %226 : vector<2x128xf32>
    %228 = arith.mulf %223, %227 : vector<2x128xf32>
    %229 = vector.extract_strided_slice %22 {offsets = [14, 0], sizes = [2, 512], strides = [1, 1]} : vector<16x512xf32> to vector<2x512xf32>
    %230 = arith.truncf %228 : vector<2x128xf32> to vector<2x128xbf16>
    %cst_52 = arith.constant dense<0.000000e+00> : vector<2x512xf32>
    %231 = tpu.matmul %230, %23, %cst_52 {dimension_numbers = #tpu.dot_dimension_numbers<[1], [0], [0], [1], [0, 0, 1, 1], [], []>} : vector<2x128xbf16>, vector<128x512xbf16>, vector<2x512xf32> -> vector<2x512xf32>
    %232 = arith.addf %229, %231 : vector<2x512xf32>
    %233 = vector.extract_strided_slice %232 {offsets = [0, 0], sizes = [2, 128], strides = [1, 1]} : vector<2x512xf32> to vector<2x128xf32>
    %234 = arith.negf %233 : vector<2x128xf32>
    %235 = math.exp %234 : vector<2x128xf32>
    %cst_53 = arith.constant 1.000000e+00 : f32
    %236 = vector.broadcast %cst_53 : f32 to vector<2x128xf32>
    %237 = arith.addf %236, %235 : vector<2x128xf32>
    %238 = arith.divf %236, %237 : vector<2x128xf32>
    %239 = vector.extract_strided_slice %232 {offsets = [0, 128], sizes = [2, 128], strides = [1, 1]} : vector<2x512xf32> to vector<2x128xf32>
    %240 = arith.negf %239 : vector<2x128xf32>
    %241 = math.exp %240 : vector<2x128xf32>
    %cst_54 = arith.constant 1.000000e+00 : f32
    %242 = vector.broadcast %cst_54 : f32 to vector<2x128xf32>
    %243 = arith.addf %242, %241 : vector<2x128xf32>
    %244 = arith.divf %242, %243 : vector<2x128xf32>
    %245 = vector.extract_strided_slice %232 {offsets = [0, 256], sizes = [2, 128], strides = [1, 1]} : vector<2x512xf32> to vector<2x128xf32>
    %246 = math.tanh %245 : vector<2x128xf32>
    %247 = vector.extract_strided_slice %232 {offsets = [0, 384], sizes = [2, 128], strides = [1, 1]} : vector<2x512xf32> to vector<2x128xf32>
    %248 = arith.negf %247 : vector<2x128xf32>
    %249 = math.exp %248 : vector<2x128xf32>
    %cst_55 = arith.constant 1.000000e+00 : f32
    %250 = vector.broadcast %cst_55 : f32 to vector<2x128xf32>
    %251 = arith.addf %250, %249 : vector<2x128xf32>
    %252 = arith.divf %250, %251 : vector<2x128xf32>
    %253 = arith.mulf %244, %226 : vector<2x128xf32>
    %254 = arith.mulf %238, %246 : vector<2x128xf32>
    %255 = arith.addf %253, %254 : vector<2x128xf32>
    %256 = math.tanh %255 : vector<2x128xf32>
    %257 = arith.mulf %252, %256 : vector<2x128xf32>
    %258 = tpu.concatenate %54, %83, %112, %141, %170, %199, %228, %257 in 0 : vector<2x128xf32>, vector<2x128xf32>, vector<2x128xf32>, vector<2x128xf32>, vector<2x128xf32>, vector<2x128xf32>, vector<2x128xf32>, vector<2x128xf32> -> vector<16x128xf32>
    %c0_56 = arith.constant 0 : index
    %c0_57 = arith.constant 0 : index
    %259 = vector.load %arg4[%c0_56, %c0_57] : memref<128x512xbf16, #tpu.memory_space<vmem>>, vector<128x512xbf16>
    %260 = arith.truncf %258 : vector<16x128xf32> to vector<16x128xbf16>
    %cst_58 = arith.constant dense<0.000000e+00> : vector<16x512xf32>
    %261 = tpu.matmul %260, %259, %cst_58 {dimension_numbers = #tpu.dot_dimension_numbers<[1], [0], [0], [1], [0, 0, 1, 1], [], []>} : vector<16x128xbf16>, vector<128x512xbf16>, vector<16x512xf32> -> vector<16x512xf32>
    %c0_59 = arith.constant 0 : index
    %c0_60 = arith.constant 0 : index
    %262 = vector.load %arg6[%c0_59, %c0_60] : memref<1x512xf32, #tpu.memory_space<vmem>>, vector<1x512xf32>
    %263 = vector.broadcast %262 : vector<1x512xf32> to vector<16x512xf32>
    %264 = arith.addf %261, %263 : vector<16x512xf32>
    %c0_61 = arith.constant 0 : index
    %c0_62 = arith.constant 0 : index
    %265 = vector.load %arg5[%c0_61, %c0_62] : memref<128x512xbf16, #tpu.memory_space<vmem>>, vector<128x512xbf16>
    %cst_63 = arith.constant 0.000000e+00 : f32
    %266 = vector.broadcast %cst_63 : f32 to vector<2x128xf32>
    %cst_64 = arith.constant 0.000000e+00 : f32
    %267 = vector.broadcast %cst_64 : f32 to vector<2x128xf32>
    %268 = vector.extract_strided_slice %264 {offsets = [0, 0], sizes = [2, 512], strides = [1, 1]} : vector<16x512xf32> to vector<2x512xf32>
    %269 = arith.truncf %266 : vector<2x128xf32> to vector<2x128xbf16>
    %cst_65 = arith.constant dense<0.000000e+00> : vector<2x512xf32>
    %270 = tpu.matmul %269, %265, %cst_65 {dimension_numbers = #tpu.dot_dimension_numbers<[1], [0], [0], [1], [0, 0, 1, 1], [], []>} : vector<2x128xbf16>, vector<128x512xbf16>, vector<2x512xf32> -> vector<2x512xf32>
    %271 = arith.addf %268, %270 : vector<2x512xf32>
    %272 = vector.extract_strided_slice %271 {offsets = [0, 0], sizes = [2, 128], strides = [1, 1]} : vector<2x512xf32> to vector<2x128xf32>
    %273 = arith.negf %272 : vector<2x128xf32>
    %274 = math.exp %273 : vector<2x128xf32>
    %cst_66 = arith.constant 1.000000e+00 : f32
    %275 = vector.broadcast %cst_66 : f32 to vector<2x128xf32>
    %276 = arith.addf %275, %274 : vector<2x128xf32>
    %277 = arith.divf %275, %276 : vector<2x128xf32>
    %278 = vector.extract_strided_slice %271 {offsets = [0, 128], sizes = [2, 128], strides = [1, 1]} : vector<2x512xf32> to vector<2x128xf32>
    %279 = arith.negf %278 : vector<2x128xf32>
    %280 = math.exp %279 : vector<2x128xf32>
    %cst_67 = arith.constant 1.000000e+00 : f32
    %281 = vector.broadcast %cst_67 : f32 to vector<2x128xf32>
    %282 = arith.addf %281, %280 : vector<2x128xf32>
    %283 = arith.divf %281, %282 : vector<2x128xf32>
    %284 = vector.extract_strided_slice %271 {offsets = [0, 256], sizes = [2, 128], strides = [1, 1]} : vector<2x512xf32> to vector<2x128xf32>
    %285 = math.tanh %284 : vector<2x128xf32>
    %286 = vector.extract_strided_slice %271 {offsets = [0, 384], sizes = [2, 128], strides = [1, 1]} : vector<2x512xf32> to vector<2x128xf32>
    %287 = arith.negf %286 : vector<2x128xf32>
    %288 = math.exp %287 : vector<2x128xf32>
    %cst_68 = arith.constant 1.000000e+00 : f32
    %289 = vector.broadcast %cst_68 : f32 to vector<2x128xf32>
    %290 = arith.addf %289, %288 : vector<2x128xf32>
    %291 = arith.divf %289, %290 : vector<2x128xf32>
    %292 = arith.mulf %283, %267 : vector<2x128xf32>
    %293 = arith.mulf %277, %285 : vector<2x128xf32>
    %294 = arith.addf %292, %293 : vector<2x128xf32>
    %295 = math.tanh %294 : vector<2x128xf32>
    %296 = arith.mulf %291, %295 : vector<2x128xf32>
    %297 = vector.extract_strided_slice %264 {offsets = [2, 0], sizes = [2, 512], strides = [1, 1]} : vector<16x512xf32> to vector<2x512xf32>
    %298 = arith.truncf %296 : vector<2x128xf32> to vector<2x128xbf16>
    %cst_69 = arith.constant dense<0.000000e+00> : vector<2x512xf32>
    %299 = tpu.matmul %298, %265, %cst_69 {dimension_numbers = #tpu.dot_dimension_numbers<[1], [0], [0], [1], [0, 0, 1, 1], [], []>} : vector<2x128xbf16>, vector<128x512xbf16>, vector<2x512xf32> -> vector<2x512xf32>
    %300 = arith.addf %297, %299 : vector<2x512xf32>
    %301 = vector.extract_strided_slice %300 {offsets = [0, 0], sizes = [2, 128], strides = [1, 1]} : vector<2x512xf32> to vector<2x128xf32>
    %302 = arith.negf %301 : vector<2x128xf32>
    %303 = math.exp %302 : vector<2x128xf32>
    %cst_70 = arith.constant 1.000000e+00 : f32
    %304 = vector.broadcast %cst_70 : f32 to vector<2x128xf32>
    %305 = arith.addf %304, %303 : vector<2x128xf32>
    %306 = arith.divf %304, %305 : vector<2x128xf32>
    %307 = vector.extract_strided_slice %300 {offsets = [0, 128], sizes = [2, 128], strides = [1, 1]} : vector<2x512xf32> to vector<2x128xf32>
    %308 = arith.negf %307 : vector<2x128xf32>
    %309 = math.exp %308 : vector<2x128xf32>
    %cst_71 = arith.constant 1.000000e+00 : f32
    %310 = vector.broadcast %cst_71 : f32 to vector<2x128xf32>
    %311 = arith.addf %310, %309 : vector<2x128xf32>
    %312 = arith.divf %310, %311 : vector<2x128xf32>
    %313 = vector.extract_strided_slice %300 {offsets = [0, 256], sizes = [2, 128], strides = [1, 1]} : vector<2x512xf32> to vector<2x128xf32>
    %314 = math.tanh %313 : vector<2x128xf32>
    %315 = vector.extract_strided_slice %300 {offsets = [0, 384], sizes = [2, 128], strides = [1, 1]} : vector<2x512xf32> to vector<2x128xf32>
    %316 = arith.negf %315 : vector<2x128xf32>
    %317 = math.exp %316 : vector<2x128xf32>
    %cst_72 = arith.constant 1.000000e+00 : f32
    %318 = vector.broadcast %cst_72 : f32 to vector<2x128xf32>
    %319 = arith.addf %318, %317 : vector<2x128xf32>
    %320 = arith.divf %318, %319 : vector<2x128xf32>
    %321 = arith.mulf %312, %294 : vector<2x128xf32>
    %322 = arith.mulf %306, %314 : vector<2x128xf32>
    %323 = arith.addf %321, %322 : vector<2x128xf32>
    %324 = math.tanh %323 : vector<2x128xf32>
    %325 = arith.mulf %320, %324 : vector<2x128xf32>
    %326 = vector.extract_strided_slice %264 {offsets = [4, 0], sizes = [2, 512], strides = [1, 1]} : vector<16x512xf32> to vector<2x512xf32>
    %327 = arith.truncf %325 : vector<2x128xf32> to vector<2x128xbf16>
    %cst_73 = arith.constant dense<0.000000e+00> : vector<2x512xf32>
    %328 = tpu.matmul %327, %265, %cst_73 {dimension_numbers = #tpu.dot_dimension_numbers<[1], [0], [0], [1], [0, 0, 1, 1], [], []>} : vector<2x128xbf16>, vector<128x512xbf16>, vector<2x512xf32> -> vector<2x512xf32>
    %329 = arith.addf %326, %328 : vector<2x512xf32>
    %330 = vector.extract_strided_slice %329 {offsets = [0, 0], sizes = [2, 128], strides = [1, 1]} : vector<2x512xf32> to vector<2x128xf32>
    %331 = arith.negf %330 : vector<2x128xf32>
    %332 = math.exp %331 : vector<2x128xf32>
    %cst_74 = arith.constant 1.000000e+00 : f32
    %333 = vector.broadcast %cst_74 : f32 to vector<2x128xf32>
    %334 = arith.addf %333, %332 : vector<2x128xf32>
    %335 = arith.divf %333, %334 : vector<2x128xf32>
    %336 = vector.extract_strided_slice %329 {offsets = [0, 128], sizes = [2, 128], strides = [1, 1]} : vector<2x512xf32> to vector<2x128xf32>
    %337 = arith.negf %336 : vector<2x128xf32>
    %338 = math.exp %337 : vector<2x128xf32>
    %cst_75 = arith.constant 1.000000e+00 : f32
    %339 = vector.broadcast %cst_75 : f32 to vector<2x128xf32>
    %340 = arith.addf %339, %338 : vector<2x128xf32>
    %341 = arith.divf %339, %340 : vector<2x128xf32>
    %342 = vector.extract_strided_slice %329 {offsets = [0, 256], sizes = [2, 128], strides = [1, 1]} : vector<2x512xf32> to vector<2x128xf32>
    %343 = math.tanh %342 : vector<2x128xf32>
    %344 = vector.extract_strided_slice %329 {offsets = [0, 384], sizes = [2, 128], strides = [1, 1]} : vector<2x512xf32> to vector<2x128xf32>
    %345 = arith.negf %344 : vector<2x128xf32>
    %346 = math.exp %345 : vector<2x128xf32>
    %cst_76 = arith.constant 1.000000e+00 : f32
    %347 = vector.broadcast %cst_76 : f32 to vector<2x128xf32>
    %348 = arith.addf %347, %346 : vector<2x128xf32>
    %349 = arith.divf %347, %348 : vector<2x128xf32>
    %350 = arith.mulf %341, %323 : vector<2x128xf32>
    %351 = arith.mulf %335, %343 : vector<2x128xf32>
    %352 = arith.addf %350, %351 : vector<2x128xf32>
    %353 = math.tanh %352 : vector<2x128xf32>
    %354 = arith.mulf %349, %353 : vector<2x128xf32>
    %355 = vector.extract_strided_slice %264 {offsets = [6, 0], sizes = [2, 512], strides = [1, 1]} : vector<16x512xf32> to vector<2x512xf32>
    %356 = arith.truncf %354 : vector<2x128xf32> to vector<2x128xbf16>
    %cst_77 = arith.constant dense<0.000000e+00> : vector<2x512xf32>
    %357 = tpu.matmul %356, %265, %cst_77 {dimension_numbers = #tpu.dot_dimension_numbers<[1], [0], [0], [1], [0, 0, 1, 1], [], []>} : vector<2x128xbf16>, vector<128x512xbf16>, vector<2x512xf32> -> vector<2x512xf32>
    %358 = arith.addf %355, %357 : vector<2x512xf32>
    %359 = vector.extract_strided_slice %358 {offsets = [0, 0], sizes = [2, 128], strides = [1, 1]} : vector<2x512xf32> to vector<2x128xf32>
    %360 = arith.negf %359 : vector<2x128xf32>
    %361 = math.exp %360 : vector<2x128xf32>
    %cst_78 = arith.constant 1.000000e+00 : f32
    %362 = vector.broadcast %cst_78 : f32 to vector<2x128xf32>
    %363 = arith.addf %362, %361 : vector<2x128xf32>
    %364 = arith.divf %362, %363 : vector<2x128xf32>
    %365 = vector.extract_strided_slice %358 {offsets = [0, 128], sizes = [2, 128], strides = [1, 1]} : vector<2x512xf32> to vector<2x128xf32>
    %366 = arith.negf %365 : vector<2x128xf32>
    %367 = math.exp %366 : vector<2x128xf32>
    %cst_79 = arith.constant 1.000000e+00 : f32
    %368 = vector.broadcast %cst_79 : f32 to vector<2x128xf32>
    %369 = arith.addf %368, %367 : vector<2x128xf32>
    %370 = arith.divf %368, %369 : vector<2x128xf32>
    %371 = vector.extract_strided_slice %358 {offsets = [0, 256], sizes = [2, 128], strides = [1, 1]} : vector<2x512xf32> to vector<2x128xf32>
    %372 = math.tanh %371 : vector<2x128xf32>
    %373 = vector.extract_strided_slice %358 {offsets = [0, 384], sizes = [2, 128], strides = [1, 1]} : vector<2x512xf32> to vector<2x128xf32>
    %374 = arith.negf %373 : vector<2x128xf32>
    %375 = math.exp %374 : vector<2x128xf32>
    %cst_80 = arith.constant 1.000000e+00 : f32
    %376 = vector.broadcast %cst_80 : f32 to vector<2x128xf32>
    %377 = arith.addf %376, %375 : vector<2x128xf32>
    %378 = arith.divf %376, %377 : vector<2x128xf32>
    %379 = arith.mulf %370, %352 : vector<2x128xf32>
    %380 = arith.mulf %364, %372 : vector<2x128xf32>
    %381 = arith.addf %379, %380 : vector<2x128xf32>
    %382 = math.tanh %381 : vector<2x128xf32>
    %383 = arith.mulf %378, %382 : vector<2x128xf32>
    %384 = vector.extract_strided_slice %264 {offsets = [8, 0], sizes = [2, 512], strides = [1, 1]} : vector<16x512xf32> to vector<2x512xf32>
    %385 = arith.truncf %383 : vector<2x128xf32> to vector<2x128xbf16>
    %cst_81 = arith.constant dense<0.000000e+00> : vector<2x512xf32>
    %386 = tpu.matmul %385, %265, %cst_81 {dimension_numbers = #tpu.dot_dimension_numbers<[1], [0], [0], [1], [0, 0, 1, 1], [], []>} : vector<2x128xbf16>, vector<128x512xbf16>, vector<2x512xf32> -> vector<2x512xf32>
    %387 = arith.addf %384, %386 : vector<2x512xf32>
    %388 = vector.extract_strided_slice %387 {offsets = [0, 0], sizes = [2, 128], strides = [1, 1]} : vector<2x512xf32> to vector<2x128xf32>
    %389 = arith.negf %388 : vector<2x128xf32>
    %390 = math.exp %389 : vector<2x128xf32>
    %cst_82 = arith.constant 1.000000e+00 : f32
    %391 = vector.broadcast %cst_82 : f32 to vector<2x128xf32>
    %392 = arith.addf %391, %390 : vector<2x128xf32>
    %393 = arith.divf %391, %392 : vector<2x128xf32>
    %394 = vector.extract_strided_slice %387 {offsets = [0, 128], sizes = [2, 128], strides = [1, 1]} : vector<2x512xf32> to vector<2x128xf32>
    %395 = arith.negf %394 : vector<2x128xf32>
    %396 = math.exp %395 : vector<2x128xf32>
    %cst_83 = arith.constant 1.000000e+00 : f32
    %397 = vector.broadcast %cst_83 : f32 to vector<2x128xf32>
    %398 = arith.addf %397, %396 : vector<2x128xf32>
    %399 = arith.divf %397, %398 : vector<2x128xf32>
    %400 = vector.extract_strided_slice %387 {offsets = [0, 256], sizes = [2, 128], strides = [1, 1]} : vector<2x512xf32> to vector<2x128xf32>
    %401 = math.tanh %400 : vector<2x128xf32>
    %402 = vector.extract_strided_slice %387 {offsets = [0, 384], sizes = [2, 128], strides = [1, 1]} : vector<2x512xf32> to vector<2x128xf32>
    %403 = arith.negf %402 : vector<2x128xf32>
    %404 = math.exp %403 : vector<2x128xf32>
    %cst_84 = arith.constant 1.000000e+00 : f32
    %405 = vector.broadcast %cst_84 : f32 to vector<2x128xf32>
    %406 = arith.addf %405, %404 : vector<2x128xf32>
    %407 = arith.divf %405, %406 : vector<2x128xf32>
    %408 = arith.mulf %399, %381 : vector<2x128xf32>
    %409 = arith.mulf %393, %401 : vector<2x128xf32>
    %410 = arith.addf %408, %409 : vector<2x128xf32>
    %411 = math.tanh %410 : vector<2x128xf32>
    %412 = arith.mulf %407, %411 : vector<2x128xf32>
    %413 = vector.extract_strided_slice %264 {offsets = [10, 0], sizes = [2, 512], strides = [1, 1]} : vector<16x512xf32> to vector<2x512xf32>
    %414 = arith.truncf %412 : vector<2x128xf32> to vector<2x128xbf16>
    %cst_85 = arith.constant dense<0.000000e+00> : vector<2x512xf32>
    %415 = tpu.matmul %414, %265, %cst_85 {dimension_numbers = #tpu.dot_dimension_numbers<[1], [0], [0], [1], [0, 0, 1, 1], [], []>} : vector<2x128xbf16>, vector<128x512xbf16>, vector<2x512xf32> -> vector<2x512xf32>
    %416 = arith.addf %413, %415 : vector<2x512xf32>
    %417 = vector.extract_strided_slice %416 {offsets = [0, 0], sizes = [2, 128], strides = [1, 1]} : vector<2x512xf32> to vector<2x128xf32>
    %418 = arith.negf %417 : vector<2x128xf32>
    %419 = math.exp %418 : vector<2x128xf32>
    %cst_86 = arith.constant 1.000000e+00 : f32
    %420 = vector.broadcast %cst_86 : f32 to vector<2x128xf32>
    %421 = arith.addf %420, %419 : vector<2x128xf32>
    %422 = arith.divf %420, %421 : vector<2x128xf32>
    %423 = vector.extract_strided_slice %416 {offsets = [0, 128], sizes = [2, 128], strides = [1, 1]} : vector<2x512xf32> to vector<2x128xf32>
    %424 = arith.negf %423 : vector<2x128xf32>
    %425 = math.exp %424 : vector<2x128xf32>
    %cst_87 = arith.constant 1.000000e+00 : f32
    %426 = vector.broadcast %cst_87 : f32 to vector<2x128xf32>
    %427 = arith.addf %426, %425 : vector<2x128xf32>
    %428 = arith.divf %426, %427 : vector<2x128xf32>
    %429 = vector.extract_strided_slice %416 {offsets = [0, 256], sizes = [2, 128], strides = [1, 1]} : vector<2x512xf32> to vector<2x128xf32>
    %430 = math.tanh %429 : vector<2x128xf32>
    %431 = vector.extract_strided_slice %416 {offsets = [0, 384], sizes = [2, 128], strides = [1, 1]} : vector<2x512xf32> to vector<2x128xf32>
    %432 = arith.negf %431 : vector<2x128xf32>
    %433 = math.exp %432 : vector<2x128xf32>
    %cst_88 = arith.constant 1.000000e+00 : f32
    %434 = vector.broadcast %cst_88 : f32 to vector<2x128xf32>
    %435 = arith.addf %434, %433 : vector<2x128xf32>
    %436 = arith.divf %434, %435 : vector<2x128xf32>
    %437 = arith.mulf %428, %410 : vector<2x128xf32>
    %438 = arith.mulf %422, %430 : vector<2x128xf32>
    %439 = arith.addf %437, %438 : vector<2x128xf32>
    %440 = math.tanh %439 : vector<2x128xf32>
    %441 = arith.mulf %436, %440 : vector<2x128xf32>
    %442 = vector.extract_strided_slice %264 {offsets = [12, 0], sizes = [2, 512], strides = [1, 1]} : vector<16x512xf32> to vector<2x512xf32>
    %443 = arith.truncf %441 : vector<2x128xf32> to vector<2x128xbf16>
    %cst_89 = arith.constant dense<0.000000e+00> : vector<2x512xf32>
    %444 = tpu.matmul %443, %265, %cst_89 {dimension_numbers = #tpu.dot_dimension_numbers<[1], [0], [0], [1], [0, 0, 1, 1], [], []>} : vector<2x128xbf16>, vector<128x512xbf16>, vector<2x512xf32> -> vector<2x512xf32>
    %445 = arith.addf %442, %444 : vector<2x512xf32>
    %446 = vector.extract_strided_slice %445 {offsets = [0, 0], sizes = [2, 128], strides = [1, 1]} : vector<2x512xf32> to vector<2x128xf32>
    %447 = arith.negf %446 : vector<2x128xf32>
    %448 = math.exp %447 : vector<2x128xf32>
    %cst_90 = arith.constant 1.000000e+00 : f32
    %449 = vector.broadcast %cst_90 : f32 to vector<2x128xf32>
    %450 = arith.addf %449, %448 : vector<2x128xf32>
    %451 = arith.divf %449, %450 : vector<2x128xf32>
    %452 = vector.extract_strided_slice %445 {offsets = [0, 128], sizes = [2, 128], strides = [1, 1]} : vector<2x512xf32> to vector<2x128xf32>
    %453 = arith.negf %452 : vector<2x128xf32>
    %454 = math.exp %453 : vector<2x128xf32>
    %cst_91 = arith.constant 1.000000e+00 : f32
    %455 = vector.broadcast %cst_91 : f32 to vector<2x128xf32>
    %456 = arith.addf %455, %454 : vector<2x128xf32>
    %457 = arith.divf %455, %456 : vector<2x128xf32>
    %458 = vector.extract_strided_slice %445 {offsets = [0, 256], sizes = [2, 128], strides = [1, 1]} : vector<2x512xf32> to vector<2x128xf32>
    %459 = math.tanh %458 : vector<2x128xf32>
    %460 = vector.extract_strided_slice %445 {offsets = [0, 384], sizes = [2, 128], strides = [1, 1]} : vector<2x512xf32> to vector<2x128xf32>
    %461 = arith.negf %460 : vector<2x128xf32>
    %462 = math.exp %461 : vector<2x128xf32>
    %cst_92 = arith.constant 1.000000e+00 : f32
    %463 = vector.broadcast %cst_92 : f32 to vector<2x128xf32>
    %464 = arith.addf %463, %462 : vector<2x128xf32>
    %465 = arith.divf %463, %464 : vector<2x128xf32>
    %466 = arith.mulf %457, %439 : vector<2x128xf32>
    %467 = arith.mulf %451, %459 : vector<2x128xf32>
    %468 = arith.addf %466, %467 : vector<2x128xf32>
    %469 = math.tanh %468 : vector<2x128xf32>
    %470 = arith.mulf %465, %469 : vector<2x128xf32>
    %471 = vector.extract_strided_slice %264 {offsets = [14, 0], sizes = [2, 512], strides = [1, 1]} : vector<16x512xf32> to vector<2x512xf32>
    %472 = arith.truncf %470 : vector<2x128xf32> to vector<2x128xbf16>
    %cst_93 = arith.constant dense<0.000000e+00> : vector<2x512xf32>
    %473 = tpu.matmul %472, %265, %cst_93 {dimension_numbers = #tpu.dot_dimension_numbers<[1], [0], [0], [1], [0, 0, 1, 1], [], []>} : vector<2x128xbf16>, vector<128x512xbf16>, vector<2x512xf32> -> vector<2x512xf32>
    %474 = arith.addf %471, %473 : vector<2x512xf32>
    %475 = vector.extract_strided_slice %474 {offsets = [0, 0], sizes = [2, 128], strides = [1, 1]} : vector<2x512xf32> to vector<2x128xf32>
    %476 = arith.negf %475 : vector<2x128xf32>
    %477 = math.exp %476 : vector<2x128xf32>
    %cst_94 = arith.constant 1.000000e+00 : f32
    %478 = vector.broadcast %cst_94 : f32 to vector<2x128xf32>
    %479 = arith.addf %478, %477 : vector<2x128xf32>
    %480 = arith.divf %478, %479 : vector<2x128xf32>
    %481 = vector.extract_strided_slice %474 {offsets = [0, 128], sizes = [2, 128], strides = [1, 1]} : vector<2x512xf32> to vector<2x128xf32>
    %482 = arith.negf %481 : vector<2x128xf32>
    %483 = math.exp %482 : vector<2x128xf32>
    %cst_95 = arith.constant 1.000000e+00 : f32
    %484 = vector.broadcast %cst_95 : f32 to vector<2x128xf32>
    %485 = arith.addf %484, %483 : vector<2x128xf32>
    %486 = arith.divf %484, %485 : vector<2x128xf32>
    %487 = vector.extract_strided_slice %474 {offsets = [0, 256], sizes = [2, 128], strides = [1, 1]} : vector<2x512xf32> to vector<2x128xf32>
    %488 = math.tanh %487 : vector<2x128xf32>
    %489 = vector.extract_strided_slice %474 {offsets = [0, 384], sizes = [2, 128], strides = [1, 1]} : vector<2x512xf32> to vector<2x128xf32>
    %490 = arith.negf %489 : vector<2x128xf32>
    %491 = math.exp %490 : vector<2x128xf32>
    %cst_96 = arith.constant 1.000000e+00 : f32
    %492 = vector.broadcast %cst_96 : f32 to vector<2x128xf32>
    %493 = arith.addf %492, %491 : vector<2x128xf32>
    %494 = arith.divf %492, %493 : vector<2x128xf32>
    %495 = arith.mulf %486, %468 : vector<2x128xf32>
    %496 = arith.mulf %480, %488 : vector<2x128xf32>
    %497 = arith.addf %495, %496 : vector<2x128xf32>
    %498 = math.tanh %497 : vector<2x128xf32>
    %499 = arith.mulf %494, %498 : vector<2x128xf32>
    %500 = tpu.concatenate %296, %325, %354, %383, %412, %441, %470, %499 in 0 : vector<2x128xf32>, vector<2x128xf32>, vector<2x128xf32>, vector<2x128xf32>, vector<2x128xf32>, vector<2x128xf32>, vector<2x128xf32>, vector<2x128xf32> -> vector<16x128xf32>
    %c0_97 = arith.constant 0 : index
    %c0_98 = arith.constant 0 : index
    %501 = vector.load %arg7[%c0_97, %c0_98] : memref<128x512xbf16, #tpu.memory_space<vmem>>, vector<128x512xbf16>
    %502 = arith.truncf %500 : vector<16x128xf32> to vector<16x128xbf16>
    %cst_99 = arith.constant dense<0.000000e+00> : vector<16x512xf32>
    %503 = tpu.matmul %502, %501, %cst_99 {dimension_numbers = #tpu.dot_dimension_numbers<[1], [0], [0], [1], [0, 0, 1, 1], [], []>} : vector<16x128xbf16>, vector<128x512xbf16>, vector<16x512xf32> -> vector<16x512xf32>
    %c0_100 = arith.constant 0 : index
    %c0_101 = arith.constant 0 : index
    %504 = vector.load %arg9[%c0_100, %c0_101] : memref<1x512xf32, #tpu.memory_space<vmem>>, vector<1x512xf32>
    %505 = vector.broadcast %504 : vector<1x512xf32> to vector<16x512xf32>
    %506 = arith.addf %503, %505 : vector<16x512xf32>
    %c0_102 = arith.constant 0 : index
    %c0_103 = arith.constant 0 : index
    %507 = vector.load %arg8[%c0_102, %c0_103] : memref<128x512xbf16, #tpu.memory_space<vmem>>, vector<128x512xbf16>
    %cst_104 = arith.constant 0.000000e+00 : f32
    %508 = vector.broadcast %cst_104 : f32 to vector<2x128xf32>
    %cst_105 = arith.constant 0.000000e+00 : f32
    %509 = vector.broadcast %cst_105 : f32 to vector<2x128xf32>
    %510 = vector.extract_strided_slice %506 {offsets = [0, 0], sizes = [2, 512], strides = [1, 1]} : vector<16x512xf32> to vector<2x512xf32>
    %511 = arith.truncf %508 : vector<2x128xf32> to vector<2x128xbf16>
    %cst_106 = arith.constant dense<0.000000e+00> : vector<2x512xf32>
    %512 = tpu.matmul %511, %507, %cst_106 {dimension_numbers = #tpu.dot_dimension_numbers<[1], [0], [0], [1], [0, 0, 1, 1], [], []>} : vector<2x128xbf16>, vector<128x512xbf16>, vector<2x512xf32> -> vector<2x512xf32>
    %513 = arith.addf %510, %512 : vector<2x512xf32>
    %514 = vector.extract_strided_slice %513 {offsets = [0, 0], sizes = [2, 128], strides = [1, 1]} : vector<2x512xf32> to vector<2x128xf32>
    %515 = arith.negf %514 : vector<2x128xf32>
    %516 = math.exp %515 : vector<2x128xf32>
    %cst_107 = arith.constant 1.000000e+00 : f32
    %517 = vector.broadcast %cst_107 : f32 to vector<2x128xf32>
    %518 = arith.addf %517, %516 : vector<2x128xf32>
    %519 = arith.divf %517, %518 : vector<2x128xf32>
    %520 = vector.extract_strided_slice %513 {offsets = [0, 128], sizes = [2, 128], strides = [1, 1]} : vector<2x512xf32> to vector<2x128xf32>
    %521 = arith.negf %520 : vector<2x128xf32>
    %522 = math.exp %521 : vector<2x128xf32>
    %cst_108 = arith.constant 1.000000e+00 : f32
    %523 = vector.broadcast %cst_108 : f32 to vector<2x128xf32>
    %524 = arith.addf %523, %522 : vector<2x128xf32>
    %525 = arith.divf %523, %524 : vector<2x128xf32>
    %526 = vector.extract_strided_slice %513 {offsets = [0, 256], sizes = [2, 128], strides = [1, 1]} : vector<2x512xf32> to vector<2x128xf32>
    %527 = math.tanh %526 : vector<2x128xf32>
    %528 = vector.extract_strided_slice %513 {offsets = [0, 384], sizes = [2, 128], strides = [1, 1]} : vector<2x512xf32> to vector<2x128xf32>
    %529 = arith.negf %528 : vector<2x128xf32>
    %530 = math.exp %529 : vector<2x128xf32>
    %cst_109 = arith.constant 1.000000e+00 : f32
    %531 = vector.broadcast %cst_109 : f32 to vector<2x128xf32>
    %532 = arith.addf %531, %530 : vector<2x128xf32>
    %533 = arith.divf %531, %532 : vector<2x128xf32>
    %534 = arith.mulf %525, %509 : vector<2x128xf32>
    %535 = arith.mulf %519, %527 : vector<2x128xf32>
    %536 = arith.addf %534, %535 : vector<2x128xf32>
    %537 = math.tanh %536 : vector<2x128xf32>
    %538 = arith.mulf %533, %537 : vector<2x128xf32>
    %c0_110 = arith.constant 0 : index
    %c0_111 = arith.constant 0 : index
    %c0_112 = arith.constant 0 : index
    %539 = vector.load %arg31[%c0_110, %c0_111, %c0_112] : memref<2x8x128xf32, #tpu.memory_space<vmem>>, vector<2x1x128xf32>
    %540 = vector.shape_cast %539 : vector<2x1x128xf32> to vector<2x128xf32>
    %541 = vector.shape_cast %538 : vector<2x128xf32> to vector<2x1x128xf32>
    tpu.vector_store %arg31[%c0_110, %c0_111, %c0_112], %541 {strides = array<i32>} : memref<2x8x128xf32, #tpu.memory_space<vmem>>, vector<2x1x128xf32>,
    %542 = vector.extract_strided_slice %506 {offsets = [2, 0], sizes = [2, 512], strides = [1, 1]} : vector<16x512xf32> to vector<2x512xf32>
    %543 = arith.truncf %538 : vector<2x128xf32> to vector<2x128xbf16>
    %cst_113 = arith.constant dense<0.000000e+00> : vector<2x512xf32>
    %544 = tpu.matmul %543, %507, %cst_113 {dimension_numbers = #tpu.dot_dimension_numbers<[1], [0], [0], [1], [0, 0, 1, 1], [], []>} : vector<2x128xbf16>, vector<128x512xbf16>, vector<2x512xf32> -> vector<2x512xf32>
    %545 = arith.addf %542, %544 : vector<2x512xf32>
    %546 = vector.extract_strided_slice %545 {offsets = [0, 0], sizes = [2, 128], strides = [1, 1]} : vector<2x512xf32> to vector<2x128xf32>
    %547 = arith.negf %546 : vector<2x128xf32>
    %548 = math.exp %547 : vector<2x128xf32>
    %cst_114 = arith.constant 1.000000e+00 : f32
    %549 = vector.broadcast %cst_114 : f32 to vector<2x128xf32>
    %550 = arith.addf %549, %548 : vector<2x128xf32>
    %551 = arith.divf %549, %550 : vector<2x128xf32>
    %552 = vector.extract_strided_slice %545 {offsets = [0, 128], sizes = [2, 128], strides = [1, 1]} : vector<2x512xf32> to vector<2x128xf32>
    %553 = arith.negf %552 : vector<2x128xf32>
    %554 = math.exp %553 : vector<2x128xf32>
    %cst_115 = arith.constant 1.000000e+00 : f32
    %555 = vector.broadcast %cst_115 : f32 to vector<2x128xf32>
    %556 = arith.addf %555, %554 : vector<2x128xf32>
    %557 = arith.divf %555, %556 : vector<2x128xf32>
    %558 = vector.extract_strided_slice %545 {offsets = [0, 256], sizes = [2, 128], strides = [1, 1]} : vector<2x512xf32> to vector<2x128xf32>
    %559 = math.tanh %558 : vector<2x128xf32>
    %560 = vector.extract_strided_slice %545 {offsets = [0, 384], sizes = [2, 128], strides = [1, 1]} : vector<2x512xf32> to vector<2x128xf32>
    %561 = arith.negf %560 : vector<2x128xf32>
    %562 = math.exp %561 : vector<2x128xf32>
    %cst_116 = arith.constant 1.000000e+00 : f32
    %563 = vector.broadcast %cst_116 : f32 to vector<2x128xf32>
    %564 = arith.addf %563, %562 : vector<2x128xf32>
    %565 = arith.divf %563, %564 : vector<2x128xf32>
    %566 = arith.mulf %557, %536 : vector<2x128xf32>
    %567 = arith.mulf %551, %559 : vector<2x128xf32>
    %568 = arith.addf %566, %567 : vector<2x128xf32>
    %569 = math.tanh %568 : vector<2x128xf32>
    %570 = arith.mulf %565, %569 : vector<2x128xf32>
    %c0_117 = arith.constant 0 : index
    %c1_118 = arith.constant 1 : index
    %c0_119 = arith.constant 0 : index
    %571 = vector.load %arg31[%c0_117, %c1_118, %c0_119] : memref<2x8x128xf32, #tpu.memory_space<vmem>>, vector<2x1x128xf32>
    %572 = vector.shape_cast %571 : vector<2x1x128xf32> to vector<2x128xf32>
    %573 = vector.shape_cast %570 : vector<2x128xf32> to vector<2x1x128xf32>
    tpu.vector_store %arg31[%c0_117, %c1_118, %c0_119], %573 {strides = array<i32>} : memref<2x8x128xf32, #tpu.memory_space<vmem>>, vector<2x1x128xf32>,
    %574 = vector.extract_strided_slice %506 {offsets = [4, 0], sizes = [2, 512], strides = [1, 1]} : vector<16x512xf32> to vector<2x512xf32>
    %575 = arith.truncf %570 : vector<2x128xf32> to vector<2x128xbf16>
    %cst_120 = arith.constant dense<0.000000e+00> : vector<2x512xf32>
    %576 = tpu.matmul %575, %507, %cst_120 {dimension_numbers = #tpu.dot_dimension_numbers<[1], [0], [0], [1], [0, 0, 1, 1], [], []>} : vector<2x128xbf16>, vector<128x512xbf16>, vector<2x512xf32> -> vector<2x512xf32>
    %577 = arith.addf %574, %576 : vector<2x512xf32>
    %578 = vector.extract_strided_slice %577 {offsets = [0, 0], sizes = [2, 128], strides = [1, 1]} : vector<2x512xf32> to vector<2x128xf32>
    %579 = arith.negf %578 : vector<2x128xf32>
    %580 = math.exp %579 : vector<2x128xf32>
    %cst_121 = arith.constant 1.000000e+00 : f32
    %581 = vector.broadcast %cst_121 : f32 to vector<2x128xf32>
    %582 = arith.addf %581, %580 : vector<2x128xf32>
    %583 = arith.divf %581, %582 : vector<2x128xf32>
    %584 = vector.extract_strided_slice %577 {offsets = [0, 128], sizes = [2, 128], strides = [1, 1]} : vector<2x512xf32> to vector<2x128xf32>
    %585 = arith.negf %584 : vector<2x128xf32>
    %586 = math.exp %585 : vector<2x128xf32>
    %cst_122 = arith.constant 1.000000e+00 : f32
    %587 = vector.broadcast %cst_122 : f32 to vector<2x128xf32>
    %588 = arith.addf %587, %586 : vector<2x128xf32>
    %589 = arith.divf %587, %588 : vector<2x128xf32>
    %590 = vector.extract_strided_slice %577 {offsets = [0, 256], sizes = [2, 128], strides = [1, 1]} : vector<2x512xf32> to vector<2x128xf32>
    %591 = math.tanh %590 : vector<2x128xf32>
    %592 = vector.extract_strided_slice %577 {offsets = [0, 384], sizes = [2, 128], strides = [1, 1]} : vector<2x512xf32> to vector<2x128xf32>
    %593 = arith.negf %592 : vector<2x128xf32>
    %594 = math.exp %593 : vector<2x128xf32>
    %cst_123 = arith.constant 1.000000e+00 : f32
    %595 = vector.broadcast %cst_123 : f32 to vector<2x128xf32>
    %596 = arith.addf %595, %594 : vector<2x128xf32>
    %597 = arith.divf %595, %596 : vector<2x128xf32>
    %598 = arith.mulf %589, %568 : vector<2x128xf32>
    %599 = arith.mulf %583, %591 : vector<2x128xf32>
    %600 = arith.addf %598, %599 : vector<2x128xf32>
    %601 = math.tanh %600 : vector<2x128xf32>
    %602 = arith.mulf %597, %601 : vector<2x128xf32>
    %c0_124 = arith.constant 0 : index
    %c2_125 = arith.constant 2 : index
    %c0_126 = arith.constant 0 : index
    %603 = vector.load %arg31[%c0_124, %c2_125, %c0_126] : memref<2x8x128xf32, #tpu.memory_space<vmem>>, vector<2x1x128xf32>
    %604 = vector.shape_cast %603 : vector<2x1x128xf32> to vector<2x128xf32>
    %605 = vector.shape_cast %602 : vector<2x128xf32> to vector<2x1x128xf32>
    tpu.vector_store %arg31[%c0_124, %c2_125, %c0_126], %605 {strides = array<i32>} : memref<2x8x128xf32, #tpu.memory_space<vmem>>, vector<2x1x128xf32>,
    %606 = vector.extract_strided_slice %506 {offsets = [6, 0], sizes = [2, 512], strides = [1, 1]} : vector<16x512xf32> to vector<2x512xf32>
    %607 = arith.truncf %602 : vector<2x128xf32> to vector<2x128xbf16>
    %cst_127 = arith.constant dense<0.000000e+00> : vector<2x512xf32>
    %608 = tpu.matmul %607, %507, %cst_127 {dimension_numbers = #tpu.dot_dimension_numbers<[1], [0], [0], [1], [0, 0, 1, 1], [], []>} : vector<2x128xbf16>, vector<128x512xbf16>, vector<2x512xf32> -> vector<2x512xf32>
    %609 = arith.addf %606, %608 : vector<2x512xf32>
    %610 = vector.extract_strided_slice %609 {offsets = [0, 0], sizes = [2, 128], strides = [1, 1]} : vector<2x512xf32> to vector<2x128xf32>
    %611 = arith.negf %610 : vector<2x128xf32>
    %612 = math.exp %611 : vector<2x128xf32>
    %cst_128 = arith.constant 1.000000e+00 : f32
    %613 = vector.broadcast %cst_128 : f32 to vector<2x128xf32>
    %614 = arith.addf %613, %612 : vector<2x128xf32>
    %615 = arith.divf %613, %614 : vector<2x128xf32>
    %616 = vector.extract_strided_slice %609 {offsets = [0, 128], sizes = [2, 128], strides = [1, 1]} : vector<2x512xf32> to vector<2x128xf32>
    %617 = arith.negf %616 : vector<2x128xf32>
    %618 = math.exp %617 : vector<2x128xf32>
    %cst_129 = arith.constant 1.000000e+00 : f32
    %619 = vector.broadcast %cst_129 : f32 to vector<2x128xf32>
    %620 = arith.addf %619, %618 : vector<2x128xf32>
    %621 = arith.divf %619, %620 : vector<2x128xf32>
    %622 = vector.extract_strided_slice %609 {offsets = [0, 256], sizes = [2, 128], strides = [1, 1]} : vector<2x512xf32> to vector<2x128xf32>
    %623 = math.tanh %622 : vector<2x128xf32>
    %624 = vector.extract_strided_slice %609 {offsets = [0, 384], sizes = [2, 128], strides = [1, 1]} : vector<2x512xf32> to vector<2x128xf32>
    %625 = arith.negf %624 : vector<2x128xf32>
    %626 = math.exp %625 : vector<2x128xf32>
    %cst_130 = arith.constant 1.000000e+00 : f32
    %627 = vector.broadcast %cst_130 : f32 to vector<2x128xf32>
    %628 = arith.addf %627, %626 : vector<2x128xf32>
    %629 = arith.divf %627, %628 : vector<2x128xf32>
    %630 = arith.mulf %621, %600 : vector<2x128xf32>
    %631 = arith.mulf %615, %623 : vector<2x128xf32>
    %632 = arith.addf %630, %631 : vector<2x128xf32>
    %633 = math.tanh %632 : vector<2x128xf32>
    %634 = arith.mulf %629, %633 : vector<2x128xf32>
    %c0_131 = arith.constant 0 : index
    %c3_132 = arith.constant 3 : index
    %c0_133 = arith.constant 0 : index
    %635 = vector.load %arg31[%c0_131, %c3_132, %c0_133] : memref<2x8x128xf32, #tpu.memory_space<vmem>>, vector<2x1x128xf32>
    %636 = vector.shape_cast %635 : vector<2x1x128xf32> to vector<2x128xf32>
    %637 = vector.shape_cast %634 : vector<2x128xf32> to vector<2x1x128xf32>
    tpu.vector_store %arg31[%c0_131, %c3_132, %c0_133], %637 {strides = array<i32>} : memref<2x8x128xf32, #tpu.memory_space<vmem>>, vector<2x1x128xf32>,
    %638 = vector.extract_strided_slice %506 {offsets = [8, 0], sizes = [2, 512], strides = [1, 1]} : vector<16x512xf32> to vector<2x512xf32>
    %639 = arith.truncf %634 : vector<2x128xf32> to vector<2x128xbf16>
    %cst_134 = arith.constant dense<0.000000e+00> : vector<2x512xf32>
    %640 = tpu.matmul %639, %507, %cst_134 {dimension_numbers = #tpu.dot_dimension_numbers<[1], [0], [0], [1], [0, 0, 1, 1], [], []>} : vector<2x128xbf16>, vector<128x512xbf16>, vector<2x512xf32> -> vector<2x512xf32>
    %641 = arith.addf %638, %640 : vector<2x512xf32>
    %642 = vector.extract_strided_slice %641 {offsets = [0, 0], sizes = [2, 128], strides = [1, 1]} : vector<2x512xf32> to vector<2x128xf32>
    %643 = arith.negf %642 : vector<2x128xf32>
    %644 = math.exp %643 : vector<2x128xf32>
    %cst_135 = arith.constant 1.000000e+00 : f32
    %645 = vector.broadcast %cst_135 : f32 to vector<2x128xf32>
    %646 = arith.addf %645, %644 : vector<2x128xf32>
    %647 = arith.divf %645, %646 : vector<2x128xf32>
    %648 = vector.extract_strided_slice %641 {offsets = [0, 128], sizes = [2, 128], strides = [1, 1]} : vector<2x512xf32> to vector<2x128xf32>
    %649 = arith.negf %648 : vector<2x128xf32>
    %650 = math.exp %649 : vector<2x128xf32>
    %cst_136 = arith.constant 1.000000e+00 : f32
    %651 = vector.broadcast %cst_136 : f32 to vector<2x128xf32>
    %652 = arith.addf %651, %650 : vector<2x128xf32>
    %653 = arith.divf %651, %652 : vector<2x128xf32>
    %654 = vector.extract_strided_slice %641 {offsets = [0, 256], sizes = [2, 128], strides = [1, 1]} : vector<2x512xf32> to vector<2x128xf32>
    %655 = math.tanh %654 : vector<2x128xf32>
    %656 = vector.extract_strided_slice %641 {offsets = [0, 384], sizes = [2, 128], strides = [1, 1]} : vector<2x512xf32> to vector<2x128xf32>
    %657 = arith.negf %656 : vector<2x128xf32>
    %658 = math.exp %657 : vector<2x128xf32>
    %cst_137 = arith.constant 1.000000e+00 : f32
    %659 = vector.broadcast %cst_137 : f32 to vector<2x128xf32>
    %660 = arith.addf %659, %658 : vector<2x128xf32>
    %661 = arith.divf %659, %660 : vector<2x128xf32>
    %662 = arith.mulf %653, %632 : vector<2x128xf32>
    %663 = arith.mulf %647, %655 : vector<2x128xf32>
    %664 = arith.addf %662, %663 : vector<2x128xf32>
    %665 = math.tanh %664 : vector<2x128xf32>
    %666 = arith.mulf %661, %665 : vector<2x128xf32>
    %c0_138 = arith.constant 0 : index
    %c4_139 = arith.constant 4 : index
    %c0_140 = arith.constant 0 : index
    %667 = vector.load %arg31[%c0_138, %c4_139, %c0_140] : memref<2x8x128xf32, #tpu.memory_space<vmem>>, vector<2x1x128xf32>
    %668 = vector.shape_cast %667 : vector<2x1x128xf32> to vector<2x128xf32>
    %669 = vector.shape_cast %666 : vector<2x128xf32> to vector<2x1x128xf32>
    tpu.vector_store %arg31[%c0_138, %c4_139, %c0_140], %669 {strides = array<i32>} : memref<2x8x128xf32, #tpu.memory_space<vmem>>, vector<2x1x128xf32>,
    %670 = vector.extract_strided_slice %506 {offsets = [10, 0], sizes = [2, 512], strides = [1, 1]} : vector<16x512xf32> to vector<2x512xf32>
    %671 = arith.truncf %666 : vector<2x128xf32> to vector<2x128xbf16>
    %cst_141 = arith.constant dense<0.000000e+00> : vector<2x512xf32>
    %672 = tpu.matmul %671, %507, %cst_141 {dimension_numbers = #tpu.dot_dimension_numbers<[1], [0], [0], [1], [0, 0, 1, 1], [], []>} : vector<2x128xbf16>, vector<128x512xbf16>, vector<2x512xf32> -> vector<2x512xf32>
    %673 = arith.addf %670, %672 : vector<2x512xf32>
    %674 = vector.extract_strided_slice %673 {offsets = [0, 0], sizes = [2, 128], strides = [1, 1]} : vector<2x512xf32> to vector<2x128xf32>
    %675 = arith.negf %674 : vector<2x128xf32>
    %676 = math.exp %675 : vector<2x128xf32>
    %cst_142 = arith.constant 1.000000e+00 : f32
    %677 = vector.broadcast %cst_142 : f32 to vector<2x128xf32>
    %678 = arith.addf %677, %676 : vector<2x128xf32>
    %679 = arith.divf %677, %678 : vector<2x128xf32>
    %680 = vector.extract_strided_slice %673 {offsets = [0, 128], sizes = [2, 128], strides = [1, 1]} : vector<2x512xf32> to vector<2x128xf32>
    %681 = arith.negf %680 : vector<2x128xf32>
    %682 = math.exp %681 : vector<2x128xf32>
    %cst_143 = arith.constant 1.000000e+00 : f32
    %683 = vector.broadcast %cst_143 : f32 to vector<2x128xf32>
    %684 = arith.addf %683, %682 : vector<2x128xf32>
    %685 = arith.divf %683, %684 : vector<2x128xf32>
    %686 = vector.extract_strided_slice %673 {offsets = [0, 256], sizes = [2, 128], strides = [1, 1]} : vector<2x512xf32> to vector<2x128xf32>
    %687 = math.tanh %686 : vector<2x128xf32>
    %688 = vector.extract_strided_slice %673 {offsets = [0, 384], sizes = [2, 128], strides = [1, 1]} : vector<2x512xf32> to vector<2x128xf32>
    %689 = arith.negf %688 : vector<2x128xf32>
    %690 = math.exp %689 : vector<2x128xf32>
    %cst_144 = arith.constant 1.000000e+00 : f32
    %691 = vector.broadcast %cst_144 : f32 to vector<2x128xf32>
    %692 = arith.addf %691, %690 : vector<2x128xf32>
    %693 = arith.divf %691, %692 : vector<2x128xf32>
    %694 = arith.mulf %685, %664 : vector<2x128xf32>
    %695 = arith.mulf %679, %687 : vector<2x128xf32>
    %696 = arith.addf %694, %695 : vector<2x128xf32>
    %697 = math.tanh %696 : vector<2x128xf32>
    %698 = arith.mulf %693, %697 : vector<2x128xf32>
    %c0_145 = arith.constant 0 : index
    %c5_146 = arith.constant 5 : index
    %c0_147 = arith.constant 0 : index
    %699 = vector.load %arg31[%c0_145, %c5_146, %c0_147] : memref<2x8x128xf32, #tpu.memory_space<vmem>>, vector<2x1x128xf32>
    %700 = vector.shape_cast %699 : vector<2x1x128xf32> to vector<2x128xf32>
    %701 = vector.shape_cast %698 : vector<2x128xf32> to vector<2x1x128xf32>
    tpu.vector_store %arg31[%c0_145, %c5_146, %c0_147], %701 {strides = array<i32>} : memref<2x8x128xf32, #tpu.memory_space<vmem>>, vector<2x1x128xf32>,
    %702 = vector.extract_strided_slice %506 {offsets = [12, 0], sizes = [2, 512], strides = [1, 1]} : vector<16x512xf32> to vector<2x512xf32>
    %703 = arith.truncf %698 : vector<2x128xf32> to vector<2x128xbf16>
    %cst_148 = arith.constant dense<0.000000e+00> : vector<2x512xf32>
    %704 = tpu.matmul %703, %507, %cst_148 {dimension_numbers = #tpu.dot_dimension_numbers<[1], [0], [0], [1], [0, 0, 1, 1], [], []>} : vector<2x128xbf16>, vector<128x512xbf16>, vector<2x512xf32> -> vector<2x512xf32>
    %705 = arith.addf %702, %704 : vector<2x512xf32>
    %706 = vector.extract_strided_slice %705 {offsets = [0, 0], sizes = [2, 128], strides = [1, 1]} : vector<2x512xf32> to vector<2x128xf32>
    %707 = arith.negf %706 : vector<2x128xf32>
    %708 = math.exp %707 : vector<2x128xf32>
    %cst_149 = arith.constant 1.000000e+00 : f32
    %709 = vector.broadcast %cst_149 : f32 to vector<2x128xf32>
    %710 = arith.addf %709, %708 : vector<2x128xf32>
    %711 = arith.divf %709, %710 : vector<2x128xf32>
    %712 = vector.extract_strided_slice %705 {offsets = [0, 128], sizes = [2, 128], strides = [1, 1]} : vector<2x512xf32> to vector<2x128xf32>
    %713 = arith.negf %712 : vector<2x128xf32>
    %714 = math.exp %713 : vector<2x128xf32>
    %cst_150 = arith.constant 1.000000e+00 : f32
    %715 = vector.broadcast %cst_150 : f32 to vector<2x128xf32>
    %716 = arith.addf %715, %714 : vector<2x128xf32>
    %717 = arith.divf %715, %716 : vector<2x128xf32>
    %718 = vector.extract_strided_slice %705 {offsets = [0, 256], sizes = [2, 128], strides = [1, 1]} : vector<2x512xf32> to vector<2x128xf32>
    %719 = math.tanh %718 : vector<2x128xf32>
    %720 = vector.extract_strided_slice %705 {offsets = [0, 384], sizes = [2, 128], strides = [1, 1]} : vector<2x512xf32> to vector<2x128xf32>
    %721 = arith.negf %720 : vector<2x128xf32>
    %722 = math.exp %721 : vector<2x128xf32>
    %cst_151 = arith.constant 1.000000e+00 : f32
    %723 = vector.broadcast %cst_151 : f32 to vector<2x128xf32>
    %724 = arith.addf %723, %722 : vector<2x128xf32>
    %725 = arith.divf %723, %724 : vector<2x128xf32>
    %726 = arith.mulf %717, %696 : vector<2x128xf32>
    %727 = arith.mulf %711, %719 : vector<2x128xf32>
    %728 = arith.addf %726, %727 : vector<2x128xf32>
    %729 = math.tanh %728 : vector<2x128xf32>
    %730 = arith.mulf %725, %729 : vector<2x128xf32>
    %c0_152 = arith.constant 0 : index
    %c6_153 = arith.constant 6 : index
    %c0_154 = arith.constant 0 : index
    %731 = vector.load %arg31[%c0_152, %c6_153, %c0_154] : memref<2x8x128xf32, #tpu.memory_space<vmem>>, vector<2x1x128xf32>
    %732 = vector.shape_cast %731 : vector<2x1x128xf32> to vector<2x128xf32>
    %733 = vector.shape_cast %730 : vector<2x128xf32> to vector<2x1x128xf32>
    tpu.vector_store %arg31[%c0_152, %c6_153, %c0_154], %733 {strides = array<i32>} : memref<2x8x128xf32, #tpu.memory_space<vmem>>, vector<2x1x128xf32>,
    %734 = vector.extract_strided_slice %506 {offsets = [14, 0], sizes = [2, 512], strides = [1, 1]} : vector<16x512xf32> to vector<2x512xf32>
    %735 = arith.truncf %730 : vector<2x128xf32> to vector<2x128xbf16>
    %cst_155 = arith.constant dense<0.000000e+00> : vector<2x512xf32>
    %736 = tpu.matmul %735, %507, %cst_155 {dimension_numbers = #tpu.dot_dimension_numbers<[1], [0], [0], [1], [0, 0, 1, 1], [], []>} : vector<2x128xbf16>, vector<128x512xbf16>, vector<2x512xf32> -> vector<2x512xf32>
    %737 = arith.addf %734, %736 : vector<2x512xf32>
    %738 = vector.extract_strided_slice %737 {offsets = [0, 0], sizes = [2, 128], strides = [1, 1]} : vector<2x512xf32> to vector<2x128xf32>
    %739 = arith.negf %738 : vector<2x128xf32>
    %740 = math.exp %739 : vector<2x128xf32>
    %cst_156 = arith.constant 1.000000e+00 : f32
    %741 = vector.broadcast %cst_156 : f32 to vector<2x128xf32>
    %742 = arith.addf %741, %740 : vector<2x128xf32>
    %743 = arith.divf %741, %742 : vector<2x128xf32>
    %744 = vector.extract_strided_slice %737 {offsets = [0, 128], sizes = [2, 128], strides = [1, 1]} : vector<2x512xf32> to vector<2x128xf32>
    %745 = arith.negf %744 : vector<2x128xf32>
    %746 = math.exp %745 : vector<2x128xf32>
    %cst_157 = arith.constant 1.000000e+00 : f32
    %747 = vector.broadcast %cst_157 : f32 to vector<2x128xf32>
    %748 = arith.addf %747, %746 : vector<2x128xf32>
    %749 = arith.divf %747, %748 : vector<2x128xf32>
    %750 = vector.extract_strided_slice %737 {offsets = [0, 256], sizes = [2, 128], strides = [1, 1]} : vector<2x512xf32> to vector<2x128xf32>
    %751 = math.tanh %750 : vector<2x128xf32>
    %752 = vector.extract_strided_slice %737 {offsets = [0, 384], sizes = [2, 128], strides = [1, 1]} : vector<2x512xf32> to vector<2x128xf32>
    %753 = arith.negf %752 : vector<2x128xf32>
    %754 = math.exp %753 : vector<2x128xf32>
    %cst_158 = arith.constant 1.000000e+00 : f32
    %755 = vector.broadcast %cst_158 : f32 to vector<2x128xf32>
    %756 = arith.addf %755, %754 : vector<2x128xf32>
    %757 = arith.divf %755, %756 : vector<2x128xf32>
    %758 = arith.mulf %749, %728 : vector<2x128xf32>
    %759 = arith.mulf %743, %751 : vector<2x128xf32>
    %760 = arith.addf %758, %759 : vector<2x128xf32>
    %761 = math.tanh %760 : vector<2x128xf32>
    %762 = arith.mulf %757, %761 : vector<2x128xf32>
    %c0_159 = arith.constant 0 : index
    %c7_160 = arith.constant 7 : index
    %c0_161 = arith.constant 0 : index
    %763 = vector.load %arg31[%c0_159, %c7_160, %c0_161] : memref<2x8x128xf32, #tpu.memory_space<vmem>>, vector<2x1x128xf32>
    %764 = vector.shape_cast %763 : vector<2x1x128xf32> to vector<2x128xf32>
    %765 = vector.shape_cast %762 : vector<2x128xf32> to vector<2x1x128xf32>
    tpu.vector_store %arg31[%c0_159, %c7_160, %c0_161], %765 {strides = array<i32>} : memref<2x8x128xf32, #tpu.memory_space<vmem>>, vector<2x1x128xf32>,
    %c0_162 = arith.constant 0 : index
    %c0_163 = arith.constant 0 : index
    %c0_164 = arith.constant 0 : index
    %766 = vector.load %arg31[%c0_162, %c0_163, %c0_164] : memref<2x8x128xf32, #tpu.memory_space<vmem>>, vector<1x8x128xf32>
    %767 = vector.shape_cast %766 : vector<1x8x128xf32> to vector<8x128xf32>
    %c1_165 = arith.constant 1 : index
    %c0_166 = arith.constant 0 : index
    %c0_167 = arith.constant 0 : index
    %768 = vector.load %arg31[%c1_165, %c0_166, %c0_167] : memref<2x8x128xf32, #tpu.memory_space<vmem>>, vector<1x8x128xf32>
    %769 = vector.shape_cast %768 : vector<1x8x128xf32> to vector<8x128xf32>
    %770 = tpu.concatenate %767, %769 in 0 : vector<8x128xf32>, vector<8x128xf32> -> vector<16x128xf32>
    %c0_168 = arith.constant 0 : index
    %c0_169 = arith.constant 0 : index
    %771 = vector.load %arg10[%c0_168, %c0_169] : memref<128x128xbf16, #tpu.memory_space<vmem>>, vector<128x128xbf16>
    %772 = arith.truncf %770 : vector<16x128xf32> to vector<16x128xbf16>
    %cst_170 = arith.constant dense<0.000000e+00> : vector<16x128xf32>
    %773 = tpu.matmul %772, %771, %cst_170 {dimension_numbers = #tpu.dot_dimension_numbers<[1], [0], [0], [1], [0, 0, 1, 1], [], []>} : vector<16x128xbf16>, vector<128x128xbf16>, vector<16x128xf32> -> vector<16x128xf32>
    %c0_171 = arith.constant 0 : index
    %c0_172 = arith.constant 0 : index
    %774 = vector.load %arg13[%c0_171, %c0_172] : memref<1x128xf32, #tpu.memory_space<vmem>>, vector<1x128xf32>
    %775 = vector.broadcast %774 : vector<1x128xf32> to vector<16x128xf32>
    %776 = arith.addf %773, %775 : vector<16x128xf32>
    %c0_173 = arith.constant 0 : index
    %c0_174 = arith.constant 0 : index
    %777 = vector.load %arg11[%c0_173, %c0_174] : memref<128x128xbf16, #tpu.memory_space<vmem>>, vector<128x128xbf16>
    %778 = arith.truncf %770 : vector<16x128xf32> to vector<16x128xbf16>
    %cst_175 = arith.constant dense<0.000000e+00> : vector<16x128xf32>
    %779 = tpu.matmul %778, %777, %cst_175 {dimension_numbers = #tpu.dot_dimension_numbers<[1], [0], [0], [1], [0, 0, 1, 1], [], []>} : vector<16x128xbf16>, vector<128x128xbf16>, vector<16x128xf32> -> vector<16x128xf32>
    %c0_176 = arith.constant 0 : index
    %c0_177 = arith.constant 0 : index
    %780 = vector.load %arg14[%c0_176, %c0_177] : memref<1x128xf32, #tpu.memory_space<vmem>>, vector<1x128xf32>
    %781 = vector.broadcast %780 : vector<1x128xf32> to vector<16x128xf32>
    %782 = arith.addf %779, %781 : vector<16x128xf32>
    %c0_178 = arith.constant 0 : index
    %c0_179 = arith.constant 0 : index
    %783 = vector.load %arg12[%c0_178, %c0_179] : memref<128x128xbf16, #tpu.memory_space<vmem>>, vector<128x128xbf16>
    %784 = arith.truncf %770 : vector<16x128xf32> to vector<16x128xbf16>
    %cst_180 = arith.constant dense<0.000000e+00> : vector<16x128xf32>
    %785 = tpu.matmul %784, %783, %cst_180 {dimension_numbers = #tpu.dot_dimension_numbers<[1], [0], [0], [1], [0, 0, 1, 1], [], []>} : vector<16x128xbf16>, vector<128x128xbf16>, vector<16x128xf32> -> vector<16x128xf32>
    %c0_181 = arith.constant 0 : index
    %c0_182 = arith.constant 0 : index
    %786 = vector.load %arg15[%c0_181, %c0_182] : memref<1x128xf32, #tpu.memory_space<vmem>>, vector<1x128xf32>
    %787 = vector.broadcast %786 : vector<1x128xf32> to vector<16x128xf32>
    %788 = arith.addf %785, %787 : vector<16x128xf32>
    %789 = vector.extract_strided_slice %776 {offsets = [0, 0], sizes = [8, 128], strides = [1, 1]} : vector<16x128xf32> to vector<8x128xf32>
    %790 = vector.extract_strided_slice %789 {offsets = [0, 0], sizes = [8, 16], strides = [1, 1]} : vector<8x128xf32> to vector<8x16xf32>
    %791 = vector.extract_strided_slice %789 {offsets = [0, 16], sizes = [8, 16], strides = [1, 1]} : vector<8x128xf32> to vector<8x16xf32>
    %792 = vector.extract_strided_slice %789 {offsets = [0, 32], sizes = [8, 16], strides = [1, 1]} : vector<8x128xf32> to vector<8x16xf32>
    %793 = vector.extract_strided_slice %789 {offsets = [0, 48], sizes = [8, 16], strides = [1, 1]} : vector<8x128xf32> to vector<8x16xf32>
    %794 = vector.extract_strided_slice %789 {offsets = [0, 64], sizes = [8, 16], strides = [1, 1]} : vector<8x128xf32> to vector<8x16xf32>
    %795 = vector.extract_strided_slice %789 {offsets = [0, 80], sizes = [8, 16], strides = [1, 1]} : vector<8x128xf32> to vector<8x16xf32>
    %796 = vector.extract_strided_slice %789 {offsets = [0, 96], sizes = [8, 16], strides = [1, 1]} : vector<8x128xf32> to vector<8x16xf32>
    %797 = vector.extract_strided_slice %789 {offsets = [0, 112], sizes = [8, 16], strides = [1, 1]} : vector<8x128xf32> to vector<8x16xf32>
    %798 = vector.shape_cast %790 : vector<8x16xf32> to vector<1x8x16xf32>
    %799 = vector.shape_cast %791 : vector<8x16xf32> to vector<1x8x16xf32>
    %800 = vector.shape_cast %792 : vector<8x16xf32> to vector<1x8x16xf32>
    %801 = vector.shape_cast %793 : vector<8x16xf32> to vector<1x8x16xf32>
    %802 = vector.shape_cast %794 : vector<8x16xf32> to vector<1x8x16xf32>
    %803 = vector.shape_cast %795 : vector<8x16xf32> to vector<1x8x16xf32>
    %804 = vector.shape_cast %796 : vector<8x16xf32> to vector<1x8x16xf32>
    %805 = vector.shape_cast %797 : vector<8x16xf32> to vector<1x8x16xf32>
    %806 = tpu.concatenate %798, %799, %800, %801, %802, %803, %804, %805 in 0 : vector<1x8x16xf32>, vector<1x8x16xf32>, vector<1x8x16xf32>, vector<1x8x16xf32>, vector<1x8x16xf32>, vector<1x8x16xf32>, vector<1x8x16xf32>, vector<1x8x16xf32> -> vector<8x8x16xf32>
    %807 = arith.truncf %806 : vector<8x8x16xf32> to vector<8x8x16xbf16>
    %808 = vector.extract_strided_slice %782 {offsets = [0, 0], sizes = [8, 128], strides = [1, 1]} : vector<16x128xf32> to vector<8x128xf32>
    %809 = vector.extract_strided_slice %808 {offsets = [0, 0], sizes = [8, 16], strides = [1, 1]} : vector<8x128xf32> to vector<8x16xf32>
    %810 = vector.extract_strided_slice %808 {offsets = [0, 16], sizes = [8, 16], strides = [1, 1]} : vector<8x128xf32> to vector<8x16xf32>
    %811 = vector.extract_strided_slice %808 {offsets = [0, 32], sizes = [8, 16], strides = [1, 1]} : vector<8x128xf32> to vector<8x16xf32>
    %812 = vector.extract_strided_slice %808 {offsets = [0, 48], sizes = [8, 16], strides = [1, 1]} : vector<8x128xf32> to vector<8x16xf32>
    %813 = vector.extract_strided_slice %808 {offsets = [0, 64], sizes = [8, 16], strides = [1, 1]} : vector<8x128xf32> to vector<8x16xf32>
    %814 = vector.extract_strided_slice %808 {offsets = [0, 80], sizes = [8, 16], strides = [1, 1]} : vector<8x128xf32> to vector<8x16xf32>
    %815 = vector.extract_strided_slice %808 {offsets = [0, 96], sizes = [8, 16], strides = [1, 1]} : vector<8x128xf32> to vector<8x16xf32>
    %816 = vector.extract_strided_slice %808 {offsets = [0, 112], sizes = [8, 16], strides = [1, 1]} : vector<8x128xf32> to vector<8x16xf32>
    %817 = vector.shape_cast %809 : vector<8x16xf32> to vector<1x8x16xf32>
    %818 = vector.shape_cast %810 : vector<8x16xf32> to vector<1x8x16xf32>
    %819 = vector.shape_cast %811 : vector<8x16xf32> to vector<1x8x16xf32>
    %820 = vector.shape_cast %812 : vector<8x16xf32> to vector<1x8x16xf32>
    %821 = vector.shape_cast %813 : vector<8x16xf32> to vector<1x8x16xf32>
    %822 = vector.shape_cast %814 : vector<8x16xf32> to vector<1x8x16xf32>
    %823 = vector.shape_cast %815 : vector<8x16xf32> to vector<1x8x16xf32>
    %824 = vector.shape_cast %816 : vector<8x16xf32> to vector<1x8x16xf32>
    %825 = tpu.concatenate %817, %818, %819, %820, %821, %822, %823, %824 in 0 : vector<1x8x16xf32>, vector<1x8x16xf32>, vector<1x8x16xf32>, vector<1x8x16xf32>, vector<1x8x16xf32>, vector<1x8x16xf32>, vector<1x8x16xf32>, vector<1x8x16xf32> -> vector<8x8x16xf32>
    %826 = arith.truncf %825 : vector<8x8x16xf32> to vector<8x8x16xbf16>
    %827 = vector.extract_strided_slice %788 {offsets = [0, 0], sizes = [8, 128], strides = [1, 1]} : vector<16x128xf32> to vector<8x128xf32>
    %828 = vector.extract_strided_slice %827 {offsets = [0, 0], sizes = [8, 16], strides = [1, 1]} : vector<8x128xf32> to vector<8x16xf32>
    %829 = vector.extract_strided_slice %827 {offsets = [0, 16], sizes = [8, 16], strides = [1, 1]} : vector<8x128xf32> to vector<8x16xf32>
    %830 = vector.extract_strided_slice %827 {offsets = [0, 32], sizes = [8, 16], strides = [1, 1]} : vector<8x128xf32> to vector<8x16xf32>
    %831 = vector.extract_strided_slice %827 {offsets = [0, 48], sizes = [8, 16], strides = [1, 1]} : vector<8x128xf32> to vector<8x16xf32>
    %832 = vector.extract_strided_slice %827 {offsets = [0, 64], sizes = [8, 16], strides = [1, 1]} : vector<8x128xf32> to vector<8x16xf32>
    %833 = vector.extract_strided_slice %827 {offsets = [0, 80], sizes = [8, 16], strides = [1, 1]} : vector<8x128xf32> to vector<8x16xf32>
    %834 = vector.extract_strided_slice %827 {offsets = [0, 96], sizes = [8, 16], strides = [1, 1]} : vector<8x128xf32> to vector<8x16xf32>
    %835 = vector.extract_strided_slice %827 {offsets = [0, 112], sizes = [8, 16], strides = [1, 1]} : vector<8x128xf32> to vector<8x16xf32>
    %836 = vector.shape_cast %828 : vector<8x16xf32> to vector<1x8x16xf32>
    %837 = vector.shape_cast %829 : vector<8x16xf32> to vector<1x8x16xf32>
    %838 = vector.shape_cast %830 : vector<8x16xf32> to vector<1x8x16xf32>
    %839 = vector.shape_cast %831 : vector<8x16xf32> to vector<1x8x16xf32>
    %840 = vector.shape_cast %832 : vector<8x16xf32> to vector<1x8x16xf32>
    %841 = vector.shape_cast %833 : vector<8x16xf32> to vector<1x8x16xf32>
    %842 = vector.shape_cast %834 : vector<8x16xf32> to vector<1x8x16xf32>
    %843 = vector.shape_cast %835 : vector<8x16xf32> to vector<1x8x16xf32>
    %844 = tpu.concatenate %836, %837, %838, %839, %840, %841, %842, %843 in 0 : vector<1x8x16xf32>, vector<1x8x16xf32>, vector<1x8x16xf32>, vector<1x8x16xf32>, vector<1x8x16xf32>, vector<1x8x16xf32>, vector<1x8x16xf32>, vector<1x8x16xf32> -> vector<8x8x16xf32>
    %845 = arith.truncf %844 : vector<8x8x16xf32> to vector<8x8x16xbf16>
    "tpu.trace_start"() <{level = 10 : i32, message = "hqd,hkd->hqk"}> : () -> ()
    %cst_183 = arith.constant dense<0.000000e+00> : vector<8x8x8xf32>
    %846 = tpu.matmul %807, %826, %cst_183 {dimension_numbers = #tpu.dot_dimension_numbers<[2], [2], [1], [1], [0, 0, 0, 1, 1, 1], [0], [0]>} : vector<8x8x16xbf16>, vector<8x8x16xbf16>, vector<8x8x8xf32> -> vector<8x8x8xf32>
    "tpu.trace_stop"() : () -> ()
    %cst_184 = arith.constant 2.500000e-01 : f32
    %847 = vector.broadcast %cst_184 : f32 to vector<8x8x8xf32>
    %848 = arith.mulf %846, %847 : vector<8x8x8xf32>
    %cst_185 = arith.constant dense<0xFF800000> : vector<8x8xf32>
    %849 = vector.multi_reduction <maximumf>, %848, %cst_185 [2] : vector<8x8x8xf32> to vector<8x8xf32>
    %cst_186 = arith.constant 0xFF800000 : f32
    %850 = vector.broadcast %cst_186 : f32 to vector<8x8xf32>
    %851 = arith.maximumf %850, %849 : vector<8x8xf32>
    %852 = vector.shape_cast %851 : vector<8x8xf32> to vector<8x8x1xf32>
    %853 = vector.broadcast %852 : vector<8x8x1xf32> to vector<8x8x8xf32>
    %854 = arith.subf %848, %853 : vector<8x8x8xf32>
    %855 = math.exp %854 : vector<8x8x8xf32>
    %cst_187 = arith.constant dense<0.000000e+00> : vector<8x8xf32>
    %856 = vector.multi_reduction <add>, %855, %cst_187 [2] : vector<8x8x8xf32> to vector<8x8xf32>
    %857 = vector.shape_cast %856 : vector<8x8xf32> to vector<8x8x1xf32>
    %858 = vector.broadcast %857 : vector<8x8x1xf32> to vector<8x8x8xf32>
    %859 = arith.divf %855, %858 : vector<8x8x8xf32>
    %cst_188 = arith.constant dense<0.000000e+00> : vector<8x8xf32>
    %860 = vector.multi_reduction <add>, %859, %cst_188 [0] : vector<8x8x8xf32> to vector<8x8xf32>
    %cst_189 = arith.constant 8.000000e+00 : f32
    %861 = vector.broadcast %cst_189 : f32 to vector<8x8xf32>
    %862 = arith.divf %860, %861 : vector<8x8xf32>
    %863 = vector.extract_strided_slice %859 {offsets = [0, 7, 0], sizes = [8, 1, 8], strides = [1, 1, 1]} : vector<8x8x8xf32> to vector<8x1x8xf32>
    %864 = arith.truncf %863 : vector<8x1x8xf32> to vector<8x1x8xbf16>
    "tpu.trace_start"() <{level = 10 : i32, message = "hqk,hkd->hqd"}> : () -> ()
    %cst_190 = arith.constant dense<0.000000e+00> : vector<8x1x16xf32>
    %865 = tpu.matmul %864, %845, %cst_190 {dimension_numbers = #tpu.dot_dimension_numbers<[2], [1], [1], [2], [0, 0, 0, 1, 1, 2], [0], [0]>} : vector<8x1x8xbf16>, vector<8x8x16xbf16>, vector<8x1x16xf32> -> vector<8x1x16xf32>
    "tpu.trace_stop"() : () -> ()
    %866 = vector.extract_strided_slice %865 {offsets = [0, 0, 0], sizes = [1, 1, 16], strides = [1, 1, 1]} : vector<8x1x16xf32> to vector<1x1x16xf32>
    %867 = vector.shape_cast %866 : vector<1x1x16xf32> to vector<1x16xf32>
    %868 = vector.extract_strided_slice %865 {offsets = [1, 0, 0], sizes = [1, 1, 16], strides = [1, 1, 1]} : vector<8x1x16xf32> to vector<1x1x16xf32>
    %869 = vector.shape_cast %868 : vector<1x1x16xf32> to vector<1x16xf32>
    %870 = vector.extract_strided_slice %865 {offsets = [2, 0, 0], sizes = [1, 1, 16], strides = [1, 1, 1]} : vector<8x1x16xf32> to vector<1x1x16xf32>
    %871 = vector.shape_cast %870 : vector<1x1x16xf32> to vector<1x16xf32>
    %872 = vector.extract_strided_slice %865 {offsets = [3, 0, 0], sizes = [1, 1, 16], strides = [1, 1, 1]} : vector<8x1x16xf32> to vector<1x1x16xf32>
    %873 = vector.shape_cast %872 : vector<1x1x16xf32> to vector<1x16xf32>
    %874 = vector.extract_strided_slice %865 {offsets = [4, 0, 0], sizes = [1, 1, 16], strides = [1, 1, 1]} : vector<8x1x16xf32> to vector<1x1x16xf32>
    %875 = vector.shape_cast %874 : vector<1x1x16xf32> to vector<1x16xf32>
    %876 = vector.extract_strided_slice %865 {offsets = [5, 0, 0], sizes = [1, 1, 16], strides = [1, 1, 1]} : vector<8x1x16xf32> to vector<1x1x16xf32>
    %877 = vector.shape_cast %876 : vector<1x1x16xf32> to vector<1x16xf32>
    %878 = vector.extract_strided_slice %865 {offsets = [6, 0, 0], sizes = [1, 1, 16], strides = [1, 1, 1]} : vector<8x1x16xf32> to vector<1x1x16xf32>
    %879 = vector.shape_cast %878 : vector<1x1x16xf32> to vector<1x16xf32>
    %880 = vector.extract_strided_slice %865 {offsets = [7, 0, 0], sizes = [1, 1, 16], strides = [1, 1, 1]} : vector<8x1x16xf32> to vector<1x1x16xf32>
    %881 = vector.shape_cast %880 : vector<1x1x16xf32> to vector<1x16xf32>
    %882 = tpu.concatenate %867, %869, %871, %873, %875, %877, %879, %881 in 1 : vector<1x16xf32>, vector<1x16xf32>, vector<1x16xf32>, vector<1x16xf32>, vector<1x16xf32>, vector<1x16xf32>, vector<1x16xf32>, vector<1x16xf32> -> vector<1x128xf32>
    %883 = vector.extract_strided_slice %776 {offsets = [8, 0], sizes = [8, 128], strides = [1, 1]} : vector<16x128xf32> to vector<8x128xf32>
    %884 = vector.extract_strided_slice %883 {offsets = [0, 0], sizes = [8, 16], strides = [1, 1]} : vector<8x128xf32> to vector<8x16xf32>
    %885 = vector.extract_strided_slice %883 {offsets = [0, 16], sizes = [8, 16], strides = [1, 1]} : vector<8x128xf32> to vector<8x16xf32>
    %886 = vector.extract_strided_slice %883 {offsets = [0, 32], sizes = [8, 16], strides = [1, 1]} : vector<8x128xf32> to vector<8x16xf32>
    %887 = vector.extract_strided_slice %883 {offsets = [0, 48], sizes = [8, 16], strides = [1, 1]} : vector<8x128xf32> to vector<8x16xf32>
    %888 = vector.extract_strided_slice %883 {offsets = [0, 64], sizes = [8, 16], strides = [1, 1]} : vector<8x128xf32> to vector<8x16xf32>
    %889 = vector.extract_strided_slice %883 {offsets = [0, 80], sizes = [8, 16], strides = [1, 1]} : vector<8x128xf32> to vector<8x16xf32>
    %890 = vector.extract_strided_slice %883 {offsets = [0, 96], sizes = [8, 16], strides = [1, 1]} : vector<8x128xf32> to vector<8x16xf32>
    %891 = vector.extract_strided_slice %883 {offsets = [0, 112], sizes = [8, 16], strides = [1, 1]} : vector<8x128xf32> to vector<8x16xf32>
    %892 = vector.shape_cast %884 : vector<8x16xf32> to vector<1x8x16xf32>
    %893 = vector.shape_cast %885 : vector<8x16xf32> to vector<1x8x16xf32>
    %894 = vector.shape_cast %886 : vector<8x16xf32> to vector<1x8x16xf32>
    %895 = vector.shape_cast %887 : vector<8x16xf32> to vector<1x8x16xf32>
    %896 = vector.shape_cast %888 : vector<8x16xf32> to vector<1x8x16xf32>
    %897 = vector.shape_cast %889 : vector<8x16xf32> to vector<1x8x16xf32>
    %898 = vector.shape_cast %890 : vector<8x16xf32> to vector<1x8x16xf32>
    %899 = vector.shape_cast %891 : vector<8x16xf32> to vector<1x8x16xf32>
    %900 = tpu.concatenate %892, %893, %894, %895, %896, %897, %898, %899 in 0 : vector<1x8x16xf32>, vector<1x8x16xf32>, vector<1x8x16xf32>, vector<1x8x16xf32>, vector<1x8x16xf32>, vector<1x8x16xf32>, vector<1x8x16xf32>, vector<1x8x16xf32> -> vector<8x8x16xf32>
    %901 = arith.truncf %900 : vector<8x8x16xf32> to vector<8x8x16xbf16>
    %902 = vector.extract_strided_slice %782 {offsets = [8, 0], sizes = [8, 128], strides = [1, 1]} : vector<16x128xf32> to vector<8x128xf32>
    %903 = vector.extract_strided_slice %902 {offsets = [0, 0], sizes = [8, 16], strides = [1, 1]} : vector<8x128xf32> to vector<8x16xf32>
    %904 = vector.extract_strided_slice %902 {offsets = [0, 16], sizes = [8, 16], strides = [1, 1]} : vector<8x128xf32> to vector<8x16xf32>
    %905 = vector.extract_strided_slice %902 {offsets = [0, 32], sizes = [8, 16], strides = [1, 1]} : vector<8x128xf32> to vector<8x16xf32>
    %906 = vector.extract_strided_slice %902 {offsets = [0, 48], sizes = [8, 16], strides = [1, 1]} : vector<8x128xf32> to vector<8x16xf32>
    %907 = vector.extract_strided_slice %902 {offsets = [0, 64], sizes = [8, 16], strides = [1, 1]} : vector<8x128xf32> to vector<8x16xf32>
    %908 = vector.extract_strided_slice %902 {offsets = [0, 80], sizes = [8, 16], strides = [1, 1]} : vector<8x128xf32> to vector<8x16xf32>
    %909 = vector.extract_strided_slice %902 {offsets = [0, 96], sizes = [8, 16], strides = [1, 1]} : vector<8x128xf32> to vector<8x16xf32>
    %910 = vector.extract_strided_slice %902 {offsets = [0, 112], sizes = [8, 16], strides = [1, 1]} : vector<8x128xf32> to vector<8x16xf32>
    %911 = vector.shape_cast %903 : vector<8x16xf32> to vector<1x8x16xf32>
    %912 = vector.shape_cast %904 : vector<8x16xf32> to vector<1x8x16xf32>
    %913 = vector.shape_cast %905 : vector<8x16xf32> to vector<1x8x16xf32>
    %914 = vector.shape_cast %906 : vector<8x16xf32> to vector<1x8x16xf32>
    %915 = vector.shape_cast %907 : vector<8x16xf32> to vector<1x8x16xf32>
    %916 = vector.shape_cast %908 : vector<8x16xf32> to vector<1x8x16xf32>
    %917 = vector.shape_cast %909 : vector<8x16xf32> to vector<1x8x16xf32>
    %918 = vector.shape_cast %910 : vector<8x16xf32> to vector<1x8x16xf32>
    %919 = tpu.concatenate %911, %912, %913, %914, %915, %916, %917, %918 in 0 : vector<1x8x16xf32>, vector<1x8x16xf32>, vector<1x8x16xf32>, vector<1x8x16xf32>, vector<1x8x16xf32>, vector<1x8x16xf32>, vector<1x8x16xf32>, vector<1x8x16xf32> -> vector<8x8x16xf32>
    %920 = arith.truncf %919 : vector<8x8x16xf32> to vector<8x8x16xbf16>
    %921 = vector.extract_strided_slice %788 {offsets = [8, 0], sizes = [8, 128], strides = [1, 1]} : vector<16x128xf32> to vector<8x128xf32>
    %922 = vector.extract_strided_slice %921 {offsets = [0, 0], sizes = [8, 16], strides = [1, 1]} : vector<8x128xf32> to vector<8x16xf32>
    %923 = vector.extract_strided_slice %921 {offsets = [0, 16], sizes = [8, 16], strides = [1, 1]} : vector<8x128xf32> to vector<8x16xf32>
    %924 = vector.extract_strided_slice %921 {offsets = [0, 32], sizes = [8, 16], strides = [1, 1]} : vector<8x128xf32> to vector<8x16xf32>
    %925 = vector.extract_strided_slice %921 {offsets = [0, 48], sizes = [8, 16], strides = [1, 1]} : vector<8x128xf32> to vector<8x16xf32>
    %926 = vector.extract_strided_slice %921 {offsets = [0, 64], sizes = [8, 16], strides = [1, 1]} : vector<8x128xf32> to vector<8x16xf32>
    %927 = vector.extract_strided_slice %921 {offsets = [0, 80], sizes = [8, 16], strides = [1, 1]} : vector<8x128xf32> to vector<8x16xf32>
    %928 = vector.extract_strided_slice %921 {offsets = [0, 96], sizes = [8, 16], strides = [1, 1]} : vector<8x128xf32> to vector<8x16xf32>
    %929 = vector.extract_strided_slice %921 {offsets = [0, 112], sizes = [8, 16], strides = [1, 1]} : vector<8x128xf32> to vector<8x16xf32>
    %930 = vector.shape_cast %922 : vector<8x16xf32> to vector<1x8x16xf32>
    %931 = vector.shape_cast %923 : vector<8x16xf32> to vector<1x8x16xf32>
    %932 = vector.shape_cast %924 : vector<8x16xf32> to vector<1x8x16xf32>
    %933 = vector.shape_cast %925 : vector<8x16xf32> to vector<1x8x16xf32>
    %934 = vector.shape_cast %926 : vector<8x16xf32> to vector<1x8x16xf32>
    %935 = vector.shape_cast %927 : vector<8x16xf32> to vector<1x8x16xf32>
    %936 = vector.shape_cast %928 : vector<8x16xf32> to vector<1x8x16xf32>
    %937 = vector.shape_cast %929 : vector<8x16xf32> to vector<1x8x16xf32>
    %938 = tpu.concatenate %930, %931, %932, %933, %934, %935, %936, %937 in 0 : vector<1x8x16xf32>, vector<1x8x16xf32>, vector<1x8x16xf32>, vector<1x8x16xf32>, vector<1x8x16xf32>, vector<1x8x16xf32>, vector<1x8x16xf32>, vector<1x8x16xf32> -> vector<8x8x16xf32>
    %939 = arith.truncf %938 : vector<8x8x16xf32> to vector<8x8x16xbf16>
    "tpu.trace_start"() <{level = 10 : i32, message = "hqd,hkd->hqk"}> : () -> ()
    %cst_191 = arith.constant dense<0.000000e+00> : vector<8x8x8xf32>
    %940 = tpu.matmul %901, %920, %cst_191 {dimension_numbers = #tpu.dot_dimension_numbers<[2], [2], [1], [1], [0, 0, 0, 1, 1, 1], [0], [0]>} : vector<8x8x16xbf16>, vector<8x8x16xbf16>, vector<8x8x8xf32> -> vector<8x8x8xf32>
    "tpu.trace_stop"() : () -> ()
    %cst_192 = arith.constant 2.500000e-01 : f32
    %941 = vector.broadcast %cst_192 : f32 to vector<8x8x8xf32>
    %942 = arith.mulf %940, %941 : vector<8x8x8xf32>
    %cst_193 = arith.constant dense<0xFF800000> : vector<8x8xf32>
    %943 = vector.multi_reduction <maximumf>, %942, %cst_193 [2] : vector<8x8x8xf32> to vector<8x8xf32>
    %cst_194 = arith.constant 0xFF800000 : f32
    %944 = vector.broadcast %cst_194 : f32 to vector<8x8xf32>
    %945 = arith.maximumf %944, %943 : vector<8x8xf32>
    %946 = vector.shape_cast %945 : vector<8x8xf32> to vector<8x8x1xf32>
    %947 = vector.broadcast %946 : vector<8x8x1xf32> to vector<8x8x8xf32>
    %948 = arith.subf %942, %947 : vector<8x8x8xf32>
    %949 = math.exp %948 : vector<8x8x8xf32>
    %cst_195 = arith.constant dense<0.000000e+00> : vector<8x8xf32>
    %950 = vector.multi_reduction <add>, %949, %cst_195 [2] : vector<8x8x8xf32> to vector<8x8xf32>
    %951 = vector.shape_cast %950 : vector<8x8xf32> to vector<8x8x1xf32>
    %952 = vector.broadcast %951 : vector<8x8x1xf32> to vector<8x8x8xf32>
    %953 = arith.divf %949, %952 : vector<8x8x8xf32>
    %cst_196 = arith.constant dense<0.000000e+00> : vector<8x8xf32>
    %954 = vector.multi_reduction <add>, %953, %cst_196 [0] : vector<8x8x8xf32> to vector<8x8xf32>
    %cst_197 = arith.constant 8.000000e+00 : f32
    %955 = vector.broadcast %cst_197 : f32 to vector<8x8xf32>
    %956 = arith.divf %954, %955 : vector<8x8xf32>
    %957 = vector.extract_strided_slice %953 {offsets = [0, 7, 0], sizes = [8, 1, 8], strides = [1, 1, 1]} : vector<8x8x8xf32> to vector<8x1x8xf32>
    %958 = arith.truncf %957 : vector<8x1x8xf32> to vector<8x1x8xbf16>
    "tpu.trace_start"() <{level = 10 : i32, message = "hqk,hkd->hqd"}> : () -> ()
    %cst_198 = arith.constant dense<0.000000e+00> : vector<8x1x16xf32>
    %959 = tpu.matmul %958, %939, %cst_198 {dimension_numbers = #tpu.dot_dimension_numbers<[2], [1], [1], [2], [0, 0, 0, 1, 1, 2], [0], [0]>} : vector<8x1x8xbf16>, vector<8x8x16xbf16>, vector<8x1x16xf32> -> vector<8x1x16xf32>
    "tpu.trace_stop"() : () -> ()
    %960 = vector.extract_strided_slice %959 {offsets = [0, 0, 0], sizes = [1, 1, 16], strides = [1, 1, 1]} : vector<8x1x16xf32> to vector<1x1x16xf32>
    %961 = vector.shape_cast %960 : vector<1x1x16xf32> to vector<1x16xf32>
    %962 = vector.extract_strided_slice %959 {offsets = [1, 0, 0], sizes = [1, 1, 16], strides = [1, 1, 1]} : vector<8x1x16xf32> to vector<1x1x16xf32>
    %963 = vector.shape_cast %962 : vector<1x1x16xf32> to vector<1x16xf32>
    %964 = vector.extract_strided_slice %959 {offsets = [2, 0, 0], sizes = [1, 1, 16], strides = [1, 1, 1]} : vector<8x1x16xf32> to vector<1x1x16xf32>
    %965 = vector.shape_cast %964 : vector<1x1x16xf32> to vector<1x16xf32>
    %966 = vector.extract_strided_slice %959 {offsets = [3, 0, 0], sizes = [1, 1, 16], strides = [1, 1, 1]} : vector<8x1x16xf32> to vector<1x1x16xf32>
    %967 = vector.shape_cast %966 : vector<1x1x16xf32> to vector<1x16xf32>
    %968 = vector.extract_strided_slice %959 {offsets = [4, 0, 0], sizes = [1, 1, 16], strides = [1, 1, 1]} : vector<8x1x16xf32> to vector<1x1x16xf32>
    %969 = vector.shape_cast %968 : vector<1x1x16xf32> to vector<1x16xf32>
    %970 = vector.extract_strided_slice %959 {offsets = [5, 0, 0], sizes = [1, 1, 16], strides = [1, 1, 1]} : vector<8x1x16xf32> to vector<1x1x16xf32>
    %971 = vector.shape_cast %970 : vector<1x1x16xf32> to vector<1x16xf32>
    %972 = vector.extract_strided_slice %959 {offsets = [6, 0, 0], sizes = [1, 1, 16], strides = [1, 1, 1]} : vector<8x1x16xf32> to vector<1x1x16xf32>
    %973 = vector.shape_cast %972 : vector<1x1x16xf32> to vector<1x16xf32>
    %974 = vector.extract_strided_slice %959 {offsets = [7, 0, 0], sizes = [1, 1, 16], strides = [1, 1, 1]} : vector<8x1x16xf32> to vector<1x1x16xf32>
    %975 = vector.shape_cast %974 : vector<1x1x16xf32> to vector<1x16xf32>
    %976 = tpu.concatenate %961, %963, %965, %967, %969, %971, %973, %975 in 1 : vector<1x16xf32>, vector<1x16xf32>, vector<1x16xf32>, vector<1x16xf32>, vector<1x16xf32>, vector<1x16xf32>, vector<1x16xf32>, vector<1x16xf32> -> vector<1x128xf32>
    %977 = vector.shape_cast %862 : vector<8x8xf32> to vector<1x8x8xf32>
    %978 = vector.shape_cast %956 : vector<8x8xf32> to vector<1x8x8xf32>
    %979 = tpu.concatenate %977, %978 in 0 : vector<1x8x8xf32>, vector<1x8x8xf32> -> vector<2x8x8xf32>
    %c0_199 = arith.constant 0 : index
    %c0_200 = arith.constant 0 : index
    %c0_201 = arith.constant 0 : index
    %980 = vector.load %arg30[%c0_199, %c0_200, %c0_201] : memref<2x8x8xf32, #tpu.memory_space<vmem>>, vector<2x8x8xf32>
    tpu.vector_store %arg30[%c0_199, %c0_200, %c0_201], %979 {strides = array<i32>} : memref<2x8x8xf32, #tpu.memory_space<vmem>>, vector<2x8x8xf32>,
    %981 = tpu.concatenate %882, %976 in 0 : vector<1x128xf32>, vector<1x128xf32> -> vector<2x128xf32>
    %c0_202 = arith.constant 0 : index
    %c0_203 = arith.constant 0 : index
    %982 = vector.load %arg16[%c0_202, %c0_203] : memref<128x128xbf16, #tpu.memory_space<vmem>>, vector<128x128xbf16>
    %983 = arith.truncf %981 : vector<2x128xf32> to vector<2x128xbf16>
    %cst_204 = arith.constant dense<0.000000e+00> : vector<2x128xf32>
    %984 = tpu.matmul %983, %982, %cst_204 {dimension_numbers = #tpu.dot_dimension_numbers<[1], [0], [0], [1], [0, 0, 1, 1], [], []>} : vector<2x128xbf16>, vector<128x128xbf16>, vector<2x128xf32> -> vector<2x128xf32>
    %c0_205 = arith.constant 0 : index
    %c0_206 = arith.constant 0 : index
    %985 = vector.load %arg17[%c0_205, %c0_206] : memref<1x128xf32, #tpu.memory_space<vmem>>, vector<1x128xf32>
    %986 = vector.broadcast %985 : vector<1x128xf32> to vector<2x128xf32>
    %987 = arith.addf %984, %986 : vector<2x128xf32>
    %c0_207 = arith.constant 0 : index
    %c0_208 = arith.constant 0 : index
    %988 = vector.load %arg18[%c0_207, %c0_208] : memref<128x64xf32, #tpu.memory_space<vmem>>, vector<128x64xf32>
    %cst_209 = arith.constant dense<0.000000e+00> : vector<2x64xf32>
    %989 = tpu.matmul %987, %988, %cst_209 {dimension_numbers = #tpu.dot_dimension_numbers<[1], [0], [0], [1], [0, 0, 1, 1], [], []>} : vector<2x128xf32>, vector<128x64xf32>, vector<2x64xf32> -> vector<2x64xf32>
    %c0_210 = arith.constant 0 : index
    %c0_211 = arith.constant 0 : index
    %990 = vector.load %arg19[%c0_210, %c0_211] : memref<1x64xf32, #tpu.memory_space<vmem>>, vector<1x64xf32>
    %991 = vector.broadcast %990 : vector<1x64xf32> to vector<2x64xf32>
    %992 = arith.addf %989, %991 : vector<2x64xf32>
    %cst_212 = arith.constant 0.000000e+00 : f32
    %993 = vector.broadcast %cst_212 : f32 to vector<2x64xf32>
    %994 = arith.maximumf %992, %993 : vector<2x64xf32>
    %c0_213 = arith.constant 0 : index
    %c0_214 = arith.constant 0 : index
    %995 = vector.load %arg20[%c0_213, %c0_214] : memref<64x32xf32, #tpu.memory_space<vmem>>, vector<64x32xf32>
    %cst_215 = arith.constant dense<0.000000e+00> : vector<2x32xf32>
    %996 = tpu.matmul %994, %995, %cst_215 {dimension_numbers = #tpu.dot_dimension_numbers<[1], [0], [0], [1], [0, 0, 1, 1], [], []>} : vector<2x64xf32>, vector<64x32xf32>, vector<2x32xf32> -> vector<2x32xf32>
    %c0_216 = arith.constant 0 : index
    %c0_217 = arith.constant 0 : index
    %997 = vector.load %arg21[%c0_216, %c0_217] : memref<1x32xf32, #tpu.memory_space<vmem>>, vector<1x32xf32>
    %998 = vector.broadcast %997 : vector<1x32xf32> to vector<2x32xf32>
    %999 = arith.addf %996, %998 : vector<2x32xf32>
    %cst_218 = arith.constant 0.000000e+00 : f32
    %1000 = vector.broadcast %cst_218 : f32 to vector<2x32xf32>
    %1001 = arith.maximumf %999, %1000 : vector<2x32xf32>
    %c0_219 = arith.constant 0 : index
    %c0_220 = arith.constant 0 : index
    %1002 = vector.load %arg22[%c0_219, %c0_220] : memref<32x1xf32, #tpu.memory_space<vmem>>, vector<32x1xf32>
    %cst_221 = arith.constant dense<0.000000e+00> : vector<2x1xf32>
    %1003 = tpu.matmul %1001, %1002, %cst_221 {dimension_numbers = #tpu.dot_dimension_numbers<[1], [0], [0], [1], [0, 0, 1, 1], [], []>} : vector<2x32xf32>, vector<32x1xf32>, vector<2x1xf32> -> vector<2x1xf32>
    %c0_222 = arith.constant 0 : index
    %c0_223 = arith.constant 0 : index
    %1004 = vector.load %arg23[%c0_222, %c0_223] : memref<1x1xf32, #tpu.memory_space<vmem>>, vector<1x1xf32>
    %1005 = vector.broadcast %1004 : vector<1x1xf32> to vector<2x1xf32>
    %1006 = arith.addf %1003, %1005 : vector<2x1xf32>
    %c0_224 = arith.constant 0 : index
    %c0_225 = arith.constant 0 : index
    %1007 = vector.load %arg28[%c0_224, %c0_225] : memref<2x1xf32, #tpu.memory_space<vmem>>, vector<2x1xf32>
    tpu.vector_store %arg28[%c0_224, %c0_225], %1006 {strides = array<i32>} : memref<2x1xf32, #tpu.memory_space<vmem>>, vector<2x1xf32>,
    %c0_226 = arith.constant 0 : index
    %c0_227 = arith.constant 0 : index
    %1008 = vector.load %arg24[%c0_226, %c0_227] : memref<128x32xf32, #tpu.memory_space<vmem>>, vector<128x32xf32>
    %cst_228 = arith.constant dense<0.000000e+00> : vector<2x32xf32>
    %1009 = tpu.matmul %987, %1008, %cst_228 {dimension_numbers = #tpu.dot_dimension_numbers<[1], [0], [0], [1], [0, 0, 1, 1], [], []>} : vector<2x128xf32>, vector<128x32xf32>, vector<2x32xf32> -> vector<2x32xf32>
    %c0_229 = arith.constant 0 : index
    %c0_230 = arith.constant 0 : index
    %1010 = vector.load %arg25[%c0_229, %c0_230] : memref<1x32xf32, #tpu.memory_space<vmem>>, vector<1x32xf32>
    %1011 = vector.broadcast %1010 : vector<1x32xf32> to vector<2x32xf32>
    %1012 = arith.addf %1009, %1011 : vector<2x32xf32>
    %cst_231 = arith.constant 0.000000e+00 : f32
    %1013 = vector.broadcast %cst_231 : f32 to vector<2x32xf32>
    %1014 = arith.maximumf %1012, %1013 : vector<2x32xf32>
    %c0_232 = arith.constant 0 : index
    %c0_233 = arith.constant 0 : index
    %1015 = vector.load %arg26[%c0_232, %c0_233] : memref<32x1xf32, #tpu.memory_space<vmem>>, vector<32x1xf32>
    %cst_234 = arith.constant dense<0.000000e+00> : vector<2x1xf32>
    %1016 = tpu.matmul %1014, %1015, %cst_234 {dimension_numbers = #tpu.dot_dimension_numbers<[1], [0], [0], [1], [0, 0, 1, 1], [], []>} : vector<2x32xf32>, vector<32x1xf32>, vector<2x1xf32> -> vector<2x1xf32>
    %c0_235 = arith.constant 0 : index
    %c0_236 = arith.constant 0 : index
    %1017 = vector.load %arg27[%c0_235, %c0_236] : memref<1x1xf32, #tpu.memory_space<vmem>>, vector<1x1xf32>
    %1018 = vector.broadcast %1017 : vector<1x1xf32> to vector<2x1xf32>
    %1019 = arith.addf %1016, %1018 : vector<2x1xf32>
    %cst_237 = arith.constant 0.000000e+00 : f32
    %1020 = vector.broadcast %cst_237 : f32 to vector<2x1xf32>
    %1021 = arith.maximumf %1019, %1020 : vector<2x1xf32>
    %1022 = vector.broadcast %cst_237 : f32 to vector<2x1xf32>
    %1023 = arith.subf %1019, %1022 : vector<2x1xf32>
    %1024 = arith.cmpf one, %1023, %1023 : vector<2x1xf32>
    %1025 = vector.broadcast %cst_237 : f32 to vector<2x1xf32>
    %1026 = arith.addf %1019, %1025 : vector<2x1xf32>
    %1027 = math.absf %1023 : vector<2x1xf32>
    %cst_238 = arith.constant 0.000000e+00 : f32
    %1028 = vector.broadcast %cst_238 : f32 to vector<2x1xf32>
    %1029 = arith.subf %1028, %1027 : vector<2x1xf32>
    %1030 = math.exp %1029 : vector<2x1xf32>
    %1031 = math.log1p %1030 : vector<2x1xf32>
    %1032 = arith.addf %1021, %1031 : vector<2x1xf32>
    %1033 = arith.select %1024, %1026, %1032 : vector<2x1xi1>, vector<2x1xf32>
    %c0_239 = arith.constant 0 : index
    %c0_240 = arith.constant 0 : index
    %1034 = vector.load %arg29[%c0_239, %c0_240] : memref<2x1xf32, #tpu.memory_space<vmem>>, vector<2x1xf32>
    tpu.vector_store %arg29[%c0_239, %c0_240], %1033 {strides = array<i32>} : memref<2x1xf32, #tpu.memory_space<vmem>>, vector<2x1xf32>,
    return
  }
}

</mosaic_0001>

<llo_original>
// kernel: lstm_predictor_forward.1
$region0: #{lstm_predictor_forward.1}
  #allocation0 [shape = 'u32[]', space=smem, size = 0x4, offset = 0x4, fixed_abs, tag = 'smem constant byte address 0x4 - core index']
  #allocation1 [shape = 'u32[72,128]{1,0:T(1,128)}', space=vmem, size = 0x9000, scoped, tag = 'internal scratch']
  #allocation2 [shape = 'f32[2,8,128]{2,1,0:T(8,128)}', space=vmem, size = 0x2000, scoped, tag = 'scratch operand']
  #allocation3 [shape = 'f32[1,1]{1,0:T(1,128)S(1)}', space=vmem, size = 0x200, scoped, tag = 'scoped memory for lstm_predictor_forward.1']
  #allocation4 [shape = 'f32[1,1]{1,0:T(1,128)S(1)}', space=vmem, size = 0x200, scoped, tag = 'scoped memory for lstm_predictor_forward.1']
  %s0 = inlined_call_operand.smem [shape: u32[31], index: -1, kind: input, shape index: {}]
  %s1 = sld [smem:[%s0]]
  %s2 = scalar_lea.smem %s0, 1
  %s3 = sld [smem:[%s2]]
  %s4 = scalar_lea.smem %s0, 2
  %s5 = sld [smem:[%s4]]
  %s6 = scalar_lea.smem %s0, 3
  %s7 = sld [smem:[%s6]]
  %s8 = scalar_lea.smem %s0, 4
  %s9 = sld [smem:[%s8]]
  %s10 = scalar_lea.smem %s0, 5
  %s11 = sld [smem:[%s10]]
  %s12 = scalar_lea.smem %s0, 6
  %s13 = sld [smem:[%s12]]
  %s14 = scalar_lea.smem %s0, 7
  %s15 = sld [smem:[%s14]]
  %s16 = scalar_lea.smem %s0, 8
  %s17 = sld [smem:[%s16]]
  %s18 = scalar_lea.smem %s0, 9
  %s19 = sld [smem:[%s18]]
  %s20 = scalar_lea.smem %s0, 10
  %s21 = sld [smem:[%s20]]
  %s22 = scalar_lea.smem %s0, 11
  %s23 = sld [smem:[%s22]]
  %s24 = scalar_lea.smem %s0, 12
  %s25 = sld [smem:[%s24]]
  %s26 = scalar_lea.smem %s0, 13
  %s27 = sld [smem:[%s26]]
  %s28 = scalar_lea.smem %s0, 14
  %s29 = sld [smem:[%s28]]
  %s30 = scalar_lea.smem %s0, 15
  %s31 = sld [smem:[%s30]]
  %s32 = scalar_lea.smem %s0, 16
  %s33 = sld [smem:[%s32]]
  %s34 = scalar_lea.smem %s0, 17
  %s35 = sld [smem:[%s34]]
  %s36 = scalar_lea.smem %s0, 18
  %s37 = sld [smem:[%s36]]
  %s38 = scalar_lea.smem %s0, 19
  %s39 = sld [smem:[%s38]]
  %s40 = scalar_lea.smem %s0, 20
  %s41 = sld [smem:[%s40]]
  %s42 = scalar_lea.smem %s0, 21
  %s43 = sld [smem:[%s42]]
  %s44 = scalar_lea.smem %s0, 22
  %s45 = sld [smem:[%s44]]
  %s46 = scalar_lea.smem %s0, 23
  %s47 = sld [smem:[%s46]]
  %s48 = scalar_lea.smem %s0, 24
  %s49 = sld [smem:[%s48]]
  %s50 = scalar_lea.smem %s0, 25
  %s51 = sld [smem:[%s50]]
  %s52 = scalar_lea.smem %s0, 26
  %s53 = sld [smem:[%s52]]
  %s54 = scalar_lea.smem %s0, 27
  %s55 = sld [smem:[%s54]]
  %s56 = scalar_lea.smem %s0, 28
  %s57 = sld [smem:[%s56]]
  %s58 = scalar_lea.smem %s0, 29
  %s59 = sld [smem:[%s58]]
  %s60 = scalar_lea.smem %s0, 30
  %s61 = sld [smem:[%s60]]
  %62 = xla_tuple %s57, %s59, %s61
  %s63 = sld [smem:[#allocation0]]
  $region198: #{lstm_predictor_forward.1} parent=0
    _
  %s65 = ssub.s32 1, %s63
  %s66 = scalar_select 0, %s65, %s63
  %v67 = vstv %s47
  %68 = vst [vmem:[#allocation3] sm:$0x1] %v67
  %v69 = vstv %s55
  %70 = vst [vmem:[#allocation4] sm:$0x1] %v69
  $region1: #{lstm_predictor_forward.1} parent=0
    #allocation5 [shape = 'u8[16384]{0}', space=vmem, size = 0x4000, scoped, tag = 'input window, operand 1, single buffered']
    #allocation6 [shape = 's32[1]{0}', space=sflag, size = 0x4, scoped, tag = 'scoped memory for lstm_predictor_forward.1']
    #allocation7 [shape = 's32[1]{0}', space=sflag, size = 0x4, scoped, tag = 'scoped memory for lstm_predictor_forward.1']
    #allocation8 [shape = 'u8[2048]{0}', space=vmem, size = 0x800, scoped, tag = 'input window, operand 3, single buffered']
    #allocation9 [shape = 's32[1]{0}', space=sflag, size = 0x4, scoped, tag = 'scoped memory for lstm_predictor_forward.1']
    #allocation10 [shape = 'u8[131072]{0}', space=vmem, size = 0x20000, scoped, tag = 'input window, operand 5, single buffered']
    #allocation11 [shape = 'u8[131072]{0}', space=vmem, size = 0x20000, scoped, tag = 'input window, operand 7, single buffered']
    #allocation12 [shape = 's32[1]{0}', space=sflag, size = 0x4, scoped, tag = 'scoped memory for lstm_predictor_forward.1']
    #allocation13 [shape = 'u8[131072]{0}', space=vmem, size = 0x20000, scoped, tag = 'input window, operand 8, single buffered']
    #allocation14 [shape = 'u8[32768]{0}', space=vmem, size = 0x8000, scoped, tag = 'input window, operand 10, single buffered']
    #allocation15 [shape = 's32[1]{0}', space=sflag, size = 0x4, scoped, tag = 'scoped memory for lstm_predictor_forward.1']
    #allocation16 [shape = 'u8[32768]{0}', space=vmem, size = 0x8000, scoped, tag = 'input window, operand 11, single buffered']
    #allocation17 [shape = 'u8[32768]{0}', space=vmem, size = 0x8000, scoped, tag = 'input window, operand 12, single buffered']
    #allocation18 [shape = 's32[1]{0}', space=sflag, size = 0x4, scoped, tag = 'scoped memory for lstm_predictor_forward.1']
    #allocation19 [shape = 'u8[512]{0}', space=vmem, size = 0x400, scoped, tag = 'input window, operand 14, single buffered']
    #allocation20 [shape = 'u8[512]{0}', space=vmem, size = 0x400, scoped, tag = 'input window, operand 15, single buffered']
    #allocation21 [shape = 's32[1]{0}', space=sflag, size = 0x4, scoped, tag = 'scoped memory for lstm_predictor_forward.1']
    #allocation22 [shape = 'u8[32768]{0}', space=vmem, size = 0x8000, scoped, tag = 'input window, operand 16, single buffered']
    #allocation23 [shape = 'u8[512]{0}', space=vmem, size = 0x400, scoped, tag = 'input window, operand 17, single buffered']
    #allocation24 [shape = 's32[1]{0}', space=sflag, size = 0x4, scoped, tag = 'scoped memory for lstm_predictor_forward.1']
    #allocation25 [shape = 'u8[512]{0}', space=vmem, size = 0x400, scoped, tag = 'input window, operand 19, single buffered']
    #allocation26 [shape = 'u8[512]{0}', space=vmem, size = 0x400, scoped, tag = 'input window, operand 21, single buffered']
    #allocation27 [shape = 's32[1]{0}', space=sflag, size = 0x4, scoped, tag = 'scoped memory for lstm_predictor_forward.1']
    #allocation28 [shape = 'u8[512]{0}', space=vmem, size = 0x400, scoped, tag = 'input window, operand 25, single buffered']
    #allocation29 [shape = 'u8[8192]{0}', space=vmem, size = 0x2000, scoped, tag = 'output window, operand 2, single buffered']
    %71 = vsyncpa [#allocation6], 0
    %72 = vsyncpa [#allocation9], 0
    %73 = vsyncpa [#allocation12], 0
    %74 = vsyncpa [#allocation15], 0
    %75 = vsyncpa [#allocation18], 0
    %76 = vsyncpa [#allocation21], 0
    %77 = vsyncpa [#allocation24], 0
    %78 = vsyncpa [#allocation27], 0
    %79 = vsyncpa [#allocation7], 0
    // Predicated region
    $region2: #{lstm_predictor_forward.1} parent=1 // pred_check
      _
    $region3: #{lstm_predictor_forward.1} parent=1 // pred_check_branch
      %81 = sbr.rel (0) target = $region5
    $region4: #{lstm_predictor_forward.1} parent=1 // pred_region
      _
    $region5: #{lstm_predictor_forward.1} parent=1 // pred_fallthru
      _
    // Predicated region
    $region6: #{lstm_predictor_forward.1} parent=1 // pred_check
      _
    $region7: #{lstm_predictor_forward.1} parent=1 // pred_check_branch
      %83 = sbr.rel (0) target = $region9
    $region8: #{lstm_predictor_forward.1} parent=1 // pred_region
      %85 = vsyncadd [#allocation6], 0
      %s86 = sshll.u32 %s3, 4
      %s87 = int_to_ptr.hbm [resolvable:$true] %s86
      %s88 = sshll.u32 [#allocation5], 4
      %s89 = int_to_ptr.vmem [resolvable:$true] %s88
      %94 = dma.hbm_to_vmem [thread:$0]  %s87, 512, %s89, [#allocation6], 256, 256, 16
    $region9: #{lstm_predictor_forward.1} parent=1 // pred_fallthru
      _
    // Predicated region
    $region10: #{lstm_predictor_forward.1} parent=1 // pred_check
      _
    $region11: #{lstm_predictor_forward.1} parent=1 // pred_check_branch
      %96 = sbr.rel (0) target = $region13
    $region12: #{lstm_predictor_forward.1} parent=1 // pred_region
      _
    $region13: #{lstm_predictor_forward.1} parent=1 // pred_fallthru
      _
    // Predicated region
    $region14: #{lstm_predictor_forward.1} parent=1 // pred_check
      _
    $region15: #{lstm_predictor_forward.1} parent=1 // pred_check_branch
      %98 = sbr.rel (0) target = $region17
    $region16: #{lstm_predictor_forward.1} parent=1 // pred_region
      %100 = vsyncadd [#allocation9], 0
      %s102 = sshll.u32 %s7, 4
      %s103 = int_to_ptr.hbm [resolvable:$true] %s102
      %s104 = sshll.u32 [#allocation8], 4
      %s105 = int_to_ptr.vmem [resolvable:$true] %s104
      %107 = dma.hbm_to_vmem [thread:$0]  %s103, 64, %s105, [#allocation9]
    $region17: #{lstm_predictor_forward.1} parent=1 // pred_fallthru
      _
    // Predicated region
    $region18: #{lstm_predictor_forward.1} parent=1 // pred_check
      _
    $region19: #{lstm_predictor_forward.1} parent=1 // pred_check_branch
      %109 = sbr.rel (0) target = $region21
    $region20: #{lstm_predictor_forward.1} parent=1 // pred_region
      _
    $region21: #{lstm_predictor_forward.1} parent=1 // pred_fallthru
      _
    // Predicated region
    $region22: #{lstm_predictor_forward.1} parent=1 // pred_check
      _
    $region23: #{lstm_predictor_forward.1} parent=1 // pred_check_branch
      %111 = sbr.rel (0) target = $region25
    $region24: #{lstm_predictor_forward.1} parent=1 // pred_region
      %113 = vsyncadd [#allocation9], 0
      %s114 = sshll.u32 %s11, 4
      %s115 = int_to_ptr.hbm [resolvable:$true] %s114
      %s116 = sshll.u32 [#allocation10], 4
      %s117 = int_to_ptr.vmem [resolvable:$true] %s116
      %122 = dma.hbm_to_vmem [thread:$0]  %s115, 4096, %s117, [#allocation9], 256, 256, 16
    $region25: #{lstm_predictor_forward.1} parent=1 // pred_fallthru
      _
    // Predicated region
    $region26: #{lstm_predictor_forward.1} parent=1 // pred_check
      _
    $region27: #{lstm_predictor_forward.1} parent=1 // pred_check_branch
      %124 = sbr.rel (0) target = $region29
    $region28: #{lstm_predictor_forward.1} parent=1 // pred_region
      _
    $region29: #{lstm_predictor_forward.1} parent=1 // pred_fallthru
      _
    // Predicated region
    $region30: #{lstm_predictor_forward.1} parent=1 // pred_check
      _
    $region31: #{lstm_predictor_forward.1} parent=1 // pred_check_branch
      %126 = sbr.rel (0) target = $region33
    $region32: #{lstm_predictor_forward.1} parent=1 // pred_region
      %128 = vsyncadd [#allocation12], 0
      %s129 = sshll.u32 %s15, 4
      %s130 = int_to_ptr.hbm [resolvable:$true] %s129
      %s131 = sshll.u32 [#allocation11], 4
      %s132 = int_to_ptr.vmem [resolvable:$true] %s131
      %137 = dma.hbm_to_vmem [thread:$0]  %s130, 4096, %s132, [#allocation12], 256, 256, 16
    $region33: #{lstm_predictor_forward.1} parent=1 // pred_fallthru
      _
    // Predicated region
    $region34: #{lstm_predictor_forward.1} parent=1 // pred_check
      _
    $region35: #{lstm_predictor_forward.1} parent=1 // pred_check_branch
      %139 = sbr.rel (0) target = $region37
    $region36: #{lstm_predictor_forward.1} parent=1 // pred_region
      %141 = vsyncadd [#allocation12], 0
      %s142 = sshll.u32 %s17, 4
      %s143 = int_to_ptr.hbm [resolvable:$true] %s142
      %s144 = sshll.u32 [#allocation13], 4
      %s145 = int_to_ptr.vmem [resolvable:$true] %s144
      %150 = dma.hbm_to_vmem [thread:$0]  %s143, 4096, %s145, [#allocation12], 256, 256, 16
    $region37: #{lstm_predictor_forward.1} parent=1 // pred_fallthru
      _
    // Predicated region
    $region38: #{lstm_predictor_forward.1} parent=1 // pred_check
      _
    $region39: #{lstm_predictor_forward.1} parent=1 // pred_check_branch
      %152 = sbr.rel (0) target = $region41
    $region40: #{lstm_predictor_forward.1} parent=1 // pred_region
      _
    $region41: #{lstm_predictor_forward.1} parent=1 // pred_fallthru
      _
    // Predicated region
    $region42: #{lstm_predictor_forward.1} parent=1 // pred_check
      _
    $region43: #{lstm_predictor_forward.1} parent=1 // pred_check_branch
      %154 = sbr.rel (0) target = $region45
    $region44: #{lstm_predictor_forward.1} parent=1 // pred_region
      %156 = vsyncadd [#allocation15], 0
      %s157 = sshll.u32 %s21, 4
      %s158 = int_to_ptr.hbm [resolvable:$true] %s157
      %s159 = sshll.u32 [#allocation14], 4
      %s160 = int_to_ptr.vmem [resolvable:$true] %s159
      %165 = dma.hbm_to_vmem [thread:$0]  %s158, 1024, %s160, [#allocation15], 64, 64, 4
    $region45: #{lstm_predictor_forward.1} parent=1 // pred_fallthru
      _
    // Predicated region
    $region46: #{lstm_predictor_forward.1} parent=1 // pred_check
      _
    $region47: #{lstm_predictor_forward.1} parent=1 // pred_check_branch
      %167 = sbr.rel (0) target = $region49
    $region48: #{lstm_predictor_forward.1} parent=1 // pred_region
      %169 = vsyncadd [#allocation15], 0
      %s170 = sshll.u32 %s23, 4
      %s171 = int_to_ptr.hbm [resolvable:$true] %s170
      %s172 = sshll.u32 [#allocation16], 4
      %s173 = int_to_ptr.vmem [resolvable:$true] %s172
      %178 = dma.hbm_to_vmem [thread:$0]  %s171, 1024, %s173, [#allocation15], 64, 64, 4
    $region49: #{lstm_predictor_forward.1} parent=1 // pred_fallthru
      _
    // Predicated region
    $region50: #{lstm_predictor_forward.1} parent=1 // pred_check
      _
    $region51: #{lstm_predictor_forward.1} parent=1 // pred_check_branch
      %180 = sbr.rel (0) target = $region53
    $region52: #{lstm_predictor_forward.1} parent=1 // pred_region
      %182 = vsyncadd [#allocation18], 0
      %s183 = sshll.u32 %s25, 4
      %s184 = int_to_ptr.hbm [resolvable:$true] %s183
      %s185 = sshll.u32 [#allocation17], 4
      %s186 = int_to_ptr.vmem [resolvable:$true] %s185
      %191 = dma.hbm_to_vmem [thread:$0]  %s184, 1024, %s186, [#allocation18], 64, 64, 4
    $region53: #{lstm_predictor_forward.1} parent=1 // pred_fallthru
      _
    // Predicated region
    $region54: #{lstm_predictor_forward.1} parent=1 // pred_check
      _
    $region55: #{lstm_predictor_forward.1} parent=1 // pred_check_branch
      %193 = sbr.rel (0) target = $region57
    $region56: #{lstm_predictor_forward.1} parent=1 // pred_region
      _
    $region57: #{lstm_predictor_forward.1} parent=1 // pred_fallthru
      _
    // Predicated region
    $region58: #{lstm_predictor_forward.1} parent=1 // pred_check
      _
    $region59: #{lstm_predictor_forward.1} parent=1 // pred_check_branch
      %195 = sbr.rel (0) target = $region61
    $region60: #{lstm_predictor_forward.1} parent=1 // pred_region
      %197 = vsyncadd [#allocation18], 0
      %s199 = sshll.u32 %s29, 4
      %s200 = int_to_ptr.hbm [resolvable:$true] %s199
      %s201 = sshll.u32 [#allocation19], 4
      %s202 = int_to_ptr.vmem [resolvable:$true] %s201
      %204 = dma.hbm_to_vmem [thread:$0]  %s200, 16, %s202, [#allocation18]
    $region61: #{lstm_predictor_forward.1} parent=1 // pred_fallthru
      _
    // Predicated region
    $region62: #{lstm_predictor_forward.1} parent=1 // pred_check
      _
    $region63: #{lstm_predictor_forward.1} parent=1 // pred_check_branch
      %206 = sbr.rel (0) target = $region65
    $region64: #{lstm_predictor_forward.1} parent=1 // pred_region
      %208 = vsyncadd [#allocation21], 0
      %s210 = sshll.u32 %s31, 4
      %s211 = int_to_ptr.hbm [resolvable:$true] %s210
      %s212 = sshll.u32 [#allocation20], 4
      %s213 = int_to_ptr.vmem [resolvable:$true] %s212
      %215 = dma.hbm_to_vmem [thread:$0]  %s211, 16, %s213, [#allocation21]
    $region65: #{lstm_predictor_forward.1} parent=1 // pred_fallthru
      _
    // Predicated region
    $region66: #{lstm_predictor_forward.1} parent=1 // pred_check
      _
    $region67: #{lstm_predictor_forward.1} parent=1 // pred_check_branch
      %217 = sbr.rel (0) target = $region69
    $region68: #{lstm_predictor_forward.1} parent=1 // pred_region
      %219 = vsyncadd [#allocation21], 0
      %s220 = sshll.u32 %s33, 4
      %s221 = int_to_ptr.hbm [resolvable:$true] %s220
      %s222 = sshll.u32 [#allocation22], 4
      %s223 = int_to_ptr.vmem [resolvable:$true] %s222
      %228 = dma.hbm_to_vmem [thread:$0]  %s221, 1024, %s223, [#allocation21], 64, 64, 4
    $region69: #{lstm_predictor_forward.1} parent=1 // pred_fallthru
      _
    // Predicated region
    $region70: #{lstm_predictor_forward.1} parent=1 // pred_check
      _
    $region71: #{lstm_predictor_forward.1} parent=1 // pred_check_branch
      %230 = sbr.rel (0) target = $region73
    $region72: #{lstm_predictor_forward.1} parent=1 // pred_region
      %232 = vsyncadd [#allocation24], 0
      %s234 = sshll.u32 %s35, 4
      %s235 = int_to_ptr.hbm [resolvable:$true] %s234
      %s236 = sshll.u32 [#allocation23], 4
      %s237 = int_to_ptr.vmem [resolvable:$true] %s236
      %239 = dma.hbm_to_vmem [thread:$0]  %s235, 16, %s237, [#allocation24]
    $region73: #{lstm_predictor_forward.1} parent=1 // pred_fallthru
      _
    // Predicated region
    $region74: #{lstm_predictor_forward.1} parent=1 // pred_check
      _
    $region75: #{lstm_predictor_forward.1} parent=1 // pred_check_branch
      %241 = sbr.rel (0) target = $region77
    $region76: #{lstm_predictor_forward.1} parent=1 // pred_region
      _
    $region77: #{lstm_predictor_forward.1} parent=1 // pred_fallthru
      _
    // Predicated region
    $region78: #{lstm_predictor_forward.1} parent=1 // pred_check
      _
    $region79: #{lstm_predictor_forward.1} parent=1 // pred_check_branch
      %243 = sbr.rel (0) target = $region81
    $region80: #{lstm_predictor_forward.1} parent=1 // pred_region
      %245 = vsyncadd [#allocation24], 0
      %s247 = sshll.u32 %s39, 4
      %s248 = int_to_ptr.hbm [resolvable:$true] %s247
      %s249 = sshll.u32 [#allocation25], 4
      %s250 = int_to_ptr.vmem [resolvable:$true] %s249
      %252 = dma.hbm_to_vmem [thread:$0]  %s248, 16, %s250, [#allocation24]
    $region81: #{lstm_predictor_forward.1} parent=1 // pred_fallthru
      _
    // Predicated region
    $region82: #{lstm_predictor_forward.1} parent=1 // pred_check
      _
    $region83: #{lstm_predictor_forward.1} parent=1 // pred_check_branch
      %254 = sbr.rel (0) target = $region85
    $region84: #{lstm_predictor_forward.1} parent=1 // pred_region
      _
    $region85: #{lstm_predictor_forward.1} parent=1 // pred_fallthru
      _
    // Predicated region
    $region86: #{lstm_predictor_forward.1} parent=1 // pred_check
      _
    $region87: #{lstm_predictor_forward.1} parent=1 // pred_check_branch
      %256 = sbr.rel (0) target = $region89
    $region88: #{lstm_predictor_forward.1} parent=1 // pred_region
      %258 = vsyncadd [#allocation27], 0
      %s260 = sshll.u32 %s43, 4
      %s261 = int_to_ptr.hbm [resolvable:$true] %s260
      %s262 = sshll.u32 [#allocation26], 4
      %s263 = int_to_ptr.vmem [resolvable:$true] %s262
      %265 = dma.hbm_to_vmem [thread:$0]  %s261, 16, %s263, [#allocation27]
    $region89: #{lstm_predictor_forward.1} parent=1 // pred_fallthru
      _
    // Predicated region
    $region90: #{lstm_predictor_forward.1} parent=1 // pred_check
      _
    $region91: #{lstm_predictor_forward.1} parent=1 // pred_check_branch
      %267 = sbr.rel (0) target = $region93
    $region92: #{lstm_predictor_forward.1} parent=1 // pred_region
      _
    $region93: #{lstm_predictor_forward.1} parent=1 // pred_fallthru
      _
    // Predicated region
    $region94: #{lstm_predictor_forward.1} parent=1 // pred_check
      _
    $region95: #{lstm_predictor_forward.1} parent=1 // pred_check_branch
      %269 = sbr.rel (0) target = $region97
    $region96: #{lstm_predictor_forward.1} parent=1 // pred_region
      _
    $region97: #{lstm_predictor_forward.1} parent=1 // pred_fallthru
      _
    // Predicated region
    $region98: #{lstm_predictor_forward.1} parent=1 // pred_check
      _
    $region99: #{lstm_predictor_forward.1} parent=1 // pred_check_branch
      %271 = sbr.rel (0) target = $region101
    $region100: #{lstm_predictor_forward.1} parent=1 // pred_region
      _
    $region101: #{lstm_predictor_forward.1} parent=1 // pred_fallthru
      _
    // Predicated region
    $region102: #{lstm_predictor_forward.1} parent=1 // pred_check
      _
    $region103: #{lstm_predictor_forward.1} parent=1 // pred_check_branch
      %273 = sbr.rel (0) target = $region105
    $region104: #{lstm_predictor_forward.1} parent=1 // pred_region
      %275 = vsyncadd [#allocation27], 0
      %s277 = sshll.u32 %s51, 4
      %s278 = int_to_ptr.hbm [resolvable:$true] %s277
      %s279 = sshll.u32 [#allocation28], 4
      %s280 = int_to_ptr.vmem [resolvable:$true] %s279
      %282 = dma.hbm_to_vmem [thread:$0]  %s278, 16, %s280, [#allocation27]
    $region105: #{lstm_predictor_forward.1} parent=1 // pred_fallthru
      _
    // Predicated region
    $region106: #{lstm_predictor_forward.1} parent=1 // pred_check
      _
    $region107: #{lstm_predictor_forward.1} parent=1 // pred_check_branch
      %284 = sbr.rel (0) target = $region109
    $region108: #{lstm_predictor_forward.1} parent=1 // pred_region
      _
    $region109: #{lstm_predictor_forward.1} parent=1 // pred_fallthru
      _
    // Predicated region
    $region110: #{lstm_predictor_forward.1} parent=1 // pred_check
      _
    $region111: #{lstm_predictor_forward.1} parent=1 // pred_check_branch
      %286 = sbr.rel (0) target = $region113
    $region112: #{lstm_predictor_forward.1} parent=1 // pred_region
      _
    $region113: #{lstm_predictor_forward.1} parent=1 // pred_fallthru
      _
    // Predicated region
    $region114: #{lstm_predictor_forward.1} parent=1 // pred_check
      _
    $region115: #{lstm_predictor_forward.1} parent=1 // pred_check_branch
      %288 = sbr.rel (0) target = $region117
    $region116: #{lstm_predictor_forward.1} parent=1 // pred_region
      %290 = dma.done [#allocation6], 512
    $region117: #{lstm_predictor_forward.1} parent=1 // pred_fallthru
      _
    // Predicated region
    $region118: #{lstm_predictor_forward.1} parent=1 // pred_check
      _
    $region119: #{lstm_predictor_forward.1} parent=1 // pred_check_branch
      %292 = sbr.rel (0) target = $region121
    $region120: #{lstm_predictor_forward.1} parent=1 // pred_region
      %294 = dma.done [#allocation9], 64
    $region121: #{lstm_predictor_forward.1} parent=1 // pred_fallthru
      _
    // Predicated region
    $region122: #{lstm_predictor_forward.1} parent=1 // pred_check
      _
    $region123: #{lstm_predictor_forward.1} parent=1 // pred_check_branch
      %296 = sbr.rel (0) target = $region125
    $region124: #{lstm_predictor_forward.1} parent=1 // pred_region
      %298 = dma.done [#allocation9], 4096
    $region125: #{lstm_predictor_forward.1} parent=1 // pred_fallthru
      _
    // Predicated region
    $region126: #{lstm_predictor_forward.1} parent=1 // pred_check
      _
    $region127: #{lstm_predictor_forward.1} parent=1 // pred_check_branch
      %300 = sbr.rel (0) target = $region129
    $region128: #{lstm_predictor_forward.1} parent=1 // pred_region
      %302 = dma.done [#allocation12], 4096
    $region129: #{lstm_predictor_forward.1} parent=1 // pred_fallthru
      _
    // Predicated region
    $region130: #{lstm_predictor_forward.1} parent=1 // pred_check
      _
    $region131: #{lstm_predictor_forward.1} parent=1 // pred_check_branch
      %304 = sbr.rel (0) target = $region133
    $region132: #{lstm_predictor_forward.1} parent=1 // pred_region
      %306 = dma.done [#allocation12], 4096
    $region133: #{lstm_predictor_forward.1} parent=1 // pred_fallthru
      _
    // Predicated region
    $region134: #{lstm_predictor_forward.1} parent=1 // pred_check
      _
    $region135: #{lstm_predictor_forward.1} parent=1 // pred_check_branch
      %308 = sbr.rel (0) target = $region137
    $region136: #{lstm_predictor_forward.1} parent=1 // pred_region
      %310 = dma.done [#allocation15], 1024
    $region137: #{lstm_predictor_forward.1} parent=1 // pred_fallthru
      _
    // Predicated region
    $region138: #{lstm_predictor_forward.1} parent=1 // pred_check
      _
    $region139: #{lstm_predictor_forward.1} parent=1 // pred_check_branch
      %312 = sbr.rel (0) target = $region141
    $region140: #{lstm_predictor_forward.1} parent=1 // pred_region
      %314 = dma.done [#allocation15], 1024
    $region141: #{lstm_predictor_forward.1} parent=1 // pred_fallthru
      _
    // Predicated region
    $region142: #{lstm_predictor_forward.1} parent=1 // pred_check
      _
    $region143: #{lstm_predictor_forward.1} parent=1 // pred_check_branch
      %316 = sbr.rel (0) target = $region145
    $region144: #{lstm_predictor_forward.1} parent=1 // pred_region
      %318 = dma.done [#allocation18], 1024
    $region145: #{lstm_predictor_forward.1} parent=1 // pred_fallthru
      _
    // Predicated region
    $region146: #{lstm_predictor_forward.1} parent=1 // pred_check
      _
    $region147: #{lstm_predictor_forward.1} parent=1 // pred_check_branch
      %320 = sbr.rel (0) target = $region149
    $region148: #{lstm_predictor_forward.1} parent=1 // pred_region
      %322 = dma.done [#allocation18], 16
    $region149: #{lstm_predictor_forward.1} parent=1 // pred_fallthru
      _
    // Predicated region
    $region150: #{lstm_predictor_forward.1} parent=1 // pred_check
      _
    $region151: #{lstm_predictor_forward.1} parent=1 // pred_check_branch
      %324 = sbr.rel (0) target = $region153
    $region152: #{lstm_predictor_forward.1} parent=1 // pred_region
      %326 = dma.done [#allocation21], 16
    $region153: #{lstm_predictor_forward.1} parent=1 // pred_fallthru
      _
    // Predicated region
    $region154: #{lstm_predictor_forward.1} parent=1 // pred_check
      _
    $region155: #{lstm_predictor_forward.1} parent=1 // pred_check_branch
      %328 = sbr.rel (0) target = $region157
    $region156: #{lstm_predictor_forward.1} parent=1 // pred_region
      %330 = dma.done [#allocation21], 1024
    $region157: #{lstm_predictor_forward.1} parent=1 // pred_fallthru
      _
    // Predicated region
    $region158: #{lstm_predictor_forward.1} parent=1 // pred_check
      _
    $region159: #{lstm_predictor_forward.1} parent=1 // pred_check_branch
      %332 = sbr.rel (0) target = $region161
    $region160: #{lstm_predictor_forward.1} parent=1 // pred_region
      %334 = dma.done [#allocation24], 16
    $region161: #{lstm_predictor_forward.1} parent=1 // pred_fallthru
      _
    // Predicated region
    $region162: #{lstm_predictor_forward.1} parent=1 // pred_check
      _
    $region163: #{lstm_predictor_forward.1} parent=1 // pred_check_branch
      %336 = sbr.rel (0) target = $region165
    $region164: #{lstm_predictor_forward.1} parent=1 // pred_region
      %338 = dma.done [#allocation24], 16
    $region165: #{lstm_predictor_forward.1} parent=1 // pred_fallthru
      _
    // Predicated region
    $region166: #{lstm_predictor_forward.1} parent=1 // pred_check
      _
    $region167: #{lstm_predictor_forward.1} parent=1 // pred_check_branch
      %340 = sbr.rel (0) target = $region169
    $region168: #{lstm_predictor_forward.1} parent=1 // pred_region
      %342 = dma.done [#allocation27], 16
    $region169: #{lstm_predictor_forward.1} parent=1 // pred_fallthru
      _
    // Predicated region
    $region170: #{lstm_predictor_forward.1} parent=1 // pred_check
      _
    $region171: #{lstm_predictor_forward.1} parent=1 // pred_check_branch
      %344 = sbr.rel (0) target = $region173
    $region172: #{lstm_predictor_forward.1} parent=1 // pred_region
      %346 = dma.done [#allocation27], 16
    $region173: #{lstm_predictor_forward.1} parent=1 // pred_fallthru
      _
    %v348 = vld [vmem:[%s1] sm:$0x1]
    %v349 = vld [vmem:[%s1 + $0x8] sm:$0x1]
    %v350 = vld [vmem:[%s1 + $0x1] sm:$0x1]
    %v351 = vld [vmem:[%s1 + $0x9] sm:$0x1]
    %v352 = vld [vmem:[%s1 + $0x2] sm:$0x1]
    %v353 = vld [vmem:[%s1 + $0xa] sm:$0x1]
    %v354 = vld [vmem:[%s1 + $0x3] sm:$0x1]
    %v355 = vld [vmem:[%s1 + $0xb] sm:$0x1]
    %v356 = vld [vmem:[%s1 + $0x4] sm:$0x1]
    %v357 = vld [vmem:[%s1 + $0xc] sm:$0x1]
    %v358 = vld [vmem:[%s1 + $0x5] sm:$0x1]
    %v359 = vld [vmem:[%s1 + $0xd] sm:$0x1]
    %v360 = vld [vmem:[%s1 + $0x6] sm:$0x1]
    %v361 = vld [vmem:[%s1 + $0xe] sm:$0x1]
    %v362 = vld [vmem:[%s1 + $0x7] sm:$0x1]
    %v363 = vld [vmem:[%s1 + $0xf] sm:$0x1]
    %v366 = vrot.slane %v349, 7
    %vm367 = vcmask 1041409
    %v368 = vsel %vm367, %v366, %v348
    %v372 = vrot.slane %v350, 6
    %v373 = vrot.slane %v351, 5
    %vm374 = vcmask 1043459
    %v375 = vsel %vm374, %v373, %v372
    %v379 = vrot.slane %v352, 4
    %v380 = vrot.slane %v353, 3
    %vm381 = vcmask 1045509
    %v382 = vsel %vm381, %v380, %v379
    %v386 = vrot.slane %v354, 2
    %v387 = vrot.slane %v355, 1
    %vm388 = vcmask 1047559
    %v389 = vsel %vm388, %v387, %v386
    %v393 = vrot.slane %v357, 7
    %v394 = vsel %vm367, %v393, %v356
    %v398 = vrot.slane %v358, 6
    %v399 = vrot.slane %v359, 5
    %v400 = vsel %vm374, %v399, %v398
    %v404 = vrot.slane %v360, 4
    %v405 = vrot.slane %v361, 3
    %v406 = vsel %vm381, %v405, %v404
    %v410 = vrot.slane %v362, 2
    %v411 = vrot.slane %v363, 1
    %v412 = vsel %vm388, %v411, %v410
    %vm414 = vcmask 1041408
    %v415 = vsel %vm414, %v368, %v375
    %vm416 = vcmask 1043456
    %v417 = vsel %vm416, %v415, %v382
    %vm418 = vcmask 1045504
    %v419 = vsel %vm418, %v417, %v389
    %v420 = vsel %vm414, %v394, %v400
    %v421 = vsel %vm416, %v420, %v406
    %v422 = vsel %vm418, %v421, %v412
    %v423 = vld [vmem:[#allocation5] sm:$0xff]
    %v424 = vld [vmem:[#allocation5 + $0x8] sm:$0xff]
    %v425 = vld [vmem:[#allocation5 + $0x10] sm:$0xff]
    %v426 = vld [vmem:[#allocation5 + $0x18] sm:$0xff]
    %v427 = vpack.c.bf16 %v422, %v419
    %v428 = vld [vmem:[#allocation8] sm:$0xf]
    %v430 = vperm.slane %v428, 0
    %v431 = vperm.slane %v428, 1
    %v432 = vperm.slane %v428, 2
    %v433 = vperm.slane %v428, 3
    %v442 = vunpack.c.l.b16 %v423
    %v443 = vunpack.c.h.b16 %v423
    %v444 = vunpack.c.l.b16 %v424
    %v445 = vunpack.c.h.b16 %v424
    %v446 = vunpack.c.l.b16 %v425
    %v447 = vunpack.c.h.b16 %v425
    %v448 = vunpack.c.l.b16 %v426
    %v449 = vunpack.c.h.b16 %v426
    %v450 = vpack.c.b16 %v446, %v442
    %v451 = vpack.c.b16 %v447, %v443
    %v452 = vpack.c.b16 %v448, %v444
    %v453 = vpack.c.b16 %v449, %v445
    %vm458 = vcmask 130048
    %v460 = vsel %vm458, %v427, 0
    %462 = vmatpush.bf16.msra.mxu0 0
    %463 = vmatpush.bf16.msra.mxu0 0
    %464 = vmatpush.bf16.msra.mxu0 0
    %465 = vmatpush.bf16.msra.mxu0 0
    %466 = vmatpush.bf16.msra.mxu0 0
    %467 = vmatpush.bf16.msra.mxu0 0
    %468 = vmatpush.bf16.msra.mxu0 0
    %469 = vmatpush.bf16.msra.mxu0 %v450
    %470 = vmatmul.bf16.gmra.mxu0 %v460
    %v471 = vpop.f32.mrf.mxu0
    %v472 = vadd.f32 %v430, %v471
    %v473 = vpop.f32.mrf.mxu0
    %v474 = vadd.f32 %v430, %v473
    %475 = vdwg.mxu0
    %476 = vmatpush.bf16.msra.mxu0 0
    %477 = vmatpush.bf16.msra.mxu0 0
    %478 = vmatpush.bf16.msra.mxu0 0
    %479 = vmatpush.bf16.msra.mxu0 0
    %480 = vmatpush.bf16.msra.mxu0 0
    %481 = vmatpush.bf16.msra.mxu0 0
    %482 = vmatpush.bf16.msra.mxu0 0
    %483 = vmatpush.bf16.msra.mxu0 %v451
    %484 = vmatmul.bf16.gmra.mxu0 %v460
    %v485 = vpop.f32.mrf.mxu0
    %v486 = vadd.f32 %v431, %v485
    %v487 = vpop.f32.mrf.mxu0
    %v488 = vadd.f32 %v431, %v487
    %489 = vdwg.mxu0
    %490 = vmatpush.bf16.msra.mxu0 0
    %491 = vmatpush.bf16.msra.mxu0 0
    %492 = vmatpush.bf16.msra.mxu0 0
    %493 = vmatpush.bf16.msra.mxu0 0
    %494 = vmatpush.bf16.msra.mxu0 0
    %495 = vmatpush.bf16.msra.mxu0 0
    %496 = vmatpush.bf16.msra.mxu0 0
    %497 = vmatpush.bf16.msra.mxu0 %v452
    %498 = vmatmul.bf16.gmra.mxu0 %v460
    %v499 = vpop.f32.mrf.mxu0
    %v500 = vadd.f32 %v432, %v499
    %v501 = vpop.f32.mrf.mxu0
    %v502 = vadd.f32 %v432, %v501
    %503 = vdwg.mxu0
    %504 = vmatpush.bf16.msra.mxu0 0
    %505 = vmatpush.bf16.msra.mxu0 0
    %506 = vmatpush.bf16.msra.mxu0 0
    %507 = vmatpush.bf16.msra.mxu0 0
    %508 = vmatpush.bf16.msra.mxu0 0
    %509 = vmatpush.bf16.msra.mxu0 0
    %510 = vmatpush.bf16.msra.mxu0 0
    %511 = vmatpush.bf16.msra.mxu0 %v453
    %512 = vmatmul.bf16.gmra.mxu0 %v460
    %v513 = vpop.f32.mrf.mxu0
    %v514 = vadd.f32 %v433, %v513
    %v515 = vpop.f32.mrf.mxu0
    %v516 = vadd.f32 %v433, %v515
    %517 = vdwg.mxu0
    %v518 = vld [vmem:[%s5] sm:$0xff]
    %v519 = vld [vmem:[%s5 + $0x8] sm:$0xff]
    %v520 = vld [vmem:[%s5 + $0x10] sm:$0xff]
    %v521 = vld [vmem:[%s5 + $0x18] sm:$0xff]
    %v522 = vld [vmem:[%s5 + $0x20] sm:$0xff]
    %v523 = vld [vmem:[%s5 + $0x28] sm:$0xff]
    %v524 = vld [vmem:[%s5 + $0x30] sm:$0xff]
    %v525 = vld [vmem:[%s5 + $0x38] sm:$0xff]
    %v526 = vld [vmem:[%s5 + $0x40] sm:$0xff]
    %v527 = vld [vmem:[%s5 + $0x48] sm:$0xff]
    %v528 = vld [vmem:[%s5 + $0x50] sm:$0xff]
    %v529 = vld [vmem:[%s5 + $0x58] sm:$0xff]
    %v530 = vld [vmem:[%s5 + $0x60] sm:$0xff]
    %v531 = vld [vmem:[%s5 + $0x68] sm:$0xff]
    %v532 = vld [vmem:[%s5 + $0x70] sm:$0xff]
    %v533 = vld [vmem:[%s5 + $0x78] sm:$0xff]
    %v534 = vld [vmem:[%s5 + $0x80] sm:$0xff]
    %v535 = vld [vmem:[%s5 + $0x88] sm:$0xff]
    %v536 = vld [vmem:[%s5 + $0x90] sm:$0xff]
    %v537 = vld [vmem:[%s5 + $0x98] sm:$0xff]
    %v538 = vld [vmem:[%s5 + $0xa0] sm:$0xff]
    %v539 = vld [vmem:[%s5 + $0xa8] sm:$0xff]
    %v540 = vld [vmem:[%s5 + $0xb0] sm:$0xff]
    %v541 = vld [vmem:[%s5 + $0xb8] sm:$0xff]
    %v542 = vld [vmem:[%s5 + $0xc0] sm:$0xff]
    %v543 = vld [vmem:[%s5 + $0xc8] sm:$0xff]
    %v544 = vld [vmem:[%s5 + $0xd0] sm:$0xff]
    %v545 = vld [vmem:[%s5 + $0xd8] sm:$0xff]
    %v546 = vld [vmem:[%s5 + $0xe0] sm:$0xff]
    %v547 = vld [vmem:[%s5 + $0xe8] sm:$0xff]
    %v548 = vld [vmem:[%s5 + $0xf0] sm:$0xff]
    %v549 = vld [vmem:[%s5 + $0xf8] sm:$0xff]
    %v582 = vunpack.c.l.b16 %v518
    %v583 = vunpack.c.h.b16 %v518
    %v584 = vunpack.c.l.b16 %v519
    %v585 = vunpack.c.h.b16 %v519
    %v586 = vunpack.c.l.b16 %v520
    %v587 = vunpack.c.h.b16 %v520
    %v588 = vunpack.c.l.b16 %v521
    %v589 = vunpack.c.h.b16 %v521
    %v590 = vunpack.c.l.b16 %v522
    %v591 = vunpack.c.h.b16 %v522
    %v592 = vunpack.c.l.b16 %v523
    %v593 = vunpack.c.h.b16 %v523
    %v594 = vunpack.c.l.b16 %v524
    %v595 = vunpack.c.h.b16 %v524
    %v596 = vunpack.c.l.b16 %v525
    %v597 = vunpack.c.h.b16 %v525
    %v598 = vunpack.c.l.b16 %v526
    %v599 = vunpack.c.h.b16 %v526
    %v600 = vunpack.c.l.b16 %v527
    %v601 = vunpack.c.h.b16 %v527
    %v602 = vunpack.c.l.b16 %v528
    %v603 = vunpack.c.h.b16 %v528
    %v604 = vunpack.c.l.b16 %v529
    %v605 = vunpack.c.h.b16 %v529
    %v606 = vunpack.c.l.b16 %v530
    %v607 = vunpack.c.h.b16 %v530
    %v608 = vunpack.c.l.b16 %v531
    %v609 = vunpack.c.h.b16 %v531
    %v610 = vunpack.c.l.b16 %v532
    %v611 = vunpack.c.h.b16 %v532
    %v612 = vunpack.c.l.b16 %v533
    %v613 = vunpack.c.h.b16 %v533
    %v614 = vunpack.c.l.b16 %v534
    %v615 = vunpack.c.h.b16 %v534
    %v616 = vunpack.c.l.b16 %v535
    %v617 = vunpack.c.h.b16 %v535
    %v618 = vunpack.c.l.b16 %v536
    %v619 = vunpack.c.h.b16 %v536
    %v620 = vunpack.c.l.b16 %v537
    %v621 = vunpack.c.h.b16 %v537
    %v622 = vunpack.c.l.b16 %v538
    %v623 = vunpack.c.h.b16 %v538
    %v624 = vunpack.c.l.b16 %v539
    %v625 = vunpack.c.h.b16 %v539
    %v626 = vunpack.c.l.b16 %v540
    %v627 = vunpack.c.h.b16 %v540
    %v628 = vunpack.c.l.b16 %v541
    %v629 = vunpack.c.h.b16 %v541
    %v630 = vunpack.c.l.b16 %v542
    %v631 = vunpack.c.h.b16 %v542
    %v632 = vunpack.c.l.b16 %v543
    %v633 = vunpack.c.h.b16 %v543
    %v634 = vunpack.c.l.b16 %v544
    %v635 = vunpack.c.h.b16 %v544
    %v636 = vunpack.c.l.b16 %v545
    %v637 = vunpack.c.h.b16 %v545
    %v638 = vunpack.c.l.b16 %v546
    %v639 = vunpack.c.h.b16 %v546
    %v640 = vunpack.c.l.b16 %v547
    %v641 = vunpack.c.h.b16 %v547
    %v642 = vunpack.c.l.b16 %v548
    %v643 = vunpack.c.h.b16 %v548
    %v644 = vunpack.c.l.b16 %v549
    %v645 = vunpack.c.h.b16 %v549
    %v646 = vpack.c.b16 %v586, %v582
    %v647 = vpack.c.b16 %v587, %v583
    %v648 = vpack.c.b16 %v588, %v584
    %v649 = vpack.c.b16 %v589, %v585
    %v650 = vpack.c.b16 %v594, %v590
    %v651 = vpack.c.b16 %v595, %v591
    %v652 = vpack.c.b16 %v596, %v592
    %v653 = vpack.c.b16 %v597, %v593
    %v654 = vpack.c.b16 %v602, %v598
    %v655 = vpack.c.b16 %v603, %v599
    %v656 = vpack.c.b16 %v604, %v600
    %v657 = vpack.c.b16 %v605, %v601
    %v658 = vpack.c.b16 %v610, %v606
    %v659 = vpack.c.b16 %v611, %v607
    %v660 = vpack.c.b16 %v612, %v608
    %v661 = vpack.c.b16 %v613, %v609
    %v662 = vpack.c.b16 %v618, %v614
    %v663 = vpack.c.b16 %v619, %v615
    %v664 = vpack.c.b16 %v620, %v616
    %v665 = vpack.c.b16 %v621, %v617
    %v666 = vpack.c.b16 %v626, %v622
    %v667 = vpack.c.b16 %v627, %v623
    %v668 = vpack.c.b16 %v628, %v624
    %v669 = vpack.c.b16 %v629, %v625
    %v670 = vpack.c.b16 %v634, %v630
    %v671 = vpack.c.b16 %v635, %v631
    %v672 = vpack.c.b16 %v636, %v632
    %v673 = vpack.c.b16 %v637, %v633
    %v674 = vpack.c.b16 %v642, %v638
    %v675 = vpack.c.b16 %v643, %v639
    %v676 = vpack.c.b16 %v644, %v640
    %v677 = vpack.c.b16 %v645, %v641
    %710 = vmatpush.bf16.msra.mxu0 %v674
    %711 = vmatpush.bf16.msra.mxu0 %v670
    %712 = vmatpush.bf16.msra.mxu0 %v666
    %713 = vmatpush.bf16.msra.mxu0 %v662
    %714 = vmatpush.bf16.msra.mxu0 %v658
    %715 = vmatpush.bf16.msra.mxu0 %v654
    %716 = vmatpush.bf16.msra.mxu0 %v650
    %717 = vmatpush.bf16.msra.mxu0 %v646
    %718 = vmatmul.bf16.gmra.mxu0 0
    %v719 = vpop.f32.mrf.mxu0
    %v720 = vadd.f32 0.0, %v719
    %v721 = vpop.f32.mrf.mxu0
    %722 = vdwg.mxu0
    %723 = vmatpush.bf16.msra.mxu0 %v675
    %724 = vmatpush.bf16.msra.mxu0 %v671
    %725 = vmatpush.bf16.msra.mxu0 %v667
    %726 = vmatpush.bf16.msra.mxu0 %v663
    %727 = vmatpush.bf16.msra.mxu0 %v659
    %728 = vmatpush.bf16.msra.mxu0 %v655
    %729 = vmatpush.bf16.msra.mxu0 %v651
    %730 = vmatpush.bf16.msra.mxu0 %v647
    %731 = vmatmul.bf16.gmra.mxu0 0
    %v732 = vpop.f32.mrf.mxu0
    %v733 = vadd.f32 0.0, %v732
    %v734 = vpop.f32.mrf.mxu0
    %735 = vdwg.mxu0
    %736 = vmatpush.bf16.msra.mxu0 %v676
    %737 = vmatpush.bf16.msra.mxu0 %v672
    %738 = vmatpush.bf16.msra.mxu0 %v668
    %739 = vmatpush.bf16.msra.mxu0 %v664
    %740 = vmatpush.bf16.msra.mxu0 %v660
    %741 = vmatpush.bf16.msra.mxu0 %v656
    %742 = vmatpush.bf16.msra.mxu0 %v652
    %743 = vmatpush.bf16.msra.mxu0 %v648
    %744 = vmatmul.bf16.gmra.mxu0 0
    %v745 = vpop.f32.mrf.mxu0
    %v746 = vadd.f32 0.0, %v745
    %v747 = vpop.f32.mrf.mxu0
    %748 = vdwg.mxu0
    %749 = vmatpush.bf16.msra.mxu0 %v677
    %750 = vmatpush.bf16.msra.mxu0 %v673
    %751 = vmatpush.bf16.msra.mxu0 %v669
    %752 = vmatpush.bf16.msra.mxu0 %v665
    %753 = vmatpush.bf16.msra.mxu0 %v661
    %754 = vmatpush.bf16.msra.mxu0 %v657
    %755 = vmatpush.bf16.msra.mxu0 %v653
    %756 = vmatpush.bf16.msra.mxu0 %v649
    %757 = vmatmul.bf16.gmra.mxu0 0
    %v758 = vpop.f32.mrf.mxu0
    %v759 = vadd.f32 0.0, %v758
    %v760 = vpop.f32.mrf.mxu0
    %761 = vdwg.mxu0
    %v762 = vadd.f32 %v472, %v720
    %v763 = vadd.f32 %v486, %v733
    %v764 = vadd.f32 %v500, %v746
    %v765 = vadd.f32 %v514, %v759
    %v766 = vxor.u32 %v762, 2147483648
    %v767 = vmul.f32 %v766, 1.442695
    %v768 = vpow.pop %v767
    %v769 = vadd.f32 %v768, 1.0
    %v770 = vrcp.pop %v769
    %v771 = vmul.f32 %v769, %v770
    %v772 = vsub.f32 1.0, %v771
    %v773 = vmul.f32 %v770, %v772
    %v774 = vadd.f32 %v770, %v773
    %vm775 = vweird.f32 %v769
    %vm776 = vweird.f32 %v770
    %vm777 = vmor %vm775, %vm776
    %v778 = vsel %vm777, %v770, %v774
    %v779 = vand.u32 2147483647, %v769
    %vm780 = vcmp.eq.f32.partialorder %v779, 8.507059e+37
    %v781 = vand.u32 %v769, 2147483648
    %v782 = vor.u32 1.1754944e-38, %v781
    %v783 = vsel %vm780, %v782, %v778
    %v784 = vmul.f32 1.0, %v783
    %v785 = vxor.u32 %v763, 2147483648
    %v786 = vmul.f32 %v785, 1.442695
    %v787 = vpow.pop %v786
    %v788 = vadd.f32 %v787, 1.0
    %v789 = vrcp.pop %v788
    %v790 = vmul.f32 %v788, %v789
    %v791 = vsub.f32 1.0, %v790
    %v792 = vmul.f32 %v789, %v791
    %v793 = vadd.f32 %v789, %v792
    %vm794 = vweird.f32 %v788
    %vm795 = vweird.f32 %v789
    %vm796 = vmor %vm794, %vm795
    %v797 = vsel %vm796, %v789, %v793
    %v798 = vand.u32 2147483647, %v788
    %vm799 = vcmp.eq.f32.partialorder %v798, 8.507059e+37
    %v800 = vand.u32 %v788, 2147483648
    %v801 = vor.u32 1.1754944e-38, %v800
    %v802 = vsel %vm799, %v801, %v797
    %v803 = vmul.f32 1.0, %v802
    %v804 = vtanh.pop %v764
    %v805 = vxor.u32 %v765, 2147483648
    %v806 = vmul.f32 %v805, 1.442695
    %v807 = vpow.pop %v806
    %v808 = vadd.f32 %v807, 1.0
    %v809 = vrcp.pop %v808
    %v810 = vmul.f32 %v808, %v809
    %v811 = vsub.f32 1.0, %v810
    %v812 = vmul.f32 %v809, %v811
    %v813 = vadd.f32 %v809, %v812
    %vm814 = vweird.f32 %v808
    %vm815 = vweird.f32 %v809
    %vm816 = vmor %vm814, %vm815
    %v817 = vsel %vm816, %v809, %v813
    %v818 = vand.u32 2147483647, %v808
    %vm819 = vcmp.eq.f32.partialorder %v818, 8.507059e+37
    %v820 = vand.u32 %v808, 2147483648
    %v821 = vor.u32 1.1754944e-38, %v820
    %v822 = vsel %vm819, %v821, %v817
    %v823 = vmul.f32 1.0, %v822
    %v824 = vmul.f32 %v803, 0.0
    %v825 = vmul.f32 %v784, %v804
    %v826 = vadd.f32 %v824, %v825
    %v827 = vtanh.pop %v826
    %v828 = vmul.f32 %v823, %v827
    %v829 = vpack.c.bf16 %v828, %v828
    %830 = vmatpush.bf16.msra.mxu0 %v674
    %831 = vmatpush.bf16.msra.mxu0 %v670
    %832 = vmatpush.bf16.msra.mxu0 %v666
    %833 = vmatpush.bf16.msra.mxu0 %v662
    %834 = vmatpush.bf16.msra.mxu0 %v658
    %835 = vmatpush.bf16.msra.mxu0 %v654
    %836 = vmatpush.bf16.msra.mxu0 %v650
    %837 = vmatpush.bf16.msra.mxu0 %v646
    %838 = vmatmul.bf16.gmra.mxu0 %v829
    %v839 = vpop.f32.mrf.mxu0
    %v840 = vadd.f32 0.0, %v839
    %v841 = vpop.f32.mrf.mxu0
    %842 = vdwg.mxu0
    %843 = vmatpush.bf16.msra.mxu0 %v675
    %844 = vmatpush.bf16.msra.mxu0 %v671
    %845 = vmatpush.bf16.msra.mxu0 %v667
    %846 = vmatpush.bf16.msra.mxu0 %v663
    %847 = vmatpush.bf16.msra.mxu0 %v659
    %848 = vmatpush.bf16.msra.mxu0 %v655
    %849 = vmatpush.bf16.msra.mxu0 %v651
    %850 = vmatpush.bf16.msra.mxu0 %v647
    %851 = vmatmul.bf16.gmra.mxu0 %v829
    %v852 = vpop.f32.mrf.mxu0
    %v853 = vadd.f32 0.0, %v852
    %v854 = vpop.f32.mrf.mxu0
    %855 = vdwg.mxu0
    %856 = vmatpush.bf16.msra.mxu0 %v676
    %857 = vmatpush.bf16.msra.mxu0 %v672
    %858 = vmatpush.bf16.msra.mxu0 %v668
    %859 = vmatpush.bf16.msra.mxu0 %v664
    %860 = vmatpush.bf16.msra.mxu0 %v660
    %861 = vmatpush.bf16.msra.mxu0 %v656
    %862 = vmatpush.bf16.msra.mxu0 %v652
    %863 = vmatpush.bf16.msra.mxu0 %v648
    %864 = vmatmul.bf16.gmra.mxu0 %v829
    %v865 = vpop.f32.mrf.mxu0
    %v866 = vadd.f32 0.0, %v865
    %v867 = vpop.f32.mrf.mxu0
    %868 = vdwg.mxu0
    %869 = vmatpush.bf16.msra.mxu0 %v677
    %870 = vmatpush.bf16.msra.mxu0 %v673
    %871 = vmatpush.bf16.msra.mxu0 %v669
    %872 = vmatpush.bf16.msra.mxu0 %v665
    %873 = vmatpush.bf16.msra.mxu0 %v661
    %874 = vmatpush.bf16.msra.mxu0 %v657
    %875 = vmatpush.bf16.msra.mxu0 %v653
    %876 = vmatpush.bf16.msra.mxu0 %v649
    %877 = vmatmul.bf16.gmra.mxu0 %v829
    %v878 = vpop.f32.mrf.mxu0
    %v879 = vadd.f32 0.0, %v878
    %v880 = vpop.f32.mrf.mxu0
    %881 = vdwg.mxu0
    %v886 = vrot.slane %v840, 6
    %v887 = vrot.slane %v853, 6
    %v888 = vrot.slane %v866, 6
    %v889 = vrot.slane %v879, 6
    %v894 = vadd.f32 %v472, %v886
    %v895 = vadd.f32 %v486, %v887
    %v896 = vadd.f32 %v500, %v888
    %v897 = vadd.f32 %v514, %v889
    %v898 = vxor.u32 %v894, 2147483648
    %v899 = vmul.f32 %v898, 1.442695
    %v900 = vpow.pop %v899
    %v901 = vadd.f32 %v900, 1.0
    %v902 = vrcp.pop %v901
    %v903 = vmul.f32 %v901, %v902
    %v904 = vsub.f32 1.0, %v903
    %v905 = vmul.f32 %v902, %v904
    %v906 = vadd.f32 %v902, %v905
    %vm907 = vweird.f32 %v901
    %vm908 = vweird.f32 %v902
    %vm909 = vmor %vm907, %vm908
    %v910 = vsel %vm909, %v902, %v906
    %v911 = vand.u32 2147483647, %v901
    %vm912 = vcmp.eq.f32.partialorder %v911, 8.507059e+37
    %v913 = vand.u32 %v901, 2147483648
    %v914 = vor.u32 1.1754944e-38, %v913
    %v915 = vsel %vm912, %v914, %v910
    %v916 = vmul.f32 1.0, %v915
    %v917 = vxor.u32 %v895, 2147483648
    %v918 = vmul.f32 %v917, 1.442695
    %v919 = vpow.pop %v918
    %v920 = vadd.f32 %v919, 1.0
    %v921 = vrcp.pop %v920
    %v922 = vmul.f32 %v920, %v921
    %v923 = vsub.f32 1.0, %v922
    %v924 = vmul.f32 %v921, %v923
    %v925 = vadd.f32 %v921, %v924
    %vm926 = vweird.f32 %v920
    %vm927 = vweird.f32 %v921
    %vm928 = vmor %vm926, %vm927
    %v929 = vsel %vm928, %v921, %v925
    %v930 = vand.u32 2147483647, %v920
    %vm931 = vcmp.eq.f32.partialorder %v930, 8.507059e+37
    %v932 = vand.u32 %v920, 2147483648
    %v933 = vor.u32 1.1754944e-38, %v932
    %v934 = vsel %vm931, %v933, %v929
    %v935 = vmul.f32 1.0, %v934
    %v936 = vtanh.pop %v896
    %v937 = vxor.u32 %v897, 2147483648
    %v938 = vmul.f32 %v937, 1.442695
    %v939 = vpow.pop %v938
    %v940 = vadd.f32 %v939, 1.0
    %v941 = vrcp.pop %v940
    %v942 = vmul.f32 %v940, %v941
    %v943 = vsub.f32 1.0, %v942
    %v944 = vmul.f32 %v941, %v943
    %v945 = vadd.f32 %v941, %v944
    %vm946 = vweird.f32 %v940
    %vm947 = vweird.f32 %v941
    %vm948 = vmor %vm946, %vm947
    %v949 = vsel %vm948, %v941, %v945
    %v950 = vand.u32 2147483647, %v940
    %vm951 = vcmp.eq.f32.partialorder %v950, 8.507059e+37
    %v952 = vand.u32 %v940, 2147483648
    %v953 = vor.u32 1.1754944e-38, %v952
    %v954 = vsel %vm951, %v953, %v949
    %v955 = vmul.f32 1.0, %v954
    %v957 = vrot.slane %v826, 6
    %v959 = vmul.f32 %v935, %v957
    %v960 = vmul.f32 %v916, %v936
    %v961 = vadd.f32 %v959, %v960
    %v962 = vtanh.pop %v961
    %v963 = vmul.f32 %v955, %v962
    %v964 = vpack.c.bf16 %v963, %v963
    %v966 = vrot.slane %v964, 1
    %968 = vmatpush.bf16.msra.mxu0 %v674
    %969 = vmatpush.bf16.msra.mxu0 %v670
    %970 = vmatpush.bf16.msra.mxu0 %v666
    %971 = vmatpush.bf16.msra.mxu0 %v662
    %972 = vmatpush.bf16.msra.mxu0 %v658
    %973 = vmatpush.bf16.msra.mxu0 %v654
    %974 = vmatpush.bf16.msra.mxu0 %v650
    %975 = vmatpush.bf16.msra.mxu0 %v646
    %976 = vmatmul.bf16.gmra.mxu0 %v966
    %v977 = vpop.f32.mrf.mxu0
    %v978 = vadd.f32 0.0, %v977
    %v979 = vpop.f32.mrf.mxu0
    %980 = vdwg.mxu0
    %981 = vmatpush.bf16.msra.mxu0 %v675
    %982 = vmatpush.bf16.msra.mxu0 %v671
    %983 = vmatpush.bf16.msra.mxu0 %v667
    %984 = vmatpush.bf16.msra.mxu0 %v663
    %985 = vmatpush.bf16.msra.mxu0 %v659
    %986 = vmatpush.bf16.msra.mxu0 %v655
    %987 = vmatpush.bf16.msra.mxu0 %v651
    %988 = vmatpush.bf16.msra.mxu0 %v647
    %989 = vmatmul.bf16.gmra.mxu0 %v966
    %v990 = vpop.f32.mrf.mxu0
    %v991 = vadd.f32 0.0, %v990
    %v992 = vpop.f32.mrf.mxu0
    %993 = vdwg.mxu0
    %994 = vmatpush.bf16.msra.mxu0 %v676
    %995 = vmatpush.bf16.msra.mxu0 %v672
    %996 = vmatpush.bf16.msra.mxu0 %v668
    %997 = vmatpush.bf16.msra.mxu0 %v664
    %998 = vmatpush.bf16.msra.mxu0 %v660
    %999 = vmatpush.bf16.msra.mxu0 %v656
    %1000 = vmatpush.bf16.msra.mxu0 %v652
    %1001 = vmatpush.bf16.msra.mxu0 %v648
    %1002 = vmatmul.bf16.gmra.mxu0 %v966
    %v1003 = vpop.f32.mrf.mxu0
    %v1004 = vadd.f32 0.0, %v1003
    %v1005 = vpop.f32.mrf.mxu0
    %1006 = vdwg.mxu0
    %1007 = vmatpush.bf16.msra.mxu0 %v677
    %1008 = vmatpush.bf16.msra.mxu0 %v673
    %1009 = vmatpush.bf16.msra.mxu0 %v669
    %1010 = vmatpush.bf16.msra.mxu0 %v665
    %1011 = vmatpush.bf16.msra.mxu0 %v661
    %1012 = vmatpush.bf16.msra.mxu0 %v657
    %1013 = vmatpush.bf16.msra.mxu0 %v653
    %1014 = vmatpush.bf16.msra.mxu0 %v649
    %1015 = vmatmul.bf16.gmra.mxu0 %v966
    %v1016 = vpop.f32.mrf.mxu0
    %v1017 = vadd.f32 0.0, %v1016
    %v1018 = vpop.f32.mrf.mxu0
    %1019 = vdwg.mxu0
    %v1024 = vrot.slane %v978, 4
    %v1025 = vrot.slane %v991, 4
    %v1026 = vrot.slane %v1004, 4
    %v1027 = vrot.slane %v1017, 4
    %v1032 = vadd.f32 %v472, %v1024
    %v1033 = vadd.f32 %v486, %v1025
    %v1034 = vadd.f32 %v500, %v1026
    %v1035 = vadd.f32 %v514, %v1027
    %v1036 = vxor.u32 %v1032, 2147483648
    %v1037 = vmul.f32 %v1036, 1.442695
    %v1038 = vpow.pop %v1037
    %v1039 = vadd.f32 %v1038, 1.0
    %v1040 = vrcp.pop %v1039
    %v1041 = vmul.f32 %v1039, %v1040
    %v1042 = vsub.f32 1.0, %v1041
    %v1043 = vmul.f32 %v1040, %v1042
    %v1044 = vadd.f32 %v1040, %v1043
    %vm1045 = vweird.f32 %v1039
    %vm1046 = vweird.f32 %v1040
    %vm1047 = vmor %vm1045, %vm1046
    %v1048 = vsel %vm1047, %v1040, %v1044
    %v1049 = vand.u32 2147483647, %v1039
    %vm1050 = vcmp.eq.f32.partialorder %v1049, 8.507059e+37
    %v1051 = vand.u32 %v1039, 2147483648
    %v1052 = vor.u32 1.1754944e-38, %v1051
    %v1053 = vsel %vm1050, %v1052, %v1048
    %v1054 = vmul.f32 1.0, %v1053
    %v1055 = vxor.u32 %v1033, 2147483648
    %v1056 = vmul.f32 %v1055, 1.442695
    %v1057 = vpow.pop %v1056
    %v1058 = vadd.f32 %v1057, 1.0
    %v1059 = vrcp.pop %v1058
    %v1060 = vmul.f32 %v1058, %v1059
    %v1061 = vsub.f32 1.0, %v1060
    %v1062 = vmul.f32 %v1059, %v1061
    %v1063 = vadd.f32 %v1059, %v1062
    %vm1064 = vweird.f32 %v1058
    %vm1065 = vweird.f32 %v1059
    %vm1066 = vmor %vm1064, %vm1065
    %v1067 = vsel %vm1066, %v1059, %v1063
    %v1068 = vand.u32 2147483647, %v1058
    %vm1069 = vcmp.eq.f32.partialorder %v1068, 8.507059e+37
    %v1070 = vand.u32 %v1058, 2147483648
    %v1071 = vor.u32 1.1754944e-38, %v1070
    %v1072 = vsel %vm1069, %v1071, %v1067
    %v1073 = vmul.f32 1.0, %v1072
    %v1074 = vtanh.pop %v1034
    %v1075 = vxor.u32 %v1035, 2147483648
    %v1076 = vmul.f32 %v1075, 1.442695
    %v1077 = vpow.pop %v1076
    %v1078 = vadd.f32 %v1077, 1.0
    %v1079 = vrcp.pop %v1078
    %v1080 = vmul.f32 %v1078, %v1079
    %v1081 = vsub.f32 1.0, %v1080
    %v1082 = vmul.f32 %v1079, %v1081
    %v1083 = vadd.f32 %v1079, %v1082
    %vm1084 = vweird.f32 %v1078
    %vm1085 = vweird.f32 %v1079
    %vm1086 = vmor %vm1084, %vm1085
    %v1087 = vsel %vm1086, %v1079, %v1083
    %v1088 = vand.u32 2147483647, %v1078
    %vm1089 = vcmp.eq.f32.partialorder %v1088, 8.507059e+37
    %v1090 = vand.u32 %v1078, 2147483648
    %v1091 = vor.u32 1.1754944e-38, %v1090
    %v1092 = vsel %vm1089, %v1091, %v1087
    %v1093 = vmul.f32 1.0, %v1092
    %v1095 = vrot.slane %v961, 6
    %v1097 = vmul.f32 %v1073, %v1095
    %v1098 = vmul.f32 %v1054, %v1074
    %v1099 = vadd.f32 %v1097, %v1098
    %v1100 = vtanh.pop %v1099
    %v1101 = vmul.f32 %v1093, %v1100
    %v1102 = vpack.c.bf16 %v1101, %v1101
    %v1104 = vrot.slane %v1102, 2
    %1106 = vmatpush.bf16.msra.mxu0 %v674
    %1107 = vmatpush.bf16.msra.mxu0 %v670
    %1108 = vmatpush.bf16.msra.mxu0 %v666
    %1109 = vmatpush.bf16.msra.mxu0 %v662
    %1110 = vmatpush.bf16.msra.mxu0 %v658
    %1111 = vmatpush.bf16.msra.mxu0 %v654
    %1112 = vmatpush.bf16.msra.mxu0 %v650
    %1113 = vmatpush.bf16.msra.mxu0 %v646
    %1114 = vmatmul.bf16.gmra.mxu0 %v1104
    %v1115 = vpop.f32.mrf.mxu0
    %v1116 = vadd.f32 0.0, %v1115
    %v1117 = vpop.f32.mrf.mxu0
    %1118 = vdwg.mxu0
    %1119 = vmatpush.bf16.msra.mxu0 %v675
    %1120 = vmatpush.bf16.msra.mxu0 %v671
    %1121 = vmatpush.bf16.msra.mxu0 %v667
    %1122 = vmatpush.bf16.msra.mxu0 %v663
    %1123 = vmatpush.bf16.msra.mxu0 %v659
    %1124 = vmatpush.bf16.msra.mxu0 %v655
    %1125 = vmatpush.bf16.msra.mxu0 %v651
    %1126 = vmatpush.bf16.msra.mxu0 %v647
    %1127 = vmatmul.bf16.gmra.mxu0 %v1104
    %v1128 = vpop.f32.mrf.mxu0
    %v1129 = vadd.f32 0.0, %v1128
    %v1130 = vpop.f32.mrf.mxu0
    %1131 = vdwg.mxu0
    %1132 = vmatpush.bf16.msra.mxu0 %v676
    %1133 = vmatpush.bf16.msra.mxu0 %v672
    %1134 = vmatpush.bf16.msra.mxu0 %v668
    %1135 = vmatpush.bf16.msra.mxu0 %v664
    %1136 = vmatpush.bf16.msra.mxu0 %v660
    %1137 = vmatpush.bf16.msra.mxu0 %v656
    %1138 = vmatpush.bf16.msra.mxu0 %v652
    %1139 = vmatpush.bf16.msra.mxu0 %v648
    %1140 = vmatmul.bf16.gmra.mxu0 %v1104
    %v1141 = vpop.f32.mrf.mxu0
    %v1142 = vadd.f32 0.0, %v1141
    %v1143 = vpop.f32.mrf.mxu0
    %1144 = vdwg.mxu0
    %1145 = vmatpush.bf16.msra.mxu0 %v677
    %1146 = vmatpush.bf16.msra.mxu0 %v673
    %1147 = vmatpush.bf16.msra.mxu0 %v669
    %1148 = vmatpush.bf16.msra.mxu0 %v665
    %1149 = vmatpush.bf16.msra.mxu0 %v661
    %1150 = vmatpush.bf16.msra.mxu0 %v657
    %1151 = vmatpush.bf16.msra.mxu0 %v653
    %1152 = vmatpush.bf16.msra.mxu0 %v649
    %1153 = vmatmul.bf16.gmra.mxu0 %v1104
    %v1154 = vpop.f32.mrf.mxu0
    %v1155 = vadd.f32 0.0, %v1154
    %v1156 = vpop.f32.mrf.mxu0
    %1157 = vdwg.mxu0
    %v1162 = vrot.slane %v1116, 2
    %v1163 = vrot.slane %v1129, 2
    %v1164 = vrot.slane %v1142, 2
    %v1165 = vrot.slane %v1155, 2
    %v1170 = vadd.f32 %v472, %v1162
    %v1171 = vadd.f32 %v486, %v1163
    %v1172 = vadd.f32 %v500, %v1164
    %v1173 = vadd.f32 %v514, %v1165
    %v1174 = vxor.u32 %v1170, 2147483648
    %v1175 = vmul.f32 %v1174, 1.442695
    %v1176 = vpow.pop %v1175
    %v1177 = vadd.f32 %v1176, 1.0
    %v1178 = vrcp.pop %v1177
    %v1179 = vmul.f32 %v1177, %v1178
    %v1180 = vsub.f32 1.0, %v1179
    %v1181 = vmul.f32 %v1178, %v1180
    %v1182 = vadd.f32 %v1178, %v1181
    %vm1183 = vweird.f32 %v1177
    %vm1184 = vweird.f32 %v1178
    %vm1185 = vmor %vm1183, %vm1184
    %v1186 = vsel %vm1185, %v1178, %v1182
    %v1187 = vand.u32 2147483647, %v1177
    %vm1188 = vcmp.eq.f32.partialorder %v1187, 8.507059e+37
    %v1189 = vand.u32 %v1177, 2147483648
    %v1190 = vor.u32 1.1754944e-38, %v1189
    %v1191 = vsel %vm1188, %v1190, %v1186
    %v1192 = vmul.f32 1.0, %v1191
    %v1193 = vxor.u32 %v1171, 2147483648
    %v1194 = vmul.f32 %v1193, 1.442695
    %v1195 = vpow.pop %v1194
    %v1196 = vadd.f32 %v1195, 1.0
    %v1197 = vrcp.pop %v1196
    %v1198 = vmul.f32 %v1196, %v1197
    %v1199 = vsub.f32 1.0, %v1198
    %v1200 = vmul.f32 %v1197, %v1199
    %v1201 = vadd.f32 %v1197, %v1200
    %vm1202 = vweird.f32 %v1196
    %vm1203 = vweird.f32 %v1197
    %vm1204 = vmor %vm1202, %vm1203
    %v1205 = vsel %vm1204, %v1197, %v1201
    %v1206 = vand.u32 2147483647, %v1196
    %vm1207 = vcmp.eq.f32.partialorder %v1206, 8.507059e+37
    %v1208 = vand.u32 %v1196, 2147483648
    %v1209 = vor.u32 1.1754944e-38, %v1208
    %v1210 = vsel %vm1207, %v1209, %v1205
    %v1211 = vmul.f32 1.0, %v1210
    %v1212 = vtanh.pop %v1172
    %v1213 = vxor.u32 %v1173, 2147483648
    %v1214 = vmul.f32 %v1213, 1.442695
    %v1215 = vpow.pop %v1214
    %v1216 = vadd.f32 %v1215, 1.0
    %v1217 = vrcp.pop %v1216
    %v1218 = vmul.f32 %v1216, %v1217
    %v1219 = vsub.f32 1.0, %v1218
    %v1220 = vmul.f32 %v1217, %v1219
    %v1221 = vadd.f32 %v1217, %v1220
    %vm1222 = vweird.f32 %v1216
    %vm1223 = vweird.f32 %v1217
    %vm1224 = vmor %vm1222, %vm1223
    %v1225 = vsel %vm1224, %v1217, %v1221
    %v1226 = vand.u32 2147483647, %v1216
    %vm1227 = vcmp.eq.f32.partialorder %v1226, 8.507059e+37
    %v1228 = vand.u32 %v1216, 2147483648
    %v1229 = vor.u32 1.1754944e-38, %v1228
    %v1230 = vsel %vm1227, %v1229, %v1225
    %v1231 = vmul.f32 1.0, %v1230
    %v1233 = vrot.slane %v1099, 6
    %v1235 = vmul.f32 %v1211, %v1233
    %v1236 = vmul.f32 %v1192, %v1212
    %v1237 = vadd.f32 %v1235, %v1236
    %v1238 = vtanh.pop %v1237
    %v1239 = vmul.f32 %v1231, %v1238
    %v1240 = vpack.c.bf16 %v1239, %v1239
    %v1242 = vrot.slane %v1240, 3
    %1244 = vmatpush.bf16.msra.mxu0 %v674
    %1245 = vmatpush.bf16.msra.mxu0 %v670
    %1246 = vmatpush.bf16.msra.mxu0 %v666
    %1247 = vmatpush.bf16.msra.mxu0 %v662
    %1248 = vmatpush.bf16.msra.mxu0 %v658
    %1249 = vmatpush.bf16.msra.mxu0 %v654
    %1250 = vmatpush.bf16.msra.mxu0 %v650
    %1251 = vmatpush.bf16.msra.mxu0 %v646
    %1252 = vmatmul.bf16.gmra.mxu0 %v1242
    %v1253 = vpop.f32.mrf.mxu0
    %v1254 = vadd.f32 0.0, %v1253
    %v1255 = vpop.f32.mrf.mxu0
    %1256 = vdwg.mxu0
    %1257 = vmatpush.bf16.msra.mxu0 %v675
    %1258 = vmatpush.bf16.msra.mxu0 %v671
    %1259 = vmatpush.bf16.msra.mxu0 %v667
    %1260 = vmatpush.bf16.msra.mxu0 %v663
    %1261 = vmatpush.bf16.msra.mxu0 %v659
    %1262 = vmatpush.bf16.msra.mxu0 %v655
    %1263 = vmatpush.bf16.msra.mxu0 %v651
    %1264 = vmatpush.bf16.msra.mxu0 %v647
    %1265 = vmatmul.bf16.gmra.mxu0 %v1242
    %v1266 = vpop.f32.mrf.mxu0
    %v1267 = vadd.f32 0.0, %v1266
    %v1268 = vpop.f32.mrf.mxu0
    %1269 = vdwg.mxu0
    %1270 = vmatpush.bf16.msra.mxu0 %v676
    %1271 = vmatpush.bf16.msra.mxu0 %v672
    %1272 = vmatpush.bf16.msra.mxu0 %v668
    %1273 = vmatpush.bf16.msra.mxu0 %v664
    %1274 = vmatpush.bf16.msra.mxu0 %v660
    %1275 = vmatpush.bf16.msra.mxu0 %v656
    %1276 = vmatpush.bf16.msra.mxu0 %v652
    %1277 = vmatpush.bf16.msra.mxu0 %v648
    %1278 = vmatmul.bf16.gmra.mxu0 %v1242
    %v1279 = vpop.f32.mrf.mxu0
    %v1280 = vadd.f32 0.0, %v1279
    %v1281 = vpop.f32.mrf.mxu0
    %1282 = vdwg.mxu0
    %1283 = vmatpush.bf16.msra.mxu0 %v677
    %1284 = vmatpush.bf16.msra.mxu0 %v673
    %1285 = vmatpush.bf16.msra.mxu0 %v669
    %1286 = vmatpush.bf16.msra.mxu0 %v665
    %1287 = vmatpush.bf16.msra.mxu0 %v661
    %1288 = vmatpush.bf16.msra.mxu0 %v657
    %1289 = vmatpush.bf16.msra.mxu0 %v653
    %1290 = vmatpush.bf16.msra.mxu0 %v649
    %1291 = vmatmul.bf16.gmra.mxu0 %v1242
    %v1292 = vpop.f32.mrf.mxu0
    %v1293 = vadd.f32 0.0, %v1292
    %v1294 = vpop.f32.mrf.mxu0
    %1295 = vdwg.mxu0
    %v1296 = vadd.f32 %v474, %v1254
    %v1297 = vadd.f32 %v488, %v1267
    %v1298 = vadd.f32 %v502, %v1280
    %v1299 = vadd.f32 %v516, %v1293
    %v1300 = vxor.u32 %v1296, 2147483648
    %v1301 = vmul.f32 %v1300, 1.442695
    %v1302 = vpow.pop %v1301
    %v1303 = vadd.f32 %v1302, 1.0
    %v1304 = vrcp.pop %v1303
    %v1305 = vmul.f32 %v1303, %v1304
    %v1306 = vsub.f32 1.0, %v1305
    %v1307 = vmul.f32 %v1304, %v1306
    %v1308 = vadd.f32 %v1304, %v1307
    %vm1309 = vweird.f32 %v1303
    %vm1310 = vweird.f32 %v1304
    %vm1311 = vmor %vm1309, %vm1310
    %v1312 = vsel %vm1311, %v1304, %v1308
    %v1313 = vand.u32 2147483647, %v1303
    %vm1314 = vcmp.eq.f32.partialorder %v1313, 8.507059e+37
    %v1315 = vand.u32 %v1303, 2147483648
    %v1316 = vor.u32 1.1754944e-38, %v1315
    %v1317 = vsel %vm1314, %v1316, %v1312
    %v1318 = vmul.f32 1.0, %v1317
    %v1319 = vxor.u32 %v1297, 2147483648
    %v1320 = vmul.f32 %v1319, 1.442695
    %v1321 = vpow.pop %v1320
    %v1322 = vadd.f32 %v1321, 1.0
    %v1323 = vrcp.pop %v1322
    %v1324 = vmul.f32 %v1322, %v1323
    %v1325 = vsub.f32 1.0, %v1324
    %v1326 = vmul.f32 %v1323, %v1325
    %v1327 = vadd.f32 %v1323, %v1326
    %vm1328 = vweird.f32 %v1322
    %vm1329 = vweird.f32 %v1323
    %vm1330 = vmor %vm1328, %vm1329
    %v1331 = vsel %vm1330, %v1323, %v1327
    %v1332 = vand.u32 2147483647, %v1322
    %vm1333 = vcmp.eq.f32.partialorder %v1332, 8.507059e+37
    %v1334 = vand.u32 %v1322, 2147483648
    %v1335 = vor.u32 1.1754944e-38, %v1334
    %v1336 = vsel %vm1333, %v1335, %v1331
    %v1337 = vmul.f32 1.0, %v1336
    %v1338 = vtanh.pop %v1298
    %v1339 = vxor.u32 %v1299, 2147483648
    %v1340 = vmul.f32 %v1339, 1.442695
    %v1341 = vpow.pop %v1340
    %v1342 = vadd.f32 %v1341, 1.0
    %v1343 = vrcp.pop %v1342
    %v1344 = vmul.f32 %v1342, %v1343
    %v1345 = vsub.f32 1.0, %v1344
    %v1346 = vmul.f32 %v1343, %v1345
    %v1347 = vadd.f32 %v1343, %v1346
    %vm1348 = vweird.f32 %v1342
    %vm1349 = vweird.f32 %v1343
    %vm1350 = vmor %vm1348, %vm1349
    %v1351 = vsel %vm1350, %v1343, %v1347
    %v1352 = vand.u32 2147483647, %v1342
    %vm1353 = vcmp.eq.f32.partialorder %v1352, 8.507059e+37
    %v1354 = vand.u32 %v1342, 2147483648
    %v1355 = vor.u32 1.1754944e-38, %v1354
    %v1356 = vsel %vm1353, %v1355, %v1351
    %v1357 = vmul.f32 1.0, %v1356
    %v1359 = vrot.slane %v1237, 6
    %v1361 = vmul.f32 %v1337, %v1359
    %v1362 = vmul.f32 %v1318, %v1338
    %v1363 = vadd.f32 %v1361, %v1362
    %v1364 = vtanh.pop %v1363
    %v1365 = vmul.f32 %v1357, %v1364
    %v1366 = vpack.c.bf16 %v1365, %v1365
    %1367 = vmatpush.bf16.msra.mxu0 %v674
    %1368 = vmatpush.bf16.msra.mxu0 %v670
    %1369 = vmatpush.bf16.msra.mxu0 %v666
    %1370 = vmatpush.bf16.msra.mxu0 %v662
    %1371 = vmatpush.bf16.msra.mxu0 %v658
    %1372 = vmatpush.bf16.msra.mxu0 %v654
    %1373 = vmatpush.bf16.msra.mxu0 %v650
    %1374 = vmatpush.bf16.msra.mxu0 %v646
    %1375 = vmatmul.bf16.gmra.mxu0 %v1366
    %v1376 = vpop.f32.mrf.mxu0
    %v1377 = vadd.f32 0.0, %v1376
    %v1378 = vpop.f32.mrf.mxu0
    %1379 = vdwg.mxu0
    %1380 = vmatpush.bf16.msra.mxu0 %v675
    %1381 = vmatpush.bf16.msra.mxu0 %v671
    %1382 = vmatpush.bf16.msra.mxu0 %v667
    %1383 = vmatpush.bf16.msra.mxu0 %v663
    %1384 = vmatpush.bf16.msra.mxu0 %v659
    %1385 = vmatpush.bf16.msra.mxu0 %v655
    %1386 = vmatpush.bf16.msra.mxu0 %v651
    %1387 = vmatpush.bf16.msra.mxu0 %v647
    %1388 = vmatmul.bf16.gmra.mxu0 %v1366
    %v1389 = vpop.f32.mrf.mxu0
    %v1390 = vadd.f32 0.0, %v1389
    %v1391 = vpop.f32.mrf.mxu0
    %1392 = vdwg.mxu0
    %1393 = vmatpush.bf16.msra.mxu0 %v676
    %1394 = vmatpush.bf16.msra.mxu0 %v672
    %1395 = vmatpush.bf16.msra.mxu0 %v668
    %1396 = vmatpush.bf16.msra.mxu0 %v664
    %1397 = vmatpush.bf16.msra.mxu0 %v660
    %1398 = vmatpush.bf16.msra.mxu0 %v656
    %1399 = vmatpush.bf16.msra.mxu0 %v652
    %1400 = vmatpush.bf16.msra.mxu0 %v648
    %1401 = vmatmul.bf16.gmra.mxu0 %v1366
    %v1402 = vpop.f32.mrf.mxu0
    %v1403 = vadd.f32 0.0, %v1402
    %v1404 = vpop.f32.mrf.mxu0
    %1405 = vdwg.mxu0
    %1406 = vmatpush.bf16.msra.mxu0 %v677
    %1407 = vmatpush.bf16.msra.mxu0 %v673
    %1408 = vmatpush.bf16.msra.mxu0 %v669
    %1409 = vmatpush.bf16.msra.mxu0 %v665
    %1410 = vmatpush.bf16.msra.mxu0 %v661
    %1411 = vmatpush.bf16.msra.mxu0 %v657
    %1412 = vmatpush.bf16.msra.mxu0 %v653
    %1413 = vmatpush.bf16.msra.mxu0 %v649
    %1414 = vmatmul.bf16.gmra.mxu0 %v1366
    %v1415 = vpop.f32.mrf.mxu0
    %v1416 = vadd.f32 0.0, %v1415
    %v1417 = vpop.f32.mrf.mxu0
    %1418 = vdwg.mxu0
    %v1423 = vrot.slane %v1377, 6
    %v1424 = vrot.slane %v1390, 6
    %v1425 = vrot.slane %v1403, 6
    %v1426 = vrot.slane %v1416, 6
    %v1431 = vadd.f32 %v474, %v1423
    %v1432 = vadd.f32 %v488, %v1424
    %v1433 = vadd.f32 %v502, %v1425
    %v1434 = vadd.f32 %v516, %v1426
    %v1435 = vxor.u32 %v1431, 2147483648
    %v1436 = vmul.f32 %v1435, 1.442695
    %v1437 = vpow.pop %v1436
    %v1438 = vadd.f32 %v1437, 1.0
    %v1439 = vrcp.pop %v1438
    %v1440 = vmul.f32 %v1438, %v1439
    %v1441 = vsub.f32 1.0, %v1440
    %v1442 = vmul.f32 %v1439, %v1441
    %v1443 = vadd.f32 %v1439, %v1442
    %vm1444 = vweird.f32 %v1438
    %vm1445 = vweird.f32 %v1439
    %vm1446 = vmor %vm1444, %vm1445
    %v1447 = vsel %vm1446, %v1439, %v1443
    %v1448 = vand.u32 2147483647, %v1438
    %vm1449 = vcmp.eq.f32.partialorder %v1448, 8.507059e+37
    %v1450 = vand.u32 %v1438, 2147483648
    %v1451 = vor.u32 1.1754944e-38, %v1450
    %v1452 = vsel %vm1449, %v1451, %v1447
    %v1453 = vmul.f32 1.0, %v1452
    %v1454 = vxor.u32 %v1432, 2147483648
    %v1455 = vmul.f32 %v1454, 1.442695
    %v1456 = vpow.pop %v1455
    %v1457 = vadd.f32 %v1456, 1.0
    %v1458 = vrcp.pop %v1457
    %v1459 = vmul.f32 %v1457, %v1458
    %v1460 = vsub.f32 1.0, %v1459
    %v1461 = vmul.f32 %v1458, %v1460
    %v1462 = vadd.f32 %v1458, %v1461
    %vm1463 = vweird.f32 %v1457
    %vm1464 = vweird.f32 %v1458
    %vm1465 = vmor %vm1463, %vm1464
    %v1466 = vsel %vm1465, %v1458, %v1462
    %v1467 = vand.u32 2147483647, %v1457
    %vm1468 = vcmp.eq.f32.partialorder %v1467, 8.507059e+37
    %v1469 = vand.u32 %v1457, 2147483648
    %v1470 = vor.u32 1.1754944e-38, %v1469
    %v1471 = vsel %vm1468, %v1470, %v1466
    %v1472 = vmul.f32 1.0, %v1471
    %v1473 = vtanh.pop %v1433
    %v1474 = vxor.u32 %v1434, 2147483648
    %v1475 = vmul.f32 %v1474, 1.442695
    %v1476 = vpow.pop %v1475
    %v1477 = vadd.f32 %v1476, 1.0
    %v1478 = vrcp.pop %v1477
    %v1479 = vmul.f32 %v1477, %v1478
    %v1480 = vsub.f32 1.0, %v1479
    %v1481 = vmul.f32 %v1478, %v1480
    %v1482 = vadd.f32 %v1478, %v1481
    %vm1483 = vweird.f32 %v1477
    %vm1484 = vweird.f32 %v1478
    %vm1485 = vmor %vm1483, %vm1484
    %v1486 = vsel %vm1485, %v1478, %v1482
    %v1487 = vand.u32 2147483647, %v1477
    %vm1488 = vcmp.eq.f32.partialorder %v1487, 8.507059e+37
    %v1489 = vand.u32 %v1477, 2147483648
    %v1490 = vor.u32 1.1754944e-38, %v1489
    %v1491 = vsel %vm1488, %v1490, %v1486
    %v1492 = vmul.f32 1.0, %v1491
    %v1494 = vrot.slane %v1363, 6
    %v1496 = vmul.f32 %v1472, %v1494
    %v1497 = vmul.f32 %v1453, %v1473
    %v1498 = vadd.f32 %v1496, %v1497
    %v1499 = vtanh.pop %v1498
    %v1500 = vmul.f32 %v1492, %v1499
    %v1501 = vpack.c.bf16 %v1500, %v1500
    %v1503 = vrot.slane %v1501, 1
    %1505 = vmatpush.bf16.msra.mxu0 %v674
    %1506 = vmatpush.bf16.msra.mxu0 %v670
    %1507 = vmatpush.bf16.msra.mxu0 %v666
    %1508 = vmatpush.bf16.msra.mxu0 %v662
    %1509 = vmatpush.bf16.msra.mxu0 %v658
    %1510 = vmatpush.bf16.msra.mxu0 %v654
    %1511 = vmatpush.bf16.msra.mxu0 %v650
    %1512 = vmatpush.bf16.msra.mxu0 %v646
    %1513 = vmatmul.bf16.gmra.mxu0 %v1503
    %v1514 = vpop.f32.mrf.mxu0
    %v1515 = vadd.f32 0.0, %v1514
    %v1516 = vpop.f32.mrf.mxu0
    %1517 = vdwg.mxu0
    %1518 = vmatpush.bf16.msra.mxu0 %v675
    %1519 = vmatpush.bf16.msra.mxu0 %v671
    %1520 = vmatpush.bf16.msra.mxu0 %v667
    %1521 = vmatpush.bf16.msra.mxu0 %v663
    %1522 = vmatpush.bf16.msra.mxu0 %v659
    %1523 = vmatpush.bf16.msra.mxu0 %v655
    %1524 = vmatpush.bf16.msra.mxu0 %v651
    %1525 = vmatpush.bf16.msra.mxu0 %v647
    %1526 = vmatmul.bf16.gmra.mxu0 %v1503
    %v1527 = vpop.f32.mrf.mxu0
    %v1528 = vadd.f32 0.0, %v1527
    %v1529 = vpop.f32.mrf.mxu0
    %1530 = vdwg.mxu0
    %1531 = vmatpush.bf16.msra.mxu0 %v676
    %1532 = vmatpush.bf16.msra.mxu0 %v672
    %1533 = vmatpush.bf16.msra.mxu0 %v668
    %1534 = vmatpush.bf16.msra.mxu0 %v664
    %1535 = vmatpush.bf16.msra.mxu0 %v660
    %1536 = vmatpush.bf16.msra.mxu0 %v656
    %1537 = vmatpush.bf16.msra.mxu0 %v652
    %1538 = vmatpush.bf16.msra.mxu0 %v648
    %1539 = vmatmul.bf16.gmra.mxu0 %v1503
    %v1540 = vpop.f32.mrf.mxu0
    %v1541 = vadd.f32 0.0, %v1540
    %v1542 = vpop.f32.mrf.mxu0
    %1543 = vdwg.mxu0
    %1544 = vmatpush.bf16.msra.mxu0 %v677
    %1545 = vmatpush.bf16.msra.mxu0 %v673
    %1546 = vmatpush.bf16.msra.mxu0 %v669
    %1547 = vmatpush.bf16.msra.mxu0 %v665
    %1548 = vmatpush.bf16.msra.mxu0 %v661
    %1549 = vmatpush.bf16.msra.mxu0 %v657
    %1550 = vmatpush.bf16.msra.mxu0 %v653
    %1551 = vmatpush.bf16.msra.mxu0 %v649
    %1552 = vmatmul.bf16.gmra.mxu0 %v1503
    %v1553 = vpop.f32.mrf.mxu0
    %v1554 = vadd.f32 0.0, %v1553
    %v1555 = vpop.f32.mrf.mxu0
    %1556 = vdwg.mxu0
    %v1561 = vrot.slane %v1515, 4
    %v1562 = vrot.slane %v1528, 4
    %v1563 = vrot.slane %v1541, 4
    %v1564 = vrot.slane %v1554, 4
    %v1569 = vadd.f32 %v474, %v1561
    %v1570 = vadd.f32 %v488, %v1562
    %v1571 = vadd.f32 %v502, %v1563
    %v1572 = vadd.f32 %v516, %v1564
    %v1573 = vxor.u32 %v1569, 2147483648
    %v1574 = vmul.f32 %v1573, 1.442695
    %v1575 = vpow.pop %v1574
    %v1576 = vadd.f32 %v1575, 1.0
    %v1577 = vrcp.pop %v1576
    %v1578 = vmul.f32 %v1576, %v1577
    %v1579 = vsub.f32 1.0, %v1578
    %v1580 = vmul.f32 %v1577, %v1579
    %v1581 = vadd.f32 %v1577, %v1580
    %vm1582 = vweird.f32 %v1576
    %vm1583 = vweird.f32 %v1577
    %vm1584 = vmor %vm1582, %vm1583
    %v1585 = vsel %vm1584, %v1577, %v1581
    %v1586 = vand.u32 2147483647, %v1576
    %vm1587 = vcmp.eq.f32.partialorder %v1586, 8.507059e+37
    %v1588 = vand.u32 %v1576, 2147483648
    %v1589 = vor.u32 1.1754944e-38, %v1588
    %v1590 = vsel %vm1587, %v1589, %v1585
    %v1591 = vmul.f32 1.0, %v1590
    %v1592 = vxor.u32 %v1570, 2147483648
    %v1593 = vmul.f32 %v1592, 1.442695
    %v1594 = vpow.pop %v1593
    %v1595 = vadd.f32 %v1594, 1.0
    %v1596 = vrcp.pop %v1595
    %v1597 = vmul.f32 %v1595, %v1596
    %v1598 = vsub.f32 1.0, %v1597
    %v1599 = vmul.f32 %v1596, %v1598
    %v1600 = vadd.f32 %v1596, %v1599
    %vm1601 = vweird.f32 %v1595
    %vm1602 = vweird.f32 %v1596
    %vm1603 = vmor %vm1601, %vm1602
    %v1604 = vsel %vm1603, %v1596, %v1600
    %v1605 = vand.u32 2147483647, %v1595
    %vm1606 = vcmp.eq.f32.partialorder %v1605, 8.507059e+37
    %v1607 = vand.u32 %v1595, 2147483648
    %v1608 = vor.u32 1.1754944e-38, %v1607
    %v1609 = vsel %vm1606, %v1608, %v1604
    %v1610 = vmul.f32 1.0, %v1609
    %v1611 = vtanh.pop %v1571
    %v1612 = vxor.u32 %v1572, 2147483648
    %v1613 = vmul.f32 %v1612, 1.442695
    %v1614 = vpow.pop %v1613
    %v1615 = vadd.f32 %v1614, 1.0
    %v1616 = vrcp.pop %v1615
    %v1617 = vmul.f32 %v1615, %v1616
    %v1618 = vsub.f32 1.0, %v1617
    %v1619 = vmul.f32 %v1616, %v1618
    %v1620 = vadd.f32 %v1616, %v1619
    %vm1621 = vweird.f32 %v1615
    %vm1622 = vweird.f32 %v1616
    %vm1623 = vmor %vm1621, %vm1622
    %v1624 = vsel %vm1623, %v1616, %v1620
    %v1625 = vand.u32 2147483647, %v1615
    %vm1626 = vcmp.eq.f32.partialorder %v1625, 8.507059e+37
    %v1627 = vand.u32 %v1615, 2147483648
    %v1628 = vor.u32 1.1754944e-38, %v1627
    %v1629 = vsel %vm1626, %v1628, %v1624
    %v1630 = vmul.f32 1.0, %v1629
    %v1632 = vrot.slane %v1498, 6
    %v1634 = vmul.f32 %v1610, %v1632
    %v1635 = vmul.f32 %v1591, %v1611
    %v1636 = vadd.f32 %v1634, %v1635
    %v1637 = vtanh.pop %v1636
    %v1638 = vmul.f32 %v1630, %v1637
    %v1639 = vpack.c.bf16 %v1638, %v1638
    %v1641 = vrot.slane %v1639, 2
    %1643 = vmatpush.bf16.msra.mxu0 %v674
    %1644 = vmatpush.bf16.msra.mxu0 %v670
    %1645 = vmatpush.bf16.msra.mxu0 %v666
    %1646 = vmatpush.bf16.msra.mxu0 %v662
    %1647 = vmatpush.bf16.msra.mxu0 %v658
    %1648 = vmatpush.bf16.msra.mxu0 %v654
    %1649 = vmatpush.bf16.msra.mxu0 %v650
    %1650 = vmatpush.bf16.msra.mxu0 %v646
    %1651 = vmatmul.bf16.gmra.mxu0 %v1641
    %v1652 = vpop.f32.mrf.mxu0
    %v1653 = vadd.f32 0.0, %v1652
    %v1654 = vpop.f32.mrf.mxu0
    %1655 = vdwg.mxu0
    %1656 = vmatpush.bf16.msra.mxu0 %v675
    %1657 = vmatpush.bf16.msra.mxu0 %v671
    %1658 = vmatpush.bf16.msra.mxu0 %v667
    %1659 = vmatpush.bf16.msra.mxu0 %v663
    %1660 = vmatpush.bf16.msra.mxu0 %v659
    %1661 = vmatpush.bf16.msra.mxu0 %v655
    %1662 = vmatpush.bf16.msra.mxu0 %v651
    %1663 = vmatpush.bf16.msra.mxu0 %v647
    %1664 = vmatmul.bf16.gmra.mxu0 %v1641
    %v1665 = vpop.f32.mrf.mxu0
    %v1666 = vadd.f32 0.0, %v1665
    %v1667 = vpop.f32.mrf.mxu0
    %1668 = vdwg.mxu0
    %1669 = vmatpush.bf16.msra.mxu0 %v676
    %1670 = vmatpush.bf16.msra.mxu0 %v672
    %1671 = vmatpush.bf16.msra.mxu0 %v668
    %1672 = vmatpush.bf16.msra.mxu0 %v664
    %1673 = vmatpush.bf16.msra.mxu0 %v660
    %1674 = vmatpush.bf16.msra.mxu0 %v656
    %1675 = vmatpush.bf16.msra.mxu0 %v652
    %1676 = vmatpush.bf16.msra.mxu0 %v648
    %1677 = vmatmul.bf16.gmra.mxu0 %v1641
    %v1678 = vpop.f32.mrf.mxu0
    %v1679 = vadd.f32 0.0, %v1678
    %v1680 = vpop.f32.mrf.mxu0
    %1681 = vdwg.mxu0
    %1682 = vmatpush.bf16.msra.mxu0 %v677
    %1683 = vmatpush.bf16.msra.mxu0 %v673
    %1684 = vmatpush.bf16.msra.mxu0 %v669
    %1685 = vmatpush.bf16.msra.mxu0 %v665
    %1686 = vmatpush.bf16.msra.mxu0 %v661
    %1687 = vmatpush.bf16.msra.mxu0 %v657
    %1688 = vmatpush.bf16.msra.mxu0 %v653
    %1689 = vmatpush.bf16.msra.mxu0 %v649
    %1690 = vmatmul.bf16.gmra.mxu0 %v1641
    %v1691 = vpop.f32.mrf.mxu0
    %v1692 = vadd.f32 0.0, %v1691
    %v1693 = vpop.f32.mrf.mxu0
    %1694 = vdwg.mxu0
    %v1699 = vrot.slane %v1653, 2
    %v1700 = vrot.slane %v1666, 2
    %v1701 = vrot.slane %v1679, 2
    %v1702 = vrot.slane %v1692, 2
    %v1707 = vadd.f32 %v474, %v1699
    %v1708 = vadd.f32 %v488, %v1700
    %v1709 = vadd.f32 %v502, %v1701
    %v1710 = vadd.f32 %v516, %v1702
    %v1711 = vxor.u32 %v1707, 2147483648
    %v1712 = vmul.f32 %v1711, 1.442695
    %v1713 = vpow.pop %v1712
    %v1714 = vadd.f32 %v1713, 1.0
    %v1715 = vrcp.pop %v1714
    %v1716 = vmul.f32 %v1714, %v1715
    %v1717 = vsub.f32 1.0, %v1716
    %v1718 = vmul.f32 %v1715, %v1717
    %v1719 = vadd.f32 %v1715, %v1718
    %vm1720 = vweird.f32 %v1714
    %vm1721 = vweird.f32 %v1715
    %vm1722 = vmor %vm1720, %vm1721
    %v1723 = vsel %vm1722, %v1715, %v1719
    %v1724 = vand.u32 2147483647, %v1714
    %vm1725 = vcmp.eq.f32.partialorder %v1724, 8.507059e+37
    %v1726 = vand.u32 %v1714, 2147483648
    %v1727 = vor.u32 1.1754944e-38, %v1726
    %v1728 = vsel %vm1725, %v1727, %v1723
    %v1729 = vmul.f32 1.0, %v1728
    %v1730 = vxor.u32 %v1708, 2147483648
    %v1731 = vmul.f32 %v1730, 1.442695
    %v1732 = vpow.pop %v1731
    %v1733 = vadd.f32 %v1732, 1.0
    %v1734 = vrcp.pop %v1733
    %v1735 = vmul.f32 %v1733, %v1734
    %v1736 = vsub.f32 1.0, %v1735
    %v1737 = vmul.f32 %v1734, %v1736
    %v1738 = vadd.f32 %v1734, %v1737
    %vm1739 = vweird.f32 %v1733
    %vm1740 = vweird.f32 %v1734
    %vm1741 = vmor %vm1739, %vm1740
    %v1742 = vsel %vm1741, %v1734, %v1738
    %v1743 = vand.u32 2147483647, %v1733
    %vm1744 = vcmp.eq.f32.partialorder %v1743, 8.507059e+37
    %v1745 = vand.u32 %v1733, 2147483648
    %v1746 = vor.u32 1.1754944e-38, %v1745
    %v1747 = vsel %vm1744, %v1746, %v1742
    %v1748 = vmul.f32 1.0, %v1747
    %v1749 = vtanh.pop %v1709
    %v1750 = vxor.u32 %v1710, 2147483648
    %v1751 = vmul.f32 %v1750, 1.442695
    %v1752 = vpow.pop %v1751
    %v1753 = vadd.f32 %v1752, 1.0
    %v1754 = vrcp.pop %v1753
    %v1755 = vmul.f32 %v1753, %v1754
    %v1756 = vsub.f32 1.0, %v1755
    %v1757 = vmul.f32 %v1754, %v1756
    %v1758 = vadd.f32 %v1754, %v1757
    %vm1759 = vweird.f32 %v1753
    %vm1760 = vweird.f32 %v1754
    %vm1761 = vmor %vm1759, %vm1760
    %v1762 = vsel %vm1761, %v1754, %v1758
    %v1763 = vand.u32 2147483647, %v1753
    %vm1764 = vcmp.eq.f32.partialorder %v1763, 8.507059e+37
    %v1765 = vand.u32 %v1753, 2147483648
    %v1766 = vor.u32 1.1754944e-38, %v1765
    %v1767 = vsel %vm1764, %v1766, %v1762
    %v1768 = vmul.f32 1.0, %v1767
    %v1770 = vrot.slane %v1636, 6
    %v1772 = vmul.f32 %v1748, %v1770
    %v1773 = vmul.f32 %v1729, %v1749
    %v1774 = vadd.f32 %v1772, %v1773
    %v1775 = vtanh.pop %v1774
    %v1776 = vmul.f32 %v1768, %v1775
    %v1777 = vsel %vm414, %v828, %v963
    %v1778 = vsel %vm416, %v1777, %v1101
    %v1779 = vsel %vm418, %v1778, %v1239
    %v1780 = vsel %vm414, %v1365, %v1500
    %v1781 = vsel %vm416, %v1780, %v1638
    %v1782 = vsel %vm418, %v1781, %v1776
    %v1783 = vld [vmem:[%s9] sm:$0xff]
    %v1784 = vld [vmem:[%s9 + $0x8] sm:$0xff]
    %v1785 = vld [vmem:[%s9 + $0x10] sm:$0xff]
    %v1786 = vld [vmem:[%s9 + $0x18] sm:$0xff]
    %v1787 = vld [vmem:[%s9 + $0x20] sm:$0xff]
    %v1788 = vld [vmem:[%s9 + $0x28] sm:$0xff]
    %v1789 = vld [vmem:[%s9 + $0x30] sm:$0xff]
    %v1790 = vld [vmem:[%s9 + $0x38] sm:$0xff]
    %v1791 = vld [vmem:[%s9 + $0x40] sm:$0xff]
    %v1792 = vld [vmem:[%s9 + $0x48] sm:$0xff]
    %v1793 = vld [vmem:[%s9 + $0x50] sm:$0xff]
    %v1794 = vld [vmem:[%s9 + $0x58] sm:$0xff]
    %v1795 = vld [vmem:[%s9 + $0x60] sm:$0xff]
    %v1796 = vld [vmem:[%s9 + $0x68] sm:$0xff]
    %v1797 = vld [vmem:[%s9 + $0x70] sm:$0xff]
    %v1798 = vld [vmem:[%s9 + $0x78] sm:$0xff]
    %v1799 = vld [vmem:[%s9 + $0x80] sm:$0xff]
    %v1800 = vld [vmem:[%s9 + $0x88] sm:$0xff]
    %v1801 = vld [vmem:[%s9 + $0x90] sm:$0xff]
    %v1802 = vld [vmem:[%s9 + $0x98] sm:$0xff]
    %v1803 = vld [vmem:[%s9 + $0xa0] sm:$0xff]
    %v1804 = vld [vmem:[%s9 + $0xa8] sm:$0xff]
    %v1805 = vld [vmem:[%s9 + $0xb0] sm:$0xff]
    %v1806 = vld [vmem:[%s9 + $0xb8] sm:$0xff]
    %v1807 = vld [vmem:[%s9 + $0xc0] sm:$0xff]
    %v1808 = vld [vmem:[%s9 + $0xc8] sm:$0xff]
    %v1809 = vld [vmem:[%s9 + $0xd0] sm:$0xff]
    %v1810 = vld [vmem:[%s9 + $0xd8] sm:$0xff]
    %v1811 = vld [vmem:[%s9 + $0xe0] sm:$0xff]
    %v1812 = vld [vmem:[%s9 + $0xe8] sm:$0xff]
    %v1813 = vld [vmem:[%s9 + $0xf0] sm:$0xff]
    %v1814 = vld [vmem:[%s9 + $0xf8] sm:$0xff]
    %v1815 = vpack.c.bf16 %v1782, %v1779
    %v1816 = vld [vmem:[%s13] sm:$0xf]
    %v1818 = vperm.slane %v1816, 0
    %v1819 = vperm.slane %v1816, 1
    %v1820 = vperm.slane %v1816, 2
    %v1821 = vperm.slane %v1816, 3
    %v1858 = vunpack.c.l.b16 %v1783
    %v1859 = vunpack.c.h.b16 %v1783
    %v1860 = vunpack.c.l.b16 %v1784
    %v1861 = vunpack.c.h.b16 %v1784
    %v1862 = vunpack.c.l.b16 %v1785
    %v1863 = vunpack.c.h.b16 %v1785
    %v1864 = vunpack.c.l.b16 %v1786
    %v1865 = vunpack.c.h.b16 %v1786
    %v1866 = vunpack.c.l.b16 %v1787
    %v1867 = vunpack.c.h.b16 %v1787
    %v1868 = vunpack.c.l.b16 %v1788
    %v1869 = vunpack.c.h.b16 %v1788
    %v1870 = vunpack.c.l.b16 %v1789
    %v1871 = vunpack.c.h.b16 %v1789
    %v1872 = vunpack.c.l.b16 %v1790
    %v1873 = vunpack.c.h.b16 %v1790
    %v1874 = vunpack.c.l.b16 %v1791
    %v1875 = vunpack.c.h.b16 %v1791
    %v1876 = vunpack.c.l.b16 %v1792
    %v1877 = vunpack.c.h.b16 %v1792
    %v1878 = vunpack.c.l.b16 %v1793
    %v1879 = vunpack.c.h.b16 %v1793
    %v1880 = vunpack.c.l.b16 %v1794
    %v1881 = vunpack.c.h.b16 %v1794
    %v1882 = vunpack.c.l.b16 %v1795
    %v1883 = vunpack.c.h.b16 %v1795
    %v1884 = vunpack.c.l.b16 %v1796
    %v1885 = vunpack.c.h.b16 %v1796
    %v1886 = vunpack.c.l.b16 %v1797
    %v1887 = vunpack.c.h.b16 %v1797
    %v1888 = vunpack.c.l.b16 %v1798
    %v1889 = vunpack.c.h.b16 %v1798
    %v1890 = vunpack.c.l.b16 %v1799
    %v1891 = vunpack.c.h.b16 %v1799
    %v1892 = vunpack.c.l.b16 %v1800
    %v1893 = vunpack.c.h.b16 %v1800
    %v1894 = vunpack.c.l.b16 %v1801
    %v1895 = vunpack.c.h.b16 %v1801
    %v1896 = vunpack.c.l.b16 %v1802
    %v1897 = vunpack.c.h.b16 %v1802
    %v1898 = vunpack.c.l.b16 %v1803
    %v1899 = vunpack.c.h.b16 %v1803
    %v1900 = vunpack.c.l.b16 %v1804
    %v1901 = vunpack.c.h.b16 %v1804
    %v1902 = vunpack.c.l.b16 %v1805
    %v1903 = vunpack.c.h.b16 %v1805
    %v1904 = vunpack.c.l.b16 %v1806
    %v1905 = vunpack.c.h.b16 %v1806
    %v1906 = vunpack.c.l.b16 %v1807
    %v1907 = vunpack.c.h.b16 %v1807
    %v1908 = vunpack.c.l.b16 %v1808
    %v1909 = vunpack.c.h.b16 %v1808
    %v1910 = vunpack.c.l.b16 %v1809
    %v1911 = vunpack.c.h.b16 %v1809
    %v1912 = vunpack.c.l.b16 %v1810
    %v1913 = vunpack.c.h.b16 %v1810
    %v1914 = vunpack.c.l.b16 %v1811
    %v1915 = vunpack.c.h.b16 %v1811
    %v1916 = vunpack.c.l.b16 %v1812
    %v1917 = vunpack.c.h.b16 %v1812
    %v1918 = vunpack.c.l.b16 %v1813
    %v1919 = vunpack.c.h.b16 %v1813
    %v1920 = vunpack.c.l.b16 %v1814
    %v1921 = vunpack.c.h.b16 %v1814
    %v1922 = vpack.c.b16 %v1862, %v1858
    %v1923 = vpack.c.b16 %v1863, %v1859
    %v1924 = vpack.c.b16 %v1864, %v1860
    %v1925 = vpack.c.b16 %v1865, %v1861
    %v1926 = vpack.c.b16 %v1870, %v1866
    %v1927 = vpack.c.b16 %v1871, %v1867
    %v1928 = vpack.c.b16 %v1872, %v1868
    %v1929 = vpack.c.b16 %v1873, %v1869
    %v1930 = vpack.c.b16 %v1878, %v1874
    %v1931 = vpack.c.b16 %v1879, %v1875
    %v1932 = vpack.c.b16 %v1880, %v1876
    %v1933 = vpack.c.b16 %v1881, %v1877
    %v1934 = vpack.c.b16 %v1886, %v1882
    %v1935 = vpack.c.b16 %v1887, %v1883
    %v1936 = vpack.c.b16 %v1888, %v1884
    %v1937 = vpack.c.b16 %v1889, %v1885
    %v1938 = vpack.c.b16 %v1894, %v1890
    %v1939 = vpack.c.b16 %v1895, %v1891
    %v1940 = vpack.c.b16 %v1896, %v1892
    %v1941 = vpack.c.b16 %v1897, %v1893
    %v1942 = vpack.c.b16 %v1902, %v1898
    %v1943 = vpack.c.b16 %v1903, %v1899
    %v1944 = vpack.c.b16 %v1904, %v1900
    %v1945 = vpack.c.b16 %v1905, %v1901
    %v1946 = vpack.c.b16 %v1910, %v1906
    %v1947 = vpack.c.b16 %v1911, %v1907
    %v1948 = vpack.c.b16 %v1912, %v1908
    %v1949 = vpack.c.b16 %v1913, %v1909
    %v1950 = vpack.c.b16 %v1918, %v1914
    %v1951 = vpack.c.b16 %v1919, %v1915
    %v1952 = vpack.c.b16 %v1920, %v1916
    %v1953 = vpack.c.b16 %v1921, %v1917
    %1986 = vmatpush.bf16.msra.mxu0 %v1950
    %1987 = vmatpush.bf16.msra.mxu0 %v1946
    %1988 = vmatpush.bf16.msra.mxu0 %v1942
    %1989 = vmatpush.bf16.msra.mxu0 %v1938
    %1990 = vmatpush.bf16.msra.mxu0 %v1934
    %1991 = vmatpush.bf16.msra.mxu0 %v1930
    %1992 = vmatpush.bf16.msra.mxu0 %v1926
    %1993 = vmatpush.bf16.msra.mxu0 %v1922
    %1994 = vmatmul.bf16.gmra.mxu0 %v1815
    %v1995 = vpop.f32.mrf.mxu0
    %v1996 = vadd.f32 %v1818, %v1995
    %v1997 = vpop.f32.mrf.mxu0
    %v1998 = vadd.f32 %v1818, %v1997
    %1999 = vdwg.mxu0
    %2000 = vmatpush.bf16.msra.mxu0 %v1951
    %2001 = vmatpush.bf16.msra.mxu0 %v1947
    %2002 = vmatpush.bf16.msra.mxu0 %v1943
    %2003 = vmatpush.bf16.msra.mxu0 %v1939
    %2004 = vmatpush.bf16.msra.mxu0 %v1935
    %2005 = vmatpush.bf16.msra.mxu0 %v1931
    %2006 = vmatpush.bf16.msra.mxu0 %v1927
    %2007 = vmatpush.bf16.msra.mxu0 %v1923
    %2008 = vmatmul.bf16.gmra.mxu0 %v1815
    %v2009 = vpop.f32.mrf.mxu0
    %v2010 = vadd.f32 %v1819, %v2009
    %v2011 = vpop.f32.mrf.mxu0
    %v2012 = vadd.f32 %v1819, %v2011
    %2013 = vdwg.mxu0
    %2014 = vmatpush.bf16.msra.mxu0 %v1952
    %2015 = vmatpush.bf16.msra.mxu0 %v1948
    %2016 = vmatpush.bf16.msra.mxu0 %v1944
    %2017 = vmatpush.bf16.msra.mxu0 %v1940
    %2018 = vmatpush.bf16.msra.mxu0 %v1936
    %2019 = vmatpush.bf16.msra.mxu0 %v1932
    %2020 = vmatpush.bf16.msra.mxu0 %v1928
    %2021 = vmatpush.bf16.msra.mxu0 %v1924
    %2022 = vmatmul.bf16.gmra.mxu0 %v1815
    %v2023 = vpop.f32.mrf.mxu0
    %v2024 = vadd.f32 %v1820, %v2023
    %v2025 = vpop.f32.mrf.mxu0
    %v2026 = vadd.f32 %v1820, %v2025
    %2027 = vdwg.mxu0
    %2028 = vmatpush.bf16.msra.mxu0 %v1953
    %2029 = vmatpush.bf16.msra.mxu0 %v1949
    %2030 = vmatpush.bf16.msra.mxu0 %v1945
    %2031 = vmatpush.bf16.msra.mxu0 %v1941
    %2032 = vmatpush.bf16.msra.mxu0 %v1937
    %2033 = vmatpush.bf16.msra.mxu0 %v1933
    %2034 = vmatpush.bf16.msra.mxu0 %v1929
    %2035 = vmatpush.bf16.msra.mxu0 %v1925
    %2036 = vmatmul.bf16.gmra.mxu0 %v1815
    %v2037 = vpop.f32.mrf.mxu0
    %v2038 = vadd.f32 %v1821, %v2037
    %v2039 = vpop.f32.mrf.mxu0
    %v2040 = vadd.f32 %v1821, %v2039
    %2041 = vdwg.mxu0
    %v2042 = vld [vmem:[#allocation10] sm:$0xff]
    %v2043 = vld [vmem:[#allocation10 + $0x8] sm:$0xff]
    %v2044 = vld [vmem:[#allocation10 + $0x10] sm:$0xff]
    %v2045 = vld [vmem:[#allocation10 + $0x18] sm:$0xff]
    %v2046 = vld [vmem:[#allocation10 + $0x20] sm:$0xff]
    %v2047 = vld [vmem:[#allocation10 + $0x28] sm:$0xff]
    %v2048 = vld [vmem:[#allocation10 + $0x30] sm:$0xff]
    %v2049 = vld [vmem:[#allocation10 + $0x38] sm:$0xff]
    %v2050 = vld [vmem:[#allocation10 + $0x40] sm:$0xff]
    %v2051 = vld [vmem:[#allocation10 + $0x48] sm:$0xff]
    %v2052 = vld [vmem:[#allocation10 + $0x50] sm:$0xff]
    %v2053 = vld [vmem:[#allocation10 + $0x58] sm:$0xff]
    %v2054 = vld [vmem:[#allocation10 + $0x60] sm:$0xff]
    %v2055 = vld [vmem:[#allocation10 + $0x68] sm:$0xff]
    %v2056 = vld [vmem:[#allocation10 + $0x70] sm:$0xff]
    %v2057 = vld [vmem:[#allocation10 + $0x78] sm:$0xff]
    %v2058 = vld [vmem:[#allocation10 + $0x80] sm:$0xff]
    %v2059 = vld [vmem:[#allocation10 + $0x88] sm:$0xff]
    %v2060 = vld [vmem:[#allocation10 + $0x90] sm:$0xff]
    %v2061 = vld [vmem:[#allocation10 + $0x98] sm:$0xff]
    %v2062 = vld [vmem:[#allocation10 + $0xa0] sm:$0xff]
    %v2063 = vld [vmem:[#allocation10 + $0xa8] sm:$0xff]
    %v2064 = vld [vmem:[#allocation10 + $0xb0] sm:$0xff]
    %v2065 = vld [vmem:[#allocation10 + $0xb8] sm:$0xff]
    %v2066 = vld [vmem:[#allocation10 + $0xc0] sm:$0xff]
    %v2067 = vld [vmem:[#allocation10 + $0xc8] sm:$0xff]
    %v2068 = vld [vmem:[#allocation10 + $0xd0] sm:$0xff]
    %v2069 = vld [vmem:[#allocation10 + $0xd8] sm:$0xff]
    %v2070 = vld [vmem:[#allocation10 + $0xe0] sm:$0xff]
    %v2071 = vld [vmem:[#allocation10 + $0xe8] sm:$0xff]
    %v2072 = vld [vmem:[#allocation10 + $0xf0] sm:$0xff]
    %v2073 = vld [vmem:[#allocation10 + $0xf8] sm:$0xff]
    %v2106 = vunpack.c.l.b16 %v2042
    %v2107 = vunpack.c.h.b16 %v2042
    %v2108 = vunpack.c.l.b16 %v2043
    %v2109 = vunpack.c.h.b16 %v2043
    %v2110 = vunpack.c.l.b16 %v2044
    %v2111 = vunpack.c.h.b16 %v2044
    %v2112 = vunpack.c.l.b16 %v2045
    %v2113 = vunpack.c.h.b16 %v2045
    %v2114 = vunpack.c.l.b16 %v2046
    %v2115 = vunpack.c.h.b16 %v2046
    %v2116 = vunpack.c.l.b16 %v2047
    %v2117 = vunpack.c.h.b16 %v2047
    %v2118 = vunpack.c.l.b16 %v2048
    %v2119 = vunpack.c.h.b16 %v2048
    %v2120 = vunpack.c.l.b16 %v2049
    %v2121 = vunpack.c.h.b16 %v2049
    %v2122 = vunpack.c.l.b16 %v2050
    %v2123 = vunpack.c.h.b16 %v2050
    %v2124 = vunpack.c.l.b16 %v2051
    %v2125 = vunpack.c.h.b16 %v2051
    %v2126 = vunpack.c.l.b16 %v2052
    %v2127 = vunpack.c.h.b16 %v2052
    %v2128 = vunpack.c.l.b16 %v2053
    %v2129 = vunpack.c.h.b16 %v2053
    %v2130 = vunpack.c.l.b16 %v2054
    %v2131 = vunpack.c.h.b16 %v2054
    %v2132 = vunpack.c.l.b16 %v2055
    %v2133 = vunpack.c.h.b16 %v2055
    %v2134 = vunpack.c.l.b16 %v2056
    %v2135 = vunpack.c.h.b16 %v2056
    %v2136 = vunpack.c.l.b16 %v2057
    %v2137 = vunpack.c.h.b16 %v2057
    %v2138 = vunpack.c.l.b16 %v2058
    %v2139 = vunpack.c.h.b16 %v2058
    %v2140 = vunpack.c.l.b16 %v2059
    %v2141 = vunpack.c.h.b16 %v2059
    %v2142 = vunpack.c.l.b16 %v2060
    %v2143 = vunpack.c.h.b16 %v2060
    %v2144 = vunpack.c.l.b16 %v2061
    %v2145 = vunpack.c.h.b16 %v2061
    %v2146 = vunpack.c.l.b16 %v2062
    %v2147 = vunpack.c.h.b16 %v2062
    %v2148 = vunpack.c.l.b16 %v2063
    %v2149 = vunpack.c.h.b16 %v2063
    %v2150 = vunpack.c.l.b16 %v2064
    %v2151 = vunpack.c.h.b16 %v2064
    %v2152 = vunpack.c.l.b16 %v2065
    %v2153 = vunpack.c.h.b16 %v2065
    %v2154 = vunpack.c.l.b16 %v2066
    %v2155 = vunpack.c.h.b16 %v2066
    %v2156 = vunpack.c.l.b16 %v2067
    %v2157 = vunpack.c.h.b16 %v2067
    %v2158 = vunpack.c.l.b16 %v2068
    %v2159 = vunpack.c.h.b16 %v2068
    %v2160 = vunpack.c.l.b16 %v2069
    %v2161 = vunpack.c.h.b16 %v2069
    %v2162 = vunpack.c.l.b16 %v2070
    %v2163 = vunpack.c.h.b16 %v2070
    %v2164 = vunpack.c.l.b16 %v2071
    %v2165 = vunpack.c.h.b16 %v2071
    %v2166 = vunpack.c.l.b16 %v2072
    %v2167 = vunpack.c.h.b16 %v2072
    %v2168 = vunpack.c.l.b16 %v2073
    %v2169 = vunpack.c.h.b16 %v2073
    %v2170 = vpack.c.b16 %v2110, %v2106
    %v2171 = vpack.c.b16 %v2111, %v2107
    %v2172 = vpack.c.b16 %v2112, %v2108
    %v2173 = vpack.c.b16 %v2113, %v2109
    %v2174 = vpack.c.b16 %v2118, %v2114
    %v2175 = vpack.c.b16 %v2119, %v2115
    %v2176 = vpack.c.b16 %v2120, %v2116
    %v2177 = vpack.c.b16 %v2121, %v2117
    %v2178 = vpack.c.b16 %v2126, %v2122
    %v2179 = vpack.c.b16 %v2127, %v2123
    %v2180 = vpack.c.b16 %v2128, %v2124
    %v2181 = vpack.c.b16 %v2129, %v2125
    %v2182 = vpack.c.b16 %v2134, %v2130
    %v2183 = vpack.c.b16 %v2135, %v2131
    %v2184 = vpack.c.b16 %v2136, %v2132
    %v2185 = vpack.c.b16 %v2137, %v2133
    %v2186 = vpack.c.b16 %v2142, %v2138
    %v2187 = vpack.c.b16 %v2143, %v2139
    %v2188 = vpack.c.b16 %v2144, %v2140
    %v2189 = vpack.c.b16 %v2145, %v2141
    %v2190 = vpack.c.b16 %v2150, %v2146
    %v2191 = vpack.c.b16 %v2151, %v2147
    %v2192 = vpack.c.b16 %v2152, %v2148
    %v2193 = vpack.c.b16 %v2153, %v2149
    %v2194 = vpack.c.b16 %v2158, %v2154
    %v2195 = vpack.c.b16 %v2159, %v2155
    %v2196 = vpack.c.b16 %v2160, %v2156
    %v2197 = vpack.c.b16 %v2161, %v2157
    %v2198 = vpack.c.b16 %v2166, %v2162
    %v2199 = vpack.c.b16 %v2167, %v2163
    %v2200 = vpack.c.b16 %v2168, %v2164
    %v2201 = vpack.c.b16 %v2169, %v2165
    %2234 = vmatpush.bf16.msra.mxu0 %v2198
    %2235 = vmatpush.bf16.msra.mxu0 %v2194
    %2236 = vmatpush.bf16.msra.mxu0 %v2190
    %2237 = vmatpush.bf16.msra.mxu0 %v2186
    %2238 = vmatpush.bf16.msra.mxu0 %v2182
    %2239 = vmatpush.bf16.msra.mxu0 %v2178
    %2240 = vmatpush.bf16.msra.mxu0 %v2174
    %2241 = vmatpush.bf16.msra.mxu0 %v2170
    %2242 = vmatmul.bf16.gmra.mxu0 0
    %v2243 = vpop.f32.mrf.mxu0
    %v2244 = vadd.f32 0.0, %v2243
    %v2245 = vpop.f32.mrf.mxu0
    %2246 = vdwg.mxu0
    %2247 = vmatpush.bf16.msra.mxu0 %v2199
    %2248 = vmatpush.bf16.msra.mxu0 %v2195
    %2249 = vmatpush.bf16.msra.mxu0 %v2191
    %2250 = vmatpush.bf16.msra.mxu0 %v2187
    %2251 = vmatpush.bf16.msra.mxu0 %v2183
    %2252 = vmatpush.bf16.msra.mxu0 %v2179
    %2253 = vmatpush.bf16.msra.mxu0 %v2175
    %2254 = vmatpush.bf16.msra.mxu0 %v2171
    %2255 = vmatmul.bf16.gmra.mxu0 0
    %v2256 = vpop.f32.mrf.mxu0
    %v2257 = vadd.f32 0.0, %v2256
    %v2258 = vpop.f32.mrf.mxu0
    %2259 = vdwg.mxu0
    %2260 = vmatpush.bf16.msra.mxu0 %v2200
    %2261 = vmatpush.bf16.msra.mxu0 %v2196
    %2262 = vmatpush.bf16.msra.mxu0 %v2192
    %2263 = vmatpush.bf16.msra.mxu0 %v2188
    %2264 = vmatpush.bf16.msra.mxu0 %v2184
    %2265 = vmatpush.bf16.msra.mxu0 %v2180
    %2266 = vmatpush.bf16.msra.mxu0 %v2176
    %2267 = vmatpush.bf16.msra.mxu0 %v2172
    %2268 = vmatmul.bf16.gmra.mxu0 0
    %v2269 = vpop.f32.mrf.mxu0
    %v2270 = vadd.f32 0.0, %v2269
    %v2271 = vpop.f32.mrf.mxu0
    %2272 = vdwg.mxu0
    %2273 = vmatpush.bf16.msra.mxu0 %v2201
    %2274 = vmatpush.bf16.msra.mxu0 %v2197
    %2275 = vmatpush.bf16.msra.mxu0 %v2193
    %2276 = vmatpush.bf16.msra.mxu0 %v2189
    %2277 = vmatpush.bf16.msra.mxu0 %v2185
    %2278 = vmatpush.bf16.msra.mxu0 %v2181
    %2279 = vmatpush.bf16.msra.mxu0 %v2177
    %2280 = vmatpush.bf16.msra.mxu0 %v2173
    %2281 = vmatmul.bf16.gmra.mxu0 0
    %v2282 = vpop.f32.mrf.mxu0
    %v2283 = vadd.f32 0.0, %v2282
    %v2284 = vpop.f32.mrf.mxu0
    %2285 = vdwg.mxu0
    %v2286 = vadd.f32 %v1996, %v2244
    %v2287 = vadd.f32 %v2010, %v2257
    %v2288 = vadd.f32 %v2024, %v2270
    %v2289 = vadd.f32 %v2038, %v2283
    %v2290 = vxor.u32 %v2286, 2147483648
    %v2291 = vmul.f32 %v2290, 1.442695
    %v2292 = vpow.pop %v2291
    %v2293 = vadd.f32 %v2292, 1.0
    %v2294 = vrcp.pop %v2293
    %v2295 = vmul.f32 %v2293, %v2294
    %v2296 = vsub.f32 1.0, %v2295
    %v2297 = vmul.f32 %v2294, %v2296
    %v2298 = vadd.f32 %v2294, %v2297
    %vm2299 = vweird.f32 %v2293
    %vm2300 = vweird.f32 %v2294
    %vm2301 = vmor %vm2299, %vm2300
    %v2302 = vsel %vm2301, %v2294, %v2298
    %v2303 = vand.u32 2147483647, %v2293
    %vm2304 = vcmp.eq.f32.partialorder %v2303, 8.507059e+37
    %v2305 = vand.u32 %v2293, 2147483648
    %v2306 = vor.u32 1.1754944e-38, %v2305
    %v2307 = vsel %vm2304, %v2306, %v2302
    %v2308 = vmul.f32 1.0, %v2307
    %v2309 = vxor.u32 %v2287, 2147483648
    %v2310 = vmul.f32 %v2309, 1.442695
    %v2311 = vpow.pop %v2310
    %v2312 = vadd.f32 %v2311, 1.0
    %v2313 = vrcp.pop %v2312
    %v2314 = vmul.f32 %v2312, %v2313
    %v2315 = vsub.f32 1.0, %v2314
    %v2316 = vmul.f32 %v2313, %v2315
    %v2317 = vadd.f32 %v2313, %v2316
    %vm2318 = vweird.f32 %v2312
    %vm2319 = vweird.f32 %v2313
    %vm2320 = vmor %vm2318, %vm2319
    %v2321 = vsel %vm2320, %v2313, %v2317
    %v2322 = vand.u32 2147483647, %v2312
    %vm2323 = vcmp.eq.f32.partialorder %v2322, 8.507059e+37
    %v2324 = vand.u32 %v2312, 2147483648
    %v2325 = vor.u32 1.1754944e-38, %v2324
    %v2326 = vsel %vm2323, %v2325, %v2321
    %v2327 = vmul.f32 1.0, %v2326
    %v2328 = vtanh.pop %v2288
    %v2329 = vxor.u32 %v2289, 2147483648
    %v2330 = vmul.f32 %v2329, 1.442695
    %v2331 = vpow.pop %v2330
    %v2332 = vadd.f32 %v2331, 1.0
    %v2333 = vrcp.pop %v2332
    %v2334 = vmul.f32 %v2332, %v2333
    %v2335 = vsub.f32 1.0, %v2334
    %v2336 = vmul.f32 %v2333, %v2335
    %v2337 = vadd.f32 %v2333, %v2336
    %vm2338 = vweird.f32 %v2332
    %vm2339 = vweird.f32 %v2333
    %vm2340 = vmor %vm2338, %vm2339
    %v2341 = vsel %vm2340, %v2333, %v2337
    %v2342 = vand.u32 2147483647, %v2332
    %vm2343 = vcmp.eq.f32.partialorder %v2342, 8.507059e+37
    %v2344 = vand.u32 %v2332, 2147483648
    %v2345 = vor.u32 1.1754944e-38, %v2344
    %v2346 = vsel %vm2343, %v2345, %v2341
    %v2347 = vmul.f32 1.0, %v2346
    %v2348 = vmul.f32 %v2327, 0.0
    %v2349 = vmul.f32 %v2308, %v2328
    %v2350 = vadd.f32 %v2348, %v2349
    %v2351 = vtanh.pop %v2350
    %v2352 = vmul.f32 %v2347, %v2351
    %v2353 = vpack.c.bf16 %v2352, %v2352
    %2354 = vmatpush.bf16.msra.mxu0 %v2198
    %2355 = vmatpush.bf16.msra.mxu0 %v2194
    %2356 = vmatpush.bf16.msra.mxu0 %v2190
    %2357 = vmatpush.bf16.msra.mxu0 %v2186
    %2358 = vmatpush.bf16.msra.mxu0 %v2182
    %2359 = vmatpush.bf16.msra.mxu0 %v2178
    %2360 = vmatpush.bf16.msra.mxu0 %v2174
    %2361 = vmatpush.bf16.msra.mxu0 %v2170
    %2362 = vmatmul.bf16.gmra.mxu0 %v2353
    %v2363 = vpop.f32.mrf.mxu0
    %v2364 = vadd.f32 0.0, %v2363
    %v2365 = vpop.f32.mrf.mxu0
    %2366 = vdwg.mxu0
    %2367 = vmatpush.bf16.msra.mxu0 %v2199
    %2368 = vmatpush.bf16.msra.mxu0 %v2195
    %2369 = vmatpush.bf16.msra.mxu0 %v2191
    %2370 = vmatpush.bf16.msra.mxu0 %v2187
    %2371 = vmatpush.bf16.msra.mxu0 %v2183
    %2372 = vmatpush.bf16.msra.mxu0 %v2179
    %2373 = vmatpush.bf16.msra.mxu0 %v2175
    %2374 = vmatpush.bf16.msra.mxu0 %v2171
    %2375 = vmatmul.bf16.gmra.mxu0 %v2353
    %v2376 = vpop.f32.mrf.mxu0
    %v2377 = vadd.f32 0.0, %v2376
    %v2378 = vpop.f32.mrf.mxu0
    %2379 = vdwg.mxu0
    %2380 = vmatpush.bf16.msra.mxu0 %v2200
    %2381 = vmatpush.bf16.msra.mxu0 %v2196
    %2382 = vmatpush.bf16.msra.mxu0 %v2192
    %2383 = vmatpush.bf16.msra.mxu0 %v2188
    %2384 = vmatpush.bf16.msra.mxu0 %v2184
    %2385 = vmatpush.bf16.msra.mxu0 %v2180
    %2386 = vmatpush.bf16.msra.mxu0 %v2176
    %2387 = vmatpush.bf16.msra.mxu0 %v2172
    %2388 = vmatmul.bf16.gmra.mxu0 %v2353
    %v2389 = vpop.f32.mrf.mxu0
    %v2390 = vadd.f32 0.0, %v2389
    %v2391 = vpop.f32.mrf.mxu0
    %2392 = vdwg.mxu0
    %2393 = vmatpush.bf16.msra.mxu0 %v2201
    %2394 = vmatpush.bf16.msra.mxu0 %v2197
    %2395 = vmatpush.bf16.msra.mxu0 %v2193
    %2396 = vmatpush.bf16.msra.mxu0 %v2189
    %2397 = vmatpush.bf16.msra.mxu0 %v2185
    %2398 = vmatpush.bf16.msra.mxu0 %v2181
    %2399 = vmatpush.bf16.msra.mxu0 %v2177
    %2400 = vmatpush.bf16.msra.mxu0 %v2173
    %2401 = vmatmul.bf16.gmra.mxu0 %v2353
    %v2402 = vpop.f32.mrf.mxu0
    %v2403 = vadd.f32 0.0, %v2402
    %v2404 = vpop.f32.mrf.mxu0
    %2405 = vdwg.mxu0
    %v2410 = vrot.slane %v2364, 6
    %v2411 = vrot.slane %v2377, 6
    %v2412 = vrot.slane %v2390, 6
    %v2413 = vrot.slane %v2403, 6
    %v2418 = vadd.f32 %v1996, %v2410
    %v2419 = vadd.f32 %v2010, %v2411
    %v2420 = vadd.f32 %v2024, %v2412
    %v2421 = vadd.f32 %v2038, %v2413
    %v2422 = vxor.u32 %v2418, 2147483648
    %v2423 = vmul.f32 %v2422, 1.442695
    %v2424 = vpow.pop %v2423
    %v2425 = vadd.f32 %v2424, 1.0
    %v2426 = vrcp.pop %v2425
    %v2427 = vmul.f32 %v2425, %v2426
    %v2428 = vsub.f32 1.0, %v2427
    %v2429 = vmul.f32 %v2426, %v2428
    %v2430 = vadd.f32 %v2426, %v2429
    %vm2431 = vweird.f32 %v2425
    %vm2432 = vweird.f32 %v2426
    %vm2433 = vmor %vm2431, %vm2432
    %v2434 = vsel %vm2433, %v2426, %v2430
    %v2435 = vand.u32 2147483647, %v2425
    %vm2436 = vcmp.eq.f32.partialorder %v2435, 8.507059e+37
    %v2437 = vand.u32 %v2425, 2147483648
    %v2438 = vor.u32 1.1754944e-38, %v2437
    %v2439 = vsel %vm2436, %v2438, %v2434
    %v2440 = vmul.f32 1.0, %v2439
    %v2441 = vxor.u32 %v2419, 2147483648
    %v2442 = vmul.f32 %v2441, 1.442695
    %v2443 = vpow.pop %v2442
    %v2444 = vadd.f32 %v2443, 1.0
    %v2445 = vrcp.pop %v2444
    %v2446 = vmul.f32 %v2444, %v2445
    %v2447 = vsub.f32 1.0, %v2446
    %v2448 = vmul.f32 %v2445, %v2447
    %v2449 = vadd.f32 %v2445, %v2448
    %vm2450 = vweird.f32 %v2444
    %vm2451 = vweird.f32 %v2445
    %vm2452 = vmor %vm2450, %vm2451
    %v2453 = vsel %vm2452, %v2445, %v2449
    %v2454 = vand.u32 2147483647, %v2444
    %vm2455 = vcmp.eq.f32.partialorder %v2454, 8.507059e+37
    %v2456 = vand.u32 %v2444, 2147483648
    %v2457 = vor.u32 1.1754944e-38, %v2456
    %v2458 = vsel %vm2455, %v2457, %v2453
    %v2459 = vmul.f32 1.0, %v2458
    %v2460 = vtanh.pop %v2420
    %v2461 = vxor.u32 %v2421, 2147483648
    %v2462 = vmul.f32 %v2461, 1.442695
    %v2463 = vpow.pop %v2462
    %v2464 = vadd.f32 %v2463, 1.0
    %v2465 = vrcp.pop %v2464
    %v2466 = vmul.f32 %v2464, %v2465
    %v2467 = vsub.f32 1.0, %v2466
    %v2468 = vmul.f32 %v2465, %v2467
    %v2469 = vadd.f32 %v2465, %v2468
    %vm2470 = vweird.f32 %v2464
    %vm2471 = vweird.f32 %v2465
    %vm2472 = vmor %vm2470, %vm2471
    %v2473 = vsel %vm2472, %v2465, %v2469
    %v2474 = vand.u32 2147483647, %v2464
    %vm2475 = vcmp.eq.f32.partialorder %v2474, 8.507059e+37
    %v2476 = vand.u32 %v2464, 2147483648
    %v2477 = vor.u32 1.1754944e-38, %v2476
    %v2478 = vsel %vm2475, %v2477, %v2473
    %v2479 = vmul.f32 1.0, %v2478
    %v2481 = vrot.slane %v2350, 6
    %v2483 = vmul.f32 %v2459, %v2481
    %v2484 = vmul.f32 %v2440, %v2460
    %v2485 = vadd.f32 %v2483, %v2484
    %v2486 = vtanh.pop %v2485
    %v2487 = vmul.f32 %v2479, %v2486
    %v2488 = vpack.c.bf16 %v2487, %v2487
    %v2490 = vrot.slane %v2488, 1
    %2492 = vmatpush.bf16.msra.mxu0 %v2198
    %2493 = vmatpush.bf16.msra.mxu0 %v2194
    %2494 = vmatpush.bf16.msra.mxu0 %v2190
    %2495 = vmatpush.bf16.msra.mxu0 %v2186
    %2496 = vmatpush.bf16.msra.mxu0 %v2182
    %2497 = vmatpush.bf16.msra.mxu0 %v2178
    %2498 = vmatpush.bf16.msra.mxu0 %v2174
    %2499 = vmatpush.bf16.msra.mxu0 %v2170
    %2500 = vmatmul.bf16.gmra.mxu0 %v2490
    %v2501 = vpop.f32.mrf.mxu0
    %v2502 = vadd.f32 0.0, %v2501
    %v2503 = vpop.f32.mrf.mxu0
    %2504 = vdwg.mxu0
    %2505 = vmatpush.bf16.msra.mxu0 %v2199
    %2506 = vmatpush.bf16.msra.mxu0 %v2195
    %2507 = vmatpush.bf16.msra.mxu0 %v2191
    %2508 = vmatpush.bf16.msra.mxu0 %v2187
    %2509 = vmatpush.bf16.msra.mxu0 %v2183
    %2510 = vmatpush.bf16.msra.mxu0 %v2179
    %2511 = vmatpush.bf16.msra.mxu0 %v2175
    %2512 = vmatpush.bf16.msra.mxu0 %v2171
    %2513 = vmatmul.bf16.gmra.mxu0 %v2490
    %v2514 = vpop.f32.mrf.mxu0
    %v2515 = vadd.f32 0.0, %v2514
    %v2516 = vpop.f32.mrf.mxu0
    %2517 = vdwg.mxu0
    %2518 = vmatpush.bf16.msra.mxu0 %v2200
    %2519 = vmatpush.bf16.msra.mxu0 %v2196
    %2520 = vmatpush.bf16.msra.mxu0 %v2192
    %2521 = vmatpush.bf16.msra.mxu0 %v2188
    %2522 = vmatpush.bf16.msra.mxu0 %v2184
    %2523 = vmatpush.bf16.msra.mxu0 %v2180
    %2524 = vmatpush.bf16.msra.mxu0 %v2176
    %2525 = vmatpush.bf16.msra.mxu0 %v2172
    %2526 = vmatmul.bf16.gmra.mxu0 %v2490
    %v2527 = vpop.f32.mrf.mxu0
    %v2528 = vadd.f32 0.0, %v2527
    %v2529 = vpop.f32.mrf.mxu0
    %2530 = vdwg.mxu0
    %2531 = vmatpush.bf16.msra.mxu0 %v2201
    %2532 = vmatpush.bf16.msra.mxu0 %v2197
    %2533 = vmatpush.bf16.msra.mxu0 %v2193
    %2534 = vmatpush.bf16.msra.mxu0 %v2189
    %2535 = vmatpush.bf16.msra.mxu0 %v2185
    %2536 = vmatpush.bf16.msra.mxu0 %v2181
    %2537 = vmatpush.bf16.msra.mxu0 %v2177
    %2538 = vmatpush.bf16.msra.mxu0 %v2173
    %2539 = vmatmul.bf16.gmra.mxu0 %v2490
    %v2540 = vpop.f32.mrf.mxu0
    %v2541 = vadd.f32 0.0, %v2540
    %v2542 = vpop.f32.mrf.mxu0
    %2543 = vdwg.mxu0
    %v2548 = vrot.slane %v2502, 4
    %v2549 = vrot.slane %v2515, 4
    %v2550 = vrot.slane %v2528, 4
    %v2551 = vrot.slane %v2541, 4
    %v2556 = vadd.f32 %v1996, %v2548
    %v2557 = vadd.f32 %v2010, %v2549
    %v2558 = vadd.f32 %v2024, %v2550
    %v2559 = vadd.f32 %v2038, %v2551
    %v2560 = vxor.u32 %v2556, 2147483648
    %v2561 = vmul.f32 %v2560, 1.442695
    %v2562 = vpow.pop %v2561
    %v2563 = vadd.f32 %v2562, 1.0
    %v2564 = vrcp.pop %v2563
    %v2565 = vmul.f32 %v2563, %v2564
    %v2566 = vsub.f32 1.0, %v2565
    %v2567 = vmul.f32 %v2564, %v2566
    %v2568 = vadd.f32 %v2564, %v2567
    %vm2569 = vweird.f32 %v2563
    %vm2570 = vweird.f32 %v2564
    %vm2571 = vmor %vm2569, %vm2570
    %v2572 = vsel %vm2571, %v2564, %v2568
    %v2573 = vand.u32 2147483647, %v2563
    %vm2574 = vcmp.eq.f32.partialorder %v2573, 8.507059e+37
    %v2575 = vand.u32 %v2563, 2147483648
    %v2576 = vor.u32 1.1754944e-38, %v2575
    %v2577 = vsel %vm2574, %v2576, %v2572
    %v2578 = vmul.f32 1.0, %v2577
    %v2579 = vxor.u32 %v2557, 2147483648
    %v2580 = vmul.f32 %v2579, 1.442695
    %v2581 = vpow.pop %v2580
    %v2582 = vadd.f32 %v2581, 1.0
    %v2583 = vrcp.pop %v2582
    %v2584 = vmul.f32 %v2582, %v2583
    %v2585 = vsub.f32 1.0, %v2584
    %v2586 = vmul.f32 %v2583, %v2585
    %v2587 = vadd.f32 %v2583, %v2586
    %vm2588 = vweird.f32 %v2582
    %vm2589 = vweird.f32 %v2583
    %vm2590 = vmor %vm2588, %vm2589
    %v2591 = vsel %vm2590, %v2583, %v2587
    %v2592 = vand.u32 2147483647, %v2582
    %vm2593 = vcmp.eq.f32.partialorder %v2592, 8.507059e+37
    %v2594 = vand.u32 %v2582, 2147483648
    %v2595 = vor.u32 1.1754944e-38, %v2594
    %v2596 = vsel %vm2593, %v2595, %v2591
    %v2597 = vmul.f32 1.0, %v2596
    %v2598 = vtanh.pop %v2558
    %v2599 = vxor.u32 %v2559, 2147483648
    %v2600 = vmul.f32 %v2599, 1.442695
    %v2601 = vpow.pop %v2600
    %v2602 = vadd.f32 %v2601, 1.0
    %v2603 = vrcp.pop %v2602
    %v2604 = vmul.f32 %v2602, %v2603
    %v2605 = vsub.f32 1.0, %v2604
    %v2606 = vmul.f32 %v2603, %v2605
    %v2607 = vadd.f32 %v2603, %v2606
    %vm2608 = vweird.f32 %v2602
    %vm2609 = vweird.f32 %v2603
    %vm2610 = vmor %vm2608, %vm2609
    %v2611 = vsel %vm2610, %v2603, %v2607
    %v2612 = vand.u32 2147483647, %v2602
    %vm2613 = vcmp.eq.f32.partialorder %v2612, 8.507059e+37
    %v2614 = vand.u32 %v2602, 2147483648
    %v2615 = vor.u32 1.1754944e-38, %v2614
    %v2616 = vsel %vm2613, %v2615, %v2611
    %v2617 = vmul.f32 1.0, %v2616
    %v2619 = vrot.slane %v2485, 6
    %v2621 = vmul.f32 %v2597, %v2619
    %v2622 = vmul.f32 %v2578, %v2598
    %v2623 = vadd.f32 %v2621, %v2622
    %v2624 = vtanh.pop %v2623
    %v2625 = vmul.f32 %v2617, %v2624
    %v2626 = vpack.c.bf16 %v2625, %v2625
    %v2628 = vrot.slane %v2626, 2
    %2630 = vmatpush.bf16.msra.mxu0 %v2198
    %2631 = vmatpush.bf16.msra.mxu0 %v2194
    %2632 = vmatpush.bf16.msra.mxu0 %v2190
    %2633 = vmatpush.bf16.msra.mxu0 %v2186
    %2634 = vmatpush.bf16.msra.mxu0 %v2182
    %2635 = vmatpush.bf16.msra.mxu0 %v2178
    %2636 = vmatpush.bf16.msra.mxu0 %v2174
    %2637 = vmatpush.bf16.msra.mxu0 %v2170
    %2638 = vmatmul.bf16.gmra.mxu0 %v2628
    %v2639 = vpop.f32.mrf.mxu0
    %v2640 = vadd.f32 0.0, %v2639
    %v2641 = vpop.f32.mrf.mxu0
    %2642 = vdwg.mxu0
    %2643 = vmatpush.bf16.msra.mxu0 %v2199
    %2644 = vmatpush.bf16.msra.mxu0 %v2195
    %2645 = vmatpush.bf16.msra.mxu0 %v2191
    %2646 = vmatpush.bf16.msra.mxu0 %v2187
    %2647 = vmatpush.bf16.msra.mxu0 %v2183
    %2648 = vmatpush.bf16.msra.mxu0 %v2179
    %2649 = vmatpush.bf16.msra.mxu0 %v2175
    %2650 = vmatpush.bf16.msra.mxu0 %v2171
    %2651 = vmatmul.bf16.gmra.mxu0 %v2628
    %v2652 = vpop.f32.mrf.mxu0
    %v2653 = vadd.f32 0.0, %v2652
    %v2654 = vpop.f32.mrf.mxu0
    %2655 = vdwg.mxu0
    %2656 = vmatpush.bf16.msra.mxu0 %v2200
    %2657 = vmatpush.bf16.msra.mxu0 %v2196
    %2658 = vmatpush.bf16.msra.mxu0 %v2192
    %2659 = vmatpush.bf16.msra.mxu0 %v2188
    %2660 = vmatpush.bf16.msra.mxu0 %v2184
    %2661 = vmatpush.bf16.msra.mxu0 %v2180
    %2662 = vmatpush.bf16.msra.mxu0 %v2176
    %2663 = vmatpush.bf16.msra.mxu0 %v2172
    %2664 = vmatmul.bf16.gmra.mxu0 %v2628
    %v2665 = vpop.f32.mrf.mxu0
    %v2666 = vadd.f32 0.0, %v2665
    %v2667 = vpop.f32.mrf.mxu0
    %2668 = vdwg.mxu0
    %2669 = vmatpush.bf16.msra.mxu0 %v2201
    %2670 = vmatpush.bf16.msra.mxu0 %v2197
    %2671 = vmatpush.bf16.msra.mxu0 %v2193
    %2672 = vmatpush.bf16.msra.mxu0 %v2189
    %2673 = vmatpush.bf16.msra.mxu0 %v2185
    %2674 = vmatpush.bf16.msra.mxu0 %v2181
    %2675 = vmatpush.bf16.msra.mxu0 %v2177
    %2676 = vmatpush.bf16.msra.mxu0 %v2173
    %2677 = vmatmul.bf16.gmra.mxu0 %v2628
    %v2678 = vpop.f32.mrf.mxu0
    %v2679 = vadd.f32 0.0, %v2678
    %v2680 = vpop.f32.mrf.mxu0
    %2681 = vdwg.mxu0
    %v2686 = vrot.slane %v2640, 2
    %v2687 = vrot.slane %v2653, 2
    %v2688 = vrot.slane %v2666, 2
    %v2689 = vrot.slane %v2679, 2
    %v2694 = vadd.f32 %v1996, %v2686
    %v2695 = vadd.f32 %v2010, %v2687
    %v2696 = vadd.f32 %v2024, %v2688
    %v2697 = vadd.f32 %v2038, %v2689
    %v2698 = vxor.u32 %v2694, 2147483648
    %v2699 = vmul.f32 %v2698, 1.442695
    %v2700 = vpow.pop %v2699
    %v2701 = vadd.f32 %v2700, 1.0
    %v2702 = vrcp.pop %v2701
    %v2703 = vmul.f32 %v2701, %v2702
    %v2704 = vsub.f32 1.0, %v2703
    %v2705 = vmul.f32 %v2702, %v2704
    %v2706 = vadd.f32 %v2702, %v2705
    %vm2707 = vweird.f32 %v2701
    %vm2708 = vweird.f32 %v2702
    %vm2709 = vmor %vm2707, %vm2708
    %v2710 = vsel %vm2709, %v2702, %v2706
    %v2711 = vand.u32 2147483647, %v2701
    %vm2712 = vcmp.eq.f32.partialorder %v2711, 8.507059e+37
    %v2713 = vand.u32 %v2701, 2147483648
    %v2714 = vor.u32 1.1754944e-38, %v2713
    %v2715 = vsel %vm2712, %v2714, %v2710
    %v2716 = vmul.f32 1.0, %v2715
    %v2717 = vxor.u32 %v2695, 2147483648
    %v2718 = vmul.f32 %v2717, 1.442695
    %v2719 = vpow.pop %v2718
    %v2720 = vadd.f32 %v2719, 1.0
    %v2721 = vrcp.pop %v2720
    %v2722 = vmul.f32 %v2720, %v2721
    %v2723 = vsub.f32 1.0, %v2722
    %v2724 = vmul.f32 %v2721, %v2723
    %v2725 = vadd.f32 %v2721, %v2724
    %vm2726 = vweird.f32 %v2720
    %vm2727 = vweird.f32 %v2721
    %vm2728 = vmor %vm2726, %vm2727
    %v2729 = vsel %vm2728, %v2721, %v2725
    %v2730 = vand.u32 2147483647, %v2720
    %vm2731 = vcmp.eq.f32.partialorder %v2730, 8.507059e+37
    %v2732 = vand.u32 %v2720, 2147483648
    %v2733 = vor.u32 1.1754944e-38, %v2732
    %v2734 = vsel %vm2731, %v2733, %v2729
    %v2735 = vmul.f32 1.0, %v2734
    %v2736 = vtanh.pop %v2696
    %v2737 = vxor.u32 %v2697, 2147483648
    %v2738 = vmul.f32 %v2737, 1.442695
    %v2739 = vpow.pop %v2738
    %v2740 = vadd.f32 %v2739, 1.0
    %v2741 = vrcp.pop %v2740
    %v2742 = vmul.f32 %v2740, %v2741
    %v2743 = vsub.f32 1.0, %v2742
    %v2744 = vmul.f32 %v2741, %v2743
    %v2745 = vadd.f32 %v2741, %v2744
    %vm2746 = vweird.f32 %v2740
    %vm2747 = vweird.f32 %v2741
    %vm2748 = vmor %vm2746, %vm2747
    %v2749 = vsel %vm2748, %v2741, %v2745
    %v2750 = vand.u32 2147483647, %v2740
    %vm2751 = vcmp.eq.f32.partialorder %v2750, 8.507059e+37
    %v2752 = vand.u32 %v2740, 2147483648
    %v2753 = vor.u32 1.1754944e-38, %v2752
    %v2754 = vsel %vm2751, %v2753, %v2749
    %v2755 = vmul.f32 1.0, %v2754
    %v2757 = vrot.slane %v2623, 6
    %v2759 = vmul.f32 %v2735, %v2757
    %v2760 = vmul.f32 %v2716, %v2736
    %v2761 = vadd.f32 %v2759, %v2760
    %v2762 = vtanh.pop %v2761
    %v2763 = vmul.f32 %v2755, %v2762
    %v2764 = vpack.c.bf16 %v2763, %v2763
    %v2766 = vrot.slane %v2764, 3
    %2768 = vmatpush.bf16.msra.mxu0 %v2198
    %2769 = vmatpush.bf16.msra.mxu0 %v2194
    %2770 = vmatpush.bf16.msra.mxu0 %v2190
    %2771 = vmatpush.bf16.msra.mxu0 %v2186
    %2772 = vmatpush.bf16.msra.mxu0 %v2182
    %2773 = vmatpush.bf16.msra.mxu0 %v2178
    %2774 = vmatpush.bf16.msra.mxu0 %v2174
    %2775 = vmatpush.bf16.msra.mxu0 %v2170
    %2776 = vmatmul.bf16.gmra.mxu0 %v2766
    %v2777 = vpop.f32.mrf.mxu0
    %v2778 = vadd.f32 0.0, %v2777
    %v2779 = vpop.f32.mrf.mxu0
    %2780 = vdwg.mxu0
    %2781 = vmatpush.bf16.msra.mxu0 %v2199
    %2782 = vmatpush.bf16.msra.mxu0 %v2195
    %2783 = vmatpush.bf16.msra.mxu0 %v2191
    %2784 = vmatpush.bf16.msra.mxu0 %v2187
    %2785 = vmatpush.bf16.msra.mxu0 %v2183
    %2786 = vmatpush.bf16.msra.mxu0 %v2179
    %2787 = vmatpush.bf16.msra.mxu0 %v2175
    %2788 = vmatpush.bf16.msra.mxu0 %v2171
    %2789 = vmatmul.bf16.gmra.mxu0 %v2766
    %v2790 = vpop.f32.mrf.mxu0
    %v2791 = vadd.f32 0.0, %v2790
    %v2792 = vpop.f32.mrf.mxu0
    %2793 = vdwg.mxu0
    %2794 = vmatpush.bf16.msra.mxu0 %v2200
    %2795 = vmatpush.bf16.msra.mxu0 %v2196
    %2796 = vmatpush.bf16.msra.mxu0 %v2192
    %2797 = vmatpush.bf16.msra.mxu0 %v2188
    %2798 = vmatpush.bf16.msra.mxu0 %v2184
    %2799 = vmatpush.bf16.msra.mxu0 %v2180
    %2800 = vmatpush.bf16.msra.mxu0 %v2176
    %2801 = vmatpush.bf16.msra.mxu0 %v2172
    %2802 = vmatmul.bf16.gmra.mxu0 %v2766
    %v2803 = vpop.f32.mrf.mxu0
    %v2804 = vadd.f32 0.0, %v2803
    %v2805 = vpop.f32.mrf.mxu0
    %2806 = vdwg.mxu0
    %2807 = vmatpush.bf16.msra.mxu0 %v2201
    %2808 = vmatpush.bf16.msra.mxu0 %v2197
    %2809 = vmatpush.bf16.msra.mxu0 %v2193
    %2810 = vmatpush.bf16.msra.mxu0 %v2189
    %2811 = vmatpush.bf16.msra.mxu0 %v2185
    %2812 = vmatpush.bf16.msra.mxu0 %v2181
    %2813 = vmatpush.bf16.msra.mxu0 %v2177
    %2814 = vmatpush.bf16.msra.mxu0 %v2173
    %2815 = vmatmul.bf16.gmra.mxu0 %v2766
    %v2816 = vpop.f32.mrf.mxu0
    %v2817 = vadd.f32 0.0, %v2816
    %v2818 = vpop.f32.mrf.mxu0
    %2819 = vdwg.mxu0
    %v2820 = vadd.f32 %v1998, %v2778
    %v2821 = vadd.f32 %v2012, %v2791
    %v2822 = vadd.f32 %v2026, %v2804
    %v2823 = vadd.f32 %v2040, %v2817
    %v2824 = vxor.u32 %v2820, 2147483648
    %v2825 = vmul.f32 %v2824, 1.442695
    %v2826 = vpow.pop %v2825
    %v2827 = vadd.f32 %v2826, 1.0
    %v2828 = vrcp.pop %v2827
    %v2829 = vmul.f32 %v2827, %v2828
    %v2830 = vsub.f32 1.0, %v2829
    %v2831 = vmul.f32 %v2828, %v2830
    %v2832 = vadd.f32 %v2828, %v2831
    %vm2833 = vweird.f32 %v2827
    %vm2834 = vweird.f32 %v2828
    %vm2835 = vmor %vm2833, %vm2834
    %v2836 = vsel %vm2835, %v2828, %v2832
    %v2837 = vand.u32 2147483647, %v2827
    %vm2838 = vcmp.eq.f32.partialorder %v2837, 8.507059e+37
    %v2839 = vand.u32 %v2827, 2147483648
    %v2840 = vor.u32 1.1754944e-38, %v2839
    %v2841 = vsel %vm2838, %v2840, %v2836
    %v2842 = vmul.f32 1.0, %v2841
    %v2843 = vxor.u32 %v2821, 2147483648
    %v2844 = vmul.f32 %v2843, 1.442695
    %v2845 = vpow.pop %v2844
    %v2846 = vadd.f32 %v2845, 1.0
    %v2847 = vrcp.pop %v2846
    %v2848 = vmul.f32 %v2846, %v2847
    %v2849 = vsub.f32 1.0, %v2848
    %v2850 = vmul.f32 %v2847, %v2849
    %v2851 = vadd.f32 %v2847, %v2850
    %vm2852 = vweird.f32 %v2846
    %vm2853 = vweird.f32 %v2847
    %vm2854 = vmor %vm2852, %vm2853
    %v2855 = vsel %vm2854, %v2847, %v2851
    %v2856 = vand.u32 2147483647, %v2846
    %vm2857 = vcmp.eq.f32.partialorder %v2856, 8.507059e+37
    %v2858 = vand.u32 %v2846, 2147483648
    %v2859 = vor.u32 1.1754944e-38, %v2858
    %v2860 = vsel %vm2857, %v2859, %v2855
    %v2861 = vmul.f32 1.0, %v2860
    %v2862 = vtanh.pop %v2822
    %v2863 = vxor.u32 %v2823, 2147483648
    %v2864 = vmul.f32 %v2863, 1.442695
    %v2865 = vpow.pop %v2864
    %v2866 = vadd.f32 %v2865, 1.0
    %v2867 = vrcp.pop %v2866
    %v2868 = vmul.f32 %v2866, %v2867
    %v2869 = vsub.f32 1.0, %v2868
    %v2870 = vmul.f32 %v2867, %v2869
    %v2871 = vadd.f32 %v2867, %v2870
    %vm2872 = vweird.f32 %v2866
    %vm2873 = vweird.f32 %v2867
    %vm2874 = vmor %vm2872, %vm2873
    %v2875 = vsel %vm2874, %v2867, %v2871
    %v2876 = vand.u32 2147483647, %v2866
    %vm2877 = vcmp.eq.f32.partialorder %v2876, 8.507059e+37
    %v2878 = vand.u32 %v2866, 2147483648
    %v2879 = vor.u32 1.1754944e-38, %v2878
    %v2880 = vsel %vm2877, %v2879, %v2875
    %v2881 = vmul.f32 1.0, %v2880
    %v2883 = vrot.slane %v2761, 6
    %v2885 = vmul.f32 %v2861, %v2883
    %v2886 = vmul.f32 %v2842, %v2862
    %v2887 = vadd.f32 %v2885, %v2886
    %v2888 = vtanh.pop %v2887
    %v2889 = vmul.f32 %v2881, %v2888
    %v2890 = vpack.c.bf16 %v2889, %v2889
    %2891 = vmatpush.bf16.msra.mxu0 %v2198
    %2892 = vmatpush.bf16.msra.mxu0 %v2194
    %2893 = vmatpush.bf16.msra.mxu0 %v2190
    %2894 = vmatpush.bf16.msra.mxu0 %v2186
    %2895 = vmatpush.bf16.msra.mxu0 %v2182
    %2896 = vmatpush.bf16.msra.mxu0 %v2178
    %2897 = vmatpush.bf16.msra.mxu0 %v2174
    %2898 = vmatpush.bf16.msra.mxu0 %v2170
    %2899 = vmatmul.bf16.gmra.mxu0 %v2890
    %v2900 = vpop.f32.mrf.mxu0
    %v2901 = vadd.f32 0.0, %v2900
    %v2902 = vpop.f32.mrf.mxu0
    %2903 = vdwg.mxu0
    %2904 = vmatpush.bf16.msra.mxu0 %v2199
    %2905 = vmatpush.bf16.msra.mxu0 %v2195
    %2906 = vmatpush.bf16.msra.mxu0 %v2191
    %2907 = vmatpush.bf16.msra.mxu0 %v2187
    %2908 = vmatpush.bf16.msra.mxu0 %v2183
    %2909 = vmatpush.bf16.msra.mxu0 %v2179
    %2910 = vmatpush.bf16.msra.mxu0 %v2175
    %2911 = vmatpush.bf16.msra.mxu0 %v2171
    %2912 = vmatmul.bf16.gmra.mxu0 %v2890
    %v2913 = vpop.f32.mrf.mxu0
    %v2914 = vadd.f32 0.0, %v2913
    %v2915 = vpop.f32.mrf.mxu0
    %2916 = vdwg.mxu0
    %2917 = vmatpush.bf16.msra.mxu0 %v2200
    %2918 = vmatpush.bf16.msra.mxu0 %v2196
    %2919 = vmatpush.bf16.msra.mxu0 %v2192
    %2920 = vmatpush.bf16.msra.mxu0 %v2188
    %2921 = vmatpush.bf16.msra.mxu0 %v2184
    %2922 = vmatpush.bf16.msra.mxu0 %v2180
    %2923 = vmatpush.bf16.msra.mxu0 %v2176
    %2924 = vmatpush.bf16.msra.mxu0 %v2172
    %2925 = vmatmul.bf16.gmra.mxu0 %v2890
    %v2926 = vpop.f32.mrf.mxu0
    %v2927 = vadd.f32 0.0, %v2926
    %v2928 = vpop.f32.mrf.mxu0
    %2929 = vdwg.mxu0
    %2930 = vmatpush.bf16.msra.mxu0 %v2201
    %2931 = vmatpush.bf16.msra.mxu0 %v2197
    %2932 = vmatpush.bf16.msra.mxu0 %v2193
    %2933 = vmatpush.bf16.msra.mxu0 %v2189
    %2934 = vmatpush.bf16.msra.mxu0 %v2185
    %2935 = vmatpush.bf16.msra.mxu0 %v2181
    %2936 = vmatpush.bf16.msra.mxu0 %v2177
    %2937 = vmatpush.bf16.msra.mxu0 %v2173
    %2938 = vmatmul.bf16.gmra.mxu0 %v2890
    %v2939 = vpop.f32.mrf.mxu0
    %v2940 = vadd.f32 0.0, %v2939
    %v2941 = vpop.f32.mrf.mxu0
    %2942 = vdwg.mxu0
    %v2947 = vrot.slane %v2901, 6
    %v2948 = vrot.slane %v2914, 6
    %v2949 = vrot.slane %v2927, 6
    %v2950 = vrot.slane %v2940, 6
    %v2955 = vadd.f32 %v1998, %v2947
    %v2956 = vadd.f32 %v2012, %v2948
    %v2957 = vadd.f32 %v2026, %v2949
    %v2958 = vadd.f32 %v2040, %v2950
    %v2959 = vxor.u32 %v2955, 2147483648
    %v2960 = vmul.f32 %v2959, 1.442695
    %v2961 = vpow.pop %v2960
    %v2962 = vadd.f32 %v2961, 1.0
    %v2963 = vrcp.pop %v2962
    %v2964 = vmul.f32 %v2962, %v2963
    %v2965 = vsub.f32 1.0, %v2964
    %v2966 = vmul.f32 %v2963, %v2965
    %v2967 = vadd.f32 %v2963, %v2966
    %vm2968 = vweird.f32 %v2962
    %vm2969 = vweird.f32 %v2963
    %vm2970 = vmor %vm2968, %vm2969
    %v2971 = vsel %vm2970, %v2963, %v2967
    %v2972 = vand.u32 2147483647, %v2962
    %vm2973 = vcmp.eq.f32.partialorder %v2972, 8.507059e+37
    %v2974 = vand.u32 %v2962, 2147483648
    %v2975 = vor.u32 1.1754944e-38, %v2974
    %v2976 = vsel %vm2973, %v2975, %v2971
    %v2977 = vmul.f32 1.0, %v2976
    %v2978 = vxor.u32 %v2956, 2147483648
    %v2979 = vmul.f32 %v2978, 1.442695
    %v2980 = vpow.pop %v2979
    %v2981 = vadd.f32 %v2980, 1.0
    %v2982 = vrcp.pop %v2981
    %v2983 = vmul.f32 %v2981, %v2982
    %v2984 = vsub.f32 1.0, %v2983
    %v2985 = vmul.f32 %v2982, %v2984
    %v2986 = vadd.f32 %v2982, %v2985
    %vm2987 = vweird.f32 %v2981
    %vm2988 = vweird.f32 %v2982
    %vm2989 = vmor %vm2987, %vm2988
    %v2990 = vsel %vm2989, %v2982, %v2986
    %v2991 = vand.u32 2147483647, %v2981
    %vm2992 = vcmp.eq.f32.partialorder %v2991, 8.507059e+37
    %v2993 = vand.u32 %v2981, 2147483648
    %v2994 = vor.u32 1.1754944e-38, %v2993
    %v2995 = vsel %vm2992, %v2994, %v2990
    %v2996 = vmul.f32 1.0, %v2995
    %v2997 = vtanh.pop %v2957
    %v2998 = vxor.u32 %v2958, 2147483648
    %v2999 = vmul.f32 %v2998, 1.442695
    %v3000 = vpow.pop %v2999
    %v3001 = vadd.f32 %v3000, 1.0
    %v3002 = vrcp.pop %v3001
    %v3003 = vmul.f32 %v3001, %v3002
    %v3004 = vsub.f32 1.0, %v3003
    %v3005 = vmul.f32 %v3002, %v3004
    %v3006 = vadd.f32 %v3002, %v3005
    %vm3007 = vweird.f32 %v3001
    %vm3008 = vweird.f32 %v3002
    %vm3009 = vmor %vm3007, %vm3008
    %v3010 = vsel %vm3009, %v3002, %v3006
    %v3011 = vand.u32 2147483647, %v3001
    %vm3012 = vcmp.eq.f32.partialorder %v3011, 8.507059e+37
    %v3013 = vand.u32 %v3001, 2147483648
    %v3014 = vor.u32 1.1754944e-38, %v3013
    %v3015 = vsel %vm3012, %v3014, %v3010
    %v3016 = vmul.f32 1.0, %v3015
    %v3018 = vrot.slane %v2887, 6
    %v3020 = vmul.f32 %v2996, %v3018
    %v3021 = vmul.f32 %v2977, %v2997
    %v3022 = vadd.f32 %v3020, %v3021
    %v3023 = vtanh.pop %v3022
    %v3024 = vmul.f32 %v3016, %v3023
    %v3025 = vpack.c.bf16 %v3024, %v3024
    %v3027 = vrot.slane %v3025, 1
    %3029 = vmatpush.bf16.msra.mxu0 %v2198
    %3030 = vmatpush.bf16.msra.mxu0 %v2194
    %3031 = vmatpush.bf16.msra.mxu0 %v2190
    %3032 = vmatpush.bf16.msra.mxu0 %v2186
    %3033 = vmatpush.bf16.msra.mxu0 %v2182
    %3034 = vmatpush.bf16.msra.mxu0 %v2178
    %3035 = vmatpush.bf16.msra.mxu0 %v2174
    %3036 = vmatpush.bf16.msra.mxu0 %v2170
    %3037 = vmatmul.bf16.gmra.mxu0 %v3027
    %v3038 = vpop.f32.mrf.mxu0
    %v3039 = vadd.f32 0.0, %v3038
    %v3040 = vpop.f32.mrf.mxu0
    %3041 = vdwg.mxu0
    %3042 = vmatpush.bf16.msra.mxu0 %v2199
    %3043 = vmatpush.bf16.msra.mxu0 %v2195
    %3044 = vmatpush.bf16.msra.mxu0 %v2191
    %3045 = vmatpush.bf16.msra.mxu0 %v2187
    %3046 = vmatpush.bf16.msra.mxu0 %v2183
    %3047 = vmatpush.bf16.msra.mxu0 %v2179
    %3048 = vmatpush.bf16.msra.mxu0 %v2175
    %3049 = vmatpush.bf16.msra.mxu0 %v2171
    %3050 = vmatmul.bf16.gmra.mxu0 %v3027
    %v3051 = vpop.f32.mrf.mxu0
    %v3052 = vadd.f32 0.0, %v3051
    %v3053 = vpop.f32.mrf.mxu0
    %3054 = vdwg.mxu0
    %3055 = vmatpush.bf16.msra.mxu0 %v2200
    %3056 = vmatpush.bf16.msra.mxu0 %v2196
    %3057 = vmatpush.bf16.msra.mxu0 %v2192
    %3058 = vmatpush.bf16.msra.mxu0 %v2188
    %3059 = vmatpush.bf16.msra.mxu0 %v2184
    %3060 = vmatpush.bf16.msra.mxu0 %v2180
    %3061 = vmatpush.bf16.msra.mxu0 %v2176
    %3062 = vmatpush.bf16.msra.mxu0 %v2172
    %3063 = vmatmul.bf16.gmra.mxu0 %v3027
    %v3064 = vpop.f32.mrf.mxu0
    %v3065 = vadd.f32 0.0, %v3064
    %v3066 = vpop.f32.mrf.mxu0
    %3067 = vdwg.mxu0
    %3068 = vmatpush.bf16.msra.mxu0 %v2201
    %3069 = vmatpush.bf16.msra.mxu0 %v2197
    %3070 = vmatpush.bf16.msra.mxu0 %v2193
    %3071 = vmatpush.bf16.msra.mxu0 %v2189
    %3072 = vmatpush.bf16.msra.mxu0 %v2185
    %3073 = vmatpush.bf16.msra.mxu0 %v2181
    %3074 = vmatpush.bf16.msra.mxu0 %v2177
    %3075 = vmatpush.bf16.msra.mxu0 %v2173
    %3076 = vmatmul.bf16.gmra.mxu0 %v3027
    %v3077 = vpop.f32.mrf.mxu0
    %v3078 = vadd.f32 0.0, %v3077
    %v3079 = vpop.f32.mrf.mxu0
    %3080 = vdwg.mxu0
    %v3085 = vrot.slane %v3039, 4
    %v3086 = vrot.slane %v3052, 4
    %v3087 = vrot.slane %v3065, 4
    %v3088 = vrot.slane %v3078, 4
    %v3093 = vadd.f32 %v1998, %v3085
    %v3094 = vadd.f32 %v2012, %v3086
    %v3095 = vadd.f32 %v2026, %v3087
    %v3096 = vadd.f32 %v2040, %v3088
    %v3097 = vxor.u32 %v3093, 2147483648
    %v3098 = vmul.f32 %v3097, 1.442695
    %v3099 = vpow.pop %v3098
    %v3100 = vadd.f32 %v3099, 1.0
    %v3101 = vrcp.pop %v3100
    %v3102 = vmul.f32 %v3100, %v3101
    %v3103 = vsub.f32 1.0, %v3102
    %v3104 = vmul.f32 %v3101, %v3103
    %v3105 = vadd.f32 %v3101, %v3104
    %vm3106 = vweird.f32 %v3100
    %vm3107 = vweird.f32 %v3101
    %vm3108 = vmor %vm3106, %vm3107
    %v3109 = vsel %vm3108, %v3101, %v3105
    %v3110 = vand.u32 2147483647, %v3100
    %vm3111 = vcmp.eq.f32.partialorder %v3110, 8.507059e+37
    %v3112 = vand.u32 %v3100, 2147483648
    %v3113 = vor.u32 1.1754944e-38, %v3112
    %v3114 = vsel %vm3111, %v3113, %v3109
    %v3115 = vmul.f32 1.0, %v3114
    %v3116 = vxor.u32 %v3094, 2147483648
    %v3117 = vmul.f32 %v3116, 1.442695
    %v3118 = vpow.pop %v3117
    %v3119 = vadd.f32 %v3118, 1.0
    %v3120 = vrcp.pop %v3119
    %v3121 = vmul.f32 %v3119, %v3120
    %v3122 = vsub.f32 1.0, %v3121
    %v3123 = vmul.f32 %v3120, %v3122
    %v3124 = vadd.f32 %v3120, %v3123
    %vm3125 = vweird.f32 %v3119
    %vm3126 = vweird.f32 %v3120
    %vm3127 = vmor %vm3125, %vm3126
    %v3128 = vsel %vm3127, %v3120, %v3124
    %v3129 = vand.u32 2147483647, %v3119
    %vm3130 = vcmp.eq.f32.partialorder %v3129, 8.507059e+37
    %v3131 = vand.u32 %v3119, 2147483648
    %v3132 = vor.u32 1.1754944e-38, %v3131
    %v3133 = vsel %vm3130, %v3132, %v3128
    %v3134 = vmul.f32 1.0, %v3133
    %v3135 = vtanh.pop %v3095
    %v3136 = vxor.u32 %v3096, 2147483648
    %v3137 = vmul.f32 %v3136, 1.442695
    %v3138 = vpow.pop %v3137
    %v3139 = vadd.f32 %v3138, 1.0
    %v3140 = vrcp.pop %v3139
    %v3141 = vmul.f32 %v3139, %v3140
    %v3142 = vsub.f32 1.0, %v3141
    %v3143 = vmul.f32 %v3140, %v3142
    %v3144 = vadd.f32 %v3140, %v3143
    %vm3145 = vweird.f32 %v3139
    %vm3146 = vweird.f32 %v3140
    %vm3147 = vmor %vm3145, %vm3146
    %v3148 = vsel %vm3147, %v3140, %v3144
    %v3149 = vand.u32 2147483647, %v3139
    %vm3150 = vcmp.eq.f32.partialorder %v3149, 8.507059e+37
    %v3151 = vand.u32 %v3139, 2147483648
    %v3152 = vor.u32 1.1754944e-38, %v3151
    %v3153 = vsel %vm3150, %v3152, %v3148
    %v3154 = vmul.f32 1.0, %v3153
    %v3156 = vrot.slane %v3022, 6
    %v3158 = vmul.f32 %v3134, %v3156
    %v3159 = vmul.f32 %v3115, %v3135
    %v3160 = vadd.f32 %v3158, %v3159
    %v3161 = vtanh.pop %v3160
    %v3162 = vmul.f32 %v3154, %v3161
    %v3163 = vpack.c.bf16 %v3162, %v3162
    %v3165 = vrot.slane %v3163, 2
    %3167 = vmatpush.bf16.msra.mxu0 %v2198
    %3168 = vmatpush.bf16.msra.mxu0 %v2194
    %3169 = vmatpush.bf16.msra.mxu0 %v2190
    %3170 = vmatpush.bf16.msra.mxu0 %v2186
    %3171 = vmatpush.bf16.msra.mxu0 %v2182
    %3172 = vmatpush.bf16.msra.mxu0 %v2178
    %3173 = vmatpush.bf16.msra.mxu0 %v2174
    %3174 = vmatpush.bf16.msra.mxu0 %v2170
    %3175 = vmatmul.bf16.gmra.mxu0 %v3165
    %v3176 = vpop.f32.mrf.mxu0
    %v3177 = vadd.f32 0.0, %v3176
    %v3178 = vpop.f32.mrf.mxu0
    %3179 = vdwg.mxu0
    %3180 = vmatpush.bf16.msra.mxu0 %v2199
    %3181 = vmatpush.bf16.msra.mxu0 %v2195
    %3182 = vmatpush.bf16.msra.mxu0 %v2191
    %3183 = vmatpush.bf16.msra.mxu0 %v2187
    %3184 = vmatpush.bf16.msra.mxu0 %v2183
    %3185 = vmatpush.bf16.msra.mxu0 %v2179
    %3186 = vmatpush.bf16.msra.mxu0 %v2175
    %3187 = vmatpush.bf16.msra.mxu0 %v2171
    %3188 = vmatmul.bf16.gmra.mxu0 %v3165
    %v3189 = vpop.f32.mrf.mxu0
    %v3190 = vadd.f32 0.0, %v3189
    %v3191 = vpop.f32.mrf.mxu0
    %3192 = vdwg.mxu0
    %3193 = vmatpush.bf16.msra.mxu0 %v2200
    %3194 = vmatpush.bf16.msra.mxu0 %v2196
    %3195 = vmatpush.bf16.msra.mxu0 %v2192
    %3196 = vmatpush.bf16.msra.mxu0 %v2188
    %3197 = vmatpush.bf16.msra.mxu0 %v2184
    %3198 = vmatpush.bf16.msra.mxu0 %v2180
    %3199 = vmatpush.bf16.msra.mxu0 %v2176
    %3200 = vmatpush.bf16.msra.mxu0 %v2172
    %3201 = vmatmul.bf16.gmra.mxu0 %v3165
    %v3202 = vpop.f32.mrf.mxu0
    %v3203 = vadd.f32 0.0, %v3202
    %v3204 = vpop.f32.mrf.mxu0
    %3205 = vdwg.mxu0
    %3206 = vmatpush.bf16.msra.mxu0 %v2201
    %3207 = vmatpush.bf16.msra.mxu0 %v2197
    %3208 = vmatpush.bf16.msra.mxu0 %v2193
    %3209 = vmatpush.bf16.msra.mxu0 %v2189
    %3210 = vmatpush.bf16.msra.mxu0 %v2185
    %3211 = vmatpush.bf16.msra.mxu0 %v2181
    %3212 = vmatpush.bf16.msra.mxu0 %v2177
    %3213 = vmatpush.bf16.msra.mxu0 %v2173
    %3214 = vmatmul.bf16.gmra.mxu0 %v3165
    %v3215 = vpop.f32.mrf.mxu0
    %v3216 = vadd.f32 0.0, %v3215
    %v3217 = vpop.f32.mrf.mxu0
    %3218 = vdwg.mxu0
    %v3223 = vrot.slane %v3177, 2
    %v3224 = vrot.slane %v3190, 2
    %v3225 = vrot.slane %v3203, 2
    %v3226 = vrot.slane %v3216, 2
    %v3231 = vadd.f32 %v1998, %v3223
    %v3232 = vadd.f32 %v2012, %v3224
    %v3233 = vadd.f32 %v2026, %v3225
    %v3234 = vadd.f32 %v2040, %v3226
    %v3235 = vxor.u32 %v3231, 2147483648
    %v3236 = vmul.f32 %v3235, 1.442695
    %v3237 = vpow.pop %v3236
    %v3238 = vadd.f32 %v3237, 1.0
    %v3239 = vrcp.pop %v3238
    %v3240 = vmul.f32 %v3238, %v3239
    %v3241 = vsub.f32 1.0, %v3240
    %v3242 = vmul.f32 %v3239, %v3241
    %v3243 = vadd.f32 %v3239, %v3242
    %vm3244 = vweird.f32 %v3238
    %vm3245 = vweird.f32 %v3239
    %vm3246 = vmor %vm3244, %vm3245
    %v3247 = vsel %vm3246, %v3239, %v3243
    %v3248 = vand.u32 2147483647, %v3238
    %vm3249 = vcmp.eq.f32.partialorder %v3248, 8.507059e+37
    %v3250 = vand.u32 %v3238, 2147483648
    %v3251 = vor.u32 1.1754944e-38, %v3250
    %v3252 = vsel %vm3249, %v3251, %v3247
    %v3253 = vmul.f32 1.0, %v3252
    %v3254 = vxor.u32 %v3232, 2147483648
    %v3255 = vmul.f32 %v3254, 1.442695
    %v3256 = vpow.pop %v3255
    %v3257 = vadd.f32 %v3256, 1.0
    %v3258 = vrcp.pop %v3257
    %v3259 = vmul.f32 %v3257, %v3258
    %v3260 = vsub.f32 1.0, %v3259
    %v3261 = vmul.f32 %v3258, %v3260
    %v3262 = vadd.f32 %v3258, %v3261
    %vm3263 = vweird.f32 %v3257
    %vm3264 = vweird.f32 %v3258
    %vm3265 = vmor %vm3263, %vm3264
    %v3266 = vsel %vm3265, %v3258, %v3262
    %v3267 = vand.u32 2147483647, %v3257
    %vm3268 = vcmp.eq.f32.partialorder %v3267, 8.507059e+37
    %v3269 = vand.u32 %v3257, 2147483648
    %v3270 = vor.u32 1.1754944e-38, %v3269
    %v3271 = vsel %vm3268, %v3270, %v3266
    %v3272 = vmul.f32 1.0, %v3271
    %v3273 = vtanh.pop %v3233
    %v3274 = vxor.u32 %v3234, 2147483648
    %v3275 = vmul.f32 %v3274, 1.442695
    %v3276 = vpow.pop %v3275
    %v3277 = vadd.f32 %v3276, 1.0
    %v3278 = vrcp.pop %v3277
    %v3279 = vmul.f32 %v3277, %v3278
    %v3280 = vsub.f32 1.0, %v3279
    %v3281 = vmul.f32 %v3278, %v3280
    %v3282 = vadd.f32 %v3278, %v3281
    %vm3283 = vweird.f32 %v3277
    %vm3284 = vweird.f32 %v3278
    %vm3285 = vmor %vm3283, %vm3284
    %v3286 = vsel %vm3285, %v3278, %v3282
    %v3287 = vand.u32 2147483647, %v3277
    %vm3288 = vcmp.eq.f32.partialorder %v3287, 8.507059e+37
    %v3289 = vand.u32 %v3277, 2147483648
    %v3290 = vor.u32 1.1754944e-38, %v3289
    %v3291 = vsel %vm3288, %v3290, %v3286
    %v3292 = vmul.f32 1.0, %v3291
    %v3294 = vrot.slane %v3160, 6
    %v3296 = vmul.f32 %v3272, %v3294
    %v3297 = vmul.f32 %v3253, %v3273
    %v3298 = vadd.f32 %v3296, %v3297
    %v3299 = vtanh.pop %v3298
    %v3300 = vmul.f32 %v3292, %v3299
    %v3301 = vsel %vm414, %v2352, %v2487
    %v3302 = vsel %vm416, %v3301, %v2625
    %v3303 = vsel %vm418, %v3302, %v2763
    %v3304 = vsel %vm414, %v2889, %v3024
    %v3305 = vsel %vm416, %v3304, %v3162
    %v3306 = vsel %vm418, %v3305, %v3300
    %v3307 = vld [vmem:[#allocation11] sm:$0xff]
    %v3308 = vld [vmem:[#allocation11 + $0x8] sm:$0xff]
    %v3309 = vld [vmem:[#allocation11 + $0x10] sm:$0xff]
    %v3310 = vld [vmem:[#allocation11 + $0x18] sm:$0xff]
    %v3311 = vld [vmem:[#allocation11 + $0x20] sm:$0xff]
    %v3312 = vld [vmem:[#allocation11 + $0x28] sm:$0xff]
    %v3313 = vld [vmem:[#allocation11 + $0x30] sm:$0xff]
    %v3314 = vld [vmem:[#allocation11 + $0x38] sm:$0xff]
    %v3315 = vld [vmem:[#allocation11 + $0x40] sm:$0xff]
    %v3316 = vld [vmem:[#allocation11 + $0x48] sm:$0xff]
    %v3317 = vld [vmem:[#allocation11 + $0x50] sm:$0xff]
    %v3318 = vld [vmem:[#allocation11 + $0x58] sm:$0xff]
    %v3319 = vld [vmem:[#allocation11 + $0x60] sm:$0xff]
    %v3320 = vld [vmem:[#allocation11 + $0x68] sm:$0xff]
    %v3321 = vld [vmem:[#allocation11 + $0x70] sm:$0xff]
    %v3322 = vld [vmem:[#allocation11 + $0x78] sm:$0xff]
    %v3323 = vld [vmem:[#allocation11 + $0x80] sm:$0xff]
    %v3324 = vld [vmem:[#allocation11 + $0x88] sm:$0xff]
    %v3325 = vld [vmem:[#allocation11 + $0x90] sm:$0xff]
    %v3326 = vld [vmem:[#allocation11 + $0x98] sm:$0xff]
    %v3327 = vld [vmem:[#allocation11 + $0xa0] sm:$0xff]
    %v3328 = vld [vmem:[#allocation11 + $0xa8] sm:$0xff]
    %v3329 = vld [vmem:[#allocation11 + $0xb0] sm:$0xff]
    %v3330 = vld [vmem:[#allocation11 + $0xb8] sm:$0xff]
    %v3331 = vld [vmem:[#allocation11 + $0xc0] sm:$0xff]
    %v3332 = vld [vmem:[#allocation11 + $0xc8] sm:$0xff]
    %v3333 = vld [vmem:[#allocation11 + $0xd0] sm:$0xff]
    %v3334 = vld [vmem:[#allocation11 + $0xd8] sm:$0xff]
    %v3335 = vld [vmem:[#allocation11 + $0xe0] sm:$0xff]
    %v3336 = vld [vmem:[#allocation11 + $0xe8] sm:$0xff]
    %v3337 = vld [vmem:[#allocation11 + $0xf0] sm:$0xff]
    %v3338 = vld [vmem:[#allocation11 + $0xf8] sm:$0xff]
    %v3339 = vpack.c.bf16 %v3306, %v3303
    %v3340 = vld [vmem:[%s19] sm:$0xf]
    %v3342 = vperm.slane %v3340, 0
    %v3343 = vperm.slane %v3340, 1
    %v3344 = vperm.slane %v3340, 2
    %v3345 = vperm.slane %v3340, 3
    %v3382 = vunpack.c.l.b16 %v3307
    %v3383 = vunpack.c.h.b16 %v3307
    %v3384 = vunpack.c.l.b16 %v3308
    %v3385 = vunpack.c.h.b16 %v3308
    %v3386 = vunpack.c.l.b16 %v3309
    %v3387 = vunpack.c.h.b16 %v3309
    %v3388 = vunpack.c.l.b16 %v3310
    %v3389 = vunpack.c.h.b16 %v3310
    %v3390 = vunpack.c.l.b16 %v3311
    %v3391 = vunpack.c.h.b16 %v3311
    %v3392 = vunpack.c.l.b16 %v3312
    %v3393 = vunpack.c.h.b16 %v3312
    %v3394 = vunpack.c.l.b16 %v3313
    %v3395 = vunpack.c.h.b16 %v3313
    %v3396 = vunpack.c.l.b16 %v3314
    %v3397 = vunpack.c.h.b16 %v3314
    %v3398 = vunpack.c.l.b16 %v3315
    %v3399 = vunpack.c.h.b16 %v3315
    %v3400 = vunpack.c.l.b16 %v3316
    %v3401 = vunpack.c.h.b16 %v3316
    %v3402 = vunpack.c.l.b16 %v3317
    %v3403 = vunpack.c.h.b16 %v3317
    %v3404 = vunpack.c.l.b16 %v3318
    %v3405 = vunpack.c.h.b16 %v3318
    %v3406 = vunpack.c.l.b16 %v3319
    %v3407 = vunpack.c.h.b16 %v3319
    %v3408 = vunpack.c.l.b16 %v3320
    %v3409 = vunpack.c.h.b16 %v3320
    %v3410 = vunpack.c.l.b16 %v3321
    %v3411 = vunpack.c.h.b16 %v3321
    %v3412 = vunpack.c.l.b16 %v3322
    %v3413 = vunpack.c.h.b16 %v3322
    %v3414 = vunpack.c.l.b16 %v3323
    %v3415 = vunpack.c.h.b16 %v3323
    %v3416 = vunpack.c.l.b16 %v3324
    %v3417 = vunpack.c.h.b16 %v3324
    %v3418 = vunpack.c.l.b16 %v3325
    %v3419 = vunpack.c.h.b16 %v3325
    %v3420 = vunpack.c.l.b16 %v3326
    %v3421 = vunpack.c.h.b16 %v3326
    %v3422 = vunpack.c.l.b16 %v3327
    %v3423 = vunpack.c.h.b16 %v3327
    %v3424 = vunpack.c.l.b16 %v3328
    %v3425 = vunpack.c.h.b16 %v3328
    %v3426 = vunpack.c.l.b16 %v3329
    %v3427 = vunpack.c.h.b16 %v3329
    %v3428 = vunpack.c.l.b16 %v3330
    %v3429 = vunpack.c.h.b16 %v3330
    %v3430 = vunpack.c.l.b16 %v3331
    %v3431 = vunpack.c.h.b16 %v3331
    %v3432 = vunpack.c.l.b16 %v3332
    %v3433 = vunpack.c.h.b16 %v3332
    %v3434 = vunpack.c.l.b16 %v3333
    %v3435 = vunpack.c.h.b16 %v3333
    %v3436 = vunpack.c.l.b16 %v3334
    %v3437 = vunpack.c.h.b16 %v3334
    %v3438 = vunpack.c.l.b16 %v3335
    %v3439 = vunpack.c.h.b16 %v3335
    %v3440 = vunpack.c.l.b16 %v3336
    %v3441 = vunpack.c.h.b16 %v3336
    %v3442 = vunpack.c.l.b16 %v3337
    %v3443 = vunpack.c.h.b16 %v3337
    %v3444 = vunpack.c.l.b16 %v3338
    %v3445 = vunpack.c.h.b16 %v3338
    %v3446 = vpack.c.b16 %v3386, %v3382
    %v3447 = vpack.c.b16 %v3387, %v3383
    %v3448 = vpack.c.b16 %v3388, %v3384
    %v3449 = vpack.c.b16 %v3389, %v3385
    %v3450 = vpack.c.b16 %v3394, %v3390
    %v3451 = vpack.c.b16 %v3395, %v3391
    %v3452 = vpack.c.b16 %v3396, %v3392
    %v3453 = vpack.c.b16 %v3397, %v3393
    %v3454 = vpack.c.b16 %v3402, %v3398
    %v3455 = vpack.c.b16 %v3403, %v3399
    %v3456 = vpack.c.b16 %v3404, %v3400
    %v3457 = vpack.c.b16 %v3405, %v3401
    %v3458 = vpack.c.b16 %v3410, %v3406
    %v3459 = vpack.c.b16 %v3411, %v3407
    %v3460 = vpack.c.b16 %v3412, %v3408
    %v3461 = vpack.c.b16 %v3413, %v3409
    %v3462 = vpack.c.b16 %v3418, %v3414
    %v3463 = vpack.c.b16 %v3419, %v3415
    %v3464 = vpack.c.b16 %v3420, %v3416
    %v3465 = vpack.c.b16 %v3421, %v3417
    %v3466 = vpack.c.b16 %v3426, %v3422
    %v3467 = vpack.c.b16 %v3427, %v3423
    %v3468 = vpack.c.b16 %v3428, %v3424
    %v3469 = vpack.c.b16 %v3429, %v3425
    %v3470 = vpack.c.b16 %v3434, %v3430
    %v3471 = vpack.c.b16 %v3435, %v3431
    %v3472 = vpack.c.b16 %v3436, %v3432
    %v3473 = vpack.c.b16 %v3437, %v3433
    %v3474 = vpack.c.b16 %v3442, %v3438
    %v3475 = vpack.c.b16 %v3443, %v3439
    %v3476 = vpack.c.b16 %v3444, %v3440
    %v3477 = vpack.c.b16 %v3445, %v3441
    %3510 = vmatpush.bf16.msra.mxu0 %v3474
    %3511 = vmatpush.bf16.msra.mxu0 %v3470
    %3512 = vmatpush.bf16.msra.mxu0 %v3466
    %3513 = vmatpush.bf16.msra.mxu0 %v3462
    %3514 = vmatpush.bf16.msra.mxu0 %v3458
    %3515 = vmatpush.bf16.msra.mxu0 %v3454
    %3516 = vmatpush.bf16.msra.mxu0 %v3450
    %3517 = vmatpush.bf16.msra.mxu0 %v3446
    %3518 = vmatmul.bf16.gmra.mxu0 %v3339
    %v3519 = vpop.f32.mrf.mxu0
    %v3520 = vadd.f32 %v3342, %v3519
    %v3521 = vpop.f32.mrf.mxu0
    %v3522 = vadd.f32 %v3342, %v3521
    %3523 = vdwg.mxu0
    %3524 = vmatpush.bf16.msra.mxu0 %v3475
    %3525 = vmatpush.bf16.msra.mxu0 %v3471
    %3526 = vmatpush.bf16.msra.mxu0 %v3467
    %3527 = vmatpush.bf16.msra.mxu0 %v3463
    %3528 = vmatpush.bf16.msra.mxu0 %v3459
    %3529 = vmatpush.bf16.msra.mxu0 %v3455
    %3530 = vmatpush.bf16.msra.mxu0 %v3451
    %3531 = vmatpush.bf16.msra.mxu0 %v3447
    %3532 = vmatmul.bf16.gmra.mxu0 %v3339
    %v3533 = vpop.f32.mrf.mxu0
    %v3534 = vadd.f32 %v3343, %v3533
    %v3535 = vpop.f32.mrf.mxu0
    %v3536 = vadd.f32 %v3343, %v3535
    %3537 = vdwg.mxu0
    %3538 = vmatpush.bf16.msra.mxu0 %v3476
    %3539 = vmatpush.bf16.msra.mxu0 %v3472
    %3540 = vmatpush.bf16.msra.mxu0 %v3468
    %3541 = vmatpush.bf16.msra.mxu0 %v3464
    %3542 = vmatpush.bf16.msra.mxu0 %v3460
    %3543 = vmatpush.bf16.msra.mxu0 %v3456
    %3544 = vmatpush.bf16.msra.mxu0 %v3452
    %3545 = vmatpush.bf16.msra.mxu0 %v3448
    %3546 = vmatmul.bf16.gmra.mxu0 %v3339
    %v3547 = vpop.f32.mrf.mxu0
    %v3548 = vadd.f32 %v3344, %v3547
    %v3549 = vpop.f32.mrf.mxu0
    %v3550 = vadd.f32 %v3344, %v3549
    %3551 = vdwg.mxu0
    %3552 = vmatpush.bf16.msra.mxu0 %v3477
    %3553 = vmatpush.bf16.msra.mxu0 %v3473
    %3554 = vmatpush.bf16.msra.mxu0 %v3469
    %3555 = vmatpush.bf16.msra.mxu0 %v3465
    %3556 = vmatpush.bf16.msra.mxu0 %v3461
    %3557 = vmatpush.bf16.msra.mxu0 %v3457
    %3558 = vmatpush.bf16.msra.mxu0 %v3453
    %3559 = vmatpush.bf16.msra.mxu0 %v3449
    %3560 = vmatmul.bf16.gmra.mxu0 %v3339
    %v3561 = vpop.f32.mrf.mxu0
    %v3562 = vadd.f32 %v3345, %v3561
    %v3563 = vpop.f32.mrf.mxu0
    %v3564 = vadd.f32 %v3345, %v3563
    %3565 = vdwg.mxu0
    %v3566 = vld [vmem:[#allocation13] sm:$0xff]
    %v3567 = vld [vmem:[#allocation13 + $0x8] sm:$0xff]
    %v3568 = vld [vmem:[#allocation13 + $0x10] sm:$0xff]
    %v3569 = vld [vmem:[#allocation13 + $0x18] sm:$0xff]
    %v3570 = vld [vmem:[#allocation13 + $0x20] sm:$0xff]
    %v3571 = vld [vmem:[#allocation13 + $0x28] sm:$0xff]
    %v3572 = vld [vmem:[#allocation13 + $0x30] sm:$0xff]
    %v3573 = vld [vmem:[#allocation13 + $0x38] sm:$0xff]
    %v3574 = vld [vmem:[#allocation13 + $0x40] sm:$0xff]
    %v3575 = vld [vmem:[#allocation13 + $0x48] sm:$0xff]
    %v3576 = vld [vmem:[#allocation13 + $0x50] sm:$0xff]
    %v3577 = vld [vmem:[#allocation13 + $0x58] sm:$0xff]
    %v3578 = vld [vmem:[#allocation13 + $0x60] sm:$0xff]
    %v3579 = vld [vmem:[#allocation13 + $0x68] sm:$0xff]
    %v3580 = vld [vmem:[#allocation13 + $0x70] sm:$0xff]
    %v3581 = vld [vmem:[#allocation13 + $0x78] sm:$0xff]
    %v3582 = vld [vmem:[#allocation13 + $0x80] sm:$0xff]
    %v3583 = vld [vmem:[#allocation13 + $0x88] sm:$0xff]
    %v3584 = vld [vmem:[#allocation13 + $0x90] sm:$0xff]
    %v3585 = vld [vmem:[#allocation13 + $0x98] sm:$0xff]
    %v3586 = vld [vmem:[#allocation13 + $0xa0] sm:$0xff]
    %v3587 = vld [vmem:[#allocation13 + $0xa8] sm:$0xff]
    %v3588 = vld [vmem:[#allocation13 + $0xb0] sm:$0xff]
    %v3589 = vld [vmem:[#allocation13 + $0xb8] sm:$0xff]
    %v3590 = vld [vmem:[#allocation13 + $0xc0] sm:$0xff]
    %v3591 = vld [vmem:[#allocation13 + $0xc8] sm:$0xff]
    %v3592 = vld [vmem:[#allocation13 + $0xd0] sm:$0xff]
    %v3593 = vld [vmem:[#allocation13 + $0xd8] sm:$0xff]
    %v3594 = vld [vmem:[#allocation13 + $0xe0] sm:$0xff]
    %v3595 = vld [vmem:[#allocation13 + $0xe8] sm:$0xff]
    %v3596 = vld [vmem:[#allocation13 + $0xf0] sm:$0xff]
    %v3597 = vld [vmem:[#allocation13 + $0xf8] sm:$0xff]
    %v3630 = vunpack.c.l.b16 %v3566
    %v3631 = vunpack.c.h.b16 %v3566
    %v3632 = vunpack.c.l.b16 %v3567
    %v3633 = vunpack.c.h.b16 %v3567
    %v3634 = vunpack.c.l.b16 %v3568
    %v3635 = vunpack.c.h.b16 %v3568
    %v3636 = vunpack.c.l.b16 %v3569
    %v3637 = vunpack.c.h.b16 %v3569
    %v3638 = vunpack.c.l.b16 %v3570
    %v3639 = vunpack.c.h.b16 %v3570
    %v3640 = vunpack.c.l.b16 %v3571
    %v3641 = vunpack.c.h.b16 %v3571
    %v3642 = vunpack.c.l.b16 %v3572
    %v3643 = vunpack.c.h.b16 %v3572
    %v3644 = vunpack.c.l.b16 %v3573
    %v3645 = vunpack.c.h.b16 %v3573
    %v3646 = vunpack.c.l.b16 %v3574
    %v3647 = vunpack.c.h.b16 %v3574
    %v3648 = vunpack.c.l.b16 %v3575
    %v3649 = vunpack.c.h.b16 %v3575
    %v3650 = vunpack.c.l.b16 %v3576
    %v3651 = vunpack.c.h.b16 %v3576
    %v3652 = vunpack.c.l.b16 %v3577
    %v3653 = vunpack.c.h.b16 %v3577
    %v3654 = vunpack.c.l.b16 %v3578
    %v3655 = vunpack.c.h.b16 %v3578
    %v3656 = vunpack.c.l.b16 %v3579
    %v3657 = vunpack.c.h.b16 %v3579
    %v3658 = vunpack.c.l.b16 %v3580
    %v3659 = vunpack.c.h.b16 %v3580
    %v3660 = vunpack.c.l.b16 %v3581
    %v3661 = vunpack.c.h.b16 %v3581
    %v3662 = vunpack.c.l.b16 %v3582
    %v3663 = vunpack.c.h.b16 %v3582
    %v3664 = vunpack.c.l.b16 %v3583
    %v3665 = vunpack.c.h.b16 %v3583
    %v3666 = vunpack.c.l.b16 %v3584
    %v3667 = vunpack.c.h.b16 %v3584
    %v3668 = vunpack.c.l.b16 %v3585
    %v3669 = vunpack.c.h.b16 %v3585
    %v3670 = vunpack.c.l.b16 %v3586
    %v3671 = vunpack.c.h.b16 %v3586
    %v3672 = vunpack.c.l.b16 %v3587
    %v3673 = vunpack.c.h.b16 %v3587
    %v3674 = vunpack.c.l.b16 %v3588
    %v3675 = vunpack.c.h.b16 %v3588
    %v3676 = vunpack.c.l.b16 %v3589
    %v3677 = vunpack.c.h.b16 %v3589
    %v3678 = vunpack.c.l.b16 %v3590
    %v3679 = vunpack.c.h.b16 %v3590
    %v3680 = vunpack.c.l.b16 %v3591
    %v3681 = vunpack.c.h.b16 %v3591
    %v3682 = vunpack.c.l.b16 %v3592
    %v3683 = vunpack.c.h.b16 %v3592
    %v3684 = vunpack.c.l.b16 %v3593
    %v3685 = vunpack.c.h.b16 %v3593
    %v3686 = vunpack.c.l.b16 %v3594
    %v3687 = vunpack.c.h.b16 %v3594
    %v3688 = vunpack.c.l.b16 %v3595
    %v3689 = vunpack.c.h.b16 %v3595
    %v3690 = vunpack.c.l.b16 %v3596
    %v3691 = vunpack.c.h.b16 %v3596
    %v3692 = vunpack.c.l.b16 %v3597
    %v3693 = vunpack.c.h.b16 %v3597
    %v3694 = vpack.c.b16 %v3634, %v3630
    %v3695 = vpack.c.b16 %v3635, %v3631
    %v3696 = vpack.c.b16 %v3636, %v3632
    %v3697 = vpack.c.b16 %v3637, %v3633
    %v3698 = vpack.c.b16 %v3642, %v3638
    %v3699 = vpack.c.b16 %v3643, %v3639
    %v3700 = vpack.c.b16 %v3644, %v3640
    %v3701 = vpack.c.b16 %v3645, %v3641
    %v3702 = vpack.c.b16 %v3650, %v3646
    %v3703 = vpack.c.b16 %v3651, %v3647
    %v3704 = vpack.c.b16 %v3652, %v3648
    %v3705 = vpack.c.b16 %v3653, %v3649
    %v3706 = vpack.c.b16 %v3658, %v3654
    %v3707 = vpack.c.b16 %v3659, %v3655
    %v3708 = vpack.c.b16 %v3660, %v3656
    %v3709 = vpack.c.b16 %v3661, %v3657
    %v3710 = vpack.c.b16 %v3666, %v3662
    %v3711 = vpack.c.b16 %v3667, %v3663
    %v3712 = vpack.c.b16 %v3668, %v3664
    %v3713 = vpack.c.b16 %v3669, %v3665
    %v3714 = vpack.c.b16 %v3674, %v3670
    %v3715 = vpack.c.b16 %v3675, %v3671
    %v3716 = vpack.c.b16 %v3676, %v3672
    %v3717 = vpack.c.b16 %v3677, %v3673
    %v3718 = vpack.c.b16 %v3682, %v3678
    %v3719 = vpack.c.b16 %v3683, %v3679
    %v3720 = vpack.c.b16 %v3684, %v3680
    %v3721 = vpack.c.b16 %v3685, %v3681
    %v3722 = vpack.c.b16 %v3690, %v3686
    %v3723 = vpack.c.b16 %v3691, %v3687
    %v3724 = vpack.c.b16 %v3692, %v3688
    %v3725 = vpack.c.b16 %v3693, %v3689
    %3758 = vmatpush.bf16.msra.mxu0 %v3722
    %3759 = vmatpush.bf16.msra.mxu0 %v3718
    %3760 = vmatpush.bf16.msra.mxu0 %v3714
    %3761 = vmatpush.bf16.msra.mxu0 %v3710
    %3762 = vmatpush.bf16.msra.mxu0 %v3706
    %3763 = vmatpush.bf16.msra.mxu0 %v3702
    %3764 = vmatpush.bf16.msra.mxu0 %v3698
    %3765 = vmatpush.bf16.msra.mxu0 %v3694
    %3766 = vmatmul.bf16.gmra.mxu0 0
    %v3767 = vpop.f32.mrf.mxu0
    %v3768 = vadd.f32 0.0, %v3767
    %v3769 = vpop.f32.mrf.mxu0
    %3770 = vdwg.mxu0
    %3771 = vmatpush.bf16.msra.mxu0 %v3723
    %3772 = vmatpush.bf16.msra.mxu0 %v3719
    %3773 = vmatpush.bf16.msra.mxu0 %v3715
    %3774 = vmatpush.bf16.msra.mxu0 %v3711
    %3775 = vmatpush.bf16.msra.mxu0 %v3707
    %3776 = vmatpush.bf16.msra.mxu0 %v3703
    %3777 = vmatpush.bf16.msra.mxu0 %v3699
    %3778 = vmatpush.bf16.msra.mxu0 %v3695
    %3779 = vmatmul.bf16.gmra.mxu0 0
    %v3780 = vpop.f32.mrf.mxu0
    %v3781 = vadd.f32 0.0, %v3780
    %v3782 = vpop.f32.mrf.mxu0
    %3783 = vdwg.mxu0
    %3784 = vmatpush.bf16.msra.mxu0 %v3724
    %3785 = vmatpush.bf16.msra.mxu0 %v3720
    %3786 = vmatpush.bf16.msra.mxu0 %v3716
    %3787 = vmatpush.bf16.msra.mxu0 %v3712
    %3788 = vmatpush.bf16.msra.mxu0 %v3708
    %3789 = vmatpush.bf16.msra.mxu0 %v3704
    %3790 = vmatpush.bf16.msra.mxu0 %v3700
    %3791 = vmatpush.bf16.msra.mxu0 %v3696
    %3792 = vmatmul.bf16.gmra.mxu0 0
    %v3793 = vpop.f32.mrf.mxu0
    %v3794 = vadd.f32 0.0, %v3793
    %v3795 = vpop.f32.mrf.mxu0
    %3796 = vdwg.mxu0
    %3797 = vmatpush.bf16.msra.mxu0 %v3725
    %3798 = vmatpush.bf16.msra.mxu0 %v3721
    %3799 = vmatpush.bf16.msra.mxu0 %v3717
    %3800 = vmatpush.bf16.msra.mxu0 %v3713
    %3801 = vmatpush.bf16.msra.mxu0 %v3709
    %3802 = vmatpush.bf16.msra.mxu0 %v3705
    %3803 = vmatpush.bf16.msra.mxu0 %v3701
    %3804 = vmatpush.bf16.msra.mxu0 %v3697
    %3805 = vmatmul.bf16.gmra.mxu0 0
    %v3806 = vpop.f32.mrf.mxu0
    %v3807 = vadd.f32 0.0, %v3806
    %v3808 = vpop.f32.mrf.mxu0
    %3809 = vdwg.mxu0
    %v3810 = vadd.f32 %v3520, %v3768
    %v3811 = vadd.f32 %v3534, %v3781
    %v3812 = vadd.f32 %v3548, %v3794
    %v3813 = vadd.f32 %v3562, %v3807
    %v3814 = vxor.u32 %v3810, 2147483648
    %v3815 = vmul.f32 %v3814, 1.442695
    %v3816 = vpow.pop %v3815
    %v3817 = vadd.f32 %v3816, 1.0
    %v3818 = vrcp.pop %v3817
    %v3819 = vmul.f32 %v3817, %v3818
    %v3820 = vsub.f32 1.0, %v3819
    %v3821 = vmul.f32 %v3818, %v3820
    %v3822 = vadd.f32 %v3818, %v3821
    %vm3823 = vweird.f32 %v3817
    %vm3824 = vweird.f32 %v3818
    %vm3825 = vmor %vm3823, %vm3824
    %v3826 = vsel %vm3825, %v3818, %v3822
    %v3827 = vand.u32 2147483647, %v3817
    %vm3828 = vcmp.eq.f32.partialorder %v3827, 8.507059e+37
    %v3829 = vand.u32 %v3817, 2147483648
    %v3830 = vor.u32 1.1754944e-38, %v3829
    %v3831 = vsel %vm3828, %v3830, %v3826
    %v3832 = vmul.f32 1.0, %v3831
    %v3833 = vxor.u32 %v3811, 2147483648
    %v3834 = vmul.f32 %v3833, 1.442695
    %v3835 = vpow.pop %v3834
    %v3836 = vadd.f32 %v3835, 1.0
    %v3837 = vrcp.pop %v3836
    %v3838 = vmul.f32 %v3836, %v3837
    %v3839 = vsub.f32 1.0, %v3838
    %v3840 = vmul.f32 %v3837, %v3839
    %v3841 = vadd.f32 %v3837, %v3840
    %vm3842 = vweird.f32 %v3836
    %vm3843 = vweird.f32 %v3837
    %vm3844 = vmor %vm3842, %vm3843
    %v3845 = vsel %vm3844, %v3837, %v3841
    %v3846 = vand.u32 2147483647, %v3836
    %vm3847 = vcmp.eq.f32.partialorder %v3846, 8.507059e+37
    %v3848 = vand.u32 %v3836, 2147483648
    %v3849 = vor.u32 1.1754944e-38, %v3848
    %v3850 = vsel %vm3847, %v3849, %v3845
    %v3851 = vmul.f32 1.0, %v3850
    %v3852 = vtanh.pop %v3812
    %v3853 = vxor.u32 %v3813, 2147483648
    %v3854 = vmul.f32 %v3853, 1.442695
    %v3855 = vpow.pop %v3854
    %v3856 = vadd.f32 %v3855, 1.0
    %v3857 = vrcp.pop %v3856
    %v3858 = vmul.f32 %v3856, %v3857
    %v3859 = vsub.f32 1.0, %v3858
    %v3860 = vmul.f32 %v3857, %v3859
    %v3861 = vadd.f32 %v3857, %v3860
    %vm3862 = vweird.f32 %v3856
    %vm3863 = vweird.f32 %v3857
    %vm3864 = vmor %vm3862, %vm3863
    %v3865 = vsel %vm3864, %v3857, %v3861
    %v3866 = vand.u32 2147483647, %v3856
    %vm3867 = vcmp.eq.f32.partialorder %v3866, 8.507059e+37
    %v3868 = vand.u32 %v3856, 2147483648
    %v3869 = vor.u32 1.1754944e-38, %v3868
    %v3870 = vsel %vm3867, %v3869, %v3865
    %v3871 = vmul.f32 1.0, %v3870
    %v3872 = vmul.f32 %v3851, 0.0
    %v3873 = vmul.f32 %v3832, %v3852
    %v3874 = vadd.f32 %v3872, %v3873
    %v3875 = vtanh.pop %v3874
    %v3876 = vmul.f32 %v3871, %v3875
    %v3878 = vrot.slane %v3876, 1
    %3880 = vst [vmem:[#allocation2] sm:$0x1] %v3876
    %3881 = vst [vmem:[#allocation2 + $0x8] sm:$0x1] %v3878
    %v3882 = vpack.c.bf16 %v3876, %v3876
    %3883 = vmatpush.bf16.msra.mxu0 %v3722
    %3884 = vmatpush.bf16.msra.mxu0 %v3718
    %3885 = vmatpush.bf16.msra.mxu0 %v3714
    %3886 = vmatpush.bf16.msra.mxu0 %v3710
    %3887 = vmatpush.bf16.msra.mxu0 %v3706
    %3888 = vmatpush.bf16.msra.mxu0 %v3702
    %3889 = vmatpush.bf16.msra.mxu0 %v3698
    %3890 = vmatpush.bf16.msra.mxu0 %v3694
    %3891 = vmatmul.bf16.gmra.mxu0 %v3882
    %v3892 = vpop.f32.mrf.mxu0
    %v3893 = vadd.f32 0.0, %v3892
    %v3894 = vpop.f32.mrf.mxu0
    %3895 = vdwg.mxu0
    %3896 = vmatpush.bf16.msra.mxu0 %v3723
    %3897 = vmatpush.bf16.msra.mxu0 %v3719
    %3898 = vmatpush.bf16.msra.mxu0 %v3715
    %3899 = vmatpush.bf16.msra.mxu0 %v3711
    %3900 = vmatpush.bf16.msra.mxu0 %v3707
    %3901 = vmatpush.bf16.msra.mxu0 %v3703
    %3902 = vmatpush.bf16.msra.mxu0 %v3699
    %3903 = vmatpush.bf16.msra.mxu0 %v3695
    %3904 = vmatmul.bf16.gmra.mxu0 %v3882
    %v3905 = vpop.f32.mrf.mxu0
    %v3906 = vadd.f32 0.0, %v3905
    %v3907 = vpop.f32.mrf.mxu0
    %3908 = vdwg.mxu0
    %3909 = vmatpush.bf16.msra.mxu0 %v3724
    %3910 = vmatpush.bf16.msra.mxu0 %v3720
    %3911 = vmatpush.bf16.msra.mxu0 %v3716
    %3912 = vmatpush.bf16.msra.mxu0 %v3712
    %3913 = vmatpush.bf16.msra.mxu0 %v3708
    %3914 = vmatpush.bf16.msra.mxu0 %v3704
    %3915 = vmatpush.bf16.msra.mxu0 %v3700
    %3916 = vmatpush.bf16.msra.mxu0 %v3696
    %3917 = vmatmul.bf16.gmra.mxu0 %v3882
    %v3918 = vpop.f32.mrf.mxu0
    %v3919 = vadd.f32 0.0, %v3918
    %v3920 = vpop.f32.mrf.mxu0
    %3921 = vdwg.mxu0
    %3922 = vmatpush.bf16.msra.mxu0 %v3725
    %3923 = vmatpush.bf16.msra.mxu0 %v3721
    %3924 = vmatpush.bf16.msra.mxu0 %v3717
    %3925 = vmatpush.bf16.msra.mxu0 %v3713
    %3926 = vmatpush.bf16.msra.mxu0 %v3709
    %3927 = vmatpush.bf16.msra.mxu0 %v3705
    %3928 = vmatpush.bf16.msra.mxu0 %v3701
    %3929 = vmatpush.bf16.msra.mxu0 %v3697
    %3930 = vmatmul.bf16.gmra.mxu0 %v3882
    %v3931 = vpop.f32.mrf.mxu0
    %v3932 = vadd.f32 0.0, %v3931
    %v3933 = vpop.f32.mrf.mxu0
    %3934 = vdwg.mxu0
    %v3939 = vrot.slane %v3893, 6
    %v3940 = vrot.slane %v3906, 6
    %v3941 = vrot.slane %v3919, 6
    %v3942 = vrot.slane %v3932, 6
    %v3947 = vadd.f32 %v3520, %v3939
    %v3948 = vadd.f32 %v3534, %v3940
    %v3949 = vadd.f32 %v3548, %v3941
    %v3950 = vadd.f32 %v3562, %v3942
    %v3951 = vxor.u32 %v3947, 2147483648
    %v3952 = vmul.f32 %v3951, 1.442695
    %v3953 = vpow.pop %v3952
    %v3954 = vadd.f32 %v3953, 1.0
    %v3955 = vrcp.pop %v3954
    %v3956 = vmul.f32 %v3954, %v3955
    %v3957 = vsub.f32 1.0, %v3956
    %v3958 = vmul.f32 %v3955, %v3957
    %v3959 = vadd.f32 %v3955, %v3958
    %vm3960 = vweird.f32 %v3954
    %vm3961 = vweird.f32 %v3955
    %vm3962 = vmor %vm3960, %vm3961
    %v3963 = vsel %vm3962, %v3955, %v3959
    %v3964 = vand.u32 2147483647, %v3954
    %vm3965 = vcmp.eq.f32.partialorder %v3964, 8.507059e+37
    %v3966 = vand.u32 %v3954, 2147483648
    %v3967 = vor.u32 1.1754944e-38, %v3966
    %v3968 = vsel %vm3965, %v3967, %v3963
    %v3969 = vmul.f32 1.0, %v3968
    %v3970 = vxor.u32 %v3948, 2147483648
    %v3971 = vmul.f32 %v3970, 1.442695
    %v3972 = vpow.pop %v3971
    %v3973 = vadd.f32 %v3972, 1.0
    %v3974 = vrcp.pop %v3973
    %v3975 = vmul.f32 %v3973, %v3974
    %v3976 = vsub.f32 1.0, %v3975
    %v3977 = vmul.f32 %v3974, %v3976
    %v3978 = vadd.f32 %v3974, %v3977
    %vm3979 = vweird.f32 %v3973
    %vm3980 = vweird.f32 %v3974
    %vm3981 = vmor %vm3979, %vm3980
    %v3982 = vsel %vm3981, %v3974, %v3978
    %v3983 = vand.u32 2147483647, %v3973
    %vm3984 = vcmp.eq.f32.partialorder %v3983, 8.507059e+37
    %v3985 = vand.u32 %v3973, 2147483648
    %v3986 = vor.u32 1.1754944e-38, %v3985
    %v3987 = vsel %vm3984, %v3986, %v3982
    %v3988 = vmul.f32 1.0, %v3987
    %v3989 = vtanh.pop %v3949
    %v3990 = vxor.u32 %v3950, 2147483648
    %v3991 = vmul.f32 %v3990, 1.442695
    %v3992 = vpow.pop %v3991
    %v3993 = vadd.f32 %v3992, 1.0
    %v3994 = vrcp.pop %v3993
    %v3995 = vmul.f32 %v3993, %v3994
    %v3996 = vsub.f32 1.0, %v3995
    %v3997 = vmul.f32 %v3994, %v3996
    %v3998 = vadd.f32 %v3994, %v3997
    %vm3999 = vweird.f32 %v3993
    %vm4000 = vweird.f32 %v3994
    %vm4001 = vmor %vm3999, %vm4000
    %v4002 = vsel %vm4001, %v3994, %v3998
    %v4003 = vand.u32 2147483647, %v3993
    %vm4004 = vcmp.eq.f32.partialorder %v4003, 8.507059e+37
    %v4005 = vand.u32 %v3993, 2147483648
    %v4006 = vor.u32 1.1754944e-38, %v4005
    %v4007 = vsel %vm4004, %v4006, %v4002
    %v4008 = vmul.f32 1.0, %v4007
    %v4010 = vrot.slane %v3874, 6
    %v4012 = vmul.f32 %v3988, %v4010
    %v4013 = vmul.f32 %v3969, %v3989
    %v4014 = vadd.f32 %v4012, %v4013
    %v4015 = vtanh.pop %v4014
    %v4016 = vmul.f32 %v4008, %v4015
    %4018 = vst [vmem:[#allocation1] sm:$0xff] %v4016
    %s4019 = scalar_lea.vmem [#allocation1], 2
    %v4020 = vld [vmem:[%s4019] ss:$9 sm:$0xff]
    %s4021 = scalar_lea.vmem [#allocation1], 3
    %v4022 = vld [vmem:[%s4021] ss:$9 sm:$0xff]
    %4025 = vst [vmem:[#allocation2 + $0x1] sm:$0x1] %v4020
    %4026 = vst [vmem:[#allocation2 + $0x9] sm:$0x1] %v4022
    %v4027 = vpack.c.bf16 %v4016, %v4016
    %v4029 = vrot.slane %v4027, 1
    %4031 = vmatpush.bf16.msra.mxu0 %v3722
    %4032 = vmatpush.bf16.msra.mxu0 %v3718
    %4033 = vmatpush.bf16.msra.mxu0 %v3714
    %4034 = vmatpush.bf16.msra.mxu0 %v3710
    %4035 = vmatpush.bf16.msra.mxu0 %v3706
    %4036 = vmatpush.bf16.msra.mxu0 %v3702
    %4037 = vmatpush.bf16.msra.mxu0 %v3698
    %4038 = vmatpush.bf16.msra.mxu0 %v3694
    %4039 = vmatmul.bf16.gmra.mxu0 %v4029
    %v4040 = vpop.f32.mrf.mxu0
    %v4041 = vadd.f32 0.0, %v4040
    %v4042 = vpop.f32.mrf.mxu0
    %4043 = vdwg.mxu0
    %4044 = vmatpush.bf16.msra.mxu0 %v3723
    %4045 = vmatpush.bf16.msra.mxu0 %v3719
    %4046 = vmatpush.bf16.msra.mxu0 %v3715
    %4047 = vmatpush.bf16.msra.mxu0 %v3711
    %4048 = vmatpush.bf16.msra.mxu0 %v3707
    %4049 = vmatpush.bf16.msra.mxu0 %v3703
    %4050 = vmatpush.bf16.msra.mxu0 %v3699
    %4051 = vmatpush.bf16.msra.mxu0 %v3695
    %4052 = vmatmul.bf16.gmra.mxu0 %v4029
    %v4053 = vpop.f32.mrf.mxu0
    %v4054 = vadd.f32 0.0, %v4053
    %v4055 = vpop.f32.mrf.mxu0
    %4056 = vdwg.mxu0
    %4057 = vmatpush.bf16.msra.mxu0 %v3724
    %4058 = vmatpush.bf16.msra.mxu0 %v3720
    %4059 = vmatpush.bf16.msra.mxu0 %v3716
    %4060 = vmatpush.bf16.msra.mxu0 %v3712
    %4061 = vmatpush.bf16.msra.mxu0 %v3708
    %4062 = vmatpush.bf16.msra.mxu0 %v3704
    %4063 = vmatpush.bf16.msra.mxu0 %v3700
    %4064 = vmatpush.bf16.msra.mxu0 %v3696
    %4065 = vmatmul.bf16.gmra.mxu0 %v4029
    %v4066 = vpop.f32.mrf.mxu0
    %v4067 = vadd.f32 0.0, %v4066
    %v4068 = vpop.f32.mrf.mxu0
    %4069 = vdwg.mxu0
    %4070 = vmatpush.bf16.msra.mxu0 %v3725
    %4071 = vmatpush.bf16.msra.mxu0 %v3721
    %4072 = vmatpush.bf16.msra.mxu0 %v3717
    %4073 = vmatpush.bf16.msra.mxu0 %v3713
    %4074 = vmatpush.bf16.msra.mxu0 %v3709
    %4075 = vmatpush.bf16.msra.mxu0 %v3705
    %4076 = vmatpush.bf16.msra.mxu0 %v3701
    %4077 = vmatpush.bf16.msra.mxu0 %v3697
    %4078 = vmatmul.bf16.gmra.mxu0 %v4029
    %v4079 = vpop.f32.mrf.mxu0
    %v4080 = vadd.f32 0.0, %v4079
    %v4081 = vpop.f32.mrf.mxu0
    %4082 = vdwg.mxu0
    %v4087 = vrot.slane %v4041, 4
    %v4088 = vrot.slane %v4054, 4
    %v4089 = vrot.slane %v4067, 4
    %v4090 = vrot.slane %v4080, 4
    %v4095 = vadd.f32 %v3520, %v4087
    %v4096 = vadd.f32 %v3534, %v4088
    %v4097 = vadd.f32 %v3548, %v4089
    %v4098 = vadd.f32 %v3562, %v4090
    %v4099 = vxor.u32 %v4095, 2147483648
    %v4100 = vmul.f32 %v4099, 1.442695
    %v4101 = vpow.pop %v4100
    %v4102 = vadd.f32 %v4101, 1.0
    %v4103 = vrcp.pop %v4102
    %v4104 = vmul.f32 %v4102, %v4103
    %v4105 = vsub.f32 1.0, %v4104
    %v4106 = vmul.f32 %v4103, %v4105
    %v4107 = vadd.f32 %v4103, %v4106
    %vm4108 = vweird.f32 %v4102
    %vm4109 = vweird.f32 %v4103
    %vm4110 = vmor %vm4108, %vm4109
    %v4111 = vsel %vm4110, %v4103, %v4107
    %v4112 = vand.u32 2147483647, %v4102
    %vm4113 = vcmp.eq.f32.partialorder %v4112, 8.507059e+37
    %v4114 = vand.u32 %v4102, 2147483648
    %v4115 = vor.u32 1.1754944e-38, %v4114
    %v4116 = vsel %vm4113, %v4115, %v4111
    %v4117 = vmul.f32 1.0, %v4116
    %v4118 = vxor.u32 %v4096, 2147483648
    %v4119 = vmul.f32 %v4118, 1.442695
    %v4120 = vpow.pop %v4119
    %v4121 = vadd.f32 %v4120, 1.0
    %v4122 = vrcp.pop %v4121
    %v4123 = vmul.f32 %v4121, %v4122
    %v4124 = vsub.f32 1.0, %v4123
    %v4125 = vmul.f32 %v4122, %v4124
    %v4126 = vadd.f32 %v4122, %v4125
    %vm4127 = vweird.f32 %v4121
    %vm4128 = vweird.f32 %v4122
    %vm4129 = vmor %vm4127, %vm4128
    %v4130 = vsel %vm4129, %v4122, %v4126
    %v4131 = vand.u32 2147483647, %v4121
    %vm4132 = vcmp.eq.f32.partialorder %v4131, 8.507059e+37
    %v4133 = vand.u32 %v4121, 2147483648
    %v4134 = vor.u32 1.1754944e-38, %v4133
    %v4135 = vsel %vm4132, %v4134, %v4130
    %v4136 = vmul.f32 1.0, %v4135
    %v4137 = vtanh.pop %v4097
    %v4138 = vxor.u32 %v4098, 2147483648
    %v4139 = vmul.f32 %v4138, 1.442695
    %v4140 = vpow.pop %v4139
    %v4141 = vadd.f32 %v4140, 1.0
    %v4142 = vrcp.pop %v4141
    %v4143 = vmul.f32 %v4141, %v4142
    %v4144 = vsub.f32 1.0, %v4143
    %v4145 = vmul.f32 %v4142, %v4144
    %v4146 = vadd.f32 %v4142, %v4145
    %vm4147 = vweird.f32 %v4141
    %vm4148 = vweird.f32 %v4142
    %vm4149 = vmor %vm4147, %vm4148
    %v4150 = vsel %vm4149, %v4142, %v4146
    %v4151 = vand.u32 2147483647, %v4141
    %vm4152 = vcmp.eq.f32.partialorder %v4151, 8.507059e+37
    %v4153 = vand.u32 %v4141, 2147483648
    %v4154 = vor.u32 1.1754944e-38, %v4153
    %v4155 = vsel %vm4152, %v4154, %v4150
    %v4156 = vmul.f32 1.0, %v4155
    %v4158 = vrot.slane %v4014, 6
    %v4160 = vmul.f32 %v4136, %v4158
    %v4161 = vmul.f32 %v4117, %v4137
    %v4162 = vadd.f32 %v4160, %v4161
    %v4163 = vtanh.pop %v4162
    %v4164 = vmul.f32 %v4156, %v4163
    %4166 = vst [vmem:[#allocation1] sm:$0xff] %v4164
    %s4167 = scalar_lea.vmem [#allocation1], 4
    %v4168 = vld [vmem:[%s4167] ss:$9 sm:$0xff]
    %s4169 = scalar_lea.vmem [#allocation1], 5
    %v4170 = vld [vmem:[%s4169] ss:$9 sm:$0xff]
    %4173 = vst [vmem:[#allocation2 + $0x2] sm:$0x1] %v4168
    %4174 = vst [vmem:[#allocation2 + $0xa] sm:$0x1] %v4170
    %v4175 = vpack.c.bf16 %v4164, %v4164
    %v4177 = vrot.slane %v4175, 2
    %4179 = vmatpush.bf16.msra.mxu0 %v3722
    %4180 = vmatpush.bf16.msra.mxu0 %v3718
    %4181 = vmatpush.bf16.msra.mxu0 %v3714
    %4182 = vmatpush.bf16.msra.mxu0 %v3710
    %4183 = vmatpush.bf16.msra.mxu0 %v3706
    %4184 = vmatpush.bf16.msra.mxu0 %v3702
    %4185 = vmatpush.bf16.msra.mxu0 %v3698
    %4186 = vmatpush.bf16.msra.mxu0 %v3694
    %4187 = vmatmul.bf16.gmra.mxu0 %v4177
    %v4188 = vpop.f32.mrf.mxu0
    %v4189 = vadd.f32 0.0, %v4188
    %v4190 = vpop.f32.mrf.mxu0
    %4191 = vdwg.mxu0
    %4192 = vmatpush.bf16.msra.mxu0 %v3723
    %4193 = vmatpush.bf16.msra.mxu0 %v3719
    %4194 = vmatpush.bf16.msra.mxu0 %v3715
    %4195 = vmatpush.bf16.msra.mxu0 %v3711
    %4196 = vmatpush.bf16.msra.mxu0 %v3707
    %4197 = vmatpush.bf16.msra.mxu0 %v3703
    %4198 = vmatpush.bf16.msra.mxu0 %v3699
    %4199 = vmatpush.bf16.msra.mxu0 %v3695
    %4200 = vmatmul.bf16.gmra.mxu0 %v4177
    %v4201 = vpop.f32.mrf.mxu0
    %v4202 = vadd.f32 0.0, %v4201
    %v4203 = vpop.f32.mrf.mxu0
    %4204 = vdwg.mxu0
    %4205 = vmatpush.bf16.msra.mxu0 %v3724
    %4206 = vmatpush.bf16.msra.mxu0 %v3720
    %4207 = vmatpush.bf16.msra.mxu0 %v3716
    %4208 = vmatpush.bf16.msra.mxu0 %v3712
    %4209 = vmatpush.bf16.msra.mxu0 %v3708
    %4210 = vmatpush.bf16.msra.mxu0 %v3704
    %4211 = vmatpush.bf16.msra.mxu0 %v3700
    %4212 = vmatpush.bf16.msra.mxu0 %v3696
    %4213 = vmatmul.bf16.gmra.mxu0 %v4177
    %v4214 = vpop.f32.mrf.mxu0
    %v4215 = vadd.f32 0.0, %v4214
    %v4216 = vpop.f32.mrf.mxu0
    %4217 = vdwg.mxu0
    %4218 = vmatpush.bf16.msra.mxu0 %v3725
    %4219 = vmatpush.bf16.msra.mxu0 %v3721
    %4220 = vmatpush.bf16.msra.mxu0 %v3717
    %4221 = vmatpush.bf16.msra.mxu0 %v3713
    %4222 = vmatpush.bf16.msra.mxu0 %v3709
    %4223 = vmatpush.bf16.msra.mxu0 %v3705
    %4224 = vmatpush.bf16.msra.mxu0 %v3701
    %4225 = vmatpush.bf16.msra.mxu0 %v3697
    %4226 = vmatmul.bf16.gmra.mxu0 %v4177
    %v4227 = vpop.f32.mrf.mxu0
    %v4228 = vadd.f32 0.0, %v4227
    %v4229 = vpop.f32.mrf.mxu0
    %4230 = vdwg.mxu0
    %v4235 = vrot.slane %v4189, 2
    %v4236 = vrot.slane %v4202, 2
    %v4237 = vrot.slane %v4215, 2
    %v4238 = vrot.slane %v4228, 2
    %v4243 = vadd.f32 %v3520, %v4235
    %v4244 = vadd.f32 %v3534, %v4236
    %v4245 = vadd.f32 %v3548, %v4237
    %v4246 = vadd.f32 %v3562, %v4238
    %v4247 = vxor.u32 %v4243, 2147483648
    %v4248 = vmul.f32 %v4247, 1.442695
    %v4249 = vpow.pop %v4248
    %v4250 = vadd.f32 %v4249, 1.0
    %v4251 = vrcp.pop %v4250
    %v4252 = vmul.f32 %v4250, %v4251
    %v4253 = vsub.f32 1.0, %v4252
    %v4254 = vmul.f32 %v4251, %v4253
    %v4255 = vadd.f32 %v4251, %v4254
    %vm4256 = vweird.f32 %v4250
    %vm4257 = vweird.f32 %v4251
    %vm4258 = vmor %vm4256, %vm4257
    %v4259 = vsel %vm4258, %v4251, %v4255
    %v4260 = vand.u32 2147483647, %v4250
    %vm4261 = vcmp.eq.f32.partialorder %v4260, 8.507059e+37
    %v4262 = vand.u32 %v4250, 2147483648
    %v4263 = vor.u32 1.1754944e-38, %v4262
    %v4264 = vsel %vm4261, %v4263, %v4259
    %v4265 = vmul.f32 1.0, %v4264
    %v4266 = vxor.u32 %v4244, 2147483648
    %v4267 = vmul.f32 %v4266, 1.442695
    %v4268 = vpow.pop %v4267
    %v4269 = vadd.f32 %v4268, 1.0
    %v4270 = vrcp.pop %v4269
    %v4271 = vmul.f32 %v4269, %v4270
    %v4272 = vsub.f32 1.0, %v4271
    %v4273 = vmul.f32 %v4270, %v4272
    %v4274 = vadd.f32 %v4270, %v4273
    %vm4275 = vweird.f32 %v4269
    %vm4276 = vweird.f32 %v4270
    %vm4277 = vmor %vm4275, %vm4276
    %v4278 = vsel %vm4277, %v4270, %v4274
    %v4279 = vand.u32 2147483647, %v4269
    %vm4280 = vcmp.eq.f32.partialorder %v4279, 8.507059e+37
    %v4281 = vand.u32 %v4269, 2147483648
    %v4282 = vor.u32 1.1754944e-38, %v4281
    %v4283 = vsel %vm4280, %v4282, %v4278
    %v4284 = vmul.f32 1.0, %v4283
    %v4285 = vtanh.pop %v4245
    %v4286 = vxor.u32 %v4246, 2147483648
    %v4287 = vmul.f32 %v4286, 1.442695
    %v4288 = vpow.pop %v4287
    %v4289 = vadd.f32 %v4288, 1.0
    %v4290 = vrcp.pop %v4289
    %v4291 = vmul.f32 %v4289, %v4290
    %v4292 = vsub.f32 1.0, %v4291
    %v4293 = vmul.f32 %v4290, %v4292
    %v4294 = vadd.f32 %v4290, %v4293
    %vm4295 = vweird.f32 %v4289
    %vm4296 = vweird.f32 %v4290
    %vm4297 = vmor %vm4295, %vm4296
    %v4298 = vsel %vm4297, %v4290, %v4294
    %v4299 = vand.u32 2147483647, %v4289
    %vm4300 = vcmp.eq.f32.partialorder %v4299, 8.507059e+37
    %v4301 = vand.u32 %v4289, 2147483648
    %v4302 = vor.u32 1.1754944e-38, %v4301
    %v4303 = vsel %vm4300, %v4302, %v4298
    %v4304 = vmul.f32 1.0, %v4303
    %v4306 = vrot.slane %v4162, 6
    %v4308 = vmul.f32 %v4284, %v4306
    %v4309 = vmul.f32 %v4265, %v4285
    %v4310 = vadd.f32 %v4308, %v4309
    %v4311 = vtanh.pop %v4310
    %v4312 = vmul.f32 %v4304, %v4311
    %4314 = vst [vmem:[#allocation1] sm:$0xff] %v4312
    %s4315 = scalar_lea.vmem [#allocation1], 6
    %v4316 = vld [vmem:[%s4315] ss:$9 sm:$0xff]
    %s4317 = scalar_lea.vmem [#allocation1], 7
    %v4318 = vld [vmem:[%s4317] ss:$9 sm:$0xff]
    %4321 = vst [vmem:[#allocation2 + $0x3] sm:$0x1] %v4316
    %4322 = vst [vmem:[#allocation2 + $0xb] sm:$0x1] %v4318
    %v4323 = vpack.c.bf16 %v4312, %v4312
    %v4325 = vrot.slane %v4323, 3
    %4327 = vmatpush.bf16.msra.mxu0 %v3722
    %4328 = vmatpush.bf16.msra.mxu0 %v3718
    %4329 = vmatpush.bf16.msra.mxu0 %v3714
    %4330 = vmatpush.bf16.msra.mxu0 %v3710
    %4331 = vmatpush.bf16.msra.mxu0 %v3706
    %4332 = vmatpush.bf16.msra.mxu0 %v3702
    %4333 = vmatpush.bf16.msra.mxu0 %v3698
    %4334 = vmatpush.bf16.msra.mxu0 %v3694
    %4335 = vmatmul.bf16.gmra.mxu0 %v4325
    %v4336 = vpop.f32.mrf.mxu0
    %v4337 = vadd.f32 0.0, %v4336
    %v4338 = vpop.f32.mrf.mxu0
    %4339 = vdwg.mxu0
    %4340 = vmatpush.bf16.msra.mxu0 %v3723
    %4341 = vmatpush.bf16.msra.mxu0 %v3719
    %4342 = vmatpush.bf16.msra.mxu0 %v3715
    %4343 = vmatpush.bf16.msra.mxu0 %v3711
    %4344 = vmatpush.bf16.msra.mxu0 %v3707
    %4345 = vmatpush.bf16.msra.mxu0 %v3703
    %4346 = vmatpush.bf16.msra.mxu0 %v3699
    %4347 = vmatpush.bf16.msra.mxu0 %v3695
    %4348 = vmatmul.bf16.gmra.mxu0 %v4325
    %v4349 = vpop.f32.mrf.mxu0
    %v4350 = vadd.f32 0.0, %v4349
    %v4351 = vpop.f32.mrf.mxu0
    %4352 = vdwg.mxu0
    %4353 = vmatpush.bf16.msra.mxu0 %v3724
    %4354 = vmatpush.bf16.msra.mxu0 %v3720
    %4355 = vmatpush.bf16.msra.mxu0 %v3716
    %4356 = vmatpush.bf16.msra.mxu0 %v3712
    %4357 = vmatpush.bf16.msra.mxu0 %v3708
    %4358 = vmatpush.bf16.msra.mxu0 %v3704
    %4359 = vmatpush.bf16.msra.mxu0 %v3700
    %4360 = vmatpush.bf16.msra.mxu0 %v3696
    %4361 = vmatmul.bf16.gmra.mxu0 %v4325
    %v4362 = vpop.f32.mrf.mxu0
    %v4363 = vadd.f32 0.0, %v4362
    %v4364 = vpop.f32.mrf.mxu0
    %4365 = vdwg.mxu0
    %4366 = vmatpush.bf16.msra.mxu0 %v3725
    %4367 = vmatpush.bf16.msra.mxu0 %v3721
    %4368 = vmatpush.bf16.msra.mxu0 %v3717
    %4369 = vmatpush.bf16.msra.mxu0 %v3713
    %4370 = vmatpush.bf16.msra.mxu0 %v3709
    %4371 = vmatpush.bf16.msra.mxu0 %v3705
    %4372 = vmatpush.bf16.msra.mxu0 %v3701
    %4373 = vmatpush.bf16.msra.mxu0 %v3697
    %4374 = vmatmul.bf16.gmra.mxu0 %v4325
    %v4375 = vpop.f32.mrf.mxu0
    %v4376 = vadd.f32 0.0, %v4375
    %v4377 = vpop.f32.mrf.mxu0
    %4378 = vdwg.mxu0
    %v4379 = vadd.f32 %v3522, %v4337
    %v4380 = vadd.f32 %v3536, %v4350
    %v4381 = vadd.f32 %v3550, %v4363
    %v4382 = vadd.f32 %v3564, %v4376
    %v4383 = vxor.u32 %v4379, 2147483648
    %v4384 = vmul.f32 %v4383, 1.442695
    %v4385 = vpow.pop %v4384
    %v4386 = vadd.f32 %v4385, 1.0
    %v4387 = vrcp.pop %v4386
    %v4388 = vmul.f32 %v4386, %v4387
    %v4389 = vsub.f32 1.0, %v4388
    %v4390 = vmul.f32 %v4387, %v4389
    %v4391 = vadd.f32 %v4387, %v4390
    %vm4392 = vweird.f32 %v4386
    %vm4393 = vweird.f32 %v4387
    %vm4394 = vmor %vm4392, %vm4393
    %v4395 = vsel %vm4394, %v4387, %v4391
    %v4396 = vand.u32 2147483647, %v4386
    %vm4397 = vcmp.eq.f32.partialorder %v4396, 8.507059e+37
    %v4398 = vand.u32 %v4386, 2147483648
    %v4399 = vor.u32 1.1754944e-38, %v4398
    %v4400 = vsel %vm4397, %v4399, %v4395
    %v4401 = vmul.f32 1.0, %v4400
    %v4402 = vxor.u32 %v4380, 2147483648
    %v4403 = vmul.f32 %v4402, 1.442695
    %v4404 = vpow.pop %v4403
    %v4405 = vadd.f32 %v4404, 1.0
    %v4406 = vrcp.pop %v4405
    %v4407 = vmul.f32 %v4405, %v4406
    %v4408 = vsub.f32 1.0, %v4407
    %v4409 = vmul.f32 %v4406, %v4408
    %v4410 = vadd.f32 %v4406, %v4409
    %vm4411 = vweird.f32 %v4405
    %vm4412 = vweird.f32 %v4406
    %vm4413 = vmor %vm4411, %vm4412
    %v4414 = vsel %vm4413, %v4406, %v4410
    %v4415 = vand.u32 2147483647, %v4405
    %vm4416 = vcmp.eq.f32.partialorder %v4415, 8.507059e+37
    %v4417 = vand.u32 %v4405, 2147483648
    %v4418 = vor.u32 1.1754944e-38, %v4417
    %v4419 = vsel %vm4416, %v4418, %v4414
    %v4420 = vmul.f32 1.0, %v4419
    %v4421 = vtanh.pop %v4381
    %v4422 = vxor.u32 %v4382, 2147483648
    %v4423 = vmul.f32 %v4422, 1.442695
    %v4424 = vpow.pop %v4423
    %v4425 = vadd.f32 %v4424, 1.0
    %v4426 = vrcp.pop %v4425
    %v4427 = vmul.f32 %v4425, %v4426
    %v4428 = vsub.f32 1.0, %v4427
    %v4429 = vmul.f32 %v4426, %v4428
    %v4430 = vadd.f32 %v4426, %v4429
    %vm4431 = vweird.f32 %v4425
    %vm4432 = vweird.f32 %v4426
    %vm4433 = vmor %vm4431, %vm4432
    %v4434 = vsel %vm4433, %v4426, %v4430
    %v4435 = vand.u32 2147483647, %v4425
    %vm4436 = vcmp.eq.f32.partialorder %v4435, 8.507059e+37
    %v4437 = vand.u32 %v4425, 2147483648
    %v4438 = vor.u32 1.1754944e-38, %v4437
    %v4439 = vsel %vm4436, %v4438, %v4434
    %v4440 = vmul.f32 1.0, %v4439
    %v4442 = vrot.slane %v4310, 6
    %v4444 = vmul.f32 %v4420, %v4442
    %v4445 = vmul.f32 %v4401, %v4421
    %v4446 = vadd.f32 %v4444, %v4445
    %v4447 = vtanh.pop %v4446
    %v4448 = vmul.f32 %v4440, %v4447
    %v4450 = vrot.slane %v4448, 1
    %4452 = vst [vmem:[#allocation2 + $0x4] sm:$0x1] %v4448
    %4453 = vst [vmem:[#allocation2 + $0xc] sm:$0x1] %v4450
    %v4454 = vpack.c.bf16 %v4448, %v4448
    %4455 = vmatpush.bf16.msra.mxu0 %v3722
    %4456 = vmatpush.bf16.msra.mxu0 %v3718
    %4457 = vmatpush.bf16.msra.mxu0 %v3714
    %4458 = vmatpush.bf16.msra.mxu0 %v3710
    %4459 = vmatpush.bf16.msra.mxu0 %v3706
    %4460 = vmatpush.bf16.msra.mxu0 %v3702
    %4461 = vmatpush.bf16.msra.mxu0 %v3698
    %4462 = vmatpush.bf16.msra.mxu0 %v3694
    %4463 = vmatmul.bf16.gmra.mxu0 %v4454
    %v4464 = vpop.f32.mrf.mxu0
    %v4465 = vadd.f32 0.0, %v4464
    %v4466 = vpop.f32.mrf.mxu0
    %4467 = vdwg.mxu0
    %4468 = vmatpush.bf16.msra.mxu0 %v3723
    %4469 = vmatpush.bf16.msra.mxu0 %v3719
    %4470 = vmatpush.bf16.msra.mxu0 %v3715
    %4471 = vmatpush.bf16.msra.mxu0 %v3711
    %4472 = vmatpush.bf16.msra.mxu0 %v3707
    %4473 = vmatpush.bf16.msra.mxu0 %v3703
    %4474 = vmatpush.bf16.msra.mxu0 %v3699
    %4475 = vmatpush.bf16.msra.mxu0 %v3695
    %4476 = vmatmul.bf16.gmra.mxu0 %v4454
    %v4477 = vpop.f32.mrf.mxu0
    %v4478 = vadd.f32 0.0, %v4477
    %v4479 = vpop.f32.mrf.mxu0
    %4480 = vdwg.mxu0
    %4481 = vmatpush.bf16.msra.mxu0 %v3724
    %4482 = vmatpush.bf16.msra.mxu0 %v3720
    %4483 = vmatpush.bf16.msra.mxu0 %v3716
    %4484 = vmatpush.bf16.msra.mxu0 %v3712
    %4485 = vmatpush.bf16.msra.mxu0 %v3708
    %4486 = vmatpush.bf16.msra.mxu0 %v3704
    %4487 = vmatpush.bf16.msra.mxu0 %v3700
    %4488 = vmatpush.bf16.msra.mxu0 %v3696
    %4489 = vmatmul.bf16.gmra.mxu0 %v4454
    %v4490 = vpop.f32.mrf.mxu0
    %v4491 = vadd.f32 0.0, %v4490
    %v4492 = vpop.f32.mrf.mxu0
    %4493 = vdwg.mxu0
    %4494 = vmatpush.bf16.msra.mxu0 %v3725
    %4495 = vmatpush.bf16.msra.mxu0 %v3721
    %4496 = vmatpush.bf16.msra.mxu0 %v3717
    %4497 = vmatpush.bf16.msra.mxu0 %v3713
    %4498 = vmatpush.bf16.msra.mxu0 %v3709
    %4499 = vmatpush.bf16.msra.mxu0 %v3705
    %4500 = vmatpush.bf16.msra.mxu0 %v3701
    %4501 = vmatpush.bf16.msra.mxu0 %v3697
    %4502 = vmatmul.bf16.gmra.mxu0 %v4454
    %v4503 = vpop.f32.mrf.mxu0
    %v4504 = vadd.f32 0.0, %v4503
    %v4505 = vpop.f32.mrf.mxu0
    %4506 = vdwg.mxu0
    %v4511 = vrot.slane %v4465, 6
    %v4512 = vrot.slane %v4478, 6
    %v4513 = vrot.slane %v4491, 6
    %v4514 = vrot.slane %v4504, 6
    %v4519 = vadd.f32 %v3522, %v4511
    %v4520 = vadd.f32 %v3536, %v4512
    %v4521 = vadd.f32 %v3550, %v4513
    %v4522 = vadd.f32 %v3564, %v4514
    %v4523 = vxor.u32 %v4519, 2147483648
    %v4524 = vmul.f32 %v4523, 1.442695
    %v4525 = vpow.pop %v4524
    %v4526 = vadd.f32 %v4525, 1.0
    %v4527 = vrcp.pop %v4526
    %v4528 = vmul.f32 %v4526, %v4527
    %v4529 = vsub.f32 1.0, %v4528
    %v4530 = vmul.f32 %v4527, %v4529
    %v4531 = vadd.f32 %v4527, %v4530
    %vm4532 = vweird.f32 %v4526
    %vm4533 = vweird.f32 %v4527
    %vm4534 = vmor %vm4532, %vm4533
    %v4535 = vsel %vm4534, %v4527, %v4531
    %v4536 = vand.u32 2147483647, %v4526
    %vm4537 = vcmp.eq.f32.partialorder %v4536, 8.507059e+37
    %v4538 = vand.u32 %v4526, 2147483648
    %v4539 = vor.u32 1.1754944e-38, %v4538
    %v4540 = vsel %vm4537, %v4539, %v4535
    %v4541 = vmul.f32 1.0, %v4540
    %v4542 = vxor.u32 %v4520, 2147483648
    %v4543 = vmul.f32 %v4542, 1.442695
    %v4544 = vpow.pop %v4543
    %v4545 = vadd.f32 %v4544, 1.0
    %v4546 = vrcp.pop %v4545
    %v4547 = vmul.f32 %v4545, %v4546
    %v4548 = vsub.f32 1.0, %v4547
    %v4549 = vmul.f32 %v4546, %v4548
    %v4550 = vadd.f32 %v4546, %v4549
    %vm4551 = vweird.f32 %v4545
    %vm4552 = vweird.f32 %v4546
    %vm4553 = vmor %vm4551, %vm4552
    %v4554 = vsel %vm4553, %v4546, %v4550
    %v4555 = vand.u32 2147483647, %v4545
    %vm4556 = vcmp.eq.f32.partialorder %v4555, 8.507059e+37
    %v4557 = vand.u32 %v4545, 2147483648
    %v4558 = vor.u32 1.1754944e-38, %v4557
    %v4559 = vsel %vm4556, %v4558, %v4554
    %v4560 = vmul.f32 1.0, %v4559
    %v4561 = vtanh.pop %v4521
    %v4562 = vxor.u32 %v4522, 2147483648
    %v4563 = vmul.f32 %v4562, 1.442695
    %v4564 = vpow.pop %v4563
    %v4565 = vadd.f32 %v4564, 1.0
    %v4566 = vrcp.pop %v4565
    %v4567 = vmul.f32 %v4565, %v4566
    %v4568 = vsub.f32 1.0, %v4567
    %v4569 = vmul.f32 %v4566, %v4568
    %v4570 = vadd.f32 %v4566, %v4569
    %vm4571 = vweird.f32 %v4565
    %vm4572 = vweird.f32 %v4566
    %vm4573 = vmor %vm4571, %vm4572
    %v4574 = vsel %vm4573, %v4566, %v4570
    %v4575 = vand.u32 2147483647, %v4565
    %vm4576 = vcmp.eq.f32.partialorder %v4575, 8.507059e+37
    %v4577 = vand.u32 %v4565, 2147483648
    %v4578 = vor.u32 1.1754944e-38, %v4577
    %v4579 = vsel %vm4576, %v4578, %v4574
    %v4580 = vmul.f32 1.0, %v4579
    %v4582 = vrot.slane %v4446, 6
    %v4584 = vmul.f32 %v4560, %v4582
    %v4585 = vmul.f32 %v4541, %v4561
    %v4586 = vadd.f32 %v4584, %v4585
    %v4587 = vtanh.pop %v4586
    %v4588 = vmul.f32 %v4580, %v4587
    %4590 = vst [vmem:[#allocation1] sm:$0xff] %v4588
    %s4591 = scalar_lea.vmem [#allocation1], 2
    %v4592 = vld [vmem:[%s4591] ss:$9 sm:$0xff]
    %s4593 = scalar_lea.vmem [#allocation1], 3
    %v4594 = vld [vmem:[%s4593] ss:$9 sm:$0xff]
    %4597 = vst [vmem:[#allocation2 + $0x5] sm:$0x1] %v4592
    %4598 = vst [vmem:[#allocation2 + $0xd] sm:$0x1] %v4594
    %v4599 = vpack.c.bf16 %v4588, %v4588
    %v4601 = vrot.slane %v4599, 1
    %4603 = vmatpush.bf16.msra.mxu0 %v3722
    %4604 = vmatpush.bf16.msra.mxu0 %v3718
    %4605 = vmatpush.bf16.msra.mxu0 %v3714
    %4606 = vmatpush.bf16.msra.mxu0 %v3710
    %4607 = vmatpush.bf16.msra.mxu0 %v3706
    %4608 = vmatpush.bf16.msra.mxu0 %v3702
    %4609 = vmatpush.bf16.msra.mxu0 %v3698
    %4610 = vmatpush.bf16.msra.mxu0 %v3694
    %4611 = vmatmul.bf16.gmra.mxu0 %v4601
    %v4612 = vpop.f32.mrf.mxu0
    %v4613 = vadd.f32 0.0, %v4612
    %v4614 = vpop.f32.mrf.mxu0
    %4615 = vdwg.mxu0
    %4616 = vmatpush.bf16.msra.mxu0 %v3723
    %4617 = vmatpush.bf16.msra.mxu0 %v3719
    %4618 = vmatpush.bf16.msra.mxu0 %v3715
    %4619 = vmatpush.bf16.msra.mxu0 %v3711
    %4620 = vmatpush.bf16.msra.mxu0 %v3707
    %4621 = vmatpush.bf16.msra.mxu0 %v3703
    %4622 = vmatpush.bf16.msra.mxu0 %v3699
    %4623 = vmatpush.bf16.msra.mxu0 %v3695
    %4624 = vmatmul.bf16.gmra.mxu0 %v4601
    %v4625 = vpop.f32.mrf.mxu0
    %v4626 = vadd.f32 0.0, %v4625
    %v4627 = vpop.f32.mrf.mxu0
    %4628 = vdwg.mxu0
    %4629 = vmatpush.bf16.msra.mxu0 %v3724
    %4630 = vmatpush.bf16.msra.mxu0 %v3720
    %4631 = vmatpush.bf16.msra.mxu0 %v3716
    %4632 = vmatpush.bf16.msra.mxu0 %v3712
    %4633 = vmatpush.bf16.msra.mxu0 %v3708
    %4634 = vmatpush.bf16.msra.mxu0 %v3704
    %4635 = vmatpush.bf16.msra.mxu0 %v3700
    %4636 = vmatpush.bf16.msra.mxu0 %v3696
    %4637 = vmatmul.bf16.gmra.mxu0 %v4601
    %v4638 = vpop.f32.mrf.mxu0
    %v4639 = vadd.f32 0.0, %v4638
    %v4640 = vpop.f32.mrf.mxu0
    %4641 = vdwg.mxu0
    %4642 = vmatpush.bf16.msra.mxu0 %v3725
    %4643 = vmatpush.bf16.msra.mxu0 %v3721
    %4644 = vmatpush.bf16.msra.mxu0 %v3717
    %4645 = vmatpush.bf16.msra.mxu0 %v3713
    %4646 = vmatpush.bf16.msra.mxu0 %v3709
    %4647 = vmatpush.bf16.msra.mxu0 %v3705
    %4648 = vmatpush.bf16.msra.mxu0 %v3701
    %4649 = vmatpush.bf16.msra.mxu0 %v3697
    %4650 = vmatmul.bf16.gmra.mxu0 %v4601
    %v4651 = vpop.f32.mrf.mxu0
    %v4652 = vadd.f32 0.0, %v4651
    %v4653 = vpop.f32.mrf.mxu0
    %4654 = vdwg.mxu0
    %v4659 = vrot.slane %v4613, 4
    %v4660 = vrot.slane %v4626, 4
    %v4661 = vrot.slane %v4639, 4
    %v4662 = vrot.slane %v4652, 4
    %v4667 = vadd.f32 %v3522, %v4659
    %v4668 = vadd.f32 %v3536, %v4660
    %v4669 = vadd.f32 %v3550, %v4661
    %v4670 = vadd.f32 %v3564, %v4662
    %v4671 = vxor.u32 %v4667, 2147483648
    %v4672 = vmul.f32 %v4671, 1.442695
    %v4673 = vpow.pop %v4672
    %v4674 = vadd.f32 %v4673, 1.0
    %v4675 = vrcp.pop %v4674
    %v4676 = vmul.f32 %v4674, %v4675
    %v4677 = vsub.f32 1.0, %v4676
    %v4678 = vmul.f32 %v4675, %v4677
    %v4679 = vadd.f32 %v4675, %v4678
    %vm4680 = vweird.f32 %v4674
    %vm4681 = vweird.f32 %v4675
    %vm4682 = vmor %vm4680, %vm4681
    %v4683 = vsel %vm4682, %v4675, %v4679
    %v4684 = vand.u32 2147483647, %v4674
    %vm4685 = vcmp.eq.f32.partialorder %v4684, 8.507059e+37
    %v4686 = vand.u32 %v4674, 2147483648
    %v4687 = vor.u32 1.1754944e-38, %v4686
    %v4688 = vsel %vm4685, %v4687, %v4683
    %v4689 = vmul.f32 1.0, %v4688
    %v4690 = vxor.u32 %v4668, 2147483648
    %v4691 = vmul.f32 %v4690, 1.442695
    %v4692 = vpow.pop %v4691
    %v4693 = vadd.f32 %v4692, 1.0
    %v4694 = vrcp.pop %v4693
    %v4695 = vmul.f32 %v4693, %v4694
    %v4696 = vsub.f32 1.0, %v4695
    %v4697 = vmul.f32 %v4694, %v4696
    %v4698 = vadd.f32 %v4694, %v4697
    %vm4699 = vweird.f32 %v4693
    %vm4700 = vweird.f32 %v4694
    %vm4701 = vmor %vm4699, %vm4700
    %v4702 = vsel %vm4701, %v4694, %v4698
    %v4703 = vand.u32 2147483647, %v4693
    %vm4704 = vcmp.eq.f32.partialorder %v4703, 8.507059e+37
    %v4705 = vand.u32 %v4693, 2147483648
    %v4706 = vor.u32 1.1754944e-38, %v4705
    %v4707 = vsel %vm4704, %v4706, %v4702
    %v4708 = vmul.f32 1.0, %v4707
    %v4709 = vtanh.pop %v4669
    %v4710 = vxor.u32 %v4670, 2147483648
    %v4711 = vmul.f32 %v4710, 1.442695
    %v4712 = vpow.pop %v4711
    %v4713 = vadd.f32 %v4712, 1.0
    %v4714 = vrcp.pop %v4713
    %v4715 = vmul.f32 %v4713, %v4714
    %v4716 = vsub.f32 1.0, %v4715
    %v4717 = vmul.f32 %v4714, %v4716
    %v4718 = vadd.f32 %v4714, %v4717
    %vm4719 = vweird.f32 %v4713
    %vm4720 = vweird.f32 %v4714
    %vm4721 = vmor %vm4719, %vm4720
    %v4722 = vsel %vm4721, %v4714, %v4718
    %v4723 = vand.u32 2147483647, %v4713
    %vm4724 = vcmp.eq.f32.partialorder %v4723, 8.507059e+37
    %v4725 = vand.u32 %v4713, 2147483648
    %v4726 = vor.u32 1.1754944e-38, %v4725
    %v4727 = vsel %vm4724, %v4726, %v4722
    %v4728 = vmul.f32 1.0, %v4727
    %v4730 = vrot.slane %v4586, 6
    %v4732 = vmul.f32 %v4708, %v4730
    %v4733 = vmul.f32 %v4689, %v4709
    %v4734 = vadd.f32 %v4732, %v4733
    %v4735 = vtanh.pop %v4734
    %v4736 = vmul.f32 %v4728, %v4735
    %4738 = vst [vmem:[#allocation1] sm:$0xff] %v4736
    %s4739 = scalar_lea.vmem [#allocation1], 4
    %v4740 = vld [vmem:[%s4739] ss:$9 sm:$0xff]
    %s4741 = scalar_lea.vmem [#allocation1], 5
    %v4742 = vld [vmem:[%s4741] ss:$9 sm:$0xff]
    %4745 = vst [vmem:[#allocation2 + $0x6] sm:$0x1] %v4740
    %4746 = vst [vmem:[#allocation2 + $0xe] sm:$0x1] %v4742
    %v4747 = vpack.c.bf16 %v4736, %v4736
    %v4749 = vrot.slane %v4747, 2
    %4751 = vmatpush.bf16.msra.mxu0 %v3722
    %4752 = vmatpush.bf16.msra.mxu0 %v3718
    %4753 = vmatpush.bf16.msra.mxu0 %v3714
    %4754 = vmatpush.bf16.msra.mxu0 %v3710
    %4755 = vmatpush.bf16.msra.mxu0 %v3706
    %4756 = vmatpush.bf16.msra.mxu0 %v3702
    %4757 = vmatpush.bf16.msra.mxu0 %v3698
    %4758 = vmatpush.bf16.msra.mxu0 %v3694
    %4759 = vmatmul.bf16.gmra.mxu0 %v4749
    %v4760 = vpop.f32.mrf.mxu0
    %v4761 = vadd.f32 0.0, %v4760
    %v4762 = vpop.f32.mrf.mxu0
    %4763 = vdwg.mxu0
    %4764 = vmatpush.bf16.msra.mxu0 %v3723
    %4765 = vmatpush.bf16.msra.mxu0 %v3719
    %4766 = vmatpush.bf16.msra.mxu0 %v3715
    %4767 = vmatpush.bf16.msra.mxu0 %v3711
    %4768 = vmatpush.bf16.msra.mxu0 %v3707
    %4769 = vmatpush.bf16.msra.mxu0 %v3703
    %4770 = vmatpush.bf16.msra.mxu0 %v3699
    %4771 = vmatpush.bf16.msra.mxu0 %v3695
    %4772 = vmatmul.bf16.gmra.mxu0 %v4749
    %v4773 = vpop.f32.mrf.mxu0
    %v4774 = vadd.f32 0.0, %v4773
    %v4775 = vpop.f32.mrf.mxu0
    %4776 = vdwg.mxu0
    %4777 = vmatpush.bf16.msra.mxu0 %v3724
    %4778 = vmatpush.bf16.msra.mxu0 %v3720
    %4779 = vmatpush.bf16.msra.mxu0 %v3716
    %4780 = vmatpush.bf16.msra.mxu0 %v3712
    %4781 = vmatpush.bf16.msra.mxu0 %v3708
    %4782 = vmatpush.bf16.msra.mxu0 %v3704
    %4783 = vmatpush.bf16.msra.mxu0 %v3700
    %4784 = vmatpush.bf16.msra.mxu0 %v3696
    %4785 = vmatmul.bf16.gmra.mxu0 %v4749
    %v4786 = vpop.f32.mrf.mxu0
    %v4787 = vadd.f32 0.0, %v4786
    %v4788 = vpop.f32.mrf.mxu0
    %4789 = vdwg.mxu0
    %4790 = vmatpush.bf16.msra.mxu0 %v3725
    %4791 = vmatpush.bf16.msra.mxu0 %v3721
    %4792 = vmatpush.bf16.msra.mxu0 %v3717
    %4793 = vmatpush.bf16.msra.mxu0 %v3713
    %4794 = vmatpush.bf16.msra.mxu0 %v3709
    %4795 = vmatpush.bf16.msra.mxu0 %v3705
    %4796 = vmatpush.bf16.msra.mxu0 %v3701
    %4797 = vmatpush.bf16.msra.mxu0 %v3697
    %4798 = vmatmul.bf16.gmra.mxu0 %v4749
    %v4799 = vpop.f32.mrf.mxu0
    %v4800 = vadd.f32 0.0, %v4799
    %v4801 = vpop.f32.mrf.mxu0
    %4802 = vdwg.mxu0
    %v4807 = vrot.slane %v4761, 2
    %v4808 = vrot.slane %v4774, 2
    %v4809 = vrot.slane %v4787, 2
    %v4810 = vrot.slane %v4800, 2
    %v4815 = vadd.f32 %v3522, %v4807
    %v4816 = vadd.f32 %v3536, %v4808
    %v4817 = vadd.f32 %v3550, %v4809
    %v4818 = vadd.f32 %v3564, %v4810
    %v4819 = vxor.u32 %v4815, 2147483648
    %v4820 = vmul.f32 %v4819, 1.442695
    %v4821 = vpow.pop %v4820
    %v4822 = vadd.f32 %v4821, 1.0
    %v4823 = vrcp.pop %v4822
    %v4824 = vmul.f32 %v4822, %v4823
    %v4825 = vsub.f32 1.0, %v4824
    %v4826 = vmul.f32 %v4823, %v4825
    %v4827 = vadd.f32 %v4823, %v4826
    %vm4828 = vweird.f32 %v4822
    %vm4829 = vweird.f32 %v4823
    %vm4830 = vmor %vm4828, %vm4829
    %v4831 = vsel %vm4830, %v4823, %v4827
    %v4832 = vand.u32 2147483647, %v4822
    %vm4833 = vcmp.eq.f32.partialorder %v4832, 8.507059e+37
    %v4834 = vand.u32 %v4822, 2147483648
    %v4835 = vor.u32 1.1754944e-38, %v4834
    %v4836 = vsel %vm4833, %v4835, %v4831
    %v4837 = vmul.f32 1.0, %v4836
    %v4838 = vxor.u32 %v4816, 2147483648
    %v4839 = vmul.f32 %v4838, 1.442695
    %v4840 = vpow.pop %v4839
    %v4841 = vadd.f32 %v4840, 1.0
    %v4842 = vrcp.pop %v4841
    %v4843 = vmul.f32 %v4841, %v4842
    %v4844 = vsub.f32 1.0, %v4843
    %v4845 = vmul.f32 %v4842, %v4844
    %v4846 = vadd.f32 %v4842, %v4845
    %vm4847 = vweird.f32 %v4841
    %vm4848 = vweird.f32 %v4842
    %vm4849 = vmor %vm4847, %vm4848
    %v4850 = vsel %vm4849, %v4842, %v4846
    %v4851 = vand.u32 2147483647, %v4841
    %vm4852 = vcmp.eq.f32.partialorder %v4851, 8.507059e+37
    %v4853 = vand.u32 %v4841, 2147483648
    %v4854 = vor.u32 1.1754944e-38, %v4853
    %v4855 = vsel %vm4852, %v4854, %v4850
    %v4856 = vmul.f32 1.0, %v4855
    %v4857 = vtanh.pop %v4817
    %v4858 = vxor.u32 %v4818, 2147483648
    %v4859 = vmul.f32 %v4858, 1.442695
    %v4860 = vpow.pop %v4859
    %v4861 = vadd.f32 %v4860, 1.0
    %v4862 = vrcp.pop %v4861
    %v4863 = vmul.f32 %v4861, %v4862
    %v4864 = vsub.f32 1.0, %v4863
    %v4865 = vmul.f32 %v4862, %v4864
    %v4866 = vadd.f32 %v4862, %v4865
    %vm4867 = vweird.f32 %v4861
    %vm4868 = vweird.f32 %v4862
    %vm4869 = vmor %vm4867, %vm4868
    %v4870 = vsel %vm4869, %v4862, %v4866
    %v4871 = vand.u32 2147483647, %v4861
    %vm4872 = vcmp.eq.f32.partialorder %v4871, 8.507059e+37
    %v4873 = vand.u32 %v4861, 2147483648
    %v4874 = vor.u32 1.1754944e-38, %v4873
    %v4875 = vsel %vm4872, %v4874, %v4870
    %v4876 = vmul.f32 1.0, %v4875
    %v4878 = vrot.slane %v4734, 6
    %v4880 = vmul.f32 %v4856, %v4878
    %v4881 = vmul.f32 %v4837, %v4857
    %v4882 = vadd.f32 %v4880, %v4881
    %v4883 = vtanh.pop %v4882
    %v4884 = vmul.f32 %v4876, %v4883
    %4886 = vst [vmem:[#allocation1] sm:$0xff] %v4884
    %s4887 = scalar_lea.vmem [#allocation1], 6
    %v4888 = vld [vmem:[%s4887] ss:$9 sm:$0xff]
    %s4889 = scalar_lea.vmem [#allocation1], 7
    %v4890 = vld [vmem:[%s4889] ss:$9 sm:$0xff]
    %4893 = vst [vmem:[#allocation2 + $0x7] sm:$0x1] %v4888
    %4894 = vst [vmem:[#allocation2 + $0xf] sm:$0x1] %v4890
    %v4895 = vld [vmem:[#allocation2] sm:$0xff]
    %s4896 = scalar_lea.vmem [#allocation2], 8
    %v4897 = vld [vmem:[%s4896] sm:$0xff]
    %v4898 = vld [vmem:[#allocation14] sm:$0xf]
    %v4899 = vld [vmem:[#allocation14 + $0x4] sm:$0xf]
    %v4900 = vld [vmem:[#allocation14 + $0x8] sm:$0xf]
    %v4901 = vld [vmem:[#allocation14 + $0xc] sm:$0xf]
    %v4902 = vld [vmem:[#allocation14 + $0x10] sm:$0xf]
    %v4903 = vld [vmem:[#allocation14 + $0x14] sm:$0xf]
    %v4904 = vld [vmem:[#allocation14 + $0x18] sm:$0xf]
    %v4905 = vld [vmem:[#allocation14 + $0x1c] sm:$0xf]
    %v4906 = vld [vmem:[#allocation14 + $0x20] sm:$0xf]
    %v4907 = vld [vmem:[#allocation14 + $0x24] sm:$0xf]
    %v4908 = vld [vmem:[#allocation14 + $0x28] sm:$0xf]
    %v4909 = vld [vmem:[#allocation14 + $0x2c] sm:$0xf]
    %v4910 = vld [vmem:[#allocation14 + $0x30] sm:$0xf]
    %v4911 = vld [vmem:[#allocation14 + $0x34] sm:$0xf]
    %v4912 = vld [vmem:[#allocation14 + $0x38] sm:$0xf]
    %v4913 = vld [vmem:[#allocation14 + $0x3c] sm:$0xf]
    %v4914 = vpack.c.bf16 %v4897, %v4895
    %v4915 = vld [vmem:[%s27] sm:$0x1]
    %v4917 = vperm.slane %v4915, 0
    %v4935 = vunpack.c.l.b16 %v4898
    %v4936 = vunpack.c.l.b16 %v4899
    %v4937 = vunpack.c.l.b16 %v4900
    %v4938 = vunpack.c.l.b16 %v4901
    %v4939 = vunpack.c.l.b16 %v4902
    %v4940 = vunpack.c.l.b16 %v4903
    %v4941 = vunpack.c.l.b16 %v4904
    %v4942 = vunpack.c.l.b16 %v4905
    %v4943 = vunpack.c.l.b16 %v4906
    %v4944 = vunpack.c.l.b16 %v4907
    %v4945 = vunpack.c.l.b16 %v4908
    %v4946 = vunpack.c.l.b16 %v4909
    %v4947 = vunpack.c.l.b16 %v4910
    %v4948 = vunpack.c.l.b16 %v4911
    %v4949 = vunpack.c.l.b16 %v4912
    %v4950 = vunpack.c.l.b16 %v4913
    %v4951 = vpack.c.b16 %v4936, %v4935
    %v4952 = vpack.c.b16 %v4938, %v4937
    %v4953 = vpack.c.b16 %v4940, %v4939
    %v4954 = vpack.c.b16 %v4942, %v4941
    %v4955 = vpack.c.b16 %v4944, %v4943
    %v4956 = vpack.c.b16 %v4946, %v4945
    %v4957 = vpack.c.b16 %v4948, %v4947
    %v4958 = vpack.c.b16 %v4950, %v4949
    %4967 = vmatpush.bf16.msra.mxu0 %v4958
    %4968 = vmatpush.bf16.msra.mxu0 %v4957
    %4969 = vmatpush.bf16.msra.mxu0 %v4956
    %4970 = vmatpush.bf16.msra.mxu0 %v4955
    %4971 = vmatpush.bf16.msra.mxu0 %v4954
    %4972 = vmatpush.bf16.msra.mxu0 %v4953
    %4973 = vmatpush.bf16.msra.mxu0 %v4952
    %4974 = vmatpush.bf16.msra.mxu0 %v4951
    %4975 = vmatmul.bf16.gmra.mxu0 %v4914
    %v4976 = vpop.f32.mrf.mxu0
    %v4977 = vadd.f32 %v4917, %v4976
    %v4978 = vpop.f32.mrf.mxu0
    %v4979 = vadd.f32 %v4917, %v4978
    %4980 = vdwg.mxu0
    %v4981 = vld [vmem:[#allocation16] sm:$0xf]
    %v4982 = vld [vmem:[#allocation16 + $0x4] sm:$0xf]
    %v4983 = vld [vmem:[#allocation16 + $0x8] sm:$0xf]
    %v4984 = vld [vmem:[#allocation16 + $0xc] sm:$0xf]
    %v4985 = vld [vmem:[#allocation16 + $0x10] sm:$0xf]
    %v4986 = vld [vmem:[#allocation16 + $0x14] sm:$0xf]
    %v4987 = vld [vmem:[#allocation16 + $0x18] sm:$0xf]
    %v4988 = vld [vmem:[#allocation16 + $0x1c] sm:$0xf]
    %v4989 = vld [vmem:[#allocation16 + $0x20] sm:$0xf]
    %v4990 = vld [vmem:[#allocation16 + $0x24] sm:$0xf]
    %v4991 = vld [vmem:[#allocation16 + $0x28] sm:$0xf]
    %v4992 = vld [vmem:[#allocation16 + $0x2c] sm:$0xf]
    %v4993 = vld [vmem:[#allocation16 + $0x30] sm:$0xf]
    %v4994 = vld [vmem:[#allocation16 + $0x34] sm:$0xf]
    %v4995 = vld [vmem:[#allocation16 + $0x38] sm:$0xf]
    %v4996 = vld [vmem:[#allocation16 + $0x3c] sm:$0xf]
    %v4997 = vld [vmem:[#allocation19] sm:$0x1]
    %v4999 = vperm.slane %v4997, 0
    %v5017 = vunpack.c.l.b16 %v4981
    %v5018 = vunpack.c.l.b16 %v4982
    %v5019 = vunpack.c.l.b16 %v4983
    %v5020 = vunpack.c.l.b16 %v4984
    %v5021 = vunpack.c.l.b16 %v4985
    %v5022 = vunpack.c.l.b16 %v4986
    %v5023 = vunpack.c.l.b16 %v4987
    %v5024 = vunpack.c.l.b16 %v4988
    %v5025 = vunpack.c.l.b16 %v4989
    %v5026 = vunpack.c.l.b16 %v4990
    %v5027 = vunpack.c.l.b16 %v4991
    %v5028 = vunpack.c.l.b16 %v4992
    %v5029 = vunpack.c.l.b16 %v4993
    %v5030 = vunpack.c.l.b16 %v4994
    %v5031 = vunpack.c.l.b16 %v4995
    %v5032 = vunpack.c.l.b16 %v4996
    %v5033 = vpack.c.b16 %v5018, %v5017
    %v5034 = vpack.c.b16 %v5020, %v5019
    %v5035 = vpack.c.b16 %v5022, %v5021
    %v5036 = vpack.c.b16 %v5024, %v5023
    %v5037 = vpack.c.b16 %v5026, %v5025
    %v5038 = vpack.c.b16 %v5028, %v5027
    %v5039 = vpack.c.b16 %v5030, %v5029
    %v5040 = vpack.c.b16 %v5032, %v5031
    %5049 = vmatpush.bf16.msra.mxu0 %v5040
    %5050 = vmatpush.bf16.msra.mxu0 %v5039
    %5051 = vmatpush.bf16.msra.mxu0 %v5038
    %5052 = vmatpush.bf16.msra.mxu0 %v5037
    %5053 = vmatpush.bf16.msra.mxu0 %v5036
    %5054 = vmatpush.bf16.msra.mxu0 %v5035
    %5055 = vmatpush.bf16.msra.mxu0 %v5034
    %5056 = vmatpush.bf16.msra.mxu0 %v5033
    %5057 = vmatmul.bf16.gmra.mxu0 %v4914
    %v5058 = vpop.f32.mrf.mxu0
    %v5059 = vadd.f32 %v4999, %v5058
    %v5060 = vpop.f32.mrf.mxu0
    %v5061 = vadd.f32 %v4999, %v5060
    %5062 = vdwg.mxu0
    %v5063 = vld [vmem:[#allocation17] sm:$0xf]
    %v5064 = vld [vmem:[#allocation17 + $0x4] sm:$0xf]
    %v5065 = vld [vmem:[#allocation17 + $0x8] sm:$0xf]
    %v5066 = vld [vmem:[#allocation17 + $0xc] sm:$0xf]
    %v5067 = vld [vmem:[#allocation17 + $0x10] sm:$0xf]
    %v5068 = vld [vmem:[#allocation17 + $0x14] sm:$0xf]
    %v5069 = vld [vmem:[#allocation17 + $0x18] sm:$0xf]
    %v5070 = vld [vmem:[#allocation17 + $0x1c] sm:$0xf]
    %v5071 = vld [vmem:[#allocation17 + $0x20] sm:$0xf]
    %v5072 = vld [vmem:[#allocation17 + $0x24] sm:$0xf]
    %v5073 = vld [vmem:[#allocation17 + $0x28] sm:$0xf]
    %v5074 = vld [vmem:[#allocation17 + $0x2c] sm:$0xf]
    %v5075 = vld [vmem:[#allocation17 + $0x30] sm:$0xf]
    %v5076 = vld [vmem:[#allocation17 + $0x34] sm:$0xf]
    %v5077 = vld [vmem:[#allocation17 + $0x38] sm:$0xf]
    %v5078 = vld [vmem:[#allocation17 + $0x3c] sm:$0xf]
    %v5079 = vld [vmem:[#allocation20] sm:$0x1]
    %v5081 = vperm.slane %v5079, 0
    %v5099 = vunpack.c.l.b16 %v5063
    %v5100 = vunpack.c.l.b16 %v5064
    %v5101 = vunpack.c.l.b16 %v5065
    %v5102 = vunpack.c.l.b16 %v5066
    %v5103 = vunpack.c.l.b16 %v5067
    %v5104 = vunpack.c.l.b16 %v5068
    %v5105 = vunpack.c.l.b16 %v5069
    %v5106 = vunpack.c.l.b16 %v5070
    %v5107 = vunpack.c.l.b16 %v5071
    %v5108 = vunpack.c.l.b16 %v5072
    %v5109 = vunpack.c.l.b16 %v5073
    %v5110 = vunpack.c.l.b16 %v5074
    %v5111 = vunpack.c.l.b16 %v5075
    %v5112 = vunpack.c.l.b16 %v5076
    %v5113 = vunpack.c.l.b16 %v5077
    %v5114 = vunpack.c.l.b16 %v5078
    %v5115 = vpack.c.b16 %v5100, %v5099
    %v5116 = vpack.c.b16 %v5102, %v5101
    %v5117 = vpack.c.b16 %v5104, %v5103
    %v5118 = vpack.c.b16 %v5106, %v5105
    %v5119 = vpack.c.b16 %v5108, %v5107
    %v5120 = vpack.c.b16 %v5110, %v5109
    %v5121 = vpack.c.b16 %v5112, %v5111
    %v5122 = vpack.c.b16 %v5114, %v5113
    %5131 = vmatpush.bf16.msra.mxu0 %v5122
    %5132 = vmatpush.bf16.msra.mxu0 %v5121
    %5133 = vmatpush.bf16.msra.mxu0 %v5120
    %5134 = vmatpush.bf16.msra.mxu0 %v5119
    %5135 = vmatpush.bf16.msra.mxu0 %v5118
    %5136 = vmatpush.bf16.msra.mxu0 %v5117
    %5137 = vmatpush.bf16.msra.mxu0 %v5116
    %5138 = vmatpush.bf16.msra.mxu0 %v5115
    %5139 = vmatmul.bf16.gmra.mxu0 %v4914
    %v5140 = vpop.f32.mrf.mxu0
    %v5141 = vadd.f32 %v5081, %v5140
    %v5142 = vpop.f32.mrf.mxu0
    %v5143 = vadd.f32 %v5081, %v5142
    %5144 = vdwg.mxu0
    %5146 = vrot.lane.b32.xlu0 %v4977, 112
    %v5147 = vpop.permute.xlu0 %5146
    %5149 = vrot.lane.b32.xlu0 %v4977, 96
    %v5150 = vpop.permute.xlu0 %5149
    %5152 = vrot.lane.b32.xlu0 %v4977, 80
    %v5153 = vpop.permute.xlu0 %5152
    %5155 = vrot.lane.b32.xlu0 %v4977, 64
    %v5156 = vpop.permute.xlu0 %5155
    %5158 = vrot.lane.b32.xlu0 %v4977, 48
    %v5159 = vpop.permute.xlu0 %5158
    %5161 = vrot.lane.b32.xlu0 %v4977, 32
    %v5162 = vpop.permute.xlu0 %5161
    %5164 = vrot.lane.b32.xlu0 %v4977, 16
    %v5165 = vpop.permute.xlu0 %5164
    %v5167 = vpack.c.bf16 %v4977, %v4977
    %v5168 = vpack.c.bf16 %v5147, %v5147
    %v5169 = vpack.c.bf16 %v5150, %v5150
    %v5170 = vpack.c.bf16 %v5153, %v5153
    %v5171 = vpack.c.bf16 %v5156, %v5156
    %v5172 = vpack.c.bf16 %v5159, %v5159
    %v5173 = vpack.c.bf16 %v5162, %v5162
    %v5174 = vpack.c.bf16 %v5165, %v5165
    %5176 = vrot.lane.b32.xlu0 %v5059, 112
    %v5177 = vpop.permute.xlu0 %5176
    %5179 = vrot.lane.b32.xlu0 %v5059, 96
    %v5180 = vpop.permute.xlu0 %5179
    %5182 = vrot.lane.b32.xlu0 %v5059, 80
    %v5183 = vpop.permute.xlu0 %5182
    %5185 = vrot.lane.b32.xlu0 %v5059, 64
    %v5186 = vpop.permute.xlu0 %5185
    %5188 = vrot.lane.b32.xlu0 %v5059, 48
    %v5189 = vpop.permute.xlu0 %5188
    %5191 = vrot.lane.b32.xlu0 %v5059, 32
    %v5192 = vpop.permute.xlu0 %5191
    %5194 = vrot.lane.b32.xlu0 %v5059, 16
    %v5195 = vpop.permute.xlu0 %5194
    %v5197 = vpack.c.bf16 %v5059, %v5059
    %v5198 = vpack.c.bf16 %v5177, %v5177
    %v5199 = vpack.c.bf16 %v5180, %v5180
    %v5200 = vpack.c.bf16 %v5183, %v5183
    %v5201 = vpack.c.bf16 %v5186, %v5186
    %v5202 = vpack.c.bf16 %v5189, %v5189
    %v5203 = vpack.c.bf16 %v5192, %v5192
    %v5204 = vpack.c.bf16 %v5195, %v5195
    %5206 = vrot.lane.b32.xlu0 %v5141, 112
    %v5207 = vpop.permute.xlu0 %5206
    %5209 = vrot.lane.b32.xlu0 %v5141, 96
    %v5210 = vpop.permute.xlu0 %5209
    %5212 = vrot.lane.b32.xlu0 %v5141, 80
    %v5213 = vpop.permute.xlu0 %5212
    %5215 = vrot.lane.b32.xlu0 %v5141, 64
    %v5216 = vpop.permute.xlu0 %5215
    %5218 = vrot.lane.b32.xlu0 %v5141, 48
    %v5219 = vpop.permute.xlu0 %5218
    %5221 = vrot.lane.b32.xlu0 %v5141, 32
    %v5222 = vpop.permute.xlu0 %5221
    %5224 = vrot.lane.b32.xlu0 %v5141, 16
    %v5225 = vpop.permute.xlu0 %5224
    %v5227 = vpack.c.bf16 %v5141, %v5141
    %v5228 = vpack.c.bf16 %v5207, %v5207
    %v5229 = vpack.c.bf16 %v5210, %v5210
    %v5230 = vpack.c.bf16 %v5213, %v5213
    %v5231 = vpack.c.bf16 %v5216, %v5216
    %v5232 = vpack.c.bf16 %v5219, %v5219
    %v5233 = vpack.c.bf16 %v5222, %v5222
    %v5234 = vpack.c.bf16 %v5225, %v5225
    %v5236 = vsel %vm458, %v5167, 0
    %v5239 = vsel %vm458, %v5197, 0
    %5241 = vmatpush.bf16.xpose.msra.mxu0 0
    %5242 = vmatpush.bf16.xpose.msra.mxu0 0
    %5243 = vmatpush.bf16.xpose.msra.mxu0 0
    %5244 = vmatpush.bf16.xpose.msra.mxu0 0
    %5245 = vmatpush.bf16.xpose.msra.mxu0 0
    %5246 = vmatpush.bf16.xpose.msra.mxu0 0
    %5247 = vmatpush.bf16.xpose.msra.mxu0 0
    %5248 = vmatpush.bf16.xpose.msra.mxu0 %v5239
    %5249 = vmatmul.bf16.gmra.mxu0 %v5236
    %v5250 = vpop.f32.mrf.mxu0
    %v5251 = vadd.f32 0.0, %v5250
    %v5252 = vpop.f32.mrf.mxu0
    %5253 = vdwg.mxu0
    %v5255 = vsel %vm458, %v5168, 0
    %v5258 = vsel %vm458, %v5198, 0
    %5260 = vmatpush.bf16.xpose.msra.mxu0 0
    %5261 = vmatpush.bf16.xpose.msra.mxu0 0
    %5262 = vmatpush.bf16.xpose.msra.mxu0 0
    %5263 = vmatpush.bf16.xpose.msra.mxu0 0
    %5264 = vmatpush.bf16.xpose.msra.mxu0 0
    %5265 = vmatpush.bf16.xpose.msra.mxu0 0
    %5266 = vmatpush.bf16.xpose.msra.mxu0 0
    %5267 = vmatpush.bf16.xpose.msra.mxu0 %v5258
    %5268 = vmatmul.bf16.gmra.mxu0 %v5255
    %v5269 = vpop.f32.mrf.mxu0
    %v5270 = vadd.f32 0.0, %v5269
    %v5271 = vpop.f32.mrf.mxu0
    %5272 = vdwg.mxu0
    %v5274 = vsel %vm458, %v5169, 0
    %v5277 = vsel %vm458, %v5199, 0
    %5279 = vmatpush.bf16.xpose.msra.mxu0 0
    %5280 = vmatpush.bf16.xpose.msra.mxu0 0
    %5281 = vmatpush.bf16.xpose.msra.mxu0 0
    %5282 = vmatpush.bf16.xpose.msra.mxu0 0
    %5283 = vmatpush.bf16.xpose.msra.mxu0 0
    %5284 = vmatpush.bf16.xpose.msra.mxu0 0
    %5285 = vmatpush.bf16.xpose.msra.mxu0 0
    %5286 = vmatpush.bf16.xpose.msra.mxu0 %v5277
    %5287 = vmatmul.bf16.gmra.mxu0 %v5274
    %v5288 = vpop.f32.mrf.mxu0
    %v5289 = vadd.f32 0.0, %v5288
    %v5290 = vpop.f32.mrf.mxu0
    %5291 = vdwg.mxu0
    %v5293 = vsel %vm458, %v5170, 0
    %v5296 = vsel %vm458, %v5200, 0
    %5298 = vmatpush.bf16.xpose.msra.mxu0 0
    %5299 = vmatpush.bf16.xpose.msra.mxu0 0
    %5300 = vmatpush.bf16.xpose.msra.mxu0 0
    %5301 = vmatpush.bf16.xpose.msra.mxu0 0
    %5302 = vmatpush.bf16.xpose.msra.mxu0 0
    %5303 = vmatpush.bf16.xpose.msra.mxu0 0
    %5304 = vmatpush.bf16.xpose.msra.mxu0 0
    %5305 = vmatpush.bf16.xpose.msra.mxu0 %v5296
    %5306 = vmatmul.bf16.gmra.mxu0 %v5293
    %v5307 = vpop.f32.mrf.mxu0
    %v5308 = vadd.f32 0.0, %v5307
    %v5309 = vpop.f32.mrf.mxu0
    %5310 = vdwg.mxu0
    %v5312 = vsel %vm458, %v5171, 0
    %v5315 = vsel %vm458, %v5201, 0
    %5317 = vmatpush.bf16.xpose.msra.mxu0 0
    %5318 = vmatpush.bf16.xpose.msra.mxu0 0
    %5319 = vmatpush.bf16.xpose.msra.mxu0 0
    %5320 = vmatpush.bf16.xpose.msra.mxu0 0
    %5321 = vmatpush.bf16.xpose.msra.mxu0 0
    %5322 = vmatpush.bf16.xpose.msra.mxu0 0
    %5323 = vmatpush.bf16.xpose.msra.mxu0 0
    %5324 = vmatpush.bf16.xpose.msra.mxu0 %v5315
    %5325 = vmatmul.bf16.gmra.mxu0 %v5312
    %v5326 = vpop.f32.mrf.mxu0
    %v5327 = vadd.f32 0.0, %v5326
    %v5328 = vpop.f32.mrf.mxu0
    %5329 = vdwg.mxu0
    %v5331 = vsel %vm458, %v5172, 0
    %v5334 = vsel %vm458, %v5202, 0
    %5336 = vmatpush.bf16.xpose.msra.mxu0 0
    %5337 = vmatpush.bf16.xpose.msra.mxu0 0
    %5338 = vmatpush.bf16.xpose.msra.mxu0 0
    %5339 = vmatpush.bf16.xpose.msra.mxu0 0
    %5340 = vmatpush.bf16.xpose.msra.mxu0 0
    %5341 = vmatpush.bf16.xpose.msra.mxu0 0
    %5342 = vmatpush.bf16.xpose.msra.mxu0 0
    %5343 = vmatpush.bf16.xpose.msra.mxu0 %v5334
    %5344 = vmatmul.bf16.gmra.mxu0 %v5331
    %v5345 = vpop.f32.mrf.mxu0
    %v5346 = vadd.f32 0.0, %v5345
    %v5347 = vpop.f32.mrf.mxu0
    %5348 = vdwg.mxu0
    %v5350 = vsel %vm458, %v5173, 0
    %v5353 = vsel %vm458, %v5203, 0
    %5355 = vmatpush.bf16.xpose.msra.mxu0 0
    %5356 = vmatpush.bf16.xpose.msra.mxu0 0
    %5357 = vmatpush.bf16.xpose.msra.mxu0 0
    %5358 = vmatpush.bf16.xpose.msra.mxu0 0
    %5359 = vmatpush.bf16.xpose.msra.mxu0 0
    %5360 = vmatpush.bf16.xpose.msra.mxu0 0
    %5361 = vmatpush.bf16.xpose.msra.mxu0 0
    %5362 = vmatpush.bf16.xpose.msra.mxu0 %v5353
    %5363 = vmatmul.bf16.gmra.mxu0 %v5350
    %v5364 = vpop.f32.mrf.mxu0
    %v5365 = vadd.f32 0.0, %v5364
    %v5366 = vpop.f32.mrf.mxu0
    %5367 = vdwg.mxu0
    %v5369 = vsel %vm458, %v5174, 0
    %v5372 = vsel %vm458, %v5204, 0
    %5374 = vmatpush.bf16.xpose.msra.mxu0 0
    %5375 = vmatpush.bf16.xpose.msra.mxu0 0
    %5376 = vmatpush.bf16.xpose.msra.mxu0 0
    %5377 = vmatpush.bf16.xpose.msra.mxu0 0
    %5378 = vmatpush.bf16.xpose.msra.mxu0 0
    %5379 = vmatpush.bf16.xpose.msra.mxu0 0
    %5380 = vmatpush.bf16.xpose.msra.mxu0 0
    %5381 = vmatpush.bf16.xpose.msra.mxu0 %v5372
    %5382 = vmatmul.bf16.gmra.mxu0 %v5369
    %v5383 = vpop.f32.mrf.mxu0
    %v5384 = vadd.f32 0.0, %v5383
    %v5385 = vpop.f32.mrf.mxu0
    %5386 = vdwg.mxu0
    %v5387 = vmul.f32 %v5251, 0.25
    %v5388 = vmul.f32 %v5270, 0.25
    %v5389 = vmul.f32 %v5289, 0.25
    %v5390 = vmul.f32 %v5308, 0.25
    %v5391 = vmul.f32 %v5327, 0.25
    %v5392 = vmul.f32 %v5346, 0.25
    %v5393 = vmul.f32 %v5365, 0.25
    %v5394 = vmul.f32 %v5384, 0.25
    %vm5395 = vcmask 64512
    %v5396 = vsel %vm5395, %v5387, -inf
    %5397 = vmax.xlane.f32.xlu0 %v5396
    %v5398 = vpop.xlane.xlu0 %5397
    %v5399 = vsel %vm5395, %v5388, -inf
    %5400 = vmax.xlane.f32.xlu0 %v5399
    %v5401 = vpop.xlane.xlu0 %5400
    %v5402 = vsel %vm5395, %v5389, -inf
    %5403 = vmax.xlane.f32.xlu0 %v5402
    %v5404 = vpop.xlane.xlu0 %5403
    %v5405 = vsel %vm5395, %v5390, -inf
    %5406 = vmax.xlane.f32.xlu0 %v5405
    %v5407 = vpop.xlane.xlu0 %5406
    %v5408 = vsel %vm5395, %v5391, -inf
    %5409 = vmax.xlane.f32.xlu0 %v5408
    %v5410 = vpop.xlane.xlu0 %5409
    %v5411 = vsel %vm5395, %v5392, -inf
    %5412 = vmax.xlane.f32.xlu0 %v5411
    %v5413 = vpop.xlane.xlu0 %5412
    %v5414 = vsel %vm5395, %v5393, -inf
    %5415 = vmax.xlane.f32.xlu0 %v5414
    %v5416 = vpop.xlane.xlu0 %5415
    %v5417 = vsel %vm5395, %v5394, -inf
    %5418 = vmax.xlane.f32.xlu0 %v5417
    %v5419 = vpop.xlane.xlu0 %5418
    %v5420 = vsub.f32 %v5387, %v5398
    %v5421 = vsub.f32 %v5388, %v5401
    %v5422 = vsub.f32 %v5389, %v5404
    %v5423 = vsub.f32 %v5390, %v5407
    %v5424 = vsub.f32 %v5391, %v5410
    %v5425 = vsub.f32 %v5392, %v5413
    %v5426 = vsub.f32 %v5393, %v5416
    %v5427 = vsub.f32 %v5394, %v5419
    %v5428 = vmul.f32 %v5420, 1.442695
    %v5429 = vpow.pop %v5428
    %v5430 = vmul.f32 %v5421, 1.442695
    %v5431 = vpow.pop %v5430
    %v5432 = vmul.f32 %v5422, 1.442695
    %v5433 = vpow.pop %v5432
    %v5434 = vmul.f32 %v5423, 1.442695
    %v5435 = vpow.pop %v5434
    %v5436 = vmul.f32 %v5424, 1.442695
    %v5437 = vpow.pop %v5436
    %v5438 = vmul.f32 %v5425, 1.442695
    %v5439 = vpow.pop %v5438
    %v5440 = vmul.f32 %v5426, 1.442695
    %v5441 = vpow.pop %v5440
    %v5442 = vmul.f32 %v5427, 1.442695
    %v5443 = vpow.pop %v5442
    %v5444 = vsel %vm5395, %v5429, 0.0
    %5445 = vadd.xlane.f32.xlu0 %v5444
    %v5446 = vpop.xlane.xlu0 %5445
    %v5447 = vsel %vm5395, %v5431, 0.0
    %5448 = vadd.xlane.f32.xlu0 %v5447
    %v5449 = vpop.xlane.xlu0 %5448
    %v5450 = vsel %vm5395, %v5433, 0.0
    %5451 = vadd.xlane.f32.xlu0 %v5450
    %v5452 = vpop.xlane.xlu0 %5451
    %v5453 = vsel %vm5395, %v5435, 0.0
    %5454 = vadd.xlane.f32.xlu0 %v5453
    %v5455 = vpop.xlane.xlu0 %5454
    %v5456 = vsel %vm5395, %v5437, 0.0
    %5457 = vadd.xlane.f32.xlu0 %v5456
    %v5458 = vpop.xlane.xlu0 %5457
    %v5459 = vsel %vm5395, %v5439, 0.0
    %5460 = vadd.xlane.f32.xlu0 %v5459
    %v5461 = vpop.xlane.xlu0 %5460
    %v5462 = vsel %vm5395, %v5441, 0.0
    %5463 = vadd.xlane.f32.xlu0 %v5462
    %v5464 = vpop.xlane.xlu0 %5463
    %v5465 = vsel %vm5395, %v5443, 0.0
    %5466 = vadd.xlane.f32.xlu0 %v5465
    %v5467 = vpop.xlane.xlu0 %5466
    %v5468 = vrcp.pop %v5446
    %v5469 = vmul.f32 %v5446, %v5468
    %v5470 = vsub.f32 1.0, %v5469
    %v5471 = vmul.f32 %v5468, %v5470
    %v5472 = vadd.f32 %v5468, %v5471
    %vm5473 = vweird.f32 %v5446
    %vm5474 = vweird.f32 %v5468
    %vm5475 = vmor %vm5473, %vm5474
    %v5476 = vsel %vm5475, %v5468, %v5472
    %v5477 = vand.u32 2147483647, %v5446
    %vm5478 = vcmp.eq.f32.partialorder %v5477, 8.507059e+37
    %v5479 = vand.u32 %v5446, 2147483648
    %v5480 = vor.u32 1.1754944e-38, %v5479
    %v5481 = vsel %vm5478, %v5480, %v5476
    %v5482 = vmul.f32 %v5429, %v5481
    %v5483 = vrcp.pop %v5449
    %v5484 = vmul.f32 %v5449, %v5483
    %v5485 = vsub.f32 1.0, %v5484
    %v5486 = vmul.f32 %v5483, %v5485
    %v5487 = vadd.f32 %v5483, %v5486
    %vm5488 = vweird.f32 %v5449
    %vm5489 = vweird.f32 %v5483
    %vm5490 = vmor %vm5488, %vm5489
    %v5491 = vsel %vm5490, %v5483, %v5487
    %v5492 = vand.u32 2147483647, %v5449
    %vm5493 = vcmp.eq.f32.partialorder %v5492, 8.507059e+37
    %v5494 = vand.u32 %v5449, 2147483648
    %v5495 = vor.u32 1.1754944e-38, %v5494
    %v5496 = vsel %vm5493, %v5495, %v5491
    %v5497 = vmul.f32 %v5431, %v5496
    %v5498 = vrcp.pop %v5452
    %v5499 = vmul.f32 %v5452, %v5498
    %v5500 = vsub.f32 1.0, %v5499
    %v5501 = vmul.f32 %v5498, %v5500
    %v5502 = vadd.f32 %v5498, %v5501
    %vm5503 = vweird.f32 %v5452
    %vm5504 = vweird.f32 %v5498
    %vm5505 = vmor %vm5503, %vm5504
    %v5506 = vsel %vm5505, %v5498, %v5502
    %v5507 = vand.u32 2147483647, %v5452
    %vm5508 = vcmp.eq.f32.partialorder %v5507, 8.507059e+37
    %v5509 = vand.u32 %v5452, 2147483648
    %v5510 = vor.u32 1.1754944e-38, %v5509
    %v5511 = vsel %vm5508, %v5510, %v5506
    %v5512 = vmul.f32 %v5433, %v5511
    %v5513 = vrcp.pop %v5455
    %v5514 = vmul.f32 %v5455, %v5513
    %v5515 = vsub.f32 1.0, %v5514
    %v5516 = vmul.f32 %v5513, %v5515
    %v5517 = vadd.f32 %v5513, %v5516
    %vm5518 = vweird.f32 %v5455
    %vm5519 = vweird.f32 %v5513
    %vm5520 = vmor %vm5518, %vm5519
    %v5521 = vsel %vm5520, %v5513, %v5517
    %v5522 = vand.u32 2147483647, %v5455
    %vm5523 = vcmp.eq.f32.partialorder %v5522, 8.507059e+37
    %v5524 = vand.u32 %v5455, 2147483648
    %v5525 = vor.u32 1.1754944e-38, %v5524
    %v5526 = vsel %vm5523, %v5525, %v5521
    %v5527 = vmul.f32 %v5435, %v5526
    %v5528 = vrcp.pop %v5458
    %v5529 = vmul.f32 %v5458, %v5528
    %v5530 = vsub.f32 1.0, %v5529
    %v5531 = vmul.f32 %v5528, %v5530
    %v5532 = vadd.f32 %v5528, %v5531
    %vm5533 = vweird.f32 %v5458
    %vm5534 = vweird.f32 %v5528
    %vm5535 = vmor %vm5533, %vm5534
    %v5536 = vsel %vm5535, %v5528, %v5532
    %v5537 = vand.u32 2147483647, %v5458
    %vm5538 = vcmp.eq.f32.partialorder %v5537, 8.507059e+37
    %v5539 = vand.u32 %v5458, 2147483648
    %v5540 = vor.u32 1.1754944e-38, %v5539
    %v5541 = vsel %vm5538, %v5540, %v5536
    %v5542 = vmul.f32 %v5437, %v5541
    %v5543 = vrcp.pop %v5461
    %v5544 = vmul.f32 %v5461, %v5543
    %v5545 = vsub.f32 1.0, %v5544
    %v5546 = vmul.f32 %v5543, %v5545
    %v5547 = vadd.f32 %v5543, %v5546
    %vm5548 = vweird.f32 %v5461
    %vm5549 = vweird.f32 %v5543
    %vm5550 = vmor %vm5548, %vm5549
    %v5551 = vsel %vm5550, %v5543, %v5547
    %v5552 = vand.u32 2147483647, %v5461
    %vm5553 = vcmp.eq.f32.partialorder %v5552, 8.507059e+37
    %v5554 = vand.u32 %v5461, 2147483648
    %v5555 = vor.u32 1.1754944e-38, %v5554
    %v5556 = vsel %vm5553, %v5555, %v5551
    %v5557 = vmul.f32 %v5439, %v5556
    %v5558 = vrcp.pop %v5464
    %v5559 = vmul.f32 %v5464, %v5558
    %v5560 = vsub.f32 1.0, %v5559
    %v5561 = vmul.f32 %v5558, %v5560
    %v5562 = vadd.f32 %v5558, %v5561
    %vm5563 = vweird.f32 %v5464
    %vm5564 = vweird.f32 %v5558
    %vm5565 = vmor %vm5563, %vm5564
    %v5566 = vsel %vm5565, %v5558, %v5562
    %v5567 = vand.u32 2147483647, %v5464
    %vm5568 = vcmp.eq.f32.partialorder %v5567, 8.507059e+37
    %v5569 = vand.u32 %v5464, 2147483648
    %v5570 = vor.u32 1.1754944e-38, %v5569
    %v5571 = vsel %vm5568, %v5570, %v5566
    %v5572 = vmul.f32 %v5441, %v5571
    %v5573 = vrcp.pop %v5467
    %v5574 = vmul.f32 %v5467, %v5573
    %v5575 = vsub.f32 1.0, %v5574
    %v5576 = vmul.f32 %v5573, %v5575
    %v5577 = vadd.f32 %v5573, %v5576
    %vm5578 = vweird.f32 %v5467
    %vm5579 = vweird.f32 %v5573
    %vm5580 = vmor %vm5578, %vm5579
    %v5581 = vsel %vm5580, %v5573, %v5577
    %v5582 = vand.u32 2147483647, %v5467
    %vm5583 = vcmp.eq.f32.partialorder %v5582, 8.507059e+37
    %v5584 = vand.u32 %v5467, 2147483648
    %v5585 = vor.u32 1.1754944e-38, %v5584
    %v5586 = vsel %vm5583, %v5585, %v5581
    %v5587 = vmul.f32 %v5443, %v5586
    %v5588 = vsel %vm5395, %v5482, 0.0
    %v5589 = vsel %vm5395, %v5497, 0.0
    %v5590 = vadd.f32 %v5588, %v5589
    %v5591 = vsel %vm5395, %v5512, 0.0
    %v5592 = vadd.f32 %v5590, %v5591
    %v5593 = vsel %vm5395, %v5527, 0.0
    %v5594 = vadd.f32 %v5592, %v5593
    %v5595 = vsel %vm5395, %v5542, 0.0
    %v5596 = vadd.f32 %v5594, %v5595
    %v5597 = vsel %vm5395, %v5557, 0.0
    %v5598 = vadd.f32 %v5596, %v5597
    %v5599 = vsel %vm5395, %v5572, 0.0
    %v5600 = vadd.f32 %v5598, %v5599
    %v5601 = vsel %vm5395, %v5587, 0.0
    %v5602 = vadd.f32 %v5600, %v5601
    %v5603 = vrcp.pop 8.0
    %v5604 = vmul.f32 8.0, %v5603
    %v5605 = vsub.f32 1.0, %v5604
    %v5606 = vmul.f32 %v5603, %v5605
    %v5607 = vadd.f32 %v5603, %v5606
    %vm5608 = vweird.f32 %v5603
    %v5609 = vsel %vm5608, %v5603, %v5607
    %v5610 = vmul.f32 %v5602, %v5609
    %v5611 = vpack.c.bf16 %v5482, %v5482
    %v5612 = vpack.c.bf16 %v5497, %v5497
    %v5613 = vpack.c.bf16 %v5512, %v5512
    %v5614 = vpack.c.bf16 %v5527, %v5527
    %v5615 = vpack.c.bf16 %v5542, %v5542
    %v5616 = vpack.c.bf16 %v5557, %v5557
    %v5617 = vpack.c.bf16 %v5572, %v5572
    %v5618 = vpack.c.bf16 %v5587, %v5587
    %v5620 = vunpack.c.l.b16 %v5611
    %v5621 = vpack.c.b16 %v5620, %v5620
    %v5623 = vshrl.u32 %v5621, 16
    %v5625 = vrot.slane %v5623, 3
    %v5627 = vsel %vm5395, %v5625, 0
    %v5630 = vsel %vm416, %v5227, 0
    %5632 = vmatpush.bf16.msra.mxu0 0
    %5633 = vmatpush.bf16.msra.mxu0 0
    %5634 = vmatpush.bf16.msra.mxu0 0
    %5635 = vmatpush.bf16.msra.mxu0 0
    %5636 = vmatpush.bf16.msra.mxu0 0
    %5637 = vmatpush.bf16.msra.mxu0 0
    %5638 = vmatpush.bf16.msra.mxu0 0
    %5639 = vmatpush.bf16.msra.mxu0 %v5630
    %5640 = vmatmul.bf16.gmra.mxu0 %v5627
    %v5641 = vpop.f32.mrf.mxu0
    %v5642 = vadd.f32 0.0, %v5641
    %v5643 = vpop.f32.mrf.mxu0
    %5644 = vdwg.mxu0
    %v5646 = vunpack.c.l.b16 %v5612
    %v5647 = vpack.c.b16 %v5646, %v5646
    %v5649 = vshrl.u32 %v5647, 16
    %v5651 = vrot.slane %v5649, 3
    %v5653 = vsel %vm5395, %v5651, 0
    %v5656 = vsel %vm416, %v5228, 0
    %5658 = vmatpush.bf16.msra.mxu0 0
    %5659 = vmatpush.bf16.msra.mxu0 0
    %5660 = vmatpush.bf16.msra.mxu0 0
    %5661 = vmatpush.bf16.msra.mxu0 0
    %5662 = vmatpush.bf16.msra.mxu0 0
    %5663 = vmatpush.bf16.msra.mxu0 0
    %5664 = vmatpush.bf16.msra.mxu0 0
    %5665 = vmatpush.bf16.msra.mxu0 %v5656
    %5666 = vmatmul.bf16.gmra.mxu0 %v5653
    %v5667 = vpop.f32.mrf.mxu0
    %v5668 = vadd.f32 0.0, %v5667
    %v5669 = vpop.f32.mrf.mxu0
    %5670 = vdwg.mxu0
    %v5672 = vunpack.c.l.b16 %v5613
    %v5673 = vpack.c.b16 %v5672, %v5672
    %v5675 = vshrl.u32 %v5673, 16
    %v5677 = vrot.slane %v5675, 3
    %v5679 = vsel %vm5395, %v5677, 0
    %v5682 = vsel %vm416, %v5229, 0
    %5684 = vmatpush.bf16.msra.mxu0 0
    %5685 = vmatpush.bf16.msra.mxu0 0
    %5686 = vmatpush.bf16.msra.mxu0 0
    %5687 = vmatpush.bf16.msra.mxu0 0
    %5688 = vmatpush.bf16.msra.mxu0 0
    %5689 = vmatpush.bf16.msra.mxu0 0
    %5690 = vmatpush.bf16.msra.mxu0 0
    %5691 = vmatpush.bf16.msra.mxu0 %v5682
    %5692 = vmatmul.bf16.gmra.mxu0 %v5679
    %v5693 = vpop.f32.mrf.mxu0
    %v5694 = vadd.f32 0.0, %v5693
    %v5695 = vpop.f32.mrf.mxu0
    %5696 = vdwg.mxu0
    %v5698 = vunpack.c.l.b16 %v5614
    %v5699 = vpack.c.b16 %v5698, %v5698
    %v5701 = vshrl.u32 %v5699, 16
    %v5703 = vrot.slane %v5701, 3
    %v5705 = vsel %vm5395, %v5703, 0
    %v5708 = vsel %vm416, %v5230, 0
    %5710 = vmatpush.bf16.msra.mxu0 0
    %5711 = vmatpush.bf16.msra.mxu0 0
    %5712 = vmatpush.bf16.msra.mxu0 0
    %5713 = vmatpush.bf16.msra.mxu0 0
    %5714 = vmatpush.bf16.msra.mxu0 0
    %5715 = vmatpush.bf16.msra.mxu0 0
    %5716 = vmatpush.bf16.msra.mxu0 0
    %5717 = vmatpush.bf16.msra.mxu0 %v5708
    %5718 = vmatmul.bf16.gmra.mxu0 %v5705
    %v5719 = vpop.f32.mrf.mxu0
    %v5720 = vadd.f32 0.0, %v5719
    %v5721 = vpop.f32.mrf.mxu0
    %5722 = vdwg.mxu0
    %v5724 = vunpack.c.l.b16 %v5615
    %v5725 = vpack.c.b16 %v5724, %v5724
    %v5727 = vshrl.u32 %v5725, 16
    %v5729 = vrot.slane %v5727, 3
    %v5731 = vsel %vm5395, %v5729, 0
    %v5734 = vsel %vm416, %v5231, 0
    %5736 = vmatpush.bf16.msra.mxu0 0
    %5737 = vmatpush.bf16.msra.mxu0 0
    %5738 = vmatpush.bf16.msra.mxu0 0
    %5739 = vmatpush.bf16.msra.mxu0 0
    %5740 = vmatpush.bf16.msra.mxu0 0
    %5741 = vmatpush.bf16.msra.mxu0 0
    %5742 = vmatpush.bf16.msra.mxu0 0
    %5743 = vmatpush.bf16.msra.mxu0 %v5734
    %5744 = vmatmul.bf16.gmra.mxu0 %v5731
    %v5745 = vpop.f32.mrf.mxu0
    %v5746 = vadd.f32 0.0, %v5745
    %v5747 = vpop.f32.mrf.mxu0
    %5748 = vdwg.mxu0
    %v5750 = vunpack.c.l.b16 %v5616
    %v5751 = vpack.c.b16 %v5750, %v5750
    %v5753 = vshrl.u32 %v5751, 16
    %v5755 = vrot.slane %v5753, 3
    %v5757 = vsel %vm5395, %v5755, 0
    %v5760 = vsel %vm416, %v5232, 0
    %5762 = vmatpush.bf16.msra.mxu0 0
    %5763 = vmatpush.bf16.msra.mxu0 0
    %5764 = vmatpush.bf16.msra.mxu0 0
    %5765 = vmatpush.bf16.msra.mxu0 0
    %5766 = vmatpush.bf16.msra.mxu0 0
    %5767 = vmatpush.bf16.msra.mxu0 0
    %5768 = vmatpush.bf16.msra.mxu0 0
    %5769 = vmatpush.bf16.msra.mxu0 %v5760
    %5770 = vmatmul.bf16.gmra.mxu0 %v5757
    %v5771 = vpop.f32.mrf.mxu0
    %v5772 = vadd.f32 0.0, %v5771
    %v5773 = vpop.f32.mrf.mxu0
    %5774 = vdwg.mxu0
    %v5776 = vunpack.c.l.b16 %v5617
    %v5777 = vpack.c.b16 %v5776, %v5776
    %v5779 = vshrl.u32 %v5777, 16
    %v5781 = vrot.slane %v5779, 3
    %v5783 = vsel %vm5395, %v5781, 0
    %v5786 = vsel %vm416, %v5233, 0
    %5788 = vmatpush.bf16.msra.mxu0 0
    %5789 = vmatpush.bf16.msra.mxu0 0
    %5790 = vmatpush.bf16.msra.mxu0 0
    %5791 = vmatpush.bf16.msra.mxu0 0
    %5792 = vmatpush.bf16.msra.mxu0 0
    %5793 = vmatpush.bf16.msra.mxu0 0
    %5794 = vmatpush.bf16.msra.mxu0 0
    %5795 = vmatpush.bf16.msra.mxu0 %v5786
    %5796 = vmatmul.bf16.gmra.mxu0 %v5783
    %v5797 = vpop.f32.mrf.mxu0
    %v5798 = vadd.f32 0.0, %v5797
    %v5799 = vpop.f32.mrf.mxu0
    %5800 = vdwg.mxu0
    %v5802 = vunpack.c.l.b16 %v5618
    %v5803 = vpack.c.b16 %v5802, %v5802
    %v5805 = vshrl.u32 %v5803, 16
    %v5807 = vrot.slane %v5805, 3
    %v5809 = vsel %vm5395, %v5807, 0
    %v5812 = vsel %vm416, %v5234, 0
    %5814 = vmatpush.bf16.msra.mxu0 0
    %5815 = vmatpush.bf16.msra.mxu0 0
    %5816 = vmatpush.bf16.msra.mxu0 0
    %5817 = vmatpush.bf16.msra.mxu0 0
    %5818 = vmatpush.bf16.msra.mxu0 0
    %5819 = vmatpush.bf16.msra.mxu0 0
    %5820 = vmatpush.bf16.msra.mxu0 0
    %5821 = vmatpush.bf16.msra.mxu0 %v5812
    %5822 = vmatmul.bf16.gmra.mxu0 %v5809
    %v5823 = vpop.f32.mrf.mxu0
    %v5824 = vadd.f32 0.0, %v5823
    %v5825 = vpop.f32.mrf.mxu0
    %5826 = vdwg.mxu0
    %5828 = vrot.lane.b32.xlu0 %v5668, 16
    %v5829 = vpop.permute.xlu0 %5828
    %5832 = vrot.lane.b32.xlu0 %v5694, 32
    %v5833 = vpop.permute.xlu0 %5832
    %5836 = vrot.lane.b32.xlu0 %v5720, 48
    %v5837 = vpop.permute.xlu0 %5836
    %5840 = vrot.lane.b32.xlu0 %v5746, 64
    %v5841 = vpop.permute.xlu0 %5840
    %5844 = vrot.lane.b32.xlu0 %v5772, 80
    %v5845 = vpop.permute.xlu0 %5844
    %5848 = vrot.lane.b32.xlu0 %v5798, 96
    %v5849 = vpop.permute.xlu0 %5848
    %5852 = vrot.lane.b32.xlu0 %v5824, 112
    %v5853 = vpop.permute.xlu0 %5852
    %v5855 = vsel %vm458, %v5642, %v5829
    %vm5856 = vcmask 261120
    %v5857 = vsel %vm5856, %v5855, %v5833
    %vm5858 = vcmask 392192
    %v5859 = vsel %vm5858, %v5857, %v5837
    %vm5860 = vcmask 523264
    %v5861 = vsel %vm5860, %v5859, %v5841
    %vm5862 = vcmask 654336
    %v5863 = vsel %vm5862, %v5861, %v5845
    %vm5864 = vcmask 785408
    %v5865 = vsel %vm5864, %v5863, %v5849
    %vm5866 = vcmask 916480
    %v5867 = vsel %vm5866, %v5865, %v5853
    %5869 = vrot.lane.b32.xlu0 %v4979, 112
    %v5870 = vpop.permute.xlu0 %5869
    %5872 = vrot.lane.b32.xlu0 %v4979, 96
    %v5873 = vpop.permute.xlu0 %5872
    %5875 = vrot.lane.b32.xlu0 %v4979, 80
    %v5876 = vpop.permute.xlu0 %5875
    %5878 = vrot.lane.b32.xlu0 %v4979, 64
    %v5879 = vpop.permute.xlu0 %5878
    %5881 = vrot.lane.b32.xlu0 %v4979, 48
    %v5882 = vpop.permute.xlu0 %5881
    %5884 = vrot.lane.b32.xlu0 %v4979, 32
    %v5885 = vpop.permute.xlu0 %5884
    %5887 = vrot.lane.b32.xlu0 %v4979, 16
    %v5888 = vpop.permute.xlu0 %5887
    %v5890 = vpack.c.bf16 %v4979, %v4979
    %v5891 = vpack.c.bf16 %v5870, %v5870
    %v5892 = vpack.c.bf16 %v5873, %v5873
    %v5893 = vpack.c.bf16 %v5876, %v5876
    %v5894 = vpack.c.bf16 %v5879, %v5879
    %v5895 = vpack.c.bf16 %v5882, %v5882
    %v5896 = vpack.c.bf16 %v5885, %v5885
    %v5897 = vpack.c.bf16 %v5888, %v5888
    %5899 = vrot.lane.b32.xlu0 %v5061, 112
    %v5900 = vpop.permute.xlu0 %5899
    %5902 = vrot.lane.b32.xlu0 %v5061, 96
    %v5903 = vpop.permute.xlu0 %5902
    %5905 = vrot.lane.b32.xlu0 %v5061, 80
    %v5906 = vpop.permute.xlu0 %5905
    %5908 = vrot.lane.b32.xlu0 %v5061, 64
    %v5909 = vpop.permute.xlu0 %5908
    %5911 = vrot.lane.b32.xlu0 %v5061, 48
    %v5912 = vpop.permute.xlu0 %5911
    %5914 = vrot.lane.b32.xlu0 %v5061, 32
    %v5915 = vpop.permute.xlu0 %5914
    %5917 = vrot.lane.b32.xlu0 %v5061, 16
    %v5918 = vpop.permute.xlu0 %5917
    %v5920 = vpack.c.bf16 %v5061, %v5061
    %v5921 = vpack.c.bf16 %v5900, %v5900
    %v5922 = vpack.c.bf16 %v5903, %v5903
    %v5923 = vpack.c.bf16 %v5906, %v5906
    %v5924 = vpack.c.bf16 %v5909, %v5909
    %v5925 = vpack.c.bf16 %v5912, %v5912
    %v5926 = vpack.c.bf16 %v5915, %v5915
    %v5927 = vpack.c.bf16 %v5918, %v5918
    %5929 = vrot.lane.b32.xlu0 %v5143, 112
    %v5930 = vpop.permute.xlu0 %5929
    %5932 = vrot.lane.b32.xlu0 %v5143, 96
    %v5933 = vpop.permute.xlu0 %5932
    %5935 = vrot.lane.b32.xlu0 %v5143, 80
    %v5936 = vpop.permute.xlu0 %5935
    %5938 = vrot.lane.b32.xlu0 %v5143, 64
    %v5939 = vpop.permute.xlu0 %5938
    %5941 = vrot.lane.b32.xlu0 %v5143, 48
    %v5942 = vpop.permute.xlu0 %5941
    %5944 = vrot.lane.b32.xlu0 %v5143, 32
    %v5945 = vpop.permute.xlu0 %5944
    %5947 = vrot.lane.b32.xlu0 %v5143, 16
    %v5948 = vpop.permute.xlu0 %5947
    %v5950 = vpack.c.bf16 %v5143, %v5143
    %v5951 = vpack.c.bf16 %v5930, %v5930
    %v5952 = vpack.c.bf16 %v5933, %v5933
    %v5953 = vpack.c.bf16 %v5936, %v5936
    %v5954 = vpack.c.bf16 %v5939, %v5939
    %v5955 = vpack.c.bf16 %v5942, %v5942
    %v5956 = vpack.c.bf16 %v5945, %v5945
    %v5957 = vpack.c.bf16 %v5948, %v5948
    %v5959 = vsel %vm458, %v5890, 0
    %v5962 = vsel %vm458, %v5920, 0
    %5964 = vmatpush.bf16.xpose.msra.mxu0 0
    %5965 = vmatpush.bf16.xpose.msra.mxu0 0
    %5966 = vmatpush.bf16.xpose.msra.mxu0 0
    %5967 = vmatpush.bf16.xpose.msra.mxu0 0
    %5968 = vmatpush.bf16.xpose.msra.mxu0 0
    %5969 = vmatpush.bf16.xpose.msra.mxu0 0
    %5970 = vmatpush.bf16.xpose.msra.mxu0 0
    %5971 = vmatpush.bf16.xpose.msra.mxu0 %v5962
    %5972 = vmatmul.bf16.gmra.mxu0 %v5959
    %v5973 = vpop.f32.mrf.mxu0
    %v5974 = vadd.f32 0.0, %v5973
    %v5975 = vpop.f32.mrf.mxu0
    %5976 = vdwg.mxu0
    %v5978 = vsel %vm458, %v5891, 0
    %v5981 = vsel %vm458, %v5921, 0
    %5983 = vmatpush.bf16.xpose.msra.mxu0 0
    %5984 = vmatpush.bf16.xpose.msra.mxu0 0
    %5985 = vmatpush.bf16.xpose.msra.mxu0 0
    %5986 = vmatpush.bf16.xpose.msra.mxu0 0
    %5987 = vmatpush.bf16.xpose.msra.mxu0 0
    %5988 = vmatpush.bf16.xpose.msra.mxu0 0
    %5989 = vmatpush.bf16.xpose.msra.mxu0 0
    %5990 = vmatpush.bf16.xpose.msra.mxu0 %v5981
    %5991 = vmatmul.bf16.gmra.mxu0 %v5978
    %v5992 = vpop.f32.mrf.mxu0
    %v5993 = vadd.f32 0.0, %v5992
    %v5994 = vpop.f32.mrf.mxu0
    %5995 = vdwg.mxu0
    %v5997 = vsel %vm458, %v5892, 0
    %v6000 = vsel %vm458, %v5922, 0
    %6002 = vmatpush.bf16.xpose.msra.mxu0 0
    %6003 = vmatpush.bf16.xpose.msra.mxu0 0
    %6004 = vmatpush.bf16.xpose.msra.mxu0 0
    %6005 = vmatpush.bf16.xpose.msra.mxu0 0
    %6006 = vmatpush.bf16.xpose.msra.mxu0 0
    %6007 = vmatpush.bf16.xpose.msra.mxu0 0
    %6008 = vmatpush.bf16.xpose.msra.mxu0 0
    %6009 = vmatpush.bf16.xpose.msra.mxu0 %v6000
    %6010 = vmatmul.bf16.gmra.mxu0 %v5997
    %v6011 = vpop.f32.mrf.mxu0
    %v6012 = vadd.f32 0.0, %v6011
    %v6013 = vpop.f32.mrf.mxu0
    %6014 = vdwg.mxu0
    %v6016 = vsel %vm458, %v5893, 0
    %v6019 = vsel %vm458, %v5923, 0
    %6021 = vmatpush.bf16.xpose.msra.mxu0 0
    %6022 = vmatpush.bf16.xpose.msra.mxu0 0
    %6023 = vmatpush.bf16.xpose.msra.mxu0 0
    %6024 = vmatpush.bf16.xpose.msra.mxu0 0
    %6025 = vmatpush.bf16.xpose.msra.mxu0 0
    %6026 = vmatpush.bf16.xpose.msra.mxu0 0
    %6027 = vmatpush.bf16.xpose.msra.mxu0 0
    %6028 = vmatpush.bf16.xpose.msra.mxu0 %v6019
    %6029 = vmatmul.bf16.gmra.mxu0 %v6016
    %v6030 = vpop.f32.mrf.mxu0
    %v6031 = vadd.f32 0.0, %v6030
    %v6032 = vpop.f32.mrf.mxu0
    %6033 = vdwg.mxu0
    %v6035 = vsel %vm458, %v5894, 0
    %v6038 = vsel %vm458, %v5924, 0
    %6040 = vmatpush.bf16.xpose.msra.mxu0 0
    %6041 = vmatpush.bf16.xpose.msra.mxu0 0
    %6042 = vmatpush.bf16.xpose.msra.mxu0 0
    %6043 = vmatpush.bf16.xpose.msra.mxu0 0
    %6044 = vmatpush.bf16.xpose.msra.mxu0 0
    %6045 = vmatpush.bf16.xpose.msra.mxu0 0
    %6046 = vmatpush.bf16.xpose.msra.mxu0 0
    %6047 = vmatpush.bf16.xpose.msra.mxu0 %v6038
    %6048 = vmatmul.bf16.gmra.mxu0 %v6035
    %v6049 = vpop.f32.mrf.mxu0
    %v6050 = vadd.f32 0.0, %v6049
    %v6051 = vpop.f32.mrf.mxu0
    %6052 = vdwg.mxu0
    %v6054 = vsel %vm458, %v5895, 0
    %v6057 = vsel %vm458, %v5925, 0
    %6059 = vmatpush.bf16.xpose.msra.mxu0 0
    %6060 = vmatpush.bf16.xpose.msra.mxu0 0
    %6061 = vmatpush.bf16.xpose.msra.mxu0 0
    %6062 = vmatpush.bf16.xpose.msra.mxu0 0
    %6063 = vmatpush.bf16.xpose.msra.mxu0 0
    %6064 = vmatpush.bf16.xpose.msra.mxu0 0
    %6065 = vmatpush.bf16.xpose.msra.mxu0 0
    %6066 = vmatpush.bf16.xpose.msra.mxu0 %v6057
    %6067 = vmatmul.bf16.gmra.mxu0 %v6054
    %v6068 = vpop.f32.mrf.mxu0
    %v6069 = vadd.f32 0.0, %v6068
    %v6070 = vpop.f32.mrf.mxu0
    %6071 = vdwg.mxu0
    %v6073 = vsel %vm458, %v5896, 0
    %v6076 = vsel %vm458, %v5926, 0
    %6078 = vmatpush.bf16.xpose.msra.mxu0 0
    %6079 = vmatpush.bf16.xpose.msra.mxu0 0
    %6080 = vmatpush.bf16.xpose.msra.mxu0 0
    %6081 = vmatpush.bf16.xpose.msra.mxu0 0
    %6082 = vmatpush.bf16.xpose.msra.mxu0 0
    %6083 = vmatpush.bf16.xpose.msra.mxu0 0
    %6084 = vmatpush.bf16.xpose.msra.mxu0 0
    %6085 = vmatpush.bf16.xpose.msra.mxu0 %v6076
    %6086 = vmatmul.bf16.gmra.mxu0 %v6073
    %v6087 = vpop.f32.mrf.mxu0
    %v6088 = vadd.f32 0.0, %v6087
    %v6089 = vpop.f32.mrf.mxu0
    %6090 = vdwg.mxu0
    %v6092 = vsel %vm458, %v5897, 0
    %v6095 = vsel %vm458, %v5927, 0
    %6097 = vmatpush.bf16.xpose.msra.mxu0 0
    %6098 = vmatpush.bf16.xpose.msra.mxu0 0
    %6099 = vmatpush.bf16.xpose.msra.mxu0 0
    %6100 = vmatpush.bf16.xpose.msra.mxu0 0
    %6101 = vmatpush.bf16.xpose.msra.mxu0 0
    %6102 = vmatpush.bf16.xpose.msra.mxu0 0
    %6103 = vmatpush.bf16.xpose.msra.mxu0 0
    %6104 = vmatpush.bf16.xpose.msra.mxu0 %v6095
    %6105 = vmatmul.bf16.gmra.mxu0 %v6092
    %v6106 = vpop.f32.mrf.mxu0
    %v6107 = vadd.f32 0.0, %v6106
    %v6108 = vpop.f32.mrf.mxu0
    %6109 = vdwg.mxu0
    %v6110 = vmul.f32 %v5974, 0.25
    %v6111 = vmul.f32 %v5993, 0.25
    %v6112 = vmul.f32 %v6012, 0.25
    %v6113 = vmul.f32 %v6031, 0.25
    %v6114 = vmul.f32 %v6050, 0.25
    %v6115 = vmul.f32 %v6069, 0.25
    %v6116 = vmul.f32 %v6088, 0.25
    %v6117 = vmul.f32 %v6107, 0.25
    %v6118 = vsel %vm5395, %v6110, -inf
    %6119 = vmax.xlane.f32.xlu0 %v6118
    %v6120 = vpop.xlane.xlu0 %6119
    %v6121 = vsel %vm5395, %v6111, -inf
    %6122 = vmax.xlane.f32.xlu0 %v6121
    %v6123 = vpop.xlane.xlu0 %6122
    %v6124 = vsel %vm5395, %v6112, -inf
    %6125 = vmax.xlane.f32.xlu0 %v6124
    %v6126 = vpop.xlane.xlu0 %6125
    %v6127 = vsel %vm5395, %v6113, -inf
    %6128 = vmax.xlane.f32.xlu0 %v6127
    %v6129 = vpop.xlane.xlu0 %6128
    %v6130 = vsel %vm5395, %v6114, -inf
    %6131 = vmax.xlane.f32.xlu0 %v6130
    %v6132 = vpop.xlane.xlu0 %6131
    %v6133 = vsel %vm5395, %v6115, -inf
    %6134 = vmax.xlane.f32.xlu0 %v6133
    %v6135 = vpop.xlane.xlu0 %6134
    %v6136 = vsel %vm5395, %v6116, -inf
    %6137 = vmax.xlane.f32.xlu0 %v6136
    %v6138 = vpop.xlane.xlu0 %6137
    %v6139 = vsel %vm5395, %v6117, -inf
    %6140 = vmax.xlane.f32.xlu0 %v6139
    %v6141 = vpop.xlane.xlu0 %6140
    %v6142 = vsub.f32 %v6110, %v6120
    %v6143 = vsub.f32 %v6111, %v6123
    %v6144 = vsub.f32 %v6112, %v6126
    %v6145 = vsub.f32 %v6113, %v6129
    %v6146 = vsub.f32 %v6114, %v6132
    %v6147 = vsub.f32 %v6115, %v6135
    %v6148 = vsub.f32 %v6116, %v6138
    %v6149 = vsub.f32 %v6117, %v6141
    %v6150 = vmul.f32 %v6142, 1.442695
    %v6151 = vpow.pop %v6150
    %v6152 = vmul.f32 %v6143, 1.442695
    %v6153 = vpow.pop %v6152
    %v6154 = vmul.f32 %v6144, 1.442695
    %v6155 = vpow.pop %v6154
    %v6156 = vmul.f32 %v6145, 1.442695
    %v6157 = vpow.pop %v6156
    %v6158 = vmul.f32 %v6146, 1.442695
    %v6159 = vpow.pop %v6158
    %v6160 = vmul.f32 %v6147, 1.442695
    %v6161 = vpow.pop %v6160
    %v6162 = vmul.f32 %v6148, 1.442695
    %v6163 = vpow.pop %v6162
    %v6164 = vmul.f32 %v6149, 1.442695
    %v6165 = vpow.pop %v6164
    %v6166 = vsel %vm5395, %v6151, 0.0
    %6167 = vadd.xlane.f32.xlu0 %v6166
    %v6168 = vpop.xlane.xlu0 %6167
    %v6169 = vsel %vm5395, %v6153, 0.0
    %6170 = vadd.xlane.f32.xlu0 %v6169
    %v6171 = vpop.xlane.xlu0 %6170
    %v6172 = vsel %vm5395, %v6155, 0.0
    %6173 = vadd.xlane.f32.xlu0 %v6172
    %v6174 = vpop.xlane.xlu0 %6173
    %v6175 = vsel %vm5395, %v6157, 0.0
    %6176 = vadd.xlane.f32.xlu0 %v6175
    %v6177 = vpop.xlane.xlu0 %6176
    %v6178 = vsel %vm5395, %v6159, 0.0
    %6179 = vadd.xlane.f32.xlu0 %v6178
    %v6180 = vpop.xlane.xlu0 %6179
    %v6181 = vsel %vm5395, %v6161, 0.0
    %6182 = vadd.xlane.f32.xlu0 %v6181
    %v6183 = vpop.xlane.xlu0 %6182
    %v6184 = vsel %vm5395, %v6163, 0.0
    %6185 = vadd.xlane.f32.xlu0 %v6184
    %v6186 = vpop.xlane.xlu0 %6185
    %v6187 = vsel %vm5395, %v6165, 0.0
    %6188 = vadd.xlane.f32.xlu0 %v6187
    %v6189 = vpop.xlane.xlu0 %6188
    %v6190 = vrcp.pop %v6168
    %v6191 = vmul.f32 %v6168, %v6190
    %v6192 = vsub.f32 1.0, %v6191
    %v6193 = vmul.f32 %v6190, %v6192
    %v6194 = vadd.f32 %v6190, %v6193
    %vm6195 = vweird.f32 %v6168
    %vm6196 = vweird.f32 %v6190
    %vm6197 = vmor %vm6195, %vm6196
    %v6198 = vsel %vm6197, %v6190, %v6194
    %v6199 = vand.u32 2147483647, %v6168
    %vm6200 = vcmp.eq.f32.partialorder %v6199, 8.507059e+37
    %v6201 = vand.u32 %v6168, 2147483648
    %v6202 = vor.u32 1.1754944e-38, %v6201
    %v6203 = vsel %vm6200, %v6202, %v6198
    %v6204 = vmul.f32 %v6151, %v6203
    %v6205 = vrcp.pop %v6171
    %v6206 = vmul.f32 %v6171, %v6205
    %v6207 = vsub.f32 1.0, %v6206
    %v6208 = vmul.f32 %v6205, %v6207
    %v6209 = vadd.f32 %v6205, %v6208
    %vm6210 = vweird.f32 %v6171
    %vm6211 = vweird.f32 %v6205
    %vm6212 = vmor %vm6210, %vm6211
    %v6213 = vsel %vm6212, %v6205, %v6209
    %v6214 = vand.u32 2147483647, %v6171
    %vm6215 = vcmp.eq.f32.partialorder %v6214, 8.507059e+37
    %v6216 = vand.u32 %v6171, 2147483648
    %v6217 = vor.u32 1.1754944e-38, %v6216
    %v6218 = vsel %vm6215, %v6217, %v6213
    %v6219 = vmul.f32 %v6153, %v6218
    %v6220 = vrcp.pop %v6174
    %v6221 = vmul.f32 %v6174, %v6220
    %v6222 = vsub.f32 1.0, %v6221
    %v6223 = vmul.f32 %v6220, %v6222
    %v6224 = vadd.f32 %v6220, %v6223
    %vm6225 = vweird.f32 %v6174
    %vm6226 = vweird.f32 %v6220
    %vm6227 = vmor %vm6225, %vm6226
    %v6228 = vsel %vm6227, %v6220, %v6224
    %v6229 = vand.u32 2147483647, %v6174
    %vm6230 = vcmp.eq.f32.partialorder %v6229, 8.507059e+37
    %v6231 = vand.u32 %v6174, 2147483648
    %v6232 = vor.u32 1.1754944e-38, %v6231
    %v6233 = vsel %vm6230, %v6232, %v6228
    %v6234 = vmul.f32 %v6155, %v6233
    %v6235 = vrcp.pop %v6177
    %v6236 = vmul.f32 %v6177, %v6235
    %v6237 = vsub.f32 1.0, %v6236
    %v6238 = vmul.f32 %v6235, %v6237
    %v6239 = vadd.f32 %v6235, %v6238
    %vm6240 = vweird.f32 %v6177
    %vm6241 = vweird.f32 %v6235
    %vm6242 = vmor %vm6240, %vm6241
    %v6243 = vsel %vm6242, %v6235, %v6239
    %v6244 = vand.u32 2147483647, %v6177
    %vm6245 = vcmp.eq.f32.partialorder %v6244, 8.507059e+37
    %v6246 = vand.u32 %v6177, 2147483648
    %v6247 = vor.u32 1.1754944e-38, %v6246
    %v6248 = vsel %vm6245, %v6247, %v6243
    %v6249 = vmul.f32 %v6157, %v6248
    %v6250 = vrcp.pop %v6180
    %v6251 = vmul.f32 %v6180, %v6250
    %v6252 = vsub.f32 1.0, %v6251
    %v6253 = vmul.f32 %v6250, %v6252
    %v6254 = vadd.f32 %v6250, %v6253
    %vm6255 = vweird.f32 %v6180
    %vm6256 = vweird.f32 %v6250
    %vm6257 = vmor %vm6255, %vm6256
    %v6258 = vsel %vm6257, %v6250, %v6254
    %v6259 = vand.u32 2147483647, %v6180
    %vm6260 = vcmp.eq.f32.partialorder %v6259, 8.507059e+37
    %v6261 = vand.u32 %v6180, 2147483648
    %v6262 = vor.u32 1.1754944e-38, %v6261
    %v6263 = vsel %vm6260, %v6262, %v6258
    %v6264 = vmul.f32 %v6159, %v6263
    %v6265 = vrcp.pop %v6183
    %v6266 = vmul.f32 %v6183, %v6265
    %v6267 = vsub.f32 1.0, %v6266
    %v6268 = vmul.f32 %v6265, %v6267
    %v6269 = vadd.f32 %v6265, %v6268
    %vm6270 = vweird.f32 %v6183
    %vm6271 = vweird.f32 %v6265
    %vm6272 = vmor %vm6270, %vm6271
    %v6273 = vsel %vm6272, %v6265, %v6269
    %v6274 = vand.u32 2147483647, %v6183
    %vm6275 = vcmp.eq.f32.partialorder %v6274, 8.507059e+37
    %v6276 = vand.u32 %v6183, 2147483648
    %v6277 = vor.u32 1.1754944e-38, %v6276
    %v6278 = vsel %vm6275, %v6277, %v6273
    %v6279 = vmul.f32 %v6161, %v6278
    %v6280 = vrcp.pop %v6186
    %v6281 = vmul.f32 %v6186, %v6280
    %v6282 = vsub.f32 1.0, %v6281
    %v6283 = vmul.f32 %v6280, %v6282
    %v6284 = vadd.f32 %v6280, %v6283
    %vm6285 = vweird.f32 %v6186
    %vm6286 = vweird.f32 %v6280
    %vm6287 = vmor %vm6285, %vm6286
    %v6288 = vsel %vm6287, %v6280, %v6284
    %v6289 = vand.u32 2147483647, %v6186
    %vm6290 = vcmp.eq.f32.partialorder %v6289, 8.507059e+37
    %v6291 = vand.u32 %v6186, 2147483648
    %v6292 = vor.u32 1.1754944e-38, %v6291
    %v6293 = vsel %vm6290, %v6292, %v6288
    %v6294 = vmul.f32 %v6163, %v6293
    %v6295 = vrcp.pop %v6189
    %v6296 = vmul.f32 %v6189, %v6295
    %v6297 = vsub.f32 1.0, %v6296
    %v6298 = vmul.f32 %v6295, %v6297
    %v6299 = vadd.f32 %v6295, %v6298
    %vm6300 = vweird.f32 %v6189
    %vm6301 = vweird.f32 %v6295
    %vm6302 = vmor %vm6300, %vm6301
    %v6303 = vsel %vm6302, %v6295, %v6299
    %v6304 = vand.u32 2147483647, %v6189
    %vm6305 = vcmp.eq.f32.partialorder %v6304, 8.507059e+37
    %v6306 = vand.u32 %v6189, 2147483648
    %v6307 = vor.u32 1.1754944e-38, %v6306
    %v6308 = vsel %vm6305, %v6307, %v6303
    %v6309 = vmul.f32 %v6165, %v6308
    %v6310 = vsel %vm5395, %v6204, 0.0
    %v6311 = vsel %vm5395, %v6219, 0.0
    %v6312 = vadd.f32 %v6310, %v6311
    %v6313 = vsel %vm5395, %v6234, 0.0
    %v6314 = vadd.f32 %v6312, %v6313
    %v6315 = vsel %vm5395, %v6249, 0.0
    %v6316 = vadd.f32 %v6314, %v6315
    %v6317 = vsel %vm5395, %v6264, 0.0
    %v6318 = vadd.f32 %v6316, %v6317
    %v6319 = vsel %vm5395, %v6279, 0.0
    %v6320 = vadd.f32 %v6318, %v6319
    %v6321 = vsel %vm5395, %v6294, 0.0
    %v6322 = vadd.f32 %v6320, %v6321
    %v6323 = vsel %vm5395, %v6309, 0.0
    %v6324 = vadd.f32 %v6322, %v6323
    %v6325 = vmul.f32 %v6324, %v5609
    %v6326 = vpack.c.bf16 %v6204, %v6204
    %v6327 = vpack.c.bf16 %v6219, %v6219
    %v6328 = vpack.c.bf16 %v6234, %v6234
    %v6329 = vpack.c.bf16 %v6249, %v6249
    %v6330 = vpack.c.bf16 %v6264, %v6264
    %v6331 = vpack.c.bf16 %v6279, %v6279
    %v6332 = vpack.c.bf16 %v6294, %v6294
    %v6333 = vpack.c.bf16 %v6309, %v6309
    %v6335 = vunpack.c.l.b16 %v6326
    %v6336 = vpack.c.b16 %v6335, %v6335
    %v6338 = vshrl.u32 %v6336, 16
    %v6340 = vrot.slane %v6338, 3
    %v6342 = vsel %vm5395, %v6340, 0
    %v6345 = vsel %vm416, %v5950, 0
    %6347 = vmatpush.bf16.msra.mxu0 0
    %6348 = vmatpush.bf16.msra.mxu0 0
    %6349 = vmatpush.bf16.msra.mxu0 0
    %6350 = vmatpush.bf16.msra.mxu0 0
    %6351 = vmatpush.bf16.msra.mxu0 0
    %6352 = vmatpush.bf16.msra.mxu0 0
    %6353 = vmatpush.bf16.msra.mxu0 0
    %6354 = vmatpush.bf16.msra.mxu0 %v6345
    %6355 = vmatmul.bf16.gmra.mxu0 %v6342
    %v6356 = vpop.f32.mrf.mxu0
    %v6357 = vadd.f32 0.0, %v6356
    %v6358 = vpop.f32.mrf.mxu0
    %6359 = vdwg.mxu0
    %v6361 = vunpack.c.l.b16 %v6327
    %v6362 = vpack.c.b16 %v6361, %v6361
    %v6364 = vshrl.u32 %v6362, 16
    %v6366 = vrot.slane %v6364, 3
    %v6368 = vsel %vm5395, %v6366, 0
    %v6371 = vsel %vm416, %v5951, 0
    %6373 = vmatpush.bf16.msra.mxu0 0
    %6374 = vmatpush.bf16.msra.mxu0 0
    %6375 = vmatpush.bf16.msra.mxu0 0
    %6376 = vmatpush.bf16.msra.mxu0 0
    %6377 = vmatpush.bf16.msra.mxu0 0
    %6378 = vmatpush.bf16.msra.mxu0 0
    %6379 = vmatpush.bf16.msra.mxu0 0
    %6380 = vmatpush.bf16.msra.mxu0 %v6371
    %6381 = vmatmul.bf16.gmra.mxu0 %v6368
    %v6382 = vpop.f32.mrf.mxu0
    %v6383 = vadd.f32 0.0, %v6382
    %v6384 = vpop.f32.mrf.mxu0
    %6385 = vdwg.mxu0
    %v6387 = vunpack.c.l.b16 %v6328
    %v6388 = vpack.c.b16 %v6387, %v6387
    %v6390 = vshrl.u32 %v6388, 16
    %v6392 = vrot.slane %v6390, 3
    %v6394 = vsel %vm5395, %v6392, 0
    %v6397 = vsel %vm416, %v5952, 0
    %6399 = vmatpush.bf16.msra.mxu0 0
    %6400 = vmatpush.bf16.msra.mxu0 0
    %6401 = vmatpush.bf16.msra.mxu0 0
    %6402 = vmatpush.bf16.msra.mxu0 0
    %6403 = vmatpush.bf16.msra.mxu0 0
    %6404 = vmatpush.bf16.msra.mxu0 0
    %6405 = vmatpush.bf16.msra.mxu0 0
    %6406 = vmatpush.bf16.msra.mxu0 %v6397
    %6407 = vmatmul.bf16.gmra.mxu0 %v6394
    %v6408 = vpop.f32.mrf.mxu0
    %v6409 = vadd.f32 0.0, %v6408
    %v6410 = vpop.f32.mrf.mxu0
    %6411 = vdwg.mxu0
    %v6413 = vunpack.c.l.b16 %v6329
    %v6414 = vpack.c.b16 %v6413, %v6413
    %v6416 = vshrl.u32 %v6414, 16
    %v6418 = vrot.slane %v6416, 3
    %v6420 = vsel %vm5395, %v6418, 0
    %v6423 = vsel %vm416, %v5953, 0
    %6425 = vmatpush.bf16.msra.mxu0 0
    %6426 = vmatpush.bf16.msra.mxu0 0
    %6427 = vmatpush.bf16.msra.mxu0 0
    %6428 = vmatpush.bf16.msra.mxu0 0
    %6429 = vmatpush.bf16.msra.mxu0 0
    %6430 = vmatpush.bf16.msra.mxu0 0
    %6431 = vmatpush.bf16.msra.mxu0 0
    %6432 = vmatpush.bf16.msra.mxu0 %v6423
    %6433 = vmatmul.bf16.gmra.mxu0 %v6420
    %v6434 = vpop.f32.mrf.mxu0
    %v6435 = vadd.f32 0.0, %v6434
    %v6436 = vpop.f32.mrf.mxu0
    %6437 = vdwg.mxu0
    %v6439 = vunpack.c.l.b16 %v6330
    %v6440 = vpack.c.b16 %v6439, %v6439
    %v6442 = vshrl.u32 %v6440, 16
    %v6444 = vrot.slane %v6442, 3
    %v6446 = vsel %vm5395, %v6444, 0
    %v6449 = vsel %vm416, %v5954, 0
    %6451 = vmatpush.bf16.msra.mxu0 0
    %6452 = vmatpush.bf16.msra.mxu0 0
    %6453 = vmatpush.bf16.msra.mxu0 0
    %6454 = vmatpush.bf16.msra.mxu0 0
    %6455 = vmatpush.bf16.msra.mxu0 0
    %6456 = vmatpush.bf16.msra.mxu0 0
    %6457 = vmatpush.bf16.msra.mxu0 0
    %6458 = vmatpush.bf16.msra.mxu0 %v6449
    %6459 = vmatmul.bf16.gmra.mxu0 %v6446
    %v6460 = vpop.f32.mrf.mxu0
    %v6461 = vadd.f32 0.0, %v6460
    %v6462 = vpop.f32.mrf.mxu0
    %6463 = vdwg.mxu0
    %v6465 = vunpack.c.l.b16 %v6331
    %v6466 = vpack.c.b16 %v6465, %v6465
    %v6468 = vshrl.u32 %v6466, 16
    %v6470 = vrot.slane %v6468, 3
    %v6472 = vsel %vm5395, %v6470, 0
    %v6475 = vsel %vm416, %v5955, 0
    %6477 = vmatpush.bf16.msra.mxu0 0
    %6478 = vmatpush.bf16.msra.mxu0 0
    %6479 = vmatpush.bf16.msra.mxu0 0
    %6480 = vmatpush.bf16.msra.mxu0 0
    %6481 = vmatpush.bf16.msra.mxu0 0
    %6482 = vmatpush.bf16.msra.mxu0 0
    %6483 = vmatpush.bf16.msra.mxu0 0
    %6484 = vmatpush.bf16.msra.mxu0 %v6475
    %6485 = vmatmul.bf16.gmra.mxu0 %v6472
    %v6486 = vpop.f32.mrf.mxu0
    %v6487 = vadd.f32 0.0, %v6486
    %v6488 = vpop.f32.mrf.mxu0
    %6489 = vdwg.mxu0
    %v6491 = vunpack.c.l.b16 %v6332
    %v6492 = vpack.c.b16 %v6491, %v6491
    %v6494 = vshrl.u32 %v6492, 16
    %v6496 = vrot.slane %v6494, 3
    %v6498 = vsel %vm5395, %v6496, 0
    %v6501 = vsel %vm416, %v5956, 0
    %6503 = vmatpush.bf16.msra.mxu0 0
    %6504 = vmatpush.bf16.msra.mxu0 0
    %6505 = vmatpush.bf16.msra.mxu0 0
    %6506 = vmatpush.bf16.msra.mxu0 0
    %6507 = vmatpush.bf16.msra.mxu0 0
    %6508 = vmatpush.bf16.msra.mxu0 0
    %6509 = vmatpush.bf16.msra.mxu0 0
    %6510 = vmatpush.bf16.msra.mxu0 %v6501
    %6511 = vmatmul.bf16.gmra.mxu0 %v6498
    %v6512 = vpop.f32.mrf.mxu0
    %v6513 = vadd.f32 0.0, %v6512
    %v6514 = vpop.f32.mrf.mxu0
    %6515 = vdwg.mxu0
    %v6517 = vunpack.c.l.b16 %v6333
    %v6518 = vpack.c.b16 %v6517, %v6517
    %v6520 = vshrl.u32 %v6518, 16
    %v6522 = vrot.slane %v6520, 3
    %v6524 = vsel %vm5395, %v6522, 0
    %v6527 = vsel %vm416, %v5957, 0
    %6529 = vmatpush.bf16.msra.mxu0 0
    %6530 = vmatpush.bf16.msra.mxu0 0
    %6531 = vmatpush.bf16.msra.mxu0 0
    %6532 = vmatpush.bf16.msra.mxu0 0
    %6533 = vmatpush.bf16.msra.mxu0 0
    %6534 = vmatpush.bf16.msra.mxu0 0
    %6535 = vmatpush.bf16.msra.mxu0 0
    %6536 = vmatpush.bf16.msra.mxu0 %v6527
    %6537 = vmatmul.bf16.gmra.mxu0 %v6524
    %v6538 = vpop.f32.mrf.mxu0
    %v6539 = vadd.f32 0.0, %v6538
    %v6540 = vpop.f32.mrf.mxu0
    %6541 = vdwg.mxu0
    %6543 = vrot.lane.b32.xlu0 %v6383, 16
    %v6544 = vpop.permute.xlu0 %6543
    %6547 = vrot.lane.b32.xlu0 %v6409, 32
    %v6548 = vpop.permute.xlu0 %6547
    %6551 = vrot.lane.b32.xlu0 %v6435, 48
    %v6552 = vpop.permute.xlu0 %6551
    %6555 = vrot.lane.b32.xlu0 %v6461, 64
    %v6556 = vpop.permute.xlu0 %6555
    %6559 = vrot.lane.b32.xlu0 %v6487, 80
    %v6560 = vpop.permute.xlu0 %6559
    %6563 = vrot.lane.b32.xlu0 %v6513, 96
    %v6564 = vpop.permute.xlu0 %6563
    %6567 = vrot.lane.b32.xlu0 %v6539, 112
    %v6568 = vpop.permute.xlu0 %6567
    %v6570 = vsel %vm458, %v6357, %v6544
    %v6571 = vsel %vm5856, %v6570, %v6548
    %v6572 = vsel %vm5858, %v6571, %v6552
    %v6573 = vsel %vm5860, %v6572, %v6556
    %v6574 = vsel %vm5862, %v6573, %v6560
    %v6575 = vsel %vm5864, %v6574, %v6564
    %v6576 = vsel %vm5866, %v6575, %v6568
    %6577 = vst.msk [vmem:[#allocation29] sm:$0xff] %vm5395, %v5610
    %6578 = vst.msk [vmem:[#allocation29 + $0x8] sm:$0xff] %vm5395, %v6325
    %v6580 = vrot.slane %v6576, 7
    %vm6582 = vcmask 1040384
    %v6583 = vsel %vm6582, %v5867, %v6580
    %v6584 = vld [vmem:[#allocation22] sm:$0xf]
    %v6585 = vld [vmem:[#allocation22 + $0x4] sm:$0xf]
    %v6586 = vld [vmem:[#allocation22 + $0x8] sm:$0xf]
    %v6587 = vld [vmem:[#allocation22 + $0xc] sm:$0xf]
    %v6588 = vld [vmem:[#allocation22 + $0x10] sm:$0xf]
    %v6589 = vld [vmem:[#allocation22 + $0x14] sm:$0xf]
    %v6590 = vld [vmem:[#allocation22 + $0x18] sm:$0xf]
    %v6591 = vld [vmem:[#allocation22 + $0x1c] sm:$0xf]
    %v6592 = vld [vmem:[#allocation22 + $0x20] sm:$0xf]
    %v6593 = vld [vmem:[#allocation22 + $0x24] sm:$0xf]
    %v6594 = vld [vmem:[#allocation22 + $0x28] sm:$0xf]
    %v6595 = vld [vmem:[#allocation22 + $0x2c] sm:$0xf]
    %v6596 = vld [vmem:[#allocation22 + $0x30] sm:$0xf]
    %v6597 = vld [vmem:[#allocation22 + $0x34] sm:$0xf]
    %v6598 = vld [vmem:[#allocation22 + $0x38] sm:$0xf]
    %v6599 = vld [vmem:[#allocation22 + $0x3c] sm:$0xf]
    %v6600 = vpack.c.bf16 %v6583, %v6583
    %v6601 = vld [vmem:[#allocation23] sm:$0x1]
    %v6603 = vperm.slane %v6601, 0
    %v6621 = vunpack.c.l.b16 %v6584
    %v6622 = vunpack.c.l.b16 %v6585
    %v6623 = vunpack.c.l.b16 %v6586
    %v6624 = vunpack.c.l.b16 %v6587
    %v6625 = vunpack.c.l.b16 %v6588
    %v6626 = vunpack.c.l.b16 %v6589
    %v6627 = vunpack.c.l.b16 %v6590
    %v6628 = vunpack.c.l.b16 %v6591
    %v6629 = vunpack.c.l.b16 %v6592
    %v6630 = vunpack.c.l.b16 %v6593
    %v6631 = vunpack.c.l.b16 %v6594
    %v6632 = vunpack.c.l.b16 %v6595
    %v6633 = vunpack.c.l.b16 %v6596
    %v6634 = vunpack.c.l.b16 %v6597
    %v6635 = vunpack.c.l.b16 %v6598
    %v6636 = vunpack.c.l.b16 %v6599
    %v6637 = vpack.c.b16 %v6622, %v6621
    %v6638 = vpack.c.b16 %v6624, %v6623
    %v6639 = vpack.c.b16 %v6626, %v6625
    %v6640 = vpack.c.b16 %v6628, %v6627
    %v6641 = vpack.c.b16 %v6630, %v6629
    %v6642 = vpack.c.b16 %v6632, %v6631
    %v6643 = vpack.c.b16 %v6634, %v6633
    %v6644 = vpack.c.b16 %v6636, %v6635
    %6653 = vmatpush.bf16.msra.mxu0 %v6644
    %6654 = vmatpush.bf16.msra.mxu0 %v6643
    %6655 = vmatpush.bf16.msra.mxu0 %v6642
    %6656 = vmatpush.bf16.msra.mxu0 %v6641
    %6657 = vmatpush.bf16.msra.mxu0 %v6640
    %6658 = vmatpush.bf16.msra.mxu0 %v6639
    %6659 = vmatpush.bf16.msra.mxu0 %v6638
    %6660 = vmatpush.bf16.msra.mxu0 %v6637
    %6661 = vmatmul.bf16.gmra.mxu0 %v6600
    %v6662 = vpop.f32.mrf.mxu0
    %v6663 = vadd.f32 %v6603, %v6662
    %v6664 = vpop.f32.mrf.mxu0
    %6665 = vdwg.mxu0
    %v6666 = vld [vmem:[%s37] sm:$0xff]
    %v6667 = vld [vmem:[%s37 + $0x8] sm:$0xff]
    %v6668 = vld [vmem:[%s37 + $0x10] sm:$0xff]
    %v6669 = vld [vmem:[%s37 + $0x18] sm:$0xff]
    %v6670 = vld [vmem:[%s37 + $0x20] sm:$0xff]
    %v6671 = vld [vmem:[%s37 + $0x28] sm:$0xff]
    %v6672 = vld [vmem:[%s37 + $0x30] sm:$0xff]
    %v6673 = vld [vmem:[%s37 + $0x38] sm:$0xff]
    %v6674 = vld [vmem:[%s37 + $0x40] sm:$0xff]
    %v6675 = vld [vmem:[%s37 + $0x48] sm:$0xff]
    %v6676 = vld [vmem:[%s37 + $0x50] sm:$0xff]
    %v6677 = vld [vmem:[%s37 + $0x58] sm:$0xff]
    %v6678 = vld [vmem:[%s37 + $0x60] sm:$0xff]
    %v6679 = vld [vmem:[%s37 + $0x68] sm:$0xff]
    %v6680 = vld [vmem:[%s37 + $0x70] sm:$0xff]
    %v6681 = vld [vmem:[%s37 + $0x78] sm:$0xff]
    %v6682 = vld [vmem:[#allocation25] sm:$0x1]
    %v6684 = vperm.slane %v6682, 0
    %6686 = vmatpush.msra.mxu0 %v6681
    %6687 = vmatpush.msra.mxu0 %v6680
    %6688 = vmatpush.msra.mxu0 %v6679
    %6689 = vmatpush.msra.mxu0 %v6678
    %6690 = vmatpush.msra.mxu0 %v6677
    %6691 = vmatpush.msra.mxu0 %v6676
    %6692 = vmatpush.msra.mxu0 %v6675
    %6693 = vmatpush.msra.mxu0 %v6674
    %6694 = vmatpush.msra.mxu0 %v6673
    %6695 = vmatpush.msra.mxu0 %v6672
    %6696 = vmatpush.msra.mxu0 %v6671
    %6697 = vmatpush.msra.mxu0 %v6670
    %6698 = vmatpush.msra.mxu0 %v6669
    %6699 = vmatpush.msra.mxu0 %v6668
    %6700 = vmatpush.msra.mxu0 %v6667
    %6701 = vmatpush.msra.mxu0 %v6666
    %6702 = vmatmul.f32.gmra.mxu0 %v6663
    %v6703 = vpop.f32.mrf.mxu0
    %v6704 = vadd.f32 %v6684, %v6703
    %6705 = vdwg.mxu0
    %v6706 = vmax.f32 %v6704, 0.0
    %v6707 = vld [vmem:[%s41] sm:$0xff]
    %v6708 = vld [vmem:[%s41 + $0x8] sm:$0xff]
    %v6709 = vld [vmem:[%s41 + $0x10] sm:$0xff]
    %v6710 = vld [vmem:[%s41 + $0x18] sm:$0xff]
    %v6711 = vld [vmem:[%s41 + $0x20] sm:$0xff]
    %v6712 = vld [vmem:[%s41 + $0x28] sm:$0xff]
    %v6713 = vld [vmem:[%s41 + $0x30] sm:$0xff]
    %v6714 = vld [vmem:[%s41 + $0x38] sm:$0xff]
    %v6715 = vld [vmem:[#allocation26] sm:$0x1]
    %v6717 = vperm.slane %v6715, 0
    %v6720 = vsel %vm5860, %v6706, 0
    %6722 = vmatpush.msra.mxu0 0.0
    %6723 = vmatpush.msra.mxu0 0.0
    %6724 = vmatpush.msra.mxu0 0.0
    %6725 = vmatpush.msra.mxu0 0.0
    %6726 = vmatpush.msra.mxu0 0.0
    %6727 = vmatpush.msra.mxu0 0.0
    %6728 = vmatpush.msra.mxu0 0.0
    %6729 = vmatpush.msra.mxu0 0.0
    %6730 = vmatpush.msra.mxu0 %v6714
    %6731 = vmatpush.msra.mxu0 %v6713
    %6732 = vmatpush.msra.mxu0 %v6712
    %6733 = vmatpush.msra.mxu0 %v6711
    %6734 = vmatpush.msra.mxu0 %v6710
    %6735 = vmatpush.msra.mxu0 %v6709
    %6736 = vmatpush.msra.mxu0 %v6708
    %6737 = vmatpush.msra.mxu0 %v6707
    %6738 = vmatmul.f32.gmra.mxu0 %v6720
    %v6739 = vpop.f32.mrf.mxu0
    %v6740 = vadd.f32 %v6717, %v6739
    %6741 = vdwg.mxu0
    %v6742 = vmax.f32 %v6740, 0.0
    %v6743 = vld [vmem:[%s45] sm:$0xff]
    %v6744 = vld [vmem:[%s45 + $0x8] sm:$0xff]
    %v6745 = vld [vmem:[%s45 + $0x10] sm:$0xff]
    %v6746 = vld [vmem:[%s45 + $0x18] sm:$0xff]
    %v6747 = vld [vmem:[#allocation3] sm:$0x1]
    %v6749 = vperm.slane %v6747, 0
    %v6752 = vsel %vm5856, %v6742, 0
    %6754 = vmatpush.msra.mxu0 0.0
    %6755 = vmatpush.msra.mxu0 0.0
    %6756 = vmatpush.msra.mxu0 0.0
    %6757 = vmatpush.msra.mxu0 0.0
    %6758 = vmatpush.msra.mxu0 0.0
    %6759 = vmatpush.msra.mxu0 0.0
    %6760 = vmatpush.msra.mxu0 0.0
    %6761 = vmatpush.msra.mxu0 0.0
    %6762 = vmatpush.msra.mxu0 0.0
    %6763 = vmatpush.msra.mxu0 0.0
    %6764 = vmatpush.msra.mxu0 0.0
    %6765 = vmatpush.msra.mxu0 0.0
    %6766 = vmatpush.msra.mxu0 %v6746
    %6767 = vmatpush.msra.mxu0 %v6745
    %6768 = vmatpush.msra.mxu0 %v6744
    %6769 = vmatpush.msra.mxu0 %v6743
    %6770 = vmatmul.f32.gmra.mxu0 %v6752
    %v6771 = vpop.f32.mrf.mxu0
    %v6772 = vadd.f32 %v6749, %v6771
    %6773 = vdwg.mxu0
    %vm6774 = vcmask 1024
    %6775 = vst.msk [vmem:[%s57] sm:$0x3] %vm6774, %v6772
    %v6776 = vld [vmem:[%s49] sm:$0xff]
    %v6777 = vld [vmem:[%s49 + $0x8] sm:$0xff]
    %v6778 = vld [vmem:[%s49 + $0x10] sm:$0xff]
    %v6779 = vld [vmem:[%s49 + $0x18] sm:$0xff]
    %v6780 = vld [vmem:[%s49 + $0x20] sm:$0xff]
    %v6781 = vld [vmem:[%s49 + $0x28] sm:$0xff]
    %v6782 = vld [vmem:[%s49 + $0x30] sm:$0xff]
    %v6783 = vld [vmem:[%s49 + $0x38] sm:$0xff]
    %v6784 = vld [vmem:[%s49 + $0x40] sm:$0xff]
    %v6785 = vld [vmem:[%s49 + $0x48] sm:$0xff]
    %v6786 = vld [vmem:[%s49 + $0x50] sm:$0xff]
    %v6787 = vld [vmem:[%s49 + $0x58] sm:$0xff]
    %v6788 = vld [vmem:[%s49 + $0x60] sm:$0xff]
    %v6789 = vld [vmem:[%s49 + $0x68] sm:$0xff]
    %v6790 = vld [vmem:[%s49 + $0x70] sm:$0xff]
    %v6791 = vld [vmem:[%s49 + $0x78] sm:$0xff]
    %v6792 = vld [vmem:[#allocation28] sm:$0x1]
    %v6794 = vperm.slane %v6792, 0
    %6796 = vmatpush.msra.mxu0 %v6791
    %6797 = vmatpush.msra.mxu0 %v6790
    %6798 = vmatpush.msra.mxu0 %v6789
    %6799 = vmatpush.msra.mxu0 %v6788
    %6800 = vmatpush.msra.mxu0 %v6787
    %6801 = vmatpush.msra.mxu0 %v6786
    %6802 = vmatpush.msra.mxu0 %v6785
    %6803 = vmatpush.msra.mxu0 %v6784
    %6804 = vmatpush.msra.mxu0 %v6783
    %6805 = vmatpush.msra.mxu0 %v6782
    %6806 = vmatpush.msra.mxu0 %v6781
    %6807 = vmatpush.msra.mxu0 %v6780
    %6808 = vmatpush.msra.mxu0 %v6779
    %6809 = vmatpush.msra.mxu0 %v6778
    %6810 = vmatpush.msra.mxu0 %v6777
    %6811 = vmatpush.msra.mxu0 %v6776
    %6812 = vmatmul.f32.gmra.mxu0 %v6663
    %v6813 = vpop.f32.mrf.mxu0
    %v6814 = vadd.f32 %v6794, %v6813
    %6815 = vdwg.mxu0
    %v6816 = vmax.f32 %v6814, 0.0
    %v6817 = vld [vmem:[%s53] sm:$0xff]
    %v6818 = vld [vmem:[%s53 + $0x8] sm:$0xff]
    %v6819 = vld [vmem:[%s53 + $0x10] sm:$0xff]
    %v6820 = vld [vmem:[%s53 + $0x18] sm:$0xff]
    %v6821 = vld [vmem:[#allocation4] sm:$0x1]
    %v6823 = vperm.slane %v6821, 0
    %v6826 = vsel %vm5856, %v6816, 0
    %6828 = vmatpush.msra.mxu0 0.0
    %6829 = vmatpush.msra.mxu0 0.0
    %6830 = vmatpush.msra.mxu0 0.0
    %6831 = vmatpush.msra.mxu0 0.0
    %6832 = vmatpush.msra.mxu0 0.0
    %6833 = vmatpush.msra.mxu0 0.0
    %6834 = vmatpush.msra.mxu0 0.0
    %6835 = vmatpush.msra.mxu0 0.0
    %6836 = vmatpush.msra.mxu0 0.0
    %6837 = vmatpush.msra.mxu0 0.0
    %6838 = vmatpush.msra.mxu0 0.0
    %6839 = vmatpush.msra.mxu0 0.0
    %6840 = vmatpush.msra.mxu0 %v6820
    %6841 = vmatpush.msra.mxu0 %v6819
    %6842 = vmatpush.msra.mxu0 %v6818
    %6843 = vmatpush.msra.mxu0 %v6817
    %6844 = vmatmul.f32.gmra.mxu0 %v6826
    %v6845 = vpop.f32.mrf.mxu0
    %v6846 = vadd.f32 %v6823, %v6845
    %6847 = vdwg.mxu0
    %v6848 = vmax.f32 %v6846, 0.0
    %vm6849 = vcmp.ne.f32.partialorder %v6846, %v6846
    %v6850 = vadd.f32 %v6846, 0.0
    %v6851 = vand.u32 2147483647, %v6846
    %v6852 = vsub.f32 0.0, %v6851
    %v6853 = vmul.f32 %v6852, 1.442695
    %v6854 = vpow.pop %v6853
    %v6855 = vadd.f32 %v6854, 1.0
    %v6856 = vlog2.pop %v6855
    %v6857 = vmul.f32 %v6856, 0.6931472
    %v6858 = vmul.f32 -0.5, %v6854
    %v6859 = vadd.f32 %v6858, 1.0
    %v6860 = vmul.f32 %v6859, %v6854
    %v6861 = vand.u32 2147483647, %v6854
    %vm6862 = vcmp.lt.f32.partialorder %v6861, 0.0004427343
    %v6863 = vsel %vm6862, %v6860, %v6857
    %v6864 = vadd.f32 %v6848, %v6863
    %v6865 = vsel %vm6849, %v6850, %v6864
    %6866 = vst.msk [vmem:[%s59] sm:$0x3] %vm6774, %v6865
    // Predicated region
    $region174: #{lstm_predictor_forward.1} parent=1 // pred_check
      _
    $region175: #{lstm_predictor_forward.1} parent=1 // pred_check_branch
      %6868 = sbr.rel (0) target = $region177
    $region176: #{lstm_predictor_forward.1} parent=1 // pred_region
      _
    $region177: #{lstm_predictor_forward.1} parent=1 // pred_fallthru
      _
    // Predicated region
    $region178: #{lstm_predictor_forward.1} parent=1 // pred_check
      _
    $region179: #{lstm_predictor_forward.1} parent=1 // pred_check_branch
      %6870 = sbr.rel (0) target = $region181
    $region180: #{lstm_predictor_forward.1} parent=1 // pred_region
      _
    $region181: #{lstm_predictor_forward.1} parent=1 // pred_fallthru
      _
    // Predicated region
    $region182: #{lstm_predictor_forward.1} parent=1 // pred_check
      _
    $region183: #{lstm_predictor_forward.1} parent=1 // pred_check_branch
      %6872 = sbr.rel (0) target = $region185
    $region184: #{lstm_predictor_forward.1} parent=1 // pred_region
      %6874 = vsyncadd [#allocation7], 0
      %s6875 = sshll.u32 [#allocation29], 4
      %s6876 = int_to_ptr.vmem [resolvable:$true] %s6875
      %s6877 = sshll.u32 %s61, 4
      %s6878 = int_to_ptr.hbm [resolvable:$true] %s6877
      %6883 = dma.vmem_to_hbm [thread:$0]  %s6876, 256, %s6878, [#allocation7], 128, 128, 8
    $region185: #{lstm_predictor_forward.1} parent=1 // pred_fallthru
      _
    // Predicated region
    $region186: #{lstm_predictor_forward.1} parent=1 // pred_check
      _
    $region187: #{lstm_predictor_forward.1} parent=1 // pred_check_branch
      %6885 = sbr.rel (0) target = $region189
    $region188: #{lstm_predictor_forward.1} parent=1 // pred_region
      _
    $region189: #{lstm_predictor_forward.1} parent=1 // pred_fallthru
      _
    // Predicated region
    $region190: #{lstm_predictor_forward.1} parent=1 // pred_check
      _
    $region191: #{lstm_predictor_forward.1} parent=1 // pred_check_branch
      %6887 = sbr.rel (0) target = $region193
    $region192: #{lstm_predictor_forward.1} parent=1 // pred_region
      _
    $region193: #{lstm_predictor_forward.1} parent=1 // pred_fallthru
      _
    // Predicated region
    $region194: #{lstm_predictor_forward.1} parent=1 // pred_check
      _
    $region195: #{lstm_predictor_forward.1} parent=1 // pred_check_branch
      %6889 = sbr.rel (0) target = $region197
    $region196: #{lstm_predictor_forward.1} parent=1 // pred_region
      %6891 = dma.done [#allocation7], 256
    $region197: #{lstm_predictor_forward.1} parent=1 // pred_fallthru
      _
    %6892 = vsyncpa [#allocation6], 1
    %6893 = vsyncpa [#allocation9], 1
    %6894 = vsyncpa [#allocation12], 1
    %6895 = vsyncpa [#allocation15], 1
    %6896 = vsyncpa [#allocation18], 1
    %6897 = vsyncpa [#allocation21], 1
    %6898 = vsyncpa [#allocation24], 1
    %6899 = vsyncpa [#allocation27], 1
    %6900 = vsyncpa [#allocation7], 1

</llo_original>
